<compile_context>
chip_gen: v7x
topology: tpu7x:2x2x1
jax: 0.10.0
libtpu: 0.0.40
codegen_flags: <defaults>
</compile_context>

<pallas_src>
import numpy as np

import jax
import jax.numpy as jnp
from jax.experimental import pallas as pl
from jax.experimental.pallas import tpu as pltpu

BLK = 8  # images per grid step (must be a multiple of 8)


# ------------------------------------------------------------------------------------
# Fused kernel.  All activations are 2D with rows = h*BLK + img, lanes = width*channels.
# Row slices are always 8-aligned (free), reshapes only split/merge rows on 8-multiples.
# ------------------------------------------------------------------------------------
def _cnn_kernel(xt_ref, w1b_ref, b1t_ref, w2b_ref, b2t_ref, wfc_ref, bfc_ref, out_ref):
    f32 = jnp.float32
    blk = xt_ref.shape[1]

    # ---- zero-padded conv1 input: rows = h_pad*blk + img (h_pad in [0,32)) ----------
    x = xt_ref[...].reshape(28 * blk, 28)                       # free reshape
    zr = jnp.zeros((2 * blk, 28), f32)
    x1p = jnp.concatenate([zr, x, zr], axis=0)                  # (32*blk, 28)

    # ---- conv1 (banded width matmuls, 1->16 ch) + bias + ReLU ------------------------
    # a1 lanes: n = wout*16 + cout  (wout in [0,28), cout in [0,16))
    a1 = jnp.zeros((28 * blk, 448), f32)
    for ki in range(5):
        a1 = a1 + jnp.dot(x1p[ki * blk:(ki + 28) * blk],
                          w1b_ref[ki], preferred_element_type=f32)
    a1 = jnp.maximum(a1 + b1t_ref[...], 0.0)

    # ---- maxpool1 (2x2): vertical = sublane-group max, horizontal = lane-shift max ---
    r = a1.reshape(14, 2 * blk, 448)
    v = jnp.maximum(r[:, :blk, :], r[:, blk:, :]).reshape(14 * blk, 448)
    # lane l = w*16+c now holds max over rows; max with lane l+16 pools width pairs.
    # Pooled value for w2 lives at lane (2*w2)*16+c; odd-w lanes are junk and get zero
    # columns in the prepacked conv2 weight (compaction folded into w2b).
    m1 = jnp.maximum(v[:, :432], v[:, 16:])                     # (14*blk, 432)

    # ---- zero-padded conv2 input: rows = h_pad*blk + img (h_pad in [0,18)) -----------
    z2 = jnp.zeros((2 * blk, 432), f32)
    x2p = jnp.concatenate([z2, m1, z2], axis=0)                 # (18*blk, 432)

    # ---- conv2 (banded width matmuls, 16->32 ch) + bias + ReLU -----------------------
    # a2 lanes: n = wout*32 + cout  (wout in [0,14), cout in [0,32))
    a2 = jnp.zeros((14 * blk, 448), f32)
    for ki in range(5):
        a2 = a2 + jnp.dot(x2p[ki * blk:(ki + 14) * blk],
                          w2b_ref[ki], preferred_element_type=f32)
    a2 = jnp.maximum(a2 + b2t_ref[...], 0.0)

    # ---- maxpool2 (2x2) --------------------------------------------------------------
    r2 = a2.reshape(7, 2 * blk, 448)
    v2 = jnp.maximum(r2[:, :blk, :], r2[:, blk:, :]).reshape(7 * blk, 448)
    m2 = jnp.maximum(v2[:, :416], v2[:, 32:])                   # (7*blk, 416); w2 at lane (2*w2)*32+c

    # ---- fc1 (1568 -> 10, lanes padded to 128): 7 small MXU dots, one per pooled row -
    out = jnp.zeros((blk, 128), f32)
    for h2 in range(7):
        out = out + jnp.dot(m2[h2 * blk:(h2 + 1) * blk],
                            wfc_ref[h2], preferred_element_type=f32)
    out_ref[...] = out + bfc_ref[...]                           # lane-dense (blk, 128) store


# ------------------------------------------------------------------------------------
# Parameter init (PyTorch-style).
# ------------------------------------------------------------------------------------
def init_params(key):
    k1, k2, k3, k4, k5, k6 = jax.random.split(key, 6)

    def u(k, shape, fan_in):
        bound = 1.0 / jnp.sqrt(fan_in)
        return jax.random.uniform(k, shape, jnp.float32, -bound, bound)

    return {
        "cnn1_w": u(k1, (16, 1, 5, 5), 1 * 5 * 5),
        "cnn1_b": u(k2, (16,), 1 * 5 * 5),
        "cnn2_w": u(k3, (32, 16, 5, 5), 16 * 5 * 5),
        "cnn2_b": u(k4, (32,), 16 * 5 * 5),
        "fc1_w":  u(k5, (10, 32 * 7 * 7), 32 * 7 * 7),
        "fc1_b":  u(k6, (10,), 32 * 7 * 7),
    }


# ------------------------------------------------------------------------------------
# One-time host-side repack into the banded / lane-dense layouts the kernel consumes.
# ------------------------------------------------------------------------------------
def pack_params(params):
    w1 = np.asarray(params["cnn1_w"])          # (16, 1, 5, 5)  (cout, cin, kh, kw)
    w2 = np.asarray(params["cnn2_w"])          # (32, 16, 5, 5)
    fcw = np.asarray(params["fc1_w"])          # (10, 1568)  flat idx = c*49 + h*7 + w

    # conv1 banded weight: out[h, wout*16+cout] = sum_ki sum_win x[h+ki-2, win]*W1b[ki][win,...]
    w1b = np.zeros((5, 28, 28 * 16), np.float32)
    for ki in range(5):
        for wout in range(28):
            for kj in range(5):
                win = wout + kj - 2
                if 0 <= win < 28:
                    w1b[ki, win, wout * 16:(wout + 1) * 16] = w1[:, 0, ki, kj]

    # conv2 banded weight; input lane for (w2in, cin) is (2*w2in)*16 + cin (uncompacted
    # pool1 layout: odd-width lanes are junk and stay zero here).
    w2b = np.zeros((5, 432, 14 * 32), np.float32)
    for ki in range(5):
        for wout in range(14):
            for kj in range(5):
                win = wout + kj - 2
                if 0 <= win < 14:
                    for cin in range(16):
                        w2b[ki, 2 * win * 16 + cin, wout * 32:(wout + 1) * 32] = w2[:, cin, ki, kj]

    # fc1 weight: one (416, 128) slab per pooled row h2; input lane (2*w2)*32 + c,
    # PyTorch NCHW flatten order (c*49 + h2*7 + w2) absorbed here; lanes >= 10 stay zero.
    wfc = np.zeros((7, 416, 128), np.float32)
    for h2 in range(7):
        for w2i in range(7):
            for c in range(32):
                wfc[h2, 2 * w2i * 32 + c, 0:10] = fcw[:, c * 49 + h2 * 7 + w2i]

    b1t = np.tile(np.asarray(params["cnn1_b"]), 28).reshape(1, 448).astype(np.float32)
    b2t = np.tile(np.asarray(params["cnn2_b"]), 14).reshape(1, 448).astype(np.float32)
    bfc = np.zeros((1, 128), np.float32)
    bfc[0, :10] = np.asarray(params["fc1_b"])

    return {
        "w1b": jnp.asarray(w1b), "b1t": jnp.asarray(b1t),
        "w2b": jnp.asarray(w2b), "b2t": jnp.asarray(b2t),
        "wfc": jnp.asarray(wfc), "bfc": jnp.asarray(bfc),
    }


# ------------------------------------------------------------------------------------
# Forward pass: single pallas_call, BLK images per grid step, batch axis "parallel".
# ------------------------------------------------------------------------------------
@jax.jit
def cnn_forward(packed, x):
    B = x.shape[0]
    xr = x.reshape(B, 28, 28)
    Bp = ((B + BLK - 1) // BLK) * BLK
    if Bp != B:
        xr = jnp.pad(xr, ((0, Bp - B), (0, 0), (0, 0)))
    # One tiny (3 KB/img) layout copy of the network input so that inside the kernel the
    # batch sits on sublanes and width on lanes (all in-kernel row slices stay 8-aligned).
    xt = jnp.transpose(xr, (1, 0, 2))                            # (28, Bp, 28)

    out = pl.pallas_call(
        _cnn_kernel,
        out_shape=jax.ShapeDtypeStruct((Bp, 128), jnp.float32),
        grid=(Bp // BLK,),
        in_specs=[
            pl.BlockSpec((28, BLK, 28), lambda b: (0, b, 0)),    # input block (h, img, w)
            pl.BlockSpec((5, 28, 448), lambda b: (0, 0, 0)),     # conv1 banded weight
            pl.BlockSpec((1, 448),     lambda b: (0, 0)),        # conv1 bias (tiled)
            pl.BlockSpec((5, 432, 448), lambda b: (0, 0, 0)),    # conv2 banded weight
            pl.BlockSpec((1, 448),     lambda b: (0, 0)),        # conv2 bias (tiled)
            pl.BlockSpec((7, 416, 128), lambda b: (0, 0, 0)),    # fc1 weight (repacked)
            pl.BlockSpec((1, 128),     lambda b: (0, 0)),        # fc1 bias (lane padded)
        ],
        out_specs=pl.BlockSpec((BLK, 128), lambda b: (b, 0)),
        compiler_params=pltpu.CompilerParams(
            dimension_semantics=("parallel",),
            vmem_limit_bytes=32 * 1024 * 1024),
    )(xt, packed["w1b"], packed["b1t"], packed["w2b"], packed["b2t"],
      packed["wfc"], packed["bfc"])

    return out[:B, :10]                                          # strip lane / batch padding


# ------------------------------------------------------------------------------------
# Pure-JAX reference (sanity check of the forward semantics).
# ------------------------------------------------------------------------------------
def cnn_forward_ref(params, x):
    def conv(x, w, b):
        y = jax.lax.conv_general_dilated(
            x, w, window_strides=(1, 1), padding=((2, 2), (2, 2)),
            dimension_numbers=("NCHW", "OIHW", "NCHW"),
            precision=jax.lax.Precision.HIGHEST)
        return jnp.maximum(y + b[None, :, None, None], 0.0)

    def pool(x):
        return jax.lax.reduce_window(x, -jnp.inf, jax.lax.max,
                                     (1, 1, 2, 2), (1, 1, 2, 2), "VALID")

    out = pool(conv(x, params["cnn1_w"], params["cnn1_b"]))
    out = pool(conv(out, params["cnn2_w"], params["cnn2_b"]))
    out = out.reshape(out.shape[0], -1)
    return jnp.dot(out, params["fc1_w"].T,
                   precision=jax.lax.Precision.HIGHEST) + params["fc1_b"]


# ------------------------------------------------------------------------------------
if __name__ == "__main__":
    key = jax.random.PRNGKey(0)
    pkey, xkey = jax.random.split(key)
    params = init_params(pkey)
    packed = pack_params(params)

    # MNIST-shaped input (28x28 required so fc1 input is 32*7*7); 16 images = 2 grid steps.
    x = jax.random.normal(xkey, (16, 1, 28, 28), dtype=jnp.float32)

    out = jax.block_until_ready(cnn_forward(packed, x))
    ref = jax.block_until_ready(cnn_forward_ref(params, x))

    assert out.shape == (16, 10)
    err = float(jnp.max(jnp.abs(out - ref)))
    assert jnp.allclose(out, ref, rtol=2e-3, atol=2e-3), f"mismatch vs JAX reference (max abs err {err})"

    print("KERNEL_OK")
</pallas_src>

<mosaic_0001>
module attributes {stable_mosaic.version = 11 : i64} {
  func.func @_cnn_kernel(%arg0: i32, %arg1: memref<28x8x28xf32, #tpu.memory_space<vmem>>, %arg2: memref<5x28x448xf32, #tpu.memory_space<vmem>>, %arg3: memref<1x448xf32, #tpu.memory_space<vmem>>, %arg4: memref<5x432x448xf32, #tpu.memory_space<vmem>>, %arg5: memref<1x448xf32, #tpu.memory_space<vmem>>, %arg6: memref<7x416x128xf32, #tpu.memory_space<vmem>>, %arg7: memref<1x128xf32, #tpu.memory_space<vmem>>, %arg8: memref<8x128xf32, #tpu.memory_space<vmem>>) attributes {dimension_semantics = [#tpu.dimension_semantics<parallel>], iteration_bounds = array<i64: 2>, scalar_prefetch = 0 : i64, scratch_operands = 0 : i64, tpu.core_type = #tpu.core_type<tc>, window_params = [{transform_indices = @transform_0, window_bounds = array<i64: 28, 8, 28>}, {pipeline_mode = #tpu.pipeline_mode<synchronous>, transform_indices = @transform_1, window_bounds = array<i64: 5, 28, 448>}, {pipeline_mode = #tpu.pipeline_mode<synchronous>, transform_indices = @transform_2, window_bounds = array<i64: 1, 448>}, {pipeline_mode = #tpu.pipeline_mode<synchronous>, transform_indices = @transform_3, window_bounds = array<i64: 5, 432, 448>}, {pipeline_mode = #tpu.pipeline_mode<synchronous>, transform_indices = @transform_4, window_bounds = array<i64: 1, 448>}, {pipeline_mode = #tpu.pipeline_mode<synchronous>, transform_indices = @transform_5, window_bounds = array<i64: 7, 416, 128>}, {pipeline_mode = #tpu.pipeline_mode<synchronous>, transform_indices = @transform_6, window_bounds = array<i64: 1, 128>}, {transform_indices = @transform_7, window_bounds = array<i64: 8, 128>}]} {
    %c0 = arith.constant 0 : index
    %c0_0 = arith.constant 0 : index
    %c0_1 = arith.constant 0 : index
    %0 = vector.load %arg1[%c0, %c0_0, %c0_1] : memref<28x8x28xf32, #tpu.memory_space<vmem>>, vector<28x8x28xf32>
    %1 = vector.shape_cast %0 : vector<28x8x28xf32> to vector<224x28xf32>
    %cst = arith.constant 0.000000e+00 : f32
    %2 = vector.broadcast %cst : f32 to vector<16x28xf32>
    %3 = tpu.concatenate %2, %1, %2 in 0 : vector<16x28xf32>, vector<224x28xf32>, vector<16x28xf32> -> vector<256x28xf32>
    %cst_2 = arith.constant 0.000000e+00 : f32
    %4 = vector.broadcast %cst_2 : f32 to vector<224x448xf32>
    %5 = vector.extract_strided_slice %3 {offsets = [0, 0], sizes = [224, 28], strides = [1, 1]} : vector<256x28xf32> to vector<224x28xf32>
    %c0_3 = arith.constant 0 : index
    %c0_4 = arith.constant 0 : index
    %c0_5 = arith.constant 0 : index
    %6 = vector.load %arg2[%c0_3, %c0_4, %c0_5] : memref<5x28x448xf32, #tpu.memory_space<vmem>>, vector<1x28x448xf32>
    %7 = vector.shape_cast %6 : vector<1x28x448xf32> to vector<28x448xf32>
    %cst_6 = arith.constant dense<0.000000e+00> : vector<224x448xf32>
    %8 = tpu.matmul %5, %7, %cst_6 {dimension_numbers = #tpu.dot_dimension_numbers<[1], [0], [0], [1], [0, 0, 1, 1], [], []>} : vector<224x28xf32>, vector<28x448xf32>, vector<224x448xf32> -> vector<224x448xf32>
    %9 = arith.addf %4, %8 : vector<224x448xf32>
    %10 = vector.extract_strided_slice %3 {offsets = [8, 0], sizes = [224, 28], strides = [1, 1]} : vector<256x28xf32> to vector<224x28xf32>
    %c1 = arith.constant 1 : index
    %c0_7 = arith.constant 0 : index
    %c0_8 = arith.constant 0 : index
    %11 = vector.load %arg2[%c1, %c0_7, %c0_8] : memref<5x28x448xf32, #tpu.memory_space<vmem>>, vector<1x28x448xf32>
    %12 = vector.shape_cast %11 : vector<1x28x448xf32> to vector<28x448xf32>
    %cst_9 = arith.constant dense<0.000000e+00> : vector<224x448xf32>
    %13 = tpu.matmul %10, %12, %cst_9 {dimension_numbers = #tpu.dot_dimension_numbers<[1], [0], [0], [1], [0, 0, 1, 1], [], []>} : vector<224x28xf32>, vector<28x448xf32>, vector<224x448xf32> -> vector<224x448xf32>
    %14 = arith.addf %9, %13 : vector<224x448xf32>
    %15 = vector.extract_strided_slice %3 {offsets = [16, 0], sizes = [224, 28], strides = [1, 1]} : vector<256x28xf32> to vector<224x28xf32>
    %c2 = arith.constant 2 : index
    %c0_10 = arith.constant 0 : index
    %c0_11 = arith.constant 0 : index
    %16 = vector.load %arg2[%c2, %c0_10, %c0_11] : memref<5x28x448xf32, #tpu.memory_space<vmem>>, vector<1x28x448xf32>
    %17 = vector.shape_cast %16 : vector<1x28x448xf32> to vector<28x448xf32>
    %cst_12 = arith.constant dense<0.000000e+00> : vector<224x448xf32>
    %18 = tpu.matmul %15, %17, %cst_12 {dimension_numbers = #tpu.dot_dimension_numbers<[1], [0], [0], [1], [0, 0, 1, 1], [], []>} : vector<224x28xf32>, vector<28x448xf32>, vector<224x448xf32> -> vector<224x448xf32>
    %19 = arith.addf %14, %18 : vector<224x448xf32>
    %20 = vector.extract_strided_slice %3 {offsets = [24, 0], sizes = [224, 28], strides = [1, 1]} : vector<256x28xf32> to vector<224x28xf32>
    %c3 = arith.constant 3 : index
    %c0_13 = arith.constant 0 : index
    %c0_14 = arith.constant 0 : index
    %21 = vector.load %arg2[%c3, %c0_13, %c0_14] : memref<5x28x448xf32, #tpu.memory_space<vmem>>, vector<1x28x448xf32>
    %22 = vector.shape_cast %21 : vector<1x28x448xf32> to vector<28x448xf32>
    %cst_15 = arith.constant dense<0.000000e+00> : vector<224x448xf32>
    %23 = tpu.matmul %20, %22, %cst_15 {dimension_numbers = #tpu.dot_dimension_numbers<[1], [0], [0], [1], [0, 0, 1, 1], [], []>} : vector<224x28xf32>, vector<28x448xf32>, vector<224x448xf32> -> vector<224x448xf32>
    %24 = arith.addf %19, %23 : vector<224x448xf32>
    %25 = vector.extract_strided_slice %3 {offsets = [32, 0], sizes = [224, 28], strides = [1, 1]} : vector<256x28xf32> to vector<224x28xf32>
    %c4 = arith.constant 4 : index
    %c0_16 = arith.constant 0 : index
    %c0_17 = arith.constant 0 : index
    %26 = vector.load %arg2[%c4, %c0_16, %c0_17] : memref<5x28x448xf32, #tpu.memory_space<vmem>>, vector<1x28x448xf32>
    %27 = vector.shape_cast %26 : vector<1x28x448xf32> to vector<28x448xf32>
    %cst_18 = arith.constant dense<0.000000e+00> : vector<224x448xf32>
    %28 = tpu.matmul %25, %27, %cst_18 {dimension_numbers = #tpu.dot_dimension_numbers<[1], [0], [0], [1], [0, 0, 1, 1], [], []>} : vector<224x28xf32>, vector<28x448xf32>, vector<224x448xf32> -> vector<224x448xf32>
    %29 = arith.addf %24, %28 : vector<224x448xf32>
    %c0_19 = arith.constant 0 : index
    %c0_20 = arith.constant 0 : index
    %30 = vector.load %arg3[%c0_19, %c0_20] : memref<1x448xf32, #tpu.memory_space<vmem>>, vector<1x448xf32>
    %31 = vector.broadcast %30 : vector<1x448xf32> to vector<224x448xf32>
    %32 = arith.addf %29, %31 : vector<224x448xf32>
    %cst_21 = arith.constant 0.000000e+00 : f32
    %33 = vector.broadcast %cst_21 : f32 to vector<224x448xf32>
    %34 = arith.maximumf %32, %33 : vector<224x448xf32>
    %35 = vector.shape_cast %34 : vector<224x448xf32> to vector<14x16x448xf32>
    %36 = vector.extract_strided_slice %35 {offsets = [0, 0, 0], sizes = [14, 8, 448], strides = [1, 1, 1]} : vector<14x16x448xf32> to vector<14x8x448xf32>
    %37 = vector.extract_strided_slice %35 {offsets = [0, 8, 0], sizes = [14, 8, 448], strides = [1, 1, 1]} : vector<14x16x448xf32> to vector<14x8x448xf32>
    %38 = arith.maximumf %36, %37 : vector<14x8x448xf32>
    %39 = vector.shape_cast %38 : vector<14x8x448xf32> to vector<112x448xf32>
    %40 = vector.extract_strided_slice %39 {offsets = [0, 0], sizes = [112, 432], strides = [1, 1]} : vector<112x448xf32> to vector<112x432xf32>
    %41 = vector.extract_strided_slice %39 {offsets = [0, 16], sizes = [112, 432], strides = [1, 1]} : vector<112x448xf32> to vector<112x432xf32>
    %42 = arith.maximumf %40, %41 : vector<112x432xf32>
    %cst_22 = arith.constant 0.000000e+00 : f32
    %43 = vector.broadcast %cst_22 : f32 to vector<16x432xf32>
    %44 = tpu.concatenate %43, %42, %43 in 0 : vector<16x432xf32>, vector<112x432xf32>, vector<16x432xf32> -> vector<144x432xf32>
    %cst_23 = arith.constant 0.000000e+00 : f32
    %45 = vector.broadcast %cst_23 : f32 to vector<112x448xf32>
    %46 = vector.extract_strided_slice %44 {offsets = [0, 0], sizes = [112, 432], strides = [1, 1]} : vector<144x432xf32> to vector<112x432xf32>
    %c0_24 = arith.constant 0 : index
    %c0_25 = arith.constant 0 : index
    %c0_26 = arith.constant 0 : index
    %47 = vector.load %arg4[%c0_24, %c0_25, %c0_26] : memref<5x432x448xf32, #tpu.memory_space<vmem>>, vector<1x432x448xf32>
    %48 = vector.shape_cast %47 : vector<1x432x448xf32> to vector<432x448xf32>
    %cst_27 = arith.constant dense<0.000000e+00> : vector<112x448xf32>
    %49 = tpu.matmul %46, %48, %cst_27 {dimension_numbers = #tpu.dot_dimension_numbers<[1], [0], [0], [1], [0, 0, 1, 1], [], []>} : vector<112x432xf32>, vector<432x448xf32>, vector<112x448xf32> -> vector<112x448xf32>
    %50 = arith.addf %45, %49 : vector<112x448xf32>
    %51 = vector.extract_strided_slice %44 {offsets = [8, 0], sizes = [112, 432], strides = [1, 1]} : vector<144x432xf32> to vector<112x432xf32>
    %c1_28 = arith.constant 1 : index
    %c0_29 = arith.constant 0 : index
    %c0_30 = arith.constant 0 : index
    %52 = vector.load %arg4[%c1_28, %c0_29, %c0_30] : memref<5x432x448xf32, #tpu.memory_space<vmem>>, vector<1x432x448xf32>
    %53 = vector.shape_cast %52 : vector<1x432x448xf32> to vector<432x448xf32>
    %cst_31 = arith.constant dense<0.000000e+00> : vector<112x448xf32>
    %54 = tpu.matmul %51, %53, %cst_31 {dimension_numbers = #tpu.dot_dimension_numbers<[1], [0], [0], [1], [0, 0, 1, 1], [], []>} : vector<112x432xf32>, vector<432x448xf32>, vector<112x448xf32> -> vector<112x448xf32>
    %55 = arith.addf %50, %54 : vector<112x448xf32>
    %56 = vector.extract_strided_slice %44 {offsets = [16, 0], sizes = [112, 432], strides = [1, 1]} : vector<144x432xf32> to vector<112x432xf32>
    %c2_32 = arith.constant 2 : index
    %c0_33 = arith.constant 0 : index
    %c0_34 = arith.constant 0 : index
    %57 = vector.load %arg4[%c2_32, %c0_33, %c0_34] : memref<5x432x448xf32, #tpu.memory_space<vmem>>, vector<1x432x448xf32>
    %58 = vector.shape_cast %57 : vector<1x432x448xf32> to vector<432x448xf32>
    %cst_35 = arith.constant dense<0.000000e+00> : vector<112x448xf32>
    %59 = tpu.matmul %56, %58, %cst_35 {dimension_numbers = #tpu.dot_dimension_numbers<[1], [0], [0], [1], [0, 0, 1, 1], [], []>} : vector<112x432xf32>, vector<432x448xf32>, vector<112x448xf32> -> vector<112x448xf32>
    %60 = arith.addf %55, %59 : vector<112x448xf32>
    %61 = vector.extract_strided_slice %44 {offsets = [24, 0], sizes = [112, 432], strides = [1, 1]} : vector<144x432xf32> to vector<112x432xf32>
    %c3_36 = arith.constant 3 : index
    %c0_37 = arith.constant 0 : index
    %c0_38 = arith.constant 0 : index
    %62 = vector.load %arg4[%c3_36, %c0_37, %c0_38] : memref<5x432x448xf32, #tpu.memory_space<vmem>>, vector<1x432x448xf32>
    %63 = vector.shape_cast %62 : vector<1x432x448xf32> to vector<432x448xf32>
    %cst_39 = arith.constant dense<0.000000e+00> : vector<112x448xf32>
    %64 = tpu.matmul %61, %63, %cst_39 {dimension_numbers = #tpu.dot_dimension_numbers<[1], [0], [0], [1], [0, 0, 1, 1], [], []>} : vector<112x432xf32>, vector<432x448xf32>, vector<112x448xf32> -> vector<112x448xf32>
    %65 = arith.addf %60, %64 : vector<112x448xf32>
    %66 = vector.extract_strided_slice %44 {offsets = [32, 0], sizes = [112, 432], strides = [1, 1]} : vector<144x432xf32> to vector<112x432xf32>
    %c4_40 = arith.constant 4 : index
    %c0_41 = arith.constant 0 : index
    %c0_42 = arith.constant 0 : index
    %67 = vector.load %arg4[%c4_40, %c0_41, %c0_42] : memref<5x432x448xf32, #tpu.memory_space<vmem>>, vector<1x432x448xf32>
    %68 = vector.shape_cast %67 : vector<1x432x448xf32> to vector<432x448xf32>
    %cst_43 = arith.constant dense<0.000000e+00> : vector<112x448xf32>
    %69 = tpu.matmul %66, %68, %cst_43 {dimension_numbers = #tpu.dot_dimension_numbers<[1], [0], [0], [1], [0, 0, 1, 1], [], []>} : vector<112x432xf32>, vector<432x448xf32>, vector<112x448xf32> -> vector<112x448xf32>
    %70 = arith.addf %65, %69 : vector<112x448xf32>
    %c0_44 = arith.constant 0 : index
    %c0_45 = arith.constant 0 : index
    %71 = vector.load %arg5[%c0_44, %c0_45] : memref<1x448xf32, #tpu.memory_space<vmem>>, vector<1x448xf32>
    %72 = vector.broadcast %71 : vector<1x448xf32> to vector<112x448xf32>
    %73 = arith.addf %70, %72 : vector<112x448xf32>
    %cst_46 = arith.constant 0.000000e+00 : f32
    %74 = vector.broadcast %cst_46 : f32 to vector<112x448xf32>
    %75 = arith.maximumf %73, %74 : vector<112x448xf32>
    %76 = vector.shape_cast %75 : vector<112x448xf32> to vector<7x16x448xf32>
    %77 = vector.extract_strided_slice %76 {offsets = [0, 0, 0], sizes = [7, 8, 448], strides = [1, 1, 1]} : vector<7x16x448xf32> to vector<7x8x448xf32>
    %78 = vector.extract_strided_slice %76 {offsets = [0, 8, 0], sizes = [7, 8, 448], strides = [1, 1, 1]} : vector<7x16x448xf32> to vector<7x8x448xf32>
    %79 = arith.maximumf %77, %78 : vector<7x8x448xf32>
    %80 = vector.shape_cast %79 : vector<7x8x448xf32> to vector<56x448xf32>
    %81 = vector.extract_strided_slice %80 {offsets = [0, 0], sizes = [56, 416], strides = [1, 1]} : vector<56x448xf32> to vector<56x416xf32>
    %82 = vector.extract_strided_slice %80 {offsets = [0, 32], sizes = [56, 416], strides = [1, 1]} : vector<56x448xf32> to vector<56x416xf32>
    %83 = arith.maximumf %81, %82 : vector<56x416xf32>
    %cst_47 = arith.constant 0.000000e+00 : f32
    %84 = vector.broadcast %cst_47 : f32 to vector<8x128xf32>
    %85 = vector.extract_strided_slice %83 {offsets = [0, 0], sizes = [8, 416], strides = [1, 1]} : vector<56x416xf32> to vector<8x416xf32>
    %c0_48 = arith.constant 0 : index
    %c0_49 = arith.constant 0 : index
    %c0_50 = arith.constant 0 : index
    %86 = vector.load %arg6[%c0_48, %c0_49, %c0_50] : memref<7x416x128xf32, #tpu.memory_space<vmem>>, vector<1x416x128xf32>
    %87 = vector.shape_cast %86 : vector<1x416x128xf32> to vector<416x128xf32>
    %cst_51 = arith.constant dense<0.000000e+00> : vector<8x128xf32>
    %88 = tpu.matmul %85, %87, %cst_51 {dimension_numbers = #tpu.dot_dimension_numbers<[1], [0], [0], [1], [0, 0, 1, 1], [], []>} : vector<8x416xf32>, vector<416x128xf32>, vector<8x128xf32> -> vector<8x128xf32>
    %89 = arith.addf %84, %88 : vector<8x128xf32>
    %90 = vector.extract_strided_slice %83 {offsets = [8, 0], sizes = [8, 416], strides = [1, 1]} : vector<56x416xf32> to vector<8x416xf32>
    %c1_52 = arith.constant 1 : index
    %c0_53 = arith.constant 0 : index
    %c0_54 = arith.constant 0 : index
    %91 = vector.load %arg6[%c1_52, %c0_53, %c0_54] : memref<7x416x128xf32, #tpu.memory_space<vmem>>, vector<1x416x128xf32>
    %92 = vector.shape_cast %91 : vector<1x416x128xf32> to vector<416x128xf32>
    %cst_55 = arith.constant dense<0.000000e+00> : vector<8x128xf32>
    %93 = tpu.matmul %90, %92, %cst_55 {dimension_numbers = #tpu.dot_dimension_numbers<[1], [0], [0], [1], [0, 0, 1, 1], [], []>} : vector<8x416xf32>, vector<416x128xf32>, vector<8x128xf32> -> vector<8x128xf32>
    %94 = arith.addf %89, %93 : vector<8x128xf32>
    %95 = vector.extract_strided_slice %83 {offsets = [16, 0], sizes = [8, 416], strides = [1, 1]} : vector<56x416xf32> to vector<8x416xf32>
    %c2_56 = arith.constant 2 : index
    %c0_57 = arith.constant 0 : index
    %c0_58 = arith.constant 0 : index
    %96 = vector.load %arg6[%c2_56, %c0_57, %c0_58] : memref<7x416x128xf32, #tpu.memory_space<vmem>>, vector<1x416x128xf32>
    %97 = vector.shape_cast %96 : vector<1x416x128xf32> to vector<416x128xf32>
    %cst_59 = arith.constant dense<0.000000e+00> : vector<8x128xf32>
    %98 = tpu.matmul %95, %97, %cst_59 {dimension_numbers = #tpu.dot_dimension_numbers<[1], [0], [0], [1], [0, 0, 1, 1], [], []>} : vector<8x416xf32>, vector<416x128xf32>, vector<8x128xf32> -> vector<8x128xf32>
    %99 = arith.addf %94, %98 : vector<8x128xf32>
    %100 = vector.extract_strided_slice %83 {offsets = [24, 0], sizes = [8, 416], strides = [1, 1]} : vector<56x416xf32> to vector<8x416xf32>
    %c3_60 = arith.constant 3 : index
    %c0_61 = arith.constant 0 : index
    %c0_62 = arith.constant 0 : index
    %101 = vector.load %arg6[%c3_60, %c0_61, %c0_62] : memref<7x416x128xf32, #tpu.memory_space<vmem>>, vector<1x416x128xf32>
    %102 = vector.shape_cast %101 : vector<1x416x128xf32> to vector<416x128xf32>
    %cst_63 = arith.constant dense<0.000000e+00> : vector<8x128xf32>
    %103 = tpu.matmul %100, %102, %cst_63 {dimension_numbers = #tpu.dot_dimension_numbers<[1], [0], [0], [1], [0, 0, 1, 1], [], []>} : vector<8x416xf32>, vector<416x128xf32>, vector<8x128xf32> -> vector<8x128xf32>
    %104 = arith.addf %99, %103 : vector<8x128xf32>
    %105 = vector.extract_strided_slice %83 {offsets = [32, 0], sizes = [8, 416], strides = [1, 1]} : vector<56x416xf32> to vector<8x416xf32>
    %c4_64 = arith.constant 4 : index
    %c0_65 = arith.constant 0 : index
    %c0_66 = arith.constant 0 : index
    %106 = vector.load %arg6[%c4_64, %c0_65, %c0_66] : memref<7x416x128xf32, #tpu.memory_space<vmem>>, vector<1x416x128xf32>
    %107 = vector.shape_cast %106 : vector<1x416x128xf32> to vector<416x128xf32>
    %cst_67 = arith.constant dense<0.000000e+00> : vector<8x128xf32>
    %108 = tpu.matmul %105, %107, %cst_67 {dimension_numbers = #tpu.dot_dimension_numbers<[1], [0], [0], [1], [0, 0, 1, 1], [], []>} : vector<8x416xf32>, vector<416x128xf32>, vector<8x128xf32> -> vector<8x128xf32>
    %109 = arith.addf %104, %108 : vector<8x128xf32>
    %110 = vector.extract_strided_slice %83 {offsets = [40, 0], sizes = [8, 416], strides = [1, 1]} : vector<56x416xf32> to vector<8x416xf32>
    %c5 = arith.constant 5 : index
    %c0_68 = arith.constant 0 : index
    %c0_69 = arith.constant 0 : index
    %111 = vector.load %arg6[%c5, %c0_68, %c0_69] : memref<7x416x128xf32, #tpu.memory_space<vmem>>, vector<1x416x128xf32>
    %112 = vector.shape_cast %111 : vector<1x416x128xf32> to vector<416x128xf32>
    %cst_70 = arith.constant dense<0.000000e+00> : vector<8x128xf32>
    %113 = tpu.matmul %110, %112, %cst_70 {dimension_numbers = #tpu.dot_dimension_numbers<[1], [0], [0], [1], [0, 0, 1, 1], [], []>} : vector<8x416xf32>, vector<416x128xf32>, vector<8x128xf32> -> vector<8x128xf32>
    %114 = arith.addf %109, %113 : vector<8x128xf32>
    %115 = vector.extract_strided_slice %83 {offsets = [48, 0], sizes = [8, 416], strides = [1, 1]} : vector<56x416xf32> to vector<8x416xf32>
    %c6 = arith.constant 6 : index
    %c0_71 = arith.constant 0 : index
    %c0_72 = arith.constant 0 : index
    %116 = vector.load %arg6[%c6, %c0_71, %c0_72] : memref<7x416x128xf32, #tpu.memory_space<vmem>>, vector<1x416x128xf32>
    %117 = vector.shape_cast %116 : vector<1x416x128xf32> to vector<416x128xf32>
    %cst_73 = arith.constant dense<0.000000e+00> : vector<8x128xf32>
    %118 = tpu.matmul %115, %117, %cst_73 {dimension_numbers = #tpu.dot_dimension_numbers<[1], [0], [0], [1], [0, 0, 1, 1], [], []>} : vector<8x416xf32>, vector<416x128xf32>, vector<8x128xf32> -> vector<8x128xf32>
    %119 = arith.addf %114, %118 : vector<8x128xf32>
    %c0_74 = arith.constant 0 : index
    %c0_75 = arith.constant 0 : index
    %120 = vector.load %arg7[%c0_74, %c0_75] : memref<1x128xf32, #tpu.memory_space<vmem>>, vector<1x128xf32>
    %121 = vector.broadcast %120 : vector<1x128xf32> to vector<8x128xf32>
    %122 = arith.addf %119, %121 : vector<8x128xf32>
    %c0_76 = arith.constant 0 : index
    %c0_77 = arith.constant 0 : index
    %123 = vector.load %arg8[%c0_76, %c0_77] : memref<8x128xf32, #tpu.memory_space<vmem>>, vector<8x128xf32>
    tpu.vector_store %arg8[%c0_76, %c0_77], %122 {strides = array<i32>} : memref<8x128xf32, #tpu.memory_space<vmem>>, vector<8x128xf32>,
    return
  }
  func.func @transform_0(%arg0: i32) -> (i32, i32, i32) {
    %c0_i32 = arith.constant 0 : i32
    %c0_i32_0 = arith.constant 0 : i32
    %c0_i32_1 = arith.constant 0 : i32
    return %c0_i32, %arg0, %c0_i32_0 : i32, i32, i32
  }
  func.func @transform_1(%arg0: i32) -> (i32, i32, i32) {
    %c0_i32 = arith.constant 0 : i32
    %c0_i32_0 = arith.constant 0 : i32
    %c0_i32_1 = arith.constant 0 : i32
    %c0_i32_2 = arith.constant 0 : i32
    return %c0_i32, %c0_i32_0, %c0_i32_1 : i32, i32, i32
  }
  func.func @transform_2(%arg0: i32) -> (i32, i32) {
    %c0_i32 = arith.constant 0 : i32
    %c0_i32_0 = arith.constant 0 : i32
    %c0_i32_1 = arith.constant 0 : i32
    return %c0_i32, %c0_i32_0 : i32, i32
  }
  func.func @transform_3(%arg0: i32) -> (i32, i32, i32) {
    %c0_i32 = arith.constant 0 : i32
    %c0_i32_0 = arith.constant 0 : i32
    %c0_i32_1 = arith.constant 0 : i32
    %c0_i32_2 = arith.constant 0 : i32
    return %c0_i32, %c0_i32_0, %c0_i32_1 : i32, i32, i32
  }
  func.func @transform_4(%arg0: i32) -> (i32, i32) {
    %c0_i32 = arith.constant 0 : i32
    %c0_i32_0 = arith.constant 0 : i32
    %c0_i32_1 = arith.constant 0 : i32
    return %c0_i32, %c0_i32_0 : i32, i32
  }
  func.func @transform_5(%arg0: i32) -> (i32, i32, i32) {
    %c0_i32 = arith.constant 0 : i32
    %c0_i32_0 = arith.constant 0 : i32
    %c0_i32_1 = arith.constant 0 : i32
    %c0_i32_2 = arith.constant 0 : i32
    return %c0_i32, %c0_i32_0, %c0_i32_1 : i32, i32, i32
  }
  func.func @transform_6(%arg0: i32) -> (i32, i32) {
    %c0_i32 = arith.constant 0 : i32
    %c0_i32_0 = arith.constant 0 : i32
    %c0_i32_1 = arith.constant 0 : i32
    return %c0_i32, %c0_i32_0 : i32, i32
  }
  func.func @transform_7(%arg0: i32) -> (i32, i32) {
    %c0_i32 = arith.constant 0 : i32
    %c0_i32_0 = arith.constant 0 : i32
    return %arg0, %c0_i32 : i32, i32
  }
}

</mosaic_0001>

<llo_original>
// kernel: cnn_forward.1
$region0: #{cnn_forward.1}
  #allocation0 [shape = 'u32[]', space=smem, size = 0x4, offset = 0x4, fixed_abs, tag = 'smem constant byte address 0x4 - core index']
  #allocation1 [shape = 'u32[144,128]{1,0:T(1,128)}', space=vmem, size = 0x12000, scoped, tag = 'internal scratch']
  %s0 = inlined_call_operand.vmem [shape: f32[28,16,28], index: 0, kind: input, shape index: {}]
  %s1 = inlined_call_operand.hbm [shape: f32[5,28,448], index: 1, kind: input, shape index: {}]
  %s2 = inlined_call_operand.hbm [shape: f32[1,448], index: 2, kind: input, shape index: {}]
  %s3 = inlined_call_operand.hbm [shape: f32[5,432,448], index: 3, kind: input, shape index: {}]
  %s4 = inlined_call_operand.hbm [shape: f32[1,448], index: 4, kind: input, shape index: {}]
  %s5 = inlined_call_operand.hbm [shape: f32[7,416,128], index: 5, kind: input, shape index: {}]
  %s6 = inlined_call_operand.hbm [shape: f32[1,128], index: 6, kind: input, shape index: {}]
  %s7 = inlined_call_operand.hbm [shape: f32[16,128], index: 7, kind: output, shape index: {}]
  %s8 = sld [smem:[#allocation0]]
  $region123: #{cnn_forward.1} parent=0
    _
  %s10 = ssub.s32 1, %s8
  %s11 = scalar_select 0, %s10, %s8
  $region1: #{cnn_forward.1} parent=0
    #allocation2 [shape = 'u8[229376]{0}', space=vmem, size = 0x38000, scoped, tag = 'input window, operand 0']
    #allocation3 [shape = 'u8[327680]{0}', space=vmem, size = 0x50000, scoped, tag = 'input window, operand 1, single buffered']
    #allocation4 [shape = 's32[2]{0}', space=sflag, size = 0x8, scoped, tag = 'scoped memory for cnn_forward.1']
    #allocation5 [shape = 's32[2]{0}', space=sflag, size = 0x8, scoped, tag = 'scoped memory for cnn_forward.1']
    #allocation6 [shape = 'u8[2048]{0}', space=vmem, size = 0x800, scoped, tag = 'input window, operand 2, single buffered']
    #allocation7 [shape = 's32[1]{0}', space=sflag, size = 0x4, scoped, tag = 'scoped memory for cnn_forward.1']
    #allocation8 [shape = 'u8[4423680]{0}', space=vmem, size = 0x438000, scoped, tag = 'input window, operand 3, single buffered']
    #allocation9 [shape = 'u8[2048]{0}', space=vmem, size = 0x800, scoped, tag = 'input window, operand 4, single buffered']
    #allocation10 [shape = 's32[1]{0}', space=sflag, size = 0x4, scoped, tag = 'scoped memory for cnn_forward.1']
    #allocation11 [shape = 'u8[1490944]{0}', space=vmem, size = 0x16c000, scoped, tag = 'input window, operand 5, single buffered']
    #allocation12 [shape = 'u8[512]{0}', space=vmem, size = 0x400, scoped, tag = 'input window, operand 6, single buffered']
    #allocation13 [shape = 's32[1]{0}', space=sflag, size = 0x4, scoped, tag = 'scoped memory for cnn_forward.1']
    #allocation14 [shape = 'u8[8192]{0}', space=vmem, size = 0x2000, scoped, tag = 'output window, operand 0']
    %12 = vsyncpa [#allocation4], 0
    %13 = vsyncpa [#allocation7], 0
    %14 = vsyncpa [#allocation10], 0
    %15 = vsyncpa [#allocation13], 0
    %16 = vsyncpa [#allocation5], 0
    %s17 = scalar_lea.sflag [#allocation5], 1
    %18 = vsyncpa %s17, 0
    loop: start=0, step=1, limit=4
    $region2: #{cnn_forward.1} parent=1 // loop_pre_header
      _
    $region3: #{cnn_forward.1} parent=1 // loop_header
      %s20 = sphi 0, %s24
      %p21 = scmp.ge.s32.totalorder %s20, 4
      %s30 = sphi 0, %s32
      %s33 = sphi 0, %s30
      %s34 = sphi 0, %s33
      %s50 = sphi 0, %s34
      %s54 = sphi 0, %s54
      %s56 = sphi 0, %s54
      %s57 = sphi 0, %s56
      %s71 = sphi 0, %s57
      %s75 = sphi 0, %s75
      %s77 = sphi 0, %s75
      %s78 = sphi 0, %s77
      %s92 = sphi 0, %s78
      %s96 = sphi 0, %s96
      %s98 = sphi 0, %s96
      %s99 = sphi 0, %s98
      %s113 = sphi 0, %s99
      %s117 = sphi 0, %s117
      %s119 = sphi 0, %s117
      %s120 = sphi 0, %s119
      %s134 = sphi 0, %s120
      %s138 = sphi 0, %s138
      %s140 = sphi 0, %s138
      %s141 = sphi 0, %s140
      %s155 = sphi 0, %s141
      %s159 = sphi 0, %s159
      %s161 = sphi 0, %s159
      %s162 = sphi 0, %s161
      %s176 = sphi 0, %s162
      %s182 = sphi 0, %s184
      %s185 = sphi 0, %s182
      %s186 = sphi 0, %s185
      %s202 = sphi 0, %s186
    $region4: #{cnn_forward.1} parent=1 // loop_header_branch
      %23 = sbr.rel (%p21) target = $region8
    $region5: #{cnn_forward.1} parent=1 // loop_body
      %s25 = ssub.s32 %s20, 1
      %s26 = ssub.s32 %s20, 2
      %s27 = sadd.s32 %s20, 1
      %s28 = ssub.s32 %s20, %s27
      %p29 = scmp.eq.s32.totalorder %s28, 0
      %s31 = sadd.s32 %s30, 1
      %s32 = scalar_select %p29, %s30, %s31
      %p35 = pneg %p29
      %p36 = scmp.eq.s32.totalorder %s20, 1
      %p37 = por %p35, %p36
      %p38 = scmp.ne.s32.totalorder %s30, %s33
      %p39 = scmp.eq.s32.totalorder %s20, 0
      %p40 = por %p38, %p39
      %p41 = scmp.ne.s32.totalorder %s30, %s33
      %p42 = scmp.eq.s32.totalorder %s25, 1
      %p43 = por %p41, %p42
      %p44 = scmp.ne.s32.totalorder %s33, %s34
      %p45 = scmp.eq.s32.totalorder %s25, 0
      %p46 = por %p44, %p45
      %p47 = scmp.ne.s32.totalorder %s33, %s34
      %p48 = scmp.eq.s32.totalorder %s26, 1
      %p49 = por %p47, %p48
      %p51 = scmp.ne.s32.totalorder %s34, %s50
      %p52 = scmp.eq.s32.totalorder %s26, 0
      %p53 = por %p51, %p52
      %s55 = sadd.s32 %s54, 1
      %p58 = scmp.eq.s32.totalorder %s20, 1
      %p59 = scmp.ne.s32.totalorder %s54, %s56
      %p60 = scmp.eq.s32.totalorder %s20, 0
      %p61 = por %p59, %p60
      %p62 = scmp.ne.s32.totalorder %s54, %s56
      %p63 = scmp.eq.s32.totalorder %s25, 1
      %p64 = por %p62, %p63
      %p65 = scmp.ne.s32.totalorder %s56, %s57
      %p66 = scmp.eq.s32.totalorder %s25, 0
      %p67 = por %p65, %p66
      %p68 = scmp.ne.s32.totalorder %s56, %s57
      %p69 = scmp.eq.s32.totalorder %s26, 1
      %p70 = por %p68, %p69
      %p72 = scmp.ne.s32.totalorder %s57, %s71
      %p73 = scmp.eq.s32.totalorder %s26, 0
      %p74 = por %p72, %p73
      %s76 = sadd.s32 %s75, 1
      %p79 = scmp.eq.s32.totalorder %s20, 1
      %p80 = scmp.ne.s32.totalorder %s75, %s77
      %p81 = scmp.eq.s32.totalorder %s20, 0
      %p82 = por %p80, %p81
      %p83 = scmp.ne.s32.totalorder %s75, %s77
      %p84 = scmp.eq.s32.totalorder %s25, 1
      %p85 = por %p83, %p84
      %p86 = scmp.ne.s32.totalorder %s77, %s78
      %p87 = scmp.eq.s32.totalorder %s25, 0
      %p88 = por %p86, %p87
      %p89 = scmp.ne.s32.totalorder %s77, %s78
      %p90 = scmp.eq.s32.totalorder %s26, 1
      %p91 = por %p89, %p90
      %p93 = scmp.ne.s32.totalorder %s78, %s92
      %p94 = scmp.eq.s32.totalorder %s26, 0
      %p95 = por %p93, %p94
      %s97 = sadd.s32 %s96, 1
      %p100 = scmp.eq.s32.totalorder %s20, 1
      %p101 = scmp.ne.s32.totalorder %s96, %s98
      %p102 = scmp.eq.s32.totalorder %s20, 0
      %p103 = por %p101, %p102
      %p104 = scmp.ne.s32.totalorder %s96, %s98
      %p105 = scmp.eq.s32.totalorder %s25, 1
      %p106 = por %p104, %p105
      %p107 = scmp.ne.s32.totalorder %s98, %s99
      %p108 = scmp.eq.s32.totalorder %s25, 0
      %p109 = por %p107, %p108
      %p110 = scmp.ne.s32.totalorder %s98, %s99
      %p111 = scmp.eq.s32.totalorder %s26, 1
      %p112 = por %p110, %p111
      %p114 = scmp.ne.s32.totalorder %s99, %s113
      %p115 = scmp.eq.s32.totalorder %s26, 0
      %p116 = por %p114, %p115
      %s118 = sadd.s32 %s117, 1
      %p121 = scmp.eq.s32.totalorder %s20, 1
      %p122 = scmp.ne.s32.totalorder %s117, %s119
      %p123 = scmp.eq.s32.totalorder %s20, 0
      %p124 = por %p122, %p123
      %p125 = scmp.ne.s32.totalorder %s117, %s119
      %p126 = scmp.eq.s32.totalorder %s25, 1
      %p127 = por %p125, %p126
      %p128 = scmp.ne.s32.totalorder %s119, %s120
      %p129 = scmp.eq.s32.totalorder %s25, 0
      %p130 = por %p128, %p129
      %p131 = scmp.ne.s32.totalorder %s119, %s120
      %p132 = scmp.eq.s32.totalorder %s26, 1
      %p133 = por %p131, %p132
      %p135 = scmp.ne.s32.totalorder %s120, %s134
      %p136 = scmp.eq.s32.totalorder %s26, 0
      %p137 = por %p135, %p136
      %s139 = sadd.s32 %s138, 1
      %p142 = scmp.eq.s32.totalorder %s20, 1
      %p143 = scmp.ne.s32.totalorder %s138, %s140
      %p144 = scmp.eq.s32.totalorder %s20, 0
      %p145 = por %p143, %p144
      %p146 = scmp.ne.s32.totalorder %s138, %s140
      %p147 = scmp.eq.s32.totalorder %s25, 1
      %p148 = por %p146, %p147
      %p149 = scmp.ne.s32.totalorder %s140, %s141
      %p150 = scmp.eq.s32.totalorder %s25, 0
      %p151 = por %p149, %p150
      %p152 = scmp.ne.s32.totalorder %s140, %s141
      %p153 = scmp.eq.s32.totalorder %s26, 1
      %p154 = por %p152, %p153
      %p156 = scmp.ne.s32.totalorder %s141, %s155
      %p157 = scmp.eq.s32.totalorder %s26, 0
      %p158 = por %p156, %p157
      %s160 = sadd.s32 %s159, 1
      %p163 = scmp.eq.s32.totalorder %s20, 1
      %p164 = scmp.ne.s32.totalorder %s159, %s161
      %p165 = scmp.eq.s32.totalorder %s20, 0
      %p166 = por %p164, %p165
      %p167 = scmp.ne.s32.totalorder %s159, %s161
      %p168 = scmp.eq.s32.totalorder %s25, 1
      %p169 = por %p167, %p168
      %p170 = scmp.ne.s32.totalorder %s161, %s162
      %p171 = scmp.eq.s32.totalorder %s25, 0
      %p172 = por %p170, %p171
      %p173 = scmp.ne.s32.totalorder %s161, %s162
      %p174 = scmp.eq.s32.totalorder %s26, 1
      %p175 = por %p173, %p174
      %p177 = scmp.ne.s32.totalorder %s162, %s176
      %p178 = scmp.eq.s32.totalorder %s26, 0
      %p179 = por %p177, %p178
      %s180 = ssub.s32 %s20, %s27
      %p181 = scmp.eq.s32.totalorder %s180, 0
      %s183 = sadd.s32 %s182, 1
      %s184 = scalar_select %p181, %s182, %s183
      %p187 = pneg %p181
      %p188 = scmp.eq.s32.totalorder %s20, 1
      %p189 = por %p187, %p188
      %p190 = scmp.ne.s32.totalorder %s182, %s185
      %p191 = scmp.eq.s32.totalorder %s20, 0
      %p192 = por %p190, %p191
      %p193 = scmp.ne.s32.totalorder %s182, %s185
      %p194 = scmp.eq.s32.totalorder %s25, 1
      %p195 = por %p193, %p194
      %p196 = scmp.ne.s32.totalorder %s185, %s186
      %p197 = scmp.eq.s32.totalorder %s25, 0
      %p198 = por %p196, %p197
      %p199 = scmp.ne.s32.totalorder %s185, %s186
      %p200 = scmp.eq.s32.totalorder %s26, 1
      %p201 = por %p199, %p200
      %p203 = scmp.ne.s32.totalorder %s186, %s202
      %p204 = scmp.eq.s32.totalorder %s26, 0
      %p205 = por %p203, %p204
      %p206 = scmp.le.s32.totalorder 1, %s20
      %p207 = scmp.lt.s32.totalorder %s20, 3
      %p208 = pnand %p206, %p207
      %p209 = pneg %p208
      // Predicated region
      $region9: #{cnn_forward.1} parent=5 // pred_check
        _
      $region10: #{cnn_forward.1} parent=5 // pred_check_branch
        %211 = sbr.rel (%p208) target = $region12
      $region11: #{cnn_forward.1} parent=5 // pred_region
        %s212 = ssub.s32 %s20, 1
        // Predicated region
        $region13: #{cnn_forward.1} parent=11 // pred_check
          %p213 = pneg %p67
        $region14: #{cnn_forward.1} parent=11 // pred_check_branch
          %215 = sbr.rel (%p213) target = $region16
        $region15: #{cnn_forward.1} parent=11 // pred_region
          %s217 = ssub.s32 10240, 10240
          %218 = vsyncadd [#allocation4], %s217
          %s219 = sshll.u32 [#allocation3], 4
          %s220 = int_to_ptr.vmem [resolvable:$true] %s219
          %225 = dma.hbm_to_vmem [thread:$0]  %s1, 10240, %s220, [#allocation4], 512, 512, 32
        $region16: #{cnn_forward.1} parent=11 // pred_fallthru
          _
        // Predicated region
        $region17: #{cnn_forward.1} parent=11 // pred_check
          %p226 = pneg %p88
        $region18: #{cnn_forward.1} parent=11 // pred_check_branch
          %228 = sbr.rel (%p226) target = $region20
        $region19: #{cnn_forward.1} parent=11 // pred_region
          %s230 = ssub.s32 64, 64
          %231 = vsyncadd [#allocation7], %s230
          %s233 = sshll.u32 [#allocation6], 4
          %s234 = int_to_ptr.vmem [resolvable:$true] %s233
          %236 = dma.hbm_to_vmem [thread:$0]  %s2, 64, %s234, [#allocation7]
        $region20: #{cnn_forward.1} parent=11 // pred_fallthru
          _
        // Predicated region
        $region21: #{cnn_forward.1} parent=11 // pred_check
          %p237 = pneg %p109
        $region22: #{cnn_forward.1} parent=11 // pred_check_branch
          %239 = sbr.rel (%p237) target = $region24
        $region23: #{cnn_forward.1} parent=11 // pred_region
          %s241 = ssub.s32 138240, 138240
          %242 = vsyncadd [#allocation7], %s241
          %s243 = sshll.u32 [#allocation8], 4
          %s244 = int_to_ptr.vmem [resolvable:$true] %s243
          %249 = dma.hbm_to_vmem [thread:$0]  %s3, 138240, %s244, [#allocation7], 512, 512, 32
        $region24: #{cnn_forward.1} parent=11 // pred_fallthru
          _
        // Predicated region
        $region25: #{cnn_forward.1} parent=11 // pred_check
          %p250 = pneg %p130
        $region26: #{cnn_forward.1} parent=11 // pred_check_branch
          %252 = sbr.rel (%p250) target = $region28
        $region27: #{cnn_forward.1} parent=11 // pred_region
          %s254 = ssub.s32 64, 64
          %255 = vsyncadd [#allocation10], %s254
          %s257 = sshll.u32 [#allocation9], 4
          %s258 = int_to_ptr.vmem [resolvable:$true] %s257
          %260 = dma.hbm_to_vmem [thread:$0]  %s4, 64, %s258, [#allocation10]
        $region28: #{cnn_forward.1} parent=11 // pred_fallthru
          _
        // Predicated region
        $region29: #{cnn_forward.1} parent=11 // pred_check
          %p261 = pneg %p151
        $region30: #{cnn_forward.1} parent=11 // pred_check_branch
          %263 = sbr.rel (%p261) target = $region32
        $region31: #{cnn_forward.1} parent=11 // pred_region
          %s265 = ssub.s32 46592, 46592
          %266 = vsyncadd [#allocation10], %s265
          %s267 = sshll.u32 [#allocation11], 4
          %s268 = int_to_ptr.vmem [resolvable:$true] %s267
          %273 = dma.hbm_to_vmem [thread:$0]  %s5, 46592, %s268, [#allocation10], 128, 128, 8
        $region32: #{cnn_forward.1} parent=11 // pred_fallthru
          _
        // Predicated region
        $region33: #{cnn_forward.1} parent=11 // pred_check
          %p274 = pneg %p172
        $region34: #{cnn_forward.1} parent=11 // pred_check_branch
          %276 = sbr.rel (%p274) target = $region36
        $region35: #{cnn_forward.1} parent=11 // pred_region
          %s278 = ssub.s32 16, 16
          %279 = vsyncadd [#allocation13], %s278
          %s281 = sshll.u32 [#allocation12], 4
          %s282 = int_to_ptr.vmem [resolvable:$true] %s281
          %284 = dma.hbm_to_vmem [thread:$0]  %s6, 16, %s282, [#allocation13]
        $region36: #{cnn_forward.1} parent=11 // pred_fallthru
          _
      $region12: #{cnn_forward.1} parent=5 // pred_fallthru
        _
      %p285 = scmp.lt.s32.totalorder %s20, 2
      // Predicated region
      $region37: #{cnn_forward.1} parent=5 // pred_check
        %p286 = pneg %p285
      $region38: #{cnn_forward.1} parent=5 // pred_check_branch
        %288 = sbr.rel (%p286) target = $region40
      $region39: #{cnn_forward.1} parent=5 // pred_region
        // Predicated region
        $region41: #{cnn_forward.1} parent=39 // pred_check
          %p289 = pneg %p40
        $region42: #{cnn_forward.1} parent=39 // pred_check_branch
          %291 = sbr.rel (%p289) target = $region44
        $region43: #{cnn_forward.1} parent=39 // pred_region
          %s292 = sand.u32 %s30, 1
          %s293 = sand.u32 %s30, 1
          %s294 = smul.addr %s293, 224
          %s295 = scalar_lea.vmem [#allocation2], %s294
          %s296 = smul.addr %s20, 8
          %s297 = scalar_lea.vmem %s0, %s296
          // Predicated region
          $region45: #{cnn_forward.1} parent=43 // pred_check
            _
          $region46: #{cnn_forward.1} parent=43 // pred_check_branch
            %299 = sbr.rel (0) target = $region48
          $region47: #{cnn_forward.1} parent=43 // pred_region
            // Predicated region
            $region49: #{cnn_forward.1} parent=47 // pred_check
              _
            $region50: #{cnn_forward.1} parent=47 // pred_check_branch
              %301 = sbr.rel (0) target = $region52
            $region51: #{cnn_forward.1} parent=47 // pred_region
              // Predicated region
              $region64: #{cnn_forward.1} parent=51 // pred_check
                _
              $region65: #{cnn_forward.1} parent=51 // pred_check_branch
                %370 = sbr.rel (0) target = $region67
              $region66: #{cnn_forward.1} parent=51 // pred_region
                loop: start=0, step=1, limit=1
                $region68: #{cnn_forward.1} parent=66 // loop_pre_header
                  _
                $region69: #{cnn_forward.1} parent=66 // loop_header
                  %s372 = sphi 0, %s376
                  %p373 = scmp.ge.s32.totalorder %s372, 1
                  %s377 = sphi %s297, %s297
                  %s378 = sphi %s295, %s295
                $region70: #{cnn_forward.1} parent=66 // loop_header_branch
                  %375 = sbr.rel (%p373) target = $region74
                $region71: #{cnn_forward.1} parent=66 // loop_body
                  %v379 = vld [vmem:[%s377] sm:$0xff]
                  %380 = vst [vmem:[%s378] sm:$0xff] %v379
                  %v381 = vld [vmem:[%s377 + $0x10] sm:$0xff]
                  %382 = vst [vmem:[%s378 + $0x8] sm:$0xff] %v381
                  %v383 = vld [vmem:[%s377 + $0x20] sm:$0xff]
                  %384 = vst [vmem:[%s378 + $0x10] sm:$0xff] %v383
                  %v385 = vld [vmem:[%s377 + $0x30] sm:$0xff]
                  %386 = vst [vmem:[%s378 + $0x18] sm:$0xff] %v385
                  %v387 = vld [vmem:[%s377 + $0x40] sm:$0xff]
                  %388 = vst [vmem:[%s378 + $0x20] sm:$0xff] %v387
                  %v389 = vld [vmem:[%s377 + $0x50] sm:$0xff]
                  %390 = vst [vmem:[%s378 + $0x28] sm:$0xff] %v389
                  %v391 = vld [vmem:[%s377 + $0x60] sm:$0xff]
                  %392 = vst [vmem:[%s378 + $0x30] sm:$0xff] %v391
                  %v393 = vld [vmem:[%s377 + $0x70] sm:$0xff]
                  %394 = vst [vmem:[%s378 + $0x38] sm:$0xff] %v393
                  %v395 = vld [vmem:[%s377 + $0x80] sm:$0xff]
                  %396 = vst [vmem:[%s378 + $0x40] sm:$0xff] %v395
                  %v397 = vld [vmem:[%s377 + $0x90] sm:$0xff]
                  %398 = vst [vmem:[%s378 + $0x48] sm:$0xff] %v397
                  %v399 = vld [vmem:[%s377 + $0xa0] sm:$0xff]
                  %400 = vst [vmem:[%s378 + $0x50] sm:$0xff] %v399
                  %v401 = vld [vmem:[%s377 + $0xb0] sm:$0xff]
                  %402 = vst [vmem:[%s378 + $0x58] sm:$0xff] %v401
                  %v403 = vld [vmem:[%s377 + $0xc0] sm:$0xff]
                  %404 = vst [vmem:[%s378 + $0x60] sm:$0xff] %v403
                  %v405 = vld [vmem:[%s377 + $0xd0] sm:$0xff]
                  %406 = vst [vmem:[%s378 + $0x68] sm:$0xff] %v405
                  %v407 = vld [vmem:[%s377 + $0xe0] sm:$0xff]
                  %408 = vst [vmem:[%s378 + $0x70] sm:$0xff] %v407
                  %v409 = vld [vmem:[%s377 + $0xf0] sm:$0xff]
                  %410 = vst [vmem:[%s378 + $0x78] sm:$0xff] %v409
                  %v411 = vld [vmem:[%s377 + $0x100] sm:$0xff]
                  %412 = vst [vmem:[%s378 + $0x80] sm:$0xff] %v411
                  %v413 = vld [vmem:[%s377 + $0x110] sm:$0xff]
                  %414 = vst [vmem:[%s378 + $0x88] sm:$0xff] %v413
                  %v415 = vld [vmem:[%s377 + $0x120] sm:$0xff]
                  %416 = vst [vmem:[%s378 + $0x90] sm:$0xff] %v415
                  %v417 = vld [vmem:[%s377 + $0x130] sm:$0xff]
                  %418 = vst [vmem:[%s378 + $0x98] sm:$0xff] %v417
                  %v419 = vld [vmem:[%s377 + $0x140] sm:$0xff]
                  %420 = vst [vmem:[%s378 + $0xa0] sm:$0xff] %v419
                  %v421 = vld [vmem:[%s377 + $0x150] sm:$0xff]
                  %422 = vst [vmem:[%s378 + $0xa8] sm:$0xff] %v421
                  %v423 = vld [vmem:[%s377 + $0x160] sm:$0xff]
                  %424 = vst [vmem:[%s378 + $0xb0] sm:$0xff] %v423
                  %v425 = vld [vmem:[%s377 + $0x170] sm:$0xff]
                  %426 = vst [vmem:[%s378 + $0xb8] sm:$0xff] %v425
                  %v427 = vld [vmem:[%s377 + $0x180] sm:$0xff]
                  %428 = vst [vmem:[%s378 + $0xc0] sm:$0xff] %v427
                  %v429 = vld [vmem:[%s377 + $0x190] sm:$0xff]
                  %430 = vst [vmem:[%s378 + $0xc8] sm:$0xff] %v429
                  %v431 = vld [vmem:[%s377 + $0x1a0] sm:$0xff]
                  %432 = vst [vmem:[%s378 + $0xd0] sm:$0xff] %v431
                  %v433 = vld [vmem:[%s377 + $0x1b0] sm:$0xff]
                  %434 = vst [vmem:[%s378 + $0xd8] sm:$0xff] %v433
                $region72: #{cnn_forward.1} parent=66 // loop_footer
                  %s376 = sadd.s32 1, %s372
                $region73: #{cnn_forward.1} parent=66 // loop_footer_branch
                  %371 = sbr.rel target = $region69
                $region74: #{cnn_forward.1} parent=66 // loop_exit
                  _
              $region67: #{cnn_forward.1} parent=51 // pred_fallthru
                _
              // Predicated region
              $region75: #{cnn_forward.1} parent=51 // pred_check
                _
              $region76: #{cnn_forward.1} parent=51 // pred_check_branch
                %436 = sbr.rel target = $region78
              $region77: #{cnn_forward.1} parent=51 // pred_region
                _
              $region78: #{cnn_forward.1} parent=51 // pred_fallthru
                _
            $region52: #{cnn_forward.1} parent=47 // pred_fallthru
              _
            // Predicated region
            $region53: #{cnn_forward.1} parent=47 // pred_check
              _
            $region54: #{cnn_forward.1} parent=47 // pred_check_branch
              %303 = sbr.rel target = $region56
            $region55: #{cnn_forward.1} parent=47 // pred_region
              loop: start=0, step=1, limit=1
              $region57: #{cnn_forward.1} parent=55 // loop_pre_header
                _
              $region58: #{cnn_forward.1} parent=55 // loop_header
                %s306 = sphi 0, %s310
                %p307 = scmp.ge.s32.totalorder %s306, 1
                %s311 = sphi %s297, %s297
                %s312 = sphi %s295, %s295
              $region59: #{cnn_forward.1} parent=55 // loop_header_branch
                %309 = sbr.rel (%p307) target = $region63
              $region60: #{cnn_forward.1} parent=55 // loop_body
                %v313 = vld [vmem:[%s311] sm:$0xff]
                %314 = vst [vmem:[%s312] sm:$0xff] %v313
                %v315 = vld [vmem:[%s311 + $0x10] sm:$0xff]
                %316 = vst [vmem:[%s312 + $0x8] sm:$0xff] %v315
                %v317 = vld [vmem:[%s311 + $0x20] sm:$0xff]
                %318 = vst [vmem:[%s312 + $0x10] sm:$0xff] %v317
                %v319 = vld [vmem:[%s311 + $0x30] sm:$0xff]
                %320 = vst [vmem:[%s312 + $0x18] sm:$0xff] %v319
                %v321 = vld [vmem:[%s311 + $0x40] sm:$0xff]
                %322 = vst [vmem:[%s312 + $0x20] sm:$0xff] %v321
                %v323 = vld [vmem:[%s311 + $0x50] sm:$0xff]
                %324 = vst [vmem:[%s312 + $0x28] sm:$0xff] %v323
                %v325 = vld [vmem:[%s311 + $0x60] sm:$0xff]
                %326 = vst [vmem:[%s312 + $0x30] sm:$0xff] %v325
                %v327 = vld [vmem:[%s311 + $0x70] sm:$0xff]
                %328 = vst [vmem:[%s312 + $0x38] sm:$0xff] %v327
                %v329 = vld [vmem:[%s311 + $0x80] sm:$0xff]
                %330 = vst [vmem:[%s312 + $0x40] sm:$0xff] %v329
                %v331 = vld [vmem:[%s311 + $0x90] sm:$0xff]
                %332 = vst [vmem:[%s312 + $0x48] sm:$0xff] %v331
                %v333 = vld [vmem:[%s311 + $0xa0] sm:$0xff]
                %334 = vst [vmem:[%s312 + $0x50] sm:$0xff] %v333
                %v335 = vld [vmem:[%s311 + $0xb0] sm:$0xff]
                %336 = vst [vmem:[%s312 + $0x58] sm:$0xff] %v335
                %v337 = vld [vmem:[%s311 + $0xc0] sm:$0xff]
                %338 = vst [vmem:[%s312 + $0x60] sm:$0xff] %v337
                %v339 = vld [vmem:[%s311 + $0xd0] sm:$0xff]
                %340 = vst [vmem:[%s312 + $0x68] sm:$0xff] %v339
                %v341 = vld [vmem:[%s311 + $0xe0] sm:$0xff]
                %342 = vst [vmem:[%s312 + $0x70] sm:$0xff] %v341
                %v343 = vld [vmem:[%s311 + $0xf0] sm:$0xff]
                %344 = vst [vmem:[%s312 + $0x78] sm:$0xff] %v343
                %v345 = vld [vmem:[%s311 + $0x100] sm:$0xff]
                %346 = vst [vmem:[%s312 + $0x80] sm:$0xff] %v345
                %v347 = vld [vmem:[%s311 + $0x110] sm:$0xff]
                %348 = vst [vmem:[%s312 + $0x88] sm:$0xff] %v347
                %v349 = vld [vmem:[%s311 + $0x120] sm:$0xff]
                %350 = vst [vmem:[%s312 + $0x90] sm:$0xff] %v349
                %v351 = vld [vmem:[%s311 + $0x130] sm:$0xff]
                %352 = vst [vmem:[%s312 + $0x98] sm:$0xff] %v351
                %v353 = vld [vmem:[%s311 + $0x140] sm:$0xff]
                %354 = vst [vmem:[%s312 + $0xa0] sm:$0xff] %v353
                %v355 = vld [vmem:[%s311 + $0x150] sm:$0xff]
                %356 = vst [vmem:[%s312 + $0xa8] sm:$0xff] %v355
                %v357 = vld [vmem:[%s311 + $0x160] sm:$0xff]
                %358 = vst [vmem:[%s312 + $0xb0] sm:$0xff] %v357
                %v359 = vld [vmem:[%s311 + $0x170] sm:$0xff]
                %360 = vst [vmem:[%s312 + $0xb8] sm:$0xff] %v359
                %v361 = vld [vmem:[%s311 + $0x180] sm:$0xff]
                %362 = vst [vmem:[%s312 + $0xc0] sm:$0xff] %v361
                %v363 = vld [vmem:[%s311 + $0x190] sm:$0xff]
                %364 = vst [vmem:[%s312 + $0xc8] sm:$0xff] %v363
                %v365 = vld [vmem:[%s311 + $0x1a0] sm:$0xff]
                %366 = vst [vmem:[%s312 + $0xd0] sm:$0xff] %v365
                %v367 = vld [vmem:[%s311 + $0x1b0] sm:$0xff]
                %368 = vst [vmem:[%s312 + $0xd8] sm:$0xff] %v367
              $region61: #{cnn_forward.1} parent=55 // loop_footer
                %s310 = sadd.s32 1, %s306
              $region62: #{cnn_forward.1} parent=55 // loop_footer_branch
                %305 = sbr.rel target = $region58
              $region63: #{cnn_forward.1} parent=55 // loop_exit
                _
            $region56: #{cnn_forward.1} parent=47 // pred_fallthru
              _
          $region48: #{cnn_forward.1} parent=43 // pred_fallthru
            _
          %437 = vnop
        $region44: #{cnn_forward.1} parent=39 // pred_fallthru
          _
      $region40: #{cnn_forward.1} parent=5 // pred_fallthru
        _
      %p438 = scmp.le.s32.totalorder 1, %s20
      %p439 = scmp.lt.s32.totalorder %s20, 3
      %p440 = pnand %p438, %p439
      %p441 = pneg %p440
      // Predicated region
      $region79: #{cnn_forward.1} parent=5 // pred_check
        _
      $region80: #{cnn_forward.1} parent=5 // pred_check_branch
        %443 = sbr.rel (%p440) target = $region82
      $region81: #{cnn_forward.1} parent=5 // pred_region
        %s444 = ssub.s32 %s20, 1
        %s445 = sand.u32 %s33, 1
        %s446 = sand.u32 %s33, 1
        %s447 = smul.addr %s446, 224
        %s448 = scalar_lea.vmem [#allocation2], %s447
        // Predicated region
        $region83: #{cnn_forward.1} parent=81 // pred_check
          %p449 = pneg %p46
        $region84: #{cnn_forward.1} parent=81 // pred_check_branch
          %451 = sbr.rel (%p449) target = $region86
        $region85: #{cnn_forward.1} parent=81 // pred_region
          _
        $region86: #{cnn_forward.1} parent=81 // pred_fallthru
          _
        // Predicated region
        $region87: #{cnn_forward.1} parent=81 // pred_check
          %p452 = pneg %p67
        $region88: #{cnn_forward.1} parent=81 // pred_check_branch
          %454 = sbr.rel (%p452) target = $region90
        $region89: #{cnn_forward.1} parent=81 // pred_region
          %455 = dma.done [#allocation4], 10240
        $region90: #{cnn_forward.1} parent=81 // pred_fallthru
          _
        // Predicated region
        $region91: #{cnn_forward.1} parent=81 // pred_check
          %p456 = pneg %p88
        $region92: #{cnn_forward.1} parent=81 // pred_check_branch
          %458 = sbr.rel (%p456) target = $region94
        $region93: #{cnn_forward.1} parent=81 // pred_region
          %459 = dma.done [#allocation7], 64
        $region94: #{cnn_forward.1} parent=81 // pred_fallthru
          _
        // Predicated region
        $region95: #{cnn_forward.1} parent=81 // pred_check
          %p460 = pneg %p109
        $region96: #{cnn_forward.1} parent=81 // pred_check_branch
          %462 = sbr.rel (%p460) target = $region98
        $region97: #{cnn_forward.1} parent=81 // pred_region
          %463 = dma.done [#allocation7], 138240
        $region98: #{cnn_forward.1} parent=81 // pred_fallthru
          _
        // Predicated region
        $region99: #{cnn_forward.1} parent=81 // pred_check
          %p464 = pneg %p130
        $region100: #{cnn_forward.1} parent=81 // pred_check_branch
          %466 = sbr.rel (%p464) target = $region102
        $region101: #{cnn_forward.1} parent=81 // pred_region
          %467 = dma.done [#allocation10], 64
        $region102: #{cnn_forward.1} parent=81 // pred_fallthru
          _
        // Predicated region
        $region103: #{cnn_forward.1} parent=81 // pred_check
          %p468 = pneg %p151
        $region104: #{cnn_forward.1} parent=81 // pred_check_branch
          %470 = sbr.rel (%p468) target = $region106
        $region105: #{cnn_forward.1} parent=81 // pred_region
          %471 = dma.done [#allocation10], 46592
        $region106: #{cnn_forward.1} parent=81 // pred_fallthru
          _
        // Predicated region
        $region107: #{cnn_forward.1} parent=81 // pred_check
          %p472 = pneg %p172
        $region108: #{cnn_forward.1} parent=81 // pred_check_branch
          %474 = sbr.rel (%p472) target = $region110
        $region109: #{cnn_forward.1} parent=81 // pred_region
          %475 = dma.done [#allocation13], 16
        $region110: #{cnn_forward.1} parent=81 // pred_fallthru
          _
        %s476 = sand.u32 %s33, 1
        %s477 = sand.u32 %s33, 1
        %s478 = smul.addr %s477, 224
        %s479 = scalar_lea.vmem [#allocation2], %s478
        %p480 = pneg %p46
        %p481 = pneg %p43
        %p482 = pneg %p67
        %p483 = pneg %p64
        %p484 = pneg %p88
        %p485 = pneg %p85
        %p486 = pneg %p109
        %p487 = pneg %p106
        %p488 = pneg %p130
        %p489 = pneg %p127
        %p490 = pneg %p151
        %p491 = pneg %p148
        %p492 = pneg %p172
        %p493 = pneg %p169
        %p494 = pneg %p198
        %p495 = pneg %p195
        %s496 = sand.u32 %s185, 1
        %s497 = scalar_lea.sflag [#allocation5], %s496
        %s498 = sand.u32 %s185, 1
        %s499 = smul.addr %s498, 8
        %s500 = scalar_lea.vmem [#allocation14], %s499
        %v501 = vld [vmem:[%s448] sm:$0xff]
        %v502 = vld [vmem:[%s448 + $0x8] sm:$0xff]
        %v503 = vld [vmem:[%s448 + $0x10] sm:$0xff]
        %v504 = vld [vmem:[%s448 + $0x18] sm:$0xff]
        %v505 = vld [vmem:[%s448 + $0x20] sm:$0xff]
        %v506 = vld [vmem:[%s448 + $0x28] sm:$0xff]
        %v507 = vld [vmem:[%s448 + $0x30] sm:$0xff]
        %v508 = vld [vmem:[%s448 + $0x38] sm:$0xff]
        %v509 = vld [vmem:[%s448 + $0x40] sm:$0xff]
        %v510 = vld [vmem:[%s448 + $0x48] sm:$0xff]
        %v511 = vld [vmem:[%s448 + $0x50] sm:$0xff]
        %v512 = vld [vmem:[%s448 + $0x58] sm:$0xff]
        %v513 = vld [vmem:[%s448 + $0x60] sm:$0xff]
        %v514 = vld [vmem:[%s448 + $0x68] sm:$0xff]
        %v515 = vld [vmem:[%s448 + $0x70] sm:$0xff]
        %v516 = vld [vmem:[%s448 + $0x78] sm:$0xff]
        %v517 = vld [vmem:[%s448 + $0x80] sm:$0xff]
        %v518 = vld [vmem:[%s448 + $0x88] sm:$0xff]
        %v519 = vld [vmem:[%s448 + $0x90] sm:$0xff]
        %v520 = vld [vmem:[%s448 + $0x98] sm:$0xff]
        %v521 = vld [vmem:[%s448 + $0xa0] sm:$0xff]
        %v522 = vld [vmem:[%s448 + $0xa8] sm:$0xff]
        %v523 = vld [vmem:[%s448 + $0xb0] sm:$0xff]
        %v524 = vld [vmem:[%s448 + $0xb8] sm:$0xff]
        %v525 = vld [vmem:[%s448 + $0xc0] sm:$0xff]
        %v526 = vld [vmem:[%s448 + $0xc8] sm:$0xff]
        %v527 = vld [vmem:[%s448 + $0xd0] sm:$0xff]
        %v528 = vld [vmem:[%s448 + $0xd8] sm:$0xff]
        %v529 = vld [vmem:[#allocation3] sm:$0xff]
        %v530 = vld [vmem:[#allocation3 + $0x8] sm:$0xff]
        %v531 = vld [vmem:[#allocation3 + $0x10] sm:$0xff]
        %v532 = vld [vmem:[#allocation3 + $0x18] sm:$0xff]
        %v533 = vld [vmem:[#allocation3 + $0x20] sm:$0xff]
        %v534 = vld [vmem:[#allocation3 + $0x28] sm:$0xff]
        %v535 = vld [vmem:[#allocation3 + $0x30] sm:$0xff]
        %v536 = vld [vmem:[#allocation3 + $0x38] sm:$0xff]
        %v537 = vld [vmem:[#allocation3 + $0x40] sm:$0xff]
        %v538 = vld [vmem:[#allocation3 + $0x48] sm:$0xff]
        %v539 = vld [vmem:[#allocation3 + $0x50] sm:$0xff]
        %v540 = vld [vmem:[#allocation3 + $0x58] sm:$0xff]
        %v541 = vld [vmem:[#allocation3 + $0x60] sm:$0xf]
        %v542 = vld [vmem:[#allocation3 + $0x68] sm:$0xf]
        %v543 = vld [vmem:[#allocation3 + $0x70] sm:$0xf]
        %v544 = vld [vmem:[#allocation3 + $0x78] sm:$0xf]
        %s545 = scalar_lea.vmem [#allocation3], 128
        %v546 = vld [vmem:[%s545] sm:$0xff]
        %v547 = vld [vmem:[%s545 + $0x8] sm:$0xff]
        %v548 = vld [vmem:[%s545 + $0x10] sm:$0xff]
        %v549 = vld [vmem:[%s545 + $0x18] sm:$0xff]
        %v550 = vld [vmem:[%s545 + $0x20] sm:$0xff]
        %v551 = vld [vmem:[%s545 + $0x28] sm:$0xff]
        %v552 = vld [vmem:[%s545 + $0x30] sm:$0xff]
        %v553 = vld [vmem:[%s545 + $0x38] sm:$0xff]
        %v554 = vld [vmem:[%s545 + $0x40] sm:$0xff]
        %v555 = vld [vmem:[%s545 + $0x48] sm:$0xff]
        %v556 = vld [vmem:[%s545 + $0x50] sm:$0xff]
        %v557 = vld [vmem:[%s545 + $0x58] sm:$0xff]
        %v558 = vld [vmem:[%s545 + $0x60] sm:$0xf]
        %v559 = vld [vmem:[%s545 + $0x68] sm:$0xf]
        %v560 = vld [vmem:[%s545 + $0x70] sm:$0xf]
        %v561 = vld [vmem:[%s545 + $0x78] sm:$0xf]
        %vm562 = vcmask 228352
        %v564 = vsel %vm562, 0.0, 0
        %v567 = vsel %vm562, %v501, 0
        %v570 = vsel %vm562, %v502, 0
        %v573 = vsel %vm562, %v503, 0
        %v576 = vsel %vm562, %v504, 0
        %v579 = vsel %vm562, %v505, 0
        %v582 = vsel %vm562, %v506, 0
        %v585 = vsel %vm562, %v507, 0
        %v588 = vsel %vm562, %v508, 0
        %v591 = vsel %vm562, %v509, 0
        %v594 = vsel %vm562, %v510, 0
        %v597 = vsel %vm562, %v511, 0
        %v600 = vsel %vm562, %v512, 0
        %v603 = vsel %vm562, %v513, 0
        %v606 = vsel %vm562, %v514, 0
        %v609 = vsel %vm562, %v515, 0
        %v612 = vsel %vm562, %v516, 0
        %v615 = vsel %vm562, %v517, 0
        %v618 = vsel %vm562, %v518, 0
        %v621 = vsel %vm562, %v519, 0
        %v624 = vsel %vm562, %v520, 0
        %v627 = vsel %vm562, %v521, 0
        %v630 = vsel %vm562, %v522, 0
        %v633 = vsel %vm562, %v523, 0
        %v636 = vsel %vm562, %v524, 0
        %v639 = vsel %vm562, %v525, 0
        %v642 = vsel %vm562, %v526, 0
        %v645 = vsel %vm562, %v527, 0
        %vm647 = vcmask 1043456
        %v649 = vsel %vm647, %v558, 0
        %v652 = vsel %vm647, %v559, 0
        %v655 = vsel %vm647, %v560, 0
        %v658 = vsel %vm647, %v561, 0
        %660 = vmatprep.subr.mxu0 %v547
        %661 = vmatpush1.msra.mxu0 %v546
        %662 = vmatprep.subr.mxu0 %v551
        %663 = vmatpush1.msra.mxu0 %v550
        %664 = vmatprep.subr.mxu0 %v555
        %665 = vmatpush1.msra.mxu0 %v554
        %666 = vmatprep.subr.mxu0 %v652
        %667 = vmatpush1.msra.mxu0 %v649
        %668 = vmatprep.subr.mxu0 0.0
        %669 = vmatpush1.msra.mxu0 0.0
        %670 = vmatprep.subr.mxu0 0.0
        %671 = vmatpush1.msra.mxu0 0.0
        %672 = vmatprep.subr.mxu0 0.0
        %673 = vmatpush1.msra.mxu0 0.0
        %674 = vmatprep.subr.mxu0 0.0
        %675 = vmatpush1.msra.mxu0 0.0
        %676 = vmatprep.subr.mxu0 0.0
        %677 = vmatpush1.msra.mxu0 0.0
        %678 = vmatprep.subr.mxu0 0.0
        %679 = vmatpush1.msra.mxu0 0.0
        %680 = vmatprep.subr.mxu0 0.0
        %681 = vmatpush1.msra.mxu0 0.0
        %682 = vmatprep.subr.mxu0 0.0
        %683 = vmatpush1.msra.mxu0 0.0
        %684 = vmatprep.subr.mxu0 0.0
        %685 = vmatpush1.msra.mxu0 0.0
        %686 = vmatprep.subr.mxu0 0.0
        %687 = vmatpush1.msra.mxu0 0.0
        %688 = vmatprep.subr.mxu0 0.0
        %689 = vmatpush1.msra.mxu0 0.0
        %690 = vmatprep.subr.mxu0 0.0
        %691 = vmatpush1.msra.mxu0 0.0
        %692 = vmatprep.subr.mxu0 0.0
        %693 = vmatpush1.msra.mxu0 0.0
        %694 = vmatprep.subr.mxu0 0.0
        %695 = vmatpush1.msra.mxu0 0.0
        %696 = vmatprep.subr.mxu0 0.0
        %697 = vmatpush1.msra.mxu0 0.0
        %698 = vmatprep.subr.mxu0 0.0
        %699 = vmatpush1.msra.mxu0 0.0
        %700 = vmatprep.subr.mxu0 0.0
        %701 = vmatpush1.msra.mxu0 0.0
        %702 = vmatprep.subr.mxu0 0.0
        %703 = vmatpush1.msra.mxu0 0.0
        %704 = vmatprep.subr.mxu0 0.0
        %705 = vmatpush1.msra.mxu0 0.0
        %706 = vmatprep.subr.mxu0 0.0
        %707 = vmatpush1.msra.mxu0 0.0
        %708 = vmatprep.subr.mxu0 0.0
        %709 = vmatpush1.msra.mxu0 0.0
        %710 = vmatprep.subr.mxu0 0.0
        %711 = vmatpush1.msra.mxu0 0.0
        %712 = vmatprep.subr.mxu0 0.0
        %713 = vmatpush1.msra.mxu0 0.0
        %714 = vmatprep.subr.mxu0 0.0
        %715 = vmatpush1.msra.mxu0 0.0
        %716 = vmatprep.subr.mxu0 0.0
        %717 = vmatpush1.msra.mxu0 0.0
        %718 = vmatprep.subr.mxu0 0.0
        %719 = vmatpush1.msra.mxu0 0.0
        %720 = vmatprep.subr.mxu0 0.0
        %721 = vmatpush1.msra.mxu0 0.0
        %722 = vmatprep.subr.mxu0 0.0
        %723 = vmatpush1.msra.mxu0 0.0
        %724 = vmatprep.mubr.f32.mxu0 0.0
        %725 = vmatmul.mubr.f32.gmra.mrb[0].mxu0 %v564
        %v726 = vpop.f32.mrb[0].mxu0
        %v727 = vadd.f32 0.0, %v726
        %v728 = vpop.f32.mrb[0].mxu0
        %v729 = vadd.f32 0.0, %v728
        %730 = vmatprep.mubr.f32.mxu0 0.0
        %731 = vmatmul.mubr.f32.gmra.mrb[0].mxu0 %v567
        %v732 = vpop.f32.mrb[0].mxu0
        %v733 = vadd.f32 0.0, %v732
        %v734 = vpop.f32.mrb[0].mxu0
        %v735 = vadd.f32 0.0, %v734
        %736 = vmatprep.mubr.f32.mxu0 0.0
        %737 = vmatmul.mubr.f32.gmra.mrb[0].mxu0 %v570
        %v738 = vpop.f32.mrb[0].mxu0
        %v739 = vadd.f32 0.0, %v738
        %v740 = vpop.f32.mrb[0].mxu0
        %v741 = vadd.f32 0.0, %v740
        %742 = vmatprep.mubr.f32.mxu0 0.0
        %743 = vmatmul.mubr.f32.gmra.mrb[0].mxu0 %v573
        %v744 = vpop.f32.mrb[0].mxu0
        %v745 = vadd.f32 0.0, %v744
        %v746 = vpop.f32.mrb[0].mxu0
        %v747 = vadd.f32 0.0, %v746
        %748 = vmatprep.mubr.f32.mxu0 0.0
        %749 = vmatmul.mubr.f32.gmra.mrb[0].mxu0 %v576
        %v750 = vpop.f32.mrb[0].mxu0
        %v751 = vadd.f32 0.0, %v750
        %v752 = vpop.f32.mrb[0].mxu0
        %v753 = vadd.f32 0.0, %v752
        %754 = vmatprep.mubr.f32.mxu0 0.0
        %755 = vmatmul.mubr.f32.gmra.mrb[0].mxu0 %v579
        %v756 = vpop.f32.mrb[0].mxu0
        %v757 = vadd.f32 0.0, %v756
        %v758 = vpop.f32.mrb[0].mxu0
        %v759 = vadd.f32 0.0, %v758
        %760 = vmatprep.mubr.f32.mxu0 0.0
        %761 = vmatmul.mubr.f32.gmra.mrb[0].mxu0 %v582
        %v762 = vpop.f32.mrb[0].mxu0
        %v763 = vadd.f32 0.0, %v762
        %v764 = vpop.f32.mrb[0].mxu0
        %v765 = vadd.f32 0.0, %v764
        %766 = vmatprep.mubr.f32.mxu0 0.0
        %767 = vmatmul.mubr.f32.gmra.mrb[0].mxu0 %v585
        %v768 = vpop.f32.mrb[0].mxu0
        %v769 = vadd.f32 0.0, %v768
        %v770 = vpop.f32.mrb[0].mxu0
        %v771 = vadd.f32 0.0, %v770
        %772 = vmatprep.mubr.f32.mxu0 0.0
        %773 = vmatmul.mubr.f32.gmra.mrb[0].mxu0 %v588
        %v774 = vpop.f32.mrb[0].mxu0
        %v775 = vadd.f32 0.0, %v774
        %v776 = vpop.f32.mrb[0].mxu0
        %v777 = vadd.f32 0.0, %v776
        %778 = vmatprep.mubr.f32.mxu0 0.0
        %779 = vmatmul.mubr.f32.gmra.mrb[0].mxu0 %v591
        %v780 = vpop.f32.mrb[0].mxu0
        %v781 = vadd.f32 0.0, %v780
        %v782 = vpop.f32.mrb[0].mxu0
        %v783 = vadd.f32 0.0, %v782
        %784 = vmatprep.mubr.f32.mxu0 0.0
        %785 = vmatmul.mubr.f32.gmra.mrb[0].mxu0 %v594
        %v786 = vpop.f32.mrb[0].mxu0
        %v787 = vadd.f32 0.0, %v786
        %v788 = vpop.f32.mrb[0].mxu0
        %v789 = vadd.f32 0.0, %v788
        %790 = vmatprep.mubr.f32.mxu0 0.0
        %791 = vmatmul.mubr.f32.gmra.mrb[0].mxu0 %v597
        %v792 = vpop.f32.mrb[0].mxu0
        %v793 = vadd.f32 0.0, %v792
        %v794 = vpop.f32.mrb[0].mxu0
        %v795 = vadd.f32 0.0, %v794
        %796 = vmatprep.mubr.f32.mxu0 0.0
        %797 = vmatmul.mubr.f32.gmra.mrb[0].mxu0 %v600
        %v798 = vpop.f32.mrb[0].mxu0
        %v799 = vadd.f32 0.0, %v798
        %v800 = vpop.f32.mrb[0].mxu0
        %v801 = vadd.f32 0.0, %v800
        %802 = vmatprep.mubr.f32.mxu0 0.0
        %803 = vmatmul.mubr.f32.gmra.mrb[0].mxu0 %v603
        %v804 = vpop.f32.mrb[0].mxu0
        %v805 = vadd.f32 0.0, %v804
        %v806 = vpop.f32.mrb[0].mxu0
        %v807 = vadd.f32 0.0, %v806
        %808 = vmatprep.mubr.f32.mxu0 0.0
        %809 = vmatmul.mubr.f32.gmra.mrb[0].mxu0 %v606
        %v810 = vpop.f32.mrb[0].mxu0
        %v811 = vadd.f32 0.0, %v810
        %v812 = vpop.f32.mrb[0].mxu0
        %v813 = vadd.f32 0.0, %v812
        %814 = vmatprep.mubr.f32.mxu0 0.0
        %815 = vmatmul.mubr.f32.gmra.mrb[0].mxu0 %v609
        %v816 = vpop.f32.mrb[0].mxu0
        %v817 = vadd.f32 0.0, %v816
        %v818 = vpop.f32.mrb[0].mxu0
        %v819 = vadd.f32 0.0, %v818
        %820 = vmatprep.mubr.f32.mxu0 0.0
        %821 = vmatmul.mubr.f32.gmra.mrb[0].mxu0 %v612
        %v822 = vpop.f32.mrb[0].mxu0
        %v823 = vadd.f32 0.0, %v822
        %v824 = vpop.f32.mrb[0].mxu0
        %v825 = vadd.f32 0.0, %v824
        %826 = vmatprep.mubr.f32.mxu0 0.0
        %827 = vmatmul.mubr.f32.gmra.mrb[0].mxu0 %v615
        %v828 = vpop.f32.mrb[0].mxu0
        %v829 = vadd.f32 0.0, %v828
        %v830 = vpop.f32.mrb[0].mxu0
        %v831 = vadd.f32 0.0, %v830
        %832 = vmatprep.mubr.f32.mxu0 0.0
        %833 = vmatmul.mubr.f32.gmra.mrb[0].mxu0 %v618
        %v834 = vpop.f32.mrb[0].mxu0
        %v835 = vadd.f32 0.0, %v834
        %v836 = vpop.f32.mrb[0].mxu0
        %v837 = vadd.f32 0.0, %v836
        %838 = vmatprep.mubr.f32.mxu0 0.0
        %839 = vmatmul.mubr.f32.gmra.mrb[0].mxu0 %v621
        %v840 = vpop.f32.mrb[0].mxu0
        %v841 = vadd.f32 0.0, %v840
        %v842 = vpop.f32.mrb[0].mxu0
        %v843 = vadd.f32 0.0, %v842
        %844 = vmatprep.mubr.f32.mxu0 0.0
        %845 = vmatmul.mubr.f32.gmra.mrb[0].mxu0 %v624
        %v846 = vpop.f32.mrb[0].mxu0
        %v847 = vadd.f32 0.0, %v846
        %v848 = vpop.f32.mrb[0].mxu0
        %v849 = vadd.f32 0.0, %v848
        %850 = vmatprep.mubr.f32.mxu0 0.0
        %851 = vmatmul.mubr.f32.gmra.mrb[0].mxu0 %v627
        %v852 = vpop.f32.mrb[0].mxu0
        %v853 = vadd.f32 0.0, %v852
        %v854 = vpop.f32.mrb[0].mxu0
        %v855 = vadd.f32 0.0, %v854
        %856 = vmatprep.mubr.f32.mxu0 0.0
        %857 = vmatmul.mubr.f32.gmra.mrb[0].mxu0 %v630
        %v858 = vpop.f32.mrb[0].mxu0
        %v859 = vadd.f32 0.0, %v858
        %v860 = vpop.f32.mrb[0].mxu0
        %v861 = vadd.f32 0.0, %v860
        %862 = vmatprep.mubr.f32.mxu0 0.0
        %863 = vmatmul.mubr.f32.gmra.mrb[0].mxu0 %v633
        %v864 = vpop.f32.mrb[0].mxu0
        %v865 = vadd.f32 0.0, %v864
        %v866 = vpop.f32.mrb[0].mxu0
        %v867 = vadd.f32 0.0, %v866
        %868 = vmatprep.mubr.f32.mxu0 0.0
        %869 = vmatmul.mubr.f32.gmra.mrb[0].mxu0 %v636
        %v870 = vpop.f32.mrb[0].mxu0
        %v871 = vadd.f32 0.0, %v870
        %v872 = vpop.f32.mrb[0].mxu0
        %v873 = vadd.f32 0.0, %v872
        %874 = vmatprep.mubr.f32.mxu0 0.0
        %875 = vmatmul.mubr.f32.gmra.mrb[0].mxu0 %v639
        %v876 = vpop.f32.mrb[0].mxu0
        %v877 = vadd.f32 0.0, %v876
        %v878 = vpop.f32.mrb[0].mxu0
        %v879 = vadd.f32 0.0, %v878
        %880 = vmatprep.mubr.f32.mxu0 0.0
        %881 = vmatmul.mubr.f32.gmra.mrb[0].mxu0 %v642
        %v882 = vpop.f32.mrb[0].mxu0
        %v883 = vadd.f32 0.0, %v882
        %v884 = vpop.f32.mrb[0].mxu0
        %v885 = vadd.f32 0.0, %v884
        %886 = vmatprep.mubr.f32.mxu0 0.0
        %887 = vmatmul.mubr.f32.gmra.mrb[0].mxu0 %v645
        %v888 = vpop.f32.mrb[0].mxu0
        %v889 = vadd.f32 0.0, %v888
        %v890 = vpop.f32.mrb[0].mxu0
        %v891 = vadd.f32 0.0, %v890
        %892 = vdwg.mxu0
        %893 = vmatprep.subr.mxu0 %v549
        %894 = vmatpush1.msra.mxu0 %v548
        %895 = vmatprep.subr.mxu0 %v553
        %896 = vmatpush1.msra.mxu0 %v552
        %897 = vmatprep.subr.mxu0 %v557
        %898 = vmatpush1.msra.mxu0 %v556
        %899 = vmatprep.subr.mxu0 %v658
        %900 = vmatpush1.msra.mxu0 %v655
        %901 = vmatprep.subr.mxu0 0.0
        %902 = vmatpush1.msra.mxu0 0.0
        %903 = vmatprep.subr.mxu0 0.0
        %904 = vmatpush1.msra.mxu0 0.0
        %905 = vmatprep.subr.mxu0 0.0
        %906 = vmatpush1.msra.mxu0 0.0
        %907 = vmatprep.subr.mxu0 0.0
        %908 = vmatpush1.msra.mxu0 0.0
        %909 = vmatprep.subr.mxu0 0.0
        %910 = vmatpush1.msra.mxu0 0.0
        %911 = vmatprep.subr.mxu0 0.0
        %912 = vmatpush1.msra.mxu0 0.0
        %913 = vmatprep.subr.mxu0 0.0
        %914 = vmatpush1.msra.mxu0 0.0
        %915 = vmatprep.subr.mxu0 0.0
        %916 = vmatpush1.msra.mxu0 0.0
        %917 = vmatprep.subr.mxu0 0.0
        %918 = vmatpush1.msra.mxu0 0.0
        %919 = vmatprep.subr.mxu0 0.0
        %920 = vmatpush1.msra.mxu0 0.0
        %921 = vmatprep.subr.mxu0 0.0
        %922 = vmatpush1.msra.mxu0 0.0
        %923 = vmatprep.subr.mxu0 0.0
        %924 = vmatpush1.msra.mxu0 0.0
        %925 = vmatprep.subr.mxu0 0.0
        %926 = vmatpush1.msra.mxu0 0.0
        %927 = vmatprep.subr.mxu0 0.0
        %928 = vmatpush1.msra.mxu0 0.0
        %929 = vmatprep.subr.mxu0 0.0
        %930 = vmatpush1.msra.mxu0 0.0
        %931 = vmatprep.subr.mxu0 0.0
        %932 = vmatpush1.msra.mxu0 0.0
        %933 = vmatprep.subr.mxu0 0.0
        %934 = vmatpush1.msra.mxu0 0.0
        %935 = vmatprep.subr.mxu0 0.0
        %936 = vmatpush1.msra.mxu0 0.0
        %937 = vmatprep.subr.mxu0 0.0
        %938 = vmatpush1.msra.mxu0 0.0
        %939 = vmatprep.subr.mxu0 0.0
        %940 = vmatpush1.msra.mxu0 0.0
        %941 = vmatprep.subr.mxu0 0.0
        %942 = vmatpush1.msra.mxu0 0.0
        %943 = vmatprep.subr.mxu0 0.0
        %944 = vmatpush1.msra.mxu0 0.0
        %945 = vmatprep.subr.mxu0 0.0
        %946 = vmatpush1.msra.mxu0 0.0
        %947 = vmatprep.subr.mxu0 0.0
        %948 = vmatpush1.msra.mxu0 0.0
        %949 = vmatprep.subr.mxu0 0.0
        %950 = vmatpush1.msra.mxu0 0.0
        %951 = vmatprep.subr.mxu0 0.0
        %952 = vmatpush1.msra.mxu0 0.0
        %953 = vmatprep.subr.mxu0 0.0
        %954 = vmatpush1.msra.mxu0 0.0
        %955 = vmatprep.subr.mxu0 0.0
        %956 = vmatpush1.msra.mxu0 0.0
        %957 = vmatprep.mubr.f32.mxu0 0.0
        %958 = vmatmul.mubr.f32.gmra.mrb[0].mxu0 %v564
        %v959 = vpop.f32.mrb[0].mxu0
        %v960 = vadd.f32 0.0, %v959
        %v961 = vpop.f32.mrb[0].mxu0
        %v962 = vadd.f32 0.0, %v961
        %963 = vmatprep.mubr.f32.mxu0 0.0
        %964 = vmatmul.mubr.f32.gmra.mrb[0].mxu0 %v567
        %v965 = vpop.f32.mrb[0].mxu0
        %v966 = vadd.f32 0.0, %v965
        %v967 = vpop.f32.mrb[0].mxu0
        %v968 = vadd.f32 0.0, %v967
        %969 = vmatprep.mubr.f32.mxu0 0.0
        %970 = vmatmul.mubr.f32.gmra.mrb[0].mxu0 %v570
        %v971 = vpop.f32.mrb[0].mxu0
        %v972 = vadd.f32 0.0, %v971
        %v973 = vpop.f32.mrb[0].mxu0
        %v974 = vadd.f32 0.0, %v973
        %975 = vmatprep.mubr.f32.mxu0 0.0
        %976 = vmatmul.mubr.f32.gmra.mrb[0].mxu0 %v573
        %v977 = vpop.f32.mrb[0].mxu0
        %v978 = vadd.f32 0.0, %v977
        %v979 = vpop.f32.mrb[0].mxu0
        %v980 = vadd.f32 0.0, %v979
        %981 = vmatprep.mubr.f32.mxu0 0.0
        %982 = vmatmul.mubr.f32.gmra.mrb[0].mxu0 %v576
        %v983 = vpop.f32.mrb[0].mxu0
        %v984 = vadd.f32 0.0, %v983
        %v985 = vpop.f32.mrb[0].mxu0
        %v986 = vadd.f32 0.0, %v985
        %987 = vmatprep.mubr.f32.mxu0 0.0
        %988 = vmatmul.mubr.f32.gmra.mrb[0].mxu0 %v579
        %v989 = vpop.f32.mrb[0].mxu0
        %v990 = vadd.f32 0.0, %v989
        %v991 = vpop.f32.mrb[0].mxu0
        %v992 = vadd.f32 0.0, %v991
        %993 = vmatprep.mubr.f32.mxu0 0.0
        %994 = vmatmul.mubr.f32.gmra.mrb[0].mxu0 %v582
        %v995 = vpop.f32.mrb[0].mxu0
        %v996 = vadd.f32 0.0, %v995
        %v997 = vpop.f32.mrb[0].mxu0
        %v998 = vadd.f32 0.0, %v997
        %999 = vmatprep.mubr.f32.mxu0 0.0
        %1000 = vmatmul.mubr.f32.gmra.mrb[0].mxu0 %v585
        %v1001 = vpop.f32.mrb[0].mxu0
        %v1002 = vadd.f32 0.0, %v1001
        %v1003 = vpop.f32.mrb[0].mxu0
        %v1004 = vadd.f32 0.0, %v1003
        %1005 = vmatprep.mubr.f32.mxu0 0.0
        %1006 = vmatmul.mubr.f32.gmra.mrb[0].mxu0 %v588
        %v1007 = vpop.f32.mrb[0].mxu0
        %v1008 = vadd.f32 0.0, %v1007
        %v1009 = vpop.f32.mrb[0].mxu0
        %v1010 = vadd.f32 0.0, %v1009
        %1011 = vmatprep.mubr.f32.mxu0 0.0
        %1012 = vmatmul.mubr.f32.gmra.mrb[0].mxu0 %v591
        %v1013 = vpop.f32.mrb[0].mxu0
        %v1014 = vadd.f32 0.0, %v1013
        %v1015 = vpop.f32.mrb[0].mxu0
        %v1016 = vadd.f32 0.0, %v1015
        %1017 = vmatprep.mubr.f32.mxu0 0.0
        %1018 = vmatmul.mubr.f32.gmra.mrb[0].mxu0 %v594
        %v1019 = vpop.f32.mrb[0].mxu0
        %v1020 = vadd.f32 0.0, %v1019
        %v1021 = vpop.f32.mrb[0].mxu0
        %v1022 = vadd.f32 0.0, %v1021
        %1023 = vmatprep.mubr.f32.mxu0 0.0
        %1024 = vmatmul.mubr.f32.gmra.mrb[0].mxu0 %v597
        %v1025 = vpop.f32.mrb[0].mxu0
        %v1026 = vadd.f32 0.0, %v1025
        %v1027 = vpop.f32.mrb[0].mxu0
        %v1028 = vadd.f32 0.0, %v1027
        %1029 = vmatprep.mubr.f32.mxu0 0.0
        %1030 = vmatmul.mubr.f32.gmra.mrb[0].mxu0 %v600
        %v1031 = vpop.f32.mrb[0].mxu0
        %v1032 = vadd.f32 0.0, %v1031
        %v1033 = vpop.f32.mrb[0].mxu0
        %v1034 = vadd.f32 0.0, %v1033
        %1035 = vmatprep.mubr.f32.mxu0 0.0
        %1036 = vmatmul.mubr.f32.gmra.mrb[0].mxu0 %v603
        %v1037 = vpop.f32.mrb[0].mxu0
        %v1038 = vadd.f32 0.0, %v1037
        %v1039 = vpop.f32.mrb[0].mxu0
        %v1040 = vadd.f32 0.0, %v1039
        %1041 = vmatprep.mubr.f32.mxu0 0.0
        %1042 = vmatmul.mubr.f32.gmra.mrb[0].mxu0 %v606
        %v1043 = vpop.f32.mrb[0].mxu0
        %v1044 = vadd.f32 0.0, %v1043
        %v1045 = vpop.f32.mrb[0].mxu0
        %v1046 = vadd.f32 0.0, %v1045
        %1047 = vmatprep.mubr.f32.mxu0 0.0
        %1048 = vmatmul.mubr.f32.gmra.mrb[0].mxu0 %v609
        %v1049 = vpop.f32.mrb[0].mxu0
        %v1050 = vadd.f32 0.0, %v1049
        %v1051 = vpop.f32.mrb[0].mxu0
        %v1052 = vadd.f32 0.0, %v1051
        %1053 = vmatprep.mubr.f32.mxu0 0.0
        %1054 = vmatmul.mubr.f32.gmra.mrb[0].mxu0 %v612
        %v1055 = vpop.f32.mrb[0].mxu0
        %v1056 = vadd.f32 0.0, %v1055
        %v1057 = vpop.f32.mrb[0].mxu0
        %v1058 = vadd.f32 0.0, %v1057
        %1059 = vmatprep.mubr.f32.mxu0 0.0
        %1060 = vmatmul.mubr.f32.gmra.mrb[0].mxu0 %v615
        %v1061 = vpop.f32.mrb[0].mxu0
        %v1062 = vadd.f32 0.0, %v1061
        %v1063 = vpop.f32.mrb[0].mxu0
        %v1064 = vadd.f32 0.0, %v1063
        %1065 = vmatprep.mubr.f32.mxu0 0.0
        %1066 = vmatmul.mubr.f32.gmra.mrb[0].mxu0 %v618
        %v1067 = vpop.f32.mrb[0].mxu0
        %v1068 = vadd.f32 0.0, %v1067
        %v1069 = vpop.f32.mrb[0].mxu0
        %v1070 = vadd.f32 0.0, %v1069
        %1071 = vmatprep.mubr.f32.mxu0 0.0
        %1072 = vmatmul.mubr.f32.gmra.mrb[0].mxu0 %v621
        %v1073 = vpop.f32.mrb[0].mxu0
        %v1074 = vadd.f32 0.0, %v1073
        %v1075 = vpop.f32.mrb[0].mxu0
        %v1076 = vadd.f32 0.0, %v1075
        %1077 = vmatprep.mubr.f32.mxu0 0.0
        %1078 = vmatmul.mubr.f32.gmra.mrb[0].mxu0 %v624
        %v1079 = vpop.f32.mrb[0].mxu0
        %v1080 = vadd.f32 0.0, %v1079
        %v1081 = vpop.f32.mrb[0].mxu0
        %v1082 = vadd.f32 0.0, %v1081
        %1083 = vmatprep.mubr.f32.mxu0 0.0
        %1084 = vmatmul.mubr.f32.gmra.mrb[0].mxu0 %v627
        %v1085 = vpop.f32.mrb[0].mxu0
        %v1086 = vadd.f32 0.0, %v1085
        %v1087 = vpop.f32.mrb[0].mxu0
        %v1088 = vadd.f32 0.0, %v1087
        %1089 = vmatprep.mubr.f32.mxu0 0.0
        %1090 = vmatmul.mubr.f32.gmra.mrb[0].mxu0 %v630
        %v1091 = vpop.f32.mrb[0].mxu0
        %v1092 = vadd.f32 0.0, %v1091
        %v1093 = vpop.f32.mrb[0].mxu0
        %v1094 = vadd.f32 0.0, %v1093
        %1095 = vmatprep.mubr.f32.mxu0 0.0
        %1096 = vmatmul.mubr.f32.gmra.mrb[0].mxu0 %v633
        %v1097 = vpop.f32.mrb[0].mxu0
        %v1098 = vadd.f32 0.0, %v1097
        %v1099 = vpop.f32.mrb[0].mxu0
        %v1100 = vadd.f32 0.0, %v1099
        %1101 = vmatprep.mubr.f32.mxu0 0.0
        %1102 = vmatmul.mubr.f32.gmra.mrb[0].mxu0 %v636
        %v1103 = vpop.f32.mrb[0].mxu0
        %v1104 = vadd.f32 0.0, %v1103
        %v1105 = vpop.f32.mrb[0].mxu0
        %v1106 = vadd.f32 0.0, %v1105
        %1107 = vmatprep.mubr.f32.mxu0 0.0
        %1108 = vmatmul.mubr.f32.gmra.mrb[0].mxu0 %v639
        %v1109 = vpop.f32.mrb[0].mxu0
        %v1110 = vadd.f32 0.0, %v1109
        %v1111 = vpop.f32.mrb[0].mxu0
        %v1112 = vadd.f32 0.0, %v1111
        %1113 = vmatprep.mubr.f32.mxu0 0.0
        %1114 = vmatmul.mubr.f32.gmra.mrb[0].mxu0 %v642
        %v1115 = vpop.f32.mrb[0].mxu0
        %v1116 = vadd.f32 0.0, %v1115
        %v1117 = vpop.f32.mrb[0].mxu0
        %v1118 = vadd.f32 0.0, %v1117
        %1119 = vmatprep.mubr.f32.mxu0 0.0
        %1120 = vmatmul.mubr.f32.gmra.mrb[0].mxu0 %v645
        %v1121 = vpop.f32.mrb[0].mxu0
        %v1122 = vadd.f32 0.0, %v1121
        %v1123 = vpop.f32.mrb[0].mxu0
        %v1124 = vadd.f32 0.0, %v1123
        %1125 = vdwg.mxu0
        %v1127 = vsel %vm647, %v541, 0
        %v1130 = vsel %vm647, %v542, 0
        %v1133 = vsel %vm647, %v543, 0
        %v1136 = vsel %vm647, %v544, 0
        %1138 = vmatprep.subr.mxu0 %v530
        %1139 = vmatpush1.msra.mxu0 %v529
        %1140 = vmatprep.subr.mxu0 %v534
        %1141 = vmatpush1.msra.mxu0 %v533
        %1142 = vmatprep.subr.mxu0 %v538
        %1143 = vmatpush1.msra.mxu0 %v537
        %1144 = vmatprep.subr.mxu0 %v1130
        %1145 = vmatpush1.msra.mxu0 %v1127
        %1146 = vmatprep.subr.mxu0 0.0
        %1147 = vmatpush1.msra.mxu0 0.0
        %1148 = vmatprep.subr.mxu0 0.0
        %1149 = vmatpush1.msra.mxu0 0.0
        %1150 = vmatprep.subr.mxu0 0.0
        %1151 = vmatpush1.msra.mxu0 0.0
        %1152 = vmatprep.subr.mxu0 0.0
        %1153 = vmatpush1.msra.mxu0 0.0
        %1154 = vmatprep.subr.mxu0 0.0
        %1155 = vmatpush1.msra.mxu0 0.0
        %1156 = vmatprep.subr.mxu0 0.0
        %1157 = vmatpush1.msra.mxu0 0.0
        %1158 = vmatprep.subr.mxu0 0.0
        %1159 = vmatpush1.msra.mxu0 0.0
        %1160 = vmatprep.subr.mxu0 0.0
        %1161 = vmatpush1.msra.mxu0 0.0
        %1162 = vmatprep.subr.mxu0 0.0
        %1163 = vmatpush1.msra.mxu0 0.0
        %1164 = vmatprep.subr.mxu0 0.0
        %1165 = vmatpush1.msra.mxu0 0.0
        %1166 = vmatprep.subr.mxu0 0.0
        %1167 = vmatpush1.msra.mxu0 0.0
        %1168 = vmatprep.subr.mxu0 0.0
        %1169 = vmatpush1.msra.mxu0 0.0
        %1170 = vmatprep.subr.mxu0 0.0
        %1171 = vmatpush1.msra.mxu0 0.0
        %1172 = vmatprep.subr.mxu0 0.0
        %1173 = vmatpush1.msra.mxu0 0.0
        %1174 = vmatprep.subr.mxu0 0.0
        %1175 = vmatpush1.msra.mxu0 0.0
        %1176 = vmatprep.subr.mxu0 0.0
        %1177 = vmatpush1.msra.mxu0 0.0
        %1178 = vmatprep.subr.mxu0 0.0
        %1179 = vmatpush1.msra.mxu0 0.0
        %1180 = vmatprep.subr.mxu0 0.0
        %1181 = vmatpush1.msra.mxu0 0.0
        %1182 = vmatprep.subr.mxu0 0.0
        %1183 = vmatpush1.msra.mxu0 0.0
        %1184 = vmatprep.subr.mxu0 0.0
        %1185 = vmatpush1.msra.mxu0 0.0
        %1186 = vmatprep.subr.mxu0 0.0
        %1187 = vmatpush1.msra.mxu0 0.0
        %1188 = vmatprep.subr.mxu0 0.0
        %1189 = vmatpush1.msra.mxu0 0.0
        %1190 = vmatprep.subr.mxu0 0.0
        %1191 = vmatpush1.msra.mxu0 0.0
        %1192 = vmatprep.subr.mxu0 0.0
        %1193 = vmatpush1.msra.mxu0 0.0
        %1194 = vmatprep.subr.mxu0 0.0
        %1195 = vmatpush1.msra.mxu0 0.0
        %1196 = vmatprep.subr.mxu0 0.0
        %1197 = vmatpush1.msra.mxu0 0.0
        %1198 = vmatprep.subr.mxu0 0.0
        %1199 = vmatpush1.msra.mxu0 0.0
        %1200 = vmatprep.subr.mxu0 0.0
        %1201 = vmatpush1.msra.mxu0 0.0
        %1202 = vmatprep.mubr.f32.mxu0 0.0
        %1203 = vmatmul.mubr.f32.gmra.mrb[0].mxu0 %v564
        %v1204 = vpop.f32.mrb[0].mxu0
        %v1205 = vadd.f32 %v727, %v1204
        %v1206 = vpop.f32.mrb[0].mxu0
        %v1207 = vadd.f32 %v729, %v1206
        %1208 = vmatprep.mubr.f32.mxu0 0.0
        %1209 = vmatmul.mubr.f32.gmra.mrb[0].mxu0 %v564
        %v1210 = vpop.f32.mrb[0].mxu0
        %v1211 = vadd.f32 %v733, %v1210
        %v1212 = vpop.f32.mrb[0].mxu0
        %v1213 = vadd.f32 %v735, %v1212
        %1214 = vmatprep.mubr.f32.mxu0 0.0
        %1215 = vmatmul.mubr.f32.gmra.mrb[0].mxu0 %v567
        %v1216 = vpop.f32.mrb[0].mxu0
        %v1217 = vadd.f32 %v739, %v1216
        %v1218 = vpop.f32.mrb[0].mxu0
        %v1219 = vadd.f32 %v741, %v1218
        %1220 = vmatprep.mubr.f32.mxu0 0.0
        %1221 = vmatmul.mubr.f32.gmra.mrb[0].mxu0 %v570
        %v1222 = vpop.f32.mrb[0].mxu0
        %v1223 = vadd.f32 %v745, %v1222
        %v1224 = vpop.f32.mrb[0].mxu0
        %v1225 = vadd.f32 %v747, %v1224
        %1226 = vmatprep.mubr.f32.mxu0 0.0
        %1227 = vmatmul.mubr.f32.gmra.mrb[0].mxu0 %v573
        %v1228 = vpop.f32.mrb[0].mxu0
        %v1229 = vadd.f32 %v751, %v1228
        %v1230 = vpop.f32.mrb[0].mxu0
        %v1231 = vadd.f32 %v753, %v1230
        %1232 = vmatprep.mubr.f32.mxu0 0.0
        %1233 = vmatmul.mubr.f32.gmra.mrb[0].mxu0 %v576
        %v1234 = vpop.f32.mrb[0].mxu0
        %v1235 = vadd.f32 %v757, %v1234
        %v1236 = vpop.f32.mrb[0].mxu0
        %v1237 = vadd.f32 %v759, %v1236
        %1238 = vmatprep.mubr.f32.mxu0 0.0
        %1239 = vmatmul.mubr.f32.gmra.mrb[0].mxu0 %v579
        %v1240 = vpop.f32.mrb[0].mxu0
        %v1241 = vadd.f32 %v763, %v1240
        %v1242 = vpop.f32.mrb[0].mxu0
        %v1243 = vadd.f32 %v765, %v1242
        %1244 = vmatprep.mubr.f32.mxu0 0.0
        %1245 = vmatmul.mubr.f32.gmra.mrb[0].mxu0 %v582
        %v1246 = vpop.f32.mrb[0].mxu0
        %v1247 = vadd.f32 %v769, %v1246
        %v1248 = vpop.f32.mrb[0].mxu0
        %v1249 = vadd.f32 %v771, %v1248
        %1250 = vmatprep.mubr.f32.mxu0 0.0
        %1251 = vmatmul.mubr.f32.gmra.mrb[0].mxu0 %v585
        %v1252 = vpop.f32.mrb[0].mxu0
        %v1253 = vadd.f32 %v775, %v1252
        %v1254 = vpop.f32.mrb[0].mxu0
        %v1255 = vadd.f32 %v777, %v1254
        %1256 = vmatprep.mubr.f32.mxu0 0.0
        %1257 = vmatmul.mubr.f32.gmra.mrb[0].mxu0 %v588
        %v1258 = vpop.f32.mrb[0].mxu0
        %v1259 = vadd.f32 %v781, %v1258
        %v1260 = vpop.f32.mrb[0].mxu0
        %v1261 = vadd.f32 %v783, %v1260
        %1262 = vmatprep.mubr.f32.mxu0 0.0
        %1263 = vmatmul.mubr.f32.gmra.mrb[0].mxu0 %v591
        %v1264 = vpop.f32.mrb[0].mxu0
        %v1265 = vadd.f32 %v787, %v1264
        %v1266 = vpop.f32.mrb[0].mxu0
        %v1267 = vadd.f32 %v789, %v1266
        %1268 = vmatprep.mubr.f32.mxu0 0.0
        %1269 = vmatmul.mubr.f32.gmra.mrb[0].mxu0 %v594
        %v1270 = vpop.f32.mrb[0].mxu0
        %v1271 = vadd.f32 %v793, %v1270
        %v1272 = vpop.f32.mrb[0].mxu0
        %v1273 = vadd.f32 %v795, %v1272
        %1274 = vmatprep.mubr.f32.mxu0 0.0
        %1275 = vmatmul.mubr.f32.gmra.mrb[0].mxu0 %v597
        %v1276 = vpop.f32.mrb[0].mxu0
        %v1277 = vadd.f32 %v799, %v1276
        %v1278 = vpop.f32.mrb[0].mxu0
        %v1279 = vadd.f32 %v801, %v1278
        %1280 = vmatprep.mubr.f32.mxu0 0.0
        %1281 = vmatmul.mubr.f32.gmra.mrb[0].mxu0 %v600
        %v1282 = vpop.f32.mrb[0].mxu0
        %v1283 = vadd.f32 %v805, %v1282
        %v1284 = vpop.f32.mrb[0].mxu0
        %v1285 = vadd.f32 %v807, %v1284
        %1286 = vmatprep.mubr.f32.mxu0 0.0
        %1287 = vmatmul.mubr.f32.gmra.mrb[0].mxu0 %v603
        %v1288 = vpop.f32.mrb[0].mxu0
        %v1289 = vadd.f32 %v811, %v1288
        %v1290 = vpop.f32.mrb[0].mxu0
        %v1291 = vadd.f32 %v813, %v1290
        %1292 = vmatprep.mubr.f32.mxu0 0.0
        %1293 = vmatmul.mubr.f32.gmra.mrb[0].mxu0 %v606
        %v1294 = vpop.f32.mrb[0].mxu0
        %v1295 = vadd.f32 %v817, %v1294
        %v1296 = vpop.f32.mrb[0].mxu0
        %v1297 = vadd.f32 %v819, %v1296
        %1298 = vmatprep.mubr.f32.mxu0 0.0
        %1299 = vmatmul.mubr.f32.gmra.mrb[0].mxu0 %v609
        %v1300 = vpop.f32.mrb[0].mxu0
        %v1301 = vadd.f32 %v823, %v1300
        %v1302 = vpop.f32.mrb[0].mxu0
        %v1303 = vadd.f32 %v825, %v1302
        %1304 = vmatprep.mubr.f32.mxu0 0.0
        %1305 = vmatmul.mubr.f32.gmra.mrb[0].mxu0 %v612
        %v1306 = vpop.f32.mrb[0].mxu0
        %v1307 = vadd.f32 %v829, %v1306
        %v1308 = vpop.f32.mrb[0].mxu0
        %v1309 = vadd.f32 %v831, %v1308
        %1310 = vmatprep.mubr.f32.mxu0 0.0
        %1311 = vmatmul.mubr.f32.gmra.mrb[0].mxu0 %v615
        %v1312 = vpop.f32.mrb[0].mxu0
        %v1313 = vadd.f32 %v835, %v1312
        %v1314 = vpop.f32.mrb[0].mxu0
        %v1315 = vadd.f32 %v837, %v1314
        %1316 = vmatprep.mubr.f32.mxu0 0.0
        %1317 = vmatmul.mubr.f32.gmra.mrb[0].mxu0 %v618
        %v1318 = vpop.f32.mrb[0].mxu0
        %v1319 = vadd.f32 %v841, %v1318
        %v1320 = vpop.f32.mrb[0].mxu0
        %v1321 = vadd.f32 %v843, %v1320
        %1322 = vmatprep.mubr.f32.mxu0 0.0
        %1323 = vmatmul.mubr.f32.gmra.mrb[0].mxu0 %v621
        %v1324 = vpop.f32.mrb[0].mxu0
        %v1325 = vadd.f32 %v847, %v1324
        %v1326 = vpop.f32.mrb[0].mxu0
        %v1327 = vadd.f32 %v849, %v1326
        %1328 = vmatprep.mubr.f32.mxu0 0.0
        %1329 = vmatmul.mubr.f32.gmra.mrb[0].mxu0 %v624
        %v1330 = vpop.f32.mrb[0].mxu0
        %v1331 = vadd.f32 %v853, %v1330
        %v1332 = vpop.f32.mrb[0].mxu0
        %v1333 = vadd.f32 %v855, %v1332
        %1334 = vmatprep.mubr.f32.mxu0 0.0
        %1335 = vmatmul.mubr.f32.gmra.mrb[0].mxu0 %v627
        %v1336 = vpop.f32.mrb[0].mxu0
        %v1337 = vadd.f32 %v859, %v1336
        %v1338 = vpop.f32.mrb[0].mxu0
        %v1339 = vadd.f32 %v861, %v1338
        %1340 = vmatprep.mubr.f32.mxu0 0.0
        %1341 = vmatmul.mubr.f32.gmra.mrb[0].mxu0 %v630
        %v1342 = vpop.f32.mrb[0].mxu0
        %v1343 = vadd.f32 %v865, %v1342
        %v1344 = vpop.f32.mrb[0].mxu0
        %v1345 = vadd.f32 %v867, %v1344
        %1346 = vmatprep.mubr.f32.mxu0 0.0
        %1347 = vmatmul.mubr.f32.gmra.mrb[0].mxu0 %v633
        %v1348 = vpop.f32.mrb[0].mxu0
        %v1349 = vadd.f32 %v871, %v1348
        %v1350 = vpop.f32.mrb[0].mxu0
        %v1351 = vadd.f32 %v873, %v1350
        %1352 = vmatprep.mubr.f32.mxu0 0.0
        %1353 = vmatmul.mubr.f32.gmra.mrb[0].mxu0 %v636
        %v1354 = vpop.f32.mrb[0].mxu0
        %v1355 = vadd.f32 %v877, %v1354
        %v1356 = vpop.f32.mrb[0].mxu0
        %v1357 = vadd.f32 %v879, %v1356
        %1358 = vmatprep.mubr.f32.mxu0 0.0
        %1359 = vmatmul.mubr.f32.gmra.mrb[0].mxu0 %v639
        %v1360 = vpop.f32.mrb[0].mxu0
        %v1361 = vadd.f32 %v883, %v1360
        %v1362 = vpop.f32.mrb[0].mxu0
        %v1363 = vadd.f32 %v885, %v1362
        %1364 = vmatprep.mubr.f32.mxu0 0.0
        %1365 = vmatmul.mubr.f32.gmra.mrb[0].mxu0 %v642
        %v1366 = vpop.f32.mrb[0].mxu0
        %v1367 = vadd.f32 %v889, %v1366
        %v1368 = vpop.f32.mrb[0].mxu0
        %v1369 = vadd.f32 %v891, %v1368
        %1370 = vdwg.mxu0
        %1371 = vmatprep.subr.mxu0 %v532
        %1372 = vmatpush1.msra.mxu0 %v531
        %1373 = vmatprep.subr.mxu0 %v536
        %1374 = vmatpush1.msra.mxu0 %v535
        %1375 = vmatprep.subr.mxu0 %v540
        %1376 = vmatpush1.msra.mxu0 %v539
        %1377 = vmatprep.subr.mxu0 %v1136
        %1378 = vmatpush1.msra.mxu0 %v1133
        %1379 = vmatprep.subr.mxu0 0.0
        %1380 = vmatpush1.msra.mxu0 0.0
        %1381 = vmatprep.subr.mxu0 0.0
        %1382 = vmatpush1.msra.mxu0 0.0
        %1383 = vmatprep.subr.mxu0 0.0
        %1384 = vmatpush1.msra.mxu0 0.0
        %1385 = vmatprep.subr.mxu0 0.0
        %1386 = vmatpush1.msra.mxu0 0.0
        %1387 = vmatprep.subr.mxu0 0.0
        %1388 = vmatpush1.msra.mxu0 0.0
        %1389 = vmatprep.subr.mxu0 0.0
        %1390 = vmatpush1.msra.mxu0 0.0
        %1391 = vmatprep.subr.mxu0 0.0
        %1392 = vmatpush1.msra.mxu0 0.0
        %1393 = vmatprep.subr.mxu0 0.0
        %1394 = vmatpush1.msra.mxu0 0.0
        %1395 = vmatprep.subr.mxu0 0.0
        %1396 = vmatpush1.msra.mxu0 0.0
        %1397 = vmatprep.subr.mxu0 0.0
        %1398 = vmatpush1.msra.mxu0 0.0
        %1399 = vmatprep.subr.mxu0 0.0
        %1400 = vmatpush1.msra.mxu0 0.0
        %1401 = vmatprep.subr.mxu0 0.0
        %1402 = vmatpush1.msra.mxu0 0.0
        %1403 = vmatprep.subr.mxu0 0.0
        %1404 = vmatpush1.msra.mxu0 0.0
        %1405 = vmatprep.subr.mxu0 0.0
        %1406 = vmatpush1.msra.mxu0 0.0
        %1407 = vmatprep.subr.mxu0 0.0
        %1408 = vmatpush1.msra.mxu0 0.0
        %1409 = vmatprep.subr.mxu0 0.0
        %1410 = vmatpush1.msra.mxu0 0.0
        %1411 = vmatprep.subr.mxu0 0.0
        %1412 = vmatpush1.msra.mxu0 0.0
        %1413 = vmatprep.subr.mxu0 0.0
        %1414 = vmatpush1.msra.mxu0 0.0
        %1415 = vmatprep.subr.mxu0 0.0
        %1416 = vmatpush1.msra.mxu0 0.0
        %1417 = vmatprep.subr.mxu0 0.0
        %1418 = vmatpush1.msra.mxu0 0.0
        %1419 = vmatprep.subr.mxu0 0.0
        %1420 = vmatpush1.msra.mxu0 0.0
        %1421 = vmatprep.subr.mxu0 0.0
        %1422 = vmatpush1.msra.mxu0 0.0
        %1423 = vmatprep.subr.mxu0 0.0
        %1424 = vmatpush1.msra.mxu0 0.0
        %1425 = vmatprep.subr.mxu0 0.0
        %1426 = vmatpush1.msra.mxu0 0.0
        %1427 = vmatprep.subr.mxu0 0.0
        %1428 = vmatpush1.msra.mxu0 0.0
        %1429 = vmatprep.subr.mxu0 0.0
        %1430 = vmatpush1.msra.mxu0 0.0
        %1431 = vmatprep.subr.mxu0 0.0
        %1432 = vmatpush1.msra.mxu0 0.0
        %1433 = vmatprep.subr.mxu0 0.0
        %1434 = vmatpush1.msra.mxu0 0.0
        %1435 = vmatprep.mubr.f32.mxu0 0.0
        %1436 = vmatmul.mubr.f32.gmra.mrb[0].mxu0 %v564
        %v1437 = vpop.f32.mrb[0].mxu0
        %v1438 = vadd.f32 %v960, %v1437
        %v1439 = vpop.f32.mrb[0].mxu0
        %v1440 = vadd.f32 %v962, %v1439
        %1441 = vmatprep.mubr.f32.mxu0 0.0
        %1442 = vmatmul.mubr.f32.gmra.mrb[0].mxu0 %v564
        %v1443 = vpop.f32.mrb[0].mxu0
        %v1444 = vadd.f32 %v966, %v1443
        %v1445 = vpop.f32.mrb[0].mxu0
        %v1446 = vadd.f32 %v968, %v1445
        %1447 = vmatprep.mubr.f32.mxu0 0.0
        %1448 = vmatmul.mubr.f32.gmra.mrb[0].mxu0 %v567
        %v1449 = vpop.f32.mrb[0].mxu0
        %v1450 = vadd.f32 %v972, %v1449
        %v1451 = vpop.f32.mrb[0].mxu0
        %v1452 = vadd.f32 %v974, %v1451
        %1453 = vmatprep.mubr.f32.mxu0 0.0
        %1454 = vmatmul.mubr.f32.gmra.mrb[0].mxu0 %v570
        %v1455 = vpop.f32.mrb[0].mxu0
        %v1456 = vadd.f32 %v978, %v1455
        %v1457 = vpop.f32.mrb[0].mxu0
        %v1458 = vadd.f32 %v980, %v1457
        %1459 = vmatprep.mubr.f32.mxu0 0.0
        %1460 = vmatmul.mubr.f32.gmra.mrb[0].mxu0 %v573
        %v1461 = vpop.f32.mrb[0].mxu0
        %v1462 = vadd.f32 %v984, %v1461
        %v1463 = vpop.f32.mrb[0].mxu0
        %v1464 = vadd.f32 %v986, %v1463
        %1465 = vmatprep.mubr.f32.mxu0 0.0
        %1466 = vmatmul.mubr.f32.gmra.mrb[0].mxu0 %v576
        %v1467 = vpop.f32.mrb[0].mxu0
        %v1468 = vadd.f32 %v990, %v1467
        %v1469 = vpop.f32.mrb[0].mxu0
        %v1470 = vadd.f32 %v992, %v1469
        %1471 = vmatprep.mubr.f32.mxu0 0.0
        %1472 = vmatmul.mubr.f32.gmra.mrb[0].mxu0 %v579
        %v1473 = vpop.f32.mrb[0].mxu0
        %v1474 = vadd.f32 %v996, %v1473
        %v1475 = vpop.f32.mrb[0].mxu0
        %v1476 = vadd.f32 %v998, %v1475
        %1477 = vmatprep.mubr.f32.mxu0 0.0
        %1478 = vmatmul.mubr.f32.gmra.mrb[0].mxu0 %v582
        %v1479 = vpop.f32.mrb[0].mxu0
        %v1480 = vadd.f32 %v1002, %v1479
        %v1481 = vpop.f32.mrb[0].mxu0
        %v1482 = vadd.f32 %v1004, %v1481
        %1483 = vmatprep.mubr.f32.mxu0 0.0
        %1484 = vmatmul.mubr.f32.gmra.mrb[0].mxu0 %v585
        %v1485 = vpop.f32.mrb[0].mxu0
        %v1486 = vadd.f32 %v1008, %v1485
        %v1487 = vpop.f32.mrb[0].mxu0
        %v1488 = vadd.f32 %v1010, %v1487
        %1489 = vmatprep.mubr.f32.mxu0 0.0
        %1490 = vmatmul.mubr.f32.gmra.mrb[0].mxu0 %v588
        %v1491 = vpop.f32.mrb[0].mxu0
        %v1492 = vadd.f32 %v1014, %v1491
        %v1493 = vpop.f32.mrb[0].mxu0
        %v1494 = vadd.f32 %v1016, %v1493
        %1495 = vmatprep.mubr.f32.mxu0 0.0
        %1496 = vmatmul.mubr.f32.gmra.mrb[0].mxu0 %v591
        %v1497 = vpop.f32.mrb[0].mxu0
        %v1498 = vadd.f32 %v1020, %v1497
        %v1499 = vpop.f32.mrb[0].mxu0
        %v1500 = vadd.f32 %v1022, %v1499
        %1501 = vmatprep.mubr.f32.mxu0 0.0
        %1502 = vmatmul.mubr.f32.gmra.mrb[0].mxu0 %v594
        %v1503 = vpop.f32.mrb[0].mxu0
        %v1504 = vadd.f32 %v1026, %v1503
        %v1505 = vpop.f32.mrb[0].mxu0
        %v1506 = vadd.f32 %v1028, %v1505
        %1507 = vmatprep.mubr.f32.mxu0 0.0
        %1508 = vmatmul.mubr.f32.gmra.mrb[0].mxu0 %v597
        %v1509 = vpop.f32.mrb[0].mxu0
        %v1510 = vadd.f32 %v1032, %v1509
        %v1511 = vpop.f32.mrb[0].mxu0
        %v1512 = vadd.f32 %v1034, %v1511
        %1513 = vmatprep.mubr.f32.mxu0 0.0
        %1514 = vmatmul.mubr.f32.gmra.mrb[0].mxu0 %v600
        %v1515 = vpop.f32.mrb[0].mxu0
        %v1516 = vadd.f32 %v1038, %v1515
        %v1517 = vpop.f32.mrb[0].mxu0
        %v1518 = vadd.f32 %v1040, %v1517
        %1519 = vmatprep.mubr.f32.mxu0 0.0
        %1520 = vmatmul.mubr.f32.gmra.mrb[0].mxu0 %v603
        %v1521 = vpop.f32.mrb[0].mxu0
        %v1522 = vadd.f32 %v1044, %v1521
        %v1523 = vpop.f32.mrb[0].mxu0
        %v1524 = vadd.f32 %v1046, %v1523
        %1525 = vmatprep.mubr.f32.mxu0 0.0
        %1526 = vmatmul.mubr.f32.gmra.mrb[0].mxu0 %v606
        %v1527 = vpop.f32.mrb[0].mxu0
        %v1528 = vadd.f32 %v1050, %v1527
        %v1529 = vpop.f32.mrb[0].mxu0
        %v1530 = vadd.f32 %v1052, %v1529
        %1531 = vmatprep.mubr.f32.mxu0 0.0
        %1532 = vmatmul.mubr.f32.gmra.mrb[0].mxu0 %v609
        %v1533 = vpop.f32.mrb[0].mxu0
        %v1534 = vadd.f32 %v1056, %v1533
        %v1535 = vpop.f32.mrb[0].mxu0
        %v1536 = vadd.f32 %v1058, %v1535
        %1537 = vmatprep.mubr.f32.mxu0 0.0
        %1538 = vmatmul.mubr.f32.gmra.mrb[0].mxu0 %v612
        %v1539 = vpop.f32.mrb[0].mxu0
        %v1540 = vadd.f32 %v1062, %v1539
        %v1541 = vpop.f32.mrb[0].mxu0
        %v1542 = vadd.f32 %v1064, %v1541
        %1543 = vmatprep.mubr.f32.mxu0 0.0
        %1544 = vmatmul.mubr.f32.gmra.mrb[0].mxu0 %v615
        %v1545 = vpop.f32.mrb[0].mxu0
        %v1546 = vadd.f32 %v1068, %v1545
        %v1547 = vpop.f32.mrb[0].mxu0
        %v1548 = vadd.f32 %v1070, %v1547
        %1549 = vmatprep.mubr.f32.mxu0 0.0
        %1550 = vmatmul.mubr.f32.gmra.mrb[0].mxu0 %v618
        %v1551 = vpop.f32.mrb[0].mxu0
        %v1552 = vadd.f32 %v1074, %v1551
        %v1553 = vpop.f32.mrb[0].mxu0
        %v1554 = vadd.f32 %v1076, %v1553
        %1555 = vmatprep.mubr.f32.mxu0 0.0
        %1556 = vmatmul.mubr.f32.gmra.mrb[0].mxu0 %v621
        %v1557 = vpop.f32.mrb[0].mxu0
        %v1558 = vadd.f32 %v1080, %v1557
        %v1559 = vpop.f32.mrb[0].mxu0
        %v1560 = vadd.f32 %v1082, %v1559
        %1561 = vmatprep.mubr.f32.mxu0 0.0
        %1562 = vmatmul.mubr.f32.gmra.mrb[0].mxu0 %v624
        %v1563 = vpop.f32.mrb[0].mxu0
        %v1564 = vadd.f32 %v1086, %v1563
        %v1565 = vpop.f32.mrb[0].mxu0
        %v1566 = vadd.f32 %v1088, %v1565
        %1567 = vmatprep.mubr.f32.mxu0 0.0
        %1568 = vmatmul.mubr.f32.gmra.mrb[0].mxu0 %v627
        %v1569 = vpop.f32.mrb[0].mxu0
        %v1570 = vadd.f32 %v1092, %v1569
        %v1571 = vpop.f32.mrb[0].mxu0
        %v1572 = vadd.f32 %v1094, %v1571
        %1573 = vmatprep.mubr.f32.mxu0 0.0
        %1574 = vmatmul.mubr.f32.gmra.mrb[0].mxu0 %v630
        %v1575 = vpop.f32.mrb[0].mxu0
        %v1576 = vadd.f32 %v1098, %v1575
        %v1577 = vpop.f32.mrb[0].mxu0
        %v1578 = vadd.f32 %v1100, %v1577
        %1579 = vmatprep.mubr.f32.mxu0 0.0
        %1580 = vmatmul.mubr.f32.gmra.mrb[0].mxu0 %v633
        %v1581 = vpop.f32.mrb[0].mxu0
        %v1582 = vadd.f32 %v1104, %v1581
        %v1583 = vpop.f32.mrb[0].mxu0
        %v1584 = vadd.f32 %v1106, %v1583
        %1585 = vmatprep.mubr.f32.mxu0 0.0
        %1586 = vmatmul.mubr.f32.gmra.mrb[0].mxu0 %v636
        %v1587 = vpop.f32.mrb[0].mxu0
        %v1588 = vadd.f32 %v1110, %v1587
        %v1589 = vpop.f32.mrb[0].mxu0
        %v1590 = vadd.f32 %v1112, %v1589
        %1591 = vmatprep.mubr.f32.mxu0 0.0
        %1592 = vmatmul.mubr.f32.gmra.mrb[0].mxu0 %v639
        %v1593 = vpop.f32.mrb[0].mxu0
        %v1594 = vadd.f32 %v1116, %v1593
        %v1595 = vpop.f32.mrb[0].mxu0
        %v1596 = vadd.f32 %v1118, %v1595
        %1597 = vmatprep.mubr.f32.mxu0 0.0
        %1598 = vmatmul.mubr.f32.gmra.mrb[0].mxu0 %v642
        %v1599 = vpop.f32.mrb[0].mxu0
        %v1600 = vadd.f32 %v1122, %v1599
        %v1601 = vpop.f32.mrb[0].mxu0
        %v1602 = vadd.f32 %v1124, %v1601
        %1603 = vdwg.mxu0
        %s1604 = scalar_lea.vmem [#allocation3], 256
        %v1605 = vld [vmem:[%s1604] sm:$0xff]
        %v1606 = vld [vmem:[%s1604 + $0x8] sm:$0xff]
        %v1607 = vld [vmem:[%s1604 + $0x10] sm:$0xff]
        %v1608 = vld [vmem:[%s1604 + $0x18] sm:$0xff]
        %v1609 = vld [vmem:[%s1604 + $0x20] sm:$0xff]
        %v1610 = vld [vmem:[%s1604 + $0x28] sm:$0xff]
        %v1611 = vld [vmem:[%s1604 + $0x30] sm:$0xff]
        %v1612 = vld [vmem:[%s1604 + $0x38] sm:$0xff]
        %v1613 = vld [vmem:[%s1604 + $0x40] sm:$0xff]
        %v1614 = vld [vmem:[%s1604 + $0x48] sm:$0xff]
        %v1615 = vld [vmem:[%s1604 + $0x50] sm:$0xff]
        %v1616 = vld [vmem:[%s1604 + $0x58] sm:$0xff]
        %v1617 = vld [vmem:[%s1604 + $0x60] sm:$0xf]
        %v1618 = vld [vmem:[%s1604 + $0x68] sm:$0xf]
        %v1619 = vld [vmem:[%s1604 + $0x70] sm:$0xf]
        %v1620 = vld [vmem:[%s1604 + $0x78] sm:$0xf]
        %v1622 = vsel %vm562, %v528, 0
        %v1625 = vsel %vm647, %v1617, 0
        %v1628 = vsel %vm647, %v1618, 0
        %v1631 = vsel %vm647, %v1619, 0
        %v1634 = vsel %vm647, %v1620, 0
        %1636 = vmatprep.subr.mxu0 %v1606
        %1637 = vmatpush1.msra.mxu0 %v1605
        %1638 = vmatprep.subr.mxu0 %v1610
        %1639 = vmatpush1.msra.mxu0 %v1609
        %1640 = vmatprep.subr.mxu0 %v1614
        %1641 = vmatpush1.msra.mxu0 %v1613
        %1642 = vmatprep.subr.mxu0 %v1628
        %1643 = vmatpush1.msra.mxu0 %v1625
        %1644 = vmatprep.subr.mxu0 0.0
        %1645 = vmatpush1.msra.mxu0 0.0
        %1646 = vmatprep.subr.mxu0 0.0
        %1647 = vmatpush1.msra.mxu0 0.0
        %1648 = vmatprep.subr.mxu0 0.0
        %1649 = vmatpush1.msra.mxu0 0.0
        %1650 = vmatprep.subr.mxu0 0.0
        %1651 = vmatpush1.msra.mxu0 0.0
        %1652 = vmatprep.subr.mxu0 0.0
        %1653 = vmatpush1.msra.mxu0 0.0
        %1654 = vmatprep.subr.mxu0 0.0
        %1655 = vmatpush1.msra.mxu0 0.0
        %1656 = vmatprep.subr.mxu0 0.0
        %1657 = vmatpush1.msra.mxu0 0.0
        %1658 = vmatprep.subr.mxu0 0.0
        %1659 = vmatpush1.msra.mxu0 0.0
        %1660 = vmatprep.subr.mxu0 0.0
        %1661 = vmatpush1.msra.mxu0 0.0
        %1662 = vmatprep.subr.mxu0 0.0
        %1663 = vmatpush1.msra.mxu0 0.0
        %1664 = vmatprep.subr.mxu0 0.0
        %1665 = vmatpush1.msra.mxu0 0.0
        %1666 = vmatprep.subr.mxu0 0.0
        %1667 = vmatpush1.msra.mxu0 0.0
        %1668 = vmatprep.subr.mxu0 0.0
        %1669 = vmatpush1.msra.mxu0 0.0
        %1670 = vmatprep.subr.mxu0 0.0
        %1671 = vmatpush1.msra.mxu0 0.0
        %1672 = vmatprep.subr.mxu0 0.0
        %1673 = vmatpush1.msra.mxu0 0.0
        %1674 = vmatprep.subr.mxu0 0.0
        %1675 = vmatpush1.msra.mxu0 0.0
        %1676 = vmatprep.subr.mxu0 0.0
        %1677 = vmatpush1.msra.mxu0 0.0
        %1678 = vmatprep.subr.mxu0 0.0
        %1679 = vmatpush1.msra.mxu0 0.0
        %1680 = vmatprep.subr.mxu0 0.0
        %1681 = vmatpush1.msra.mxu0 0.0
        %1682 = vmatprep.subr.mxu0 0.0
        %1683 = vmatpush1.msra.mxu0 0.0
        %1684 = vmatprep.subr.mxu0 0.0
        %1685 = vmatpush1.msra.mxu0 0.0
        %1686 = vmatprep.subr.mxu0 0.0
        %1687 = vmatpush1.msra.mxu0 0.0
        %1688 = vmatprep.subr.mxu0 0.0
        %1689 = vmatpush1.msra.mxu0 0.0
        %1690 = vmatprep.subr.mxu0 0.0
        %1691 = vmatpush1.msra.mxu0 0.0
        %1692 = vmatprep.subr.mxu0 0.0
        %1693 = vmatpush1.msra.mxu0 0.0
        %1694 = vmatprep.subr.mxu0 0.0
        %1695 = vmatpush1.msra.mxu0 0.0
        %1696 = vmatprep.subr.mxu0 0.0
        %1697 = vmatpush1.msra.mxu0 0.0
        %1698 = vmatprep.subr.mxu0 0.0
        %1699 = vmatpush1.msra.mxu0 0.0
        %1700 = vmatprep.mubr.f32.mxu0 0.0
        %1701 = vmatmul.mubr.f32.gmra.mrb[0].mxu0 %v567
        %v1702 = vpop.f32.mrb[0].mxu0
        %v1703 = vadd.f32 0.0, %v1702
        %v1704 = vpop.f32.mrb[0].mxu0
        %v1705 = vadd.f32 0.0, %v1704
        %1706 = vmatprep.mubr.f32.mxu0 0.0
        %1707 = vmatmul.mubr.f32.gmra.mrb[0].mxu0 %v570
        %v1708 = vpop.f32.mrb[0].mxu0
        %v1709 = vadd.f32 0.0, %v1708
        %v1710 = vpop.f32.mrb[0].mxu0
        %v1711 = vadd.f32 0.0, %v1710
        %1712 = vmatprep.mubr.f32.mxu0 0.0
        %1713 = vmatmul.mubr.f32.gmra.mrb[0].mxu0 %v573
        %v1714 = vpop.f32.mrb[0].mxu0
        %v1715 = vadd.f32 0.0, %v1714
        %v1716 = vpop.f32.mrb[0].mxu0
        %v1717 = vadd.f32 0.0, %v1716
        %1718 = vmatprep.mubr.f32.mxu0 0.0
        %1719 = vmatmul.mubr.f32.gmra.mrb[0].mxu0 %v576
        %v1720 = vpop.f32.mrb[0].mxu0
        %v1721 = vadd.f32 0.0, %v1720
        %v1722 = vpop.f32.mrb[0].mxu0
        %v1723 = vadd.f32 0.0, %v1722
        %1724 = vmatprep.mubr.f32.mxu0 0.0
        %1725 = vmatmul.mubr.f32.gmra.mrb[0].mxu0 %v579
        %v1726 = vpop.f32.mrb[0].mxu0
        %v1727 = vadd.f32 0.0, %v1726
        %v1728 = vpop.f32.mrb[0].mxu0
        %v1729 = vadd.f32 0.0, %v1728
        %1730 = vmatprep.mubr.f32.mxu0 0.0
        %1731 = vmatmul.mubr.f32.gmra.mrb[0].mxu0 %v582
        %v1732 = vpop.f32.mrb[0].mxu0
        %v1733 = vadd.f32 0.0, %v1732
        %v1734 = vpop.f32.mrb[0].mxu0
        %v1735 = vadd.f32 0.0, %v1734
        %1736 = vmatprep.mubr.f32.mxu0 0.0
        %1737 = vmatmul.mubr.f32.gmra.mrb[0].mxu0 %v585
        %v1738 = vpop.f32.mrb[0].mxu0
        %v1739 = vadd.f32 0.0, %v1738
        %v1740 = vpop.f32.mrb[0].mxu0
        %v1741 = vadd.f32 0.0, %v1740
        %1742 = vmatprep.mubr.f32.mxu0 0.0
        %1743 = vmatmul.mubr.f32.gmra.mrb[0].mxu0 %v588
        %v1744 = vpop.f32.mrb[0].mxu0
        %v1745 = vadd.f32 0.0, %v1744
        %v1746 = vpop.f32.mrb[0].mxu0
        %v1747 = vadd.f32 0.0, %v1746
        %1748 = vmatprep.mubr.f32.mxu0 0.0
        %1749 = vmatmul.mubr.f32.gmra.mrb[0].mxu0 %v591
        %v1750 = vpop.f32.mrb[0].mxu0
        %v1751 = vadd.f32 0.0, %v1750
        %v1752 = vpop.f32.mrb[0].mxu0
        %v1753 = vadd.f32 0.0, %v1752
        %1754 = vmatprep.mubr.f32.mxu0 0.0
        %1755 = vmatmul.mubr.f32.gmra.mrb[0].mxu0 %v594
        %v1756 = vpop.f32.mrb[0].mxu0
        %v1757 = vadd.f32 0.0, %v1756
        %v1758 = vpop.f32.mrb[0].mxu0
        %v1759 = vadd.f32 0.0, %v1758
        %1760 = vmatprep.mubr.f32.mxu0 0.0
        %1761 = vmatmul.mubr.f32.gmra.mrb[0].mxu0 %v597
        %v1762 = vpop.f32.mrb[0].mxu0
        %v1763 = vadd.f32 0.0, %v1762
        %v1764 = vpop.f32.mrb[0].mxu0
        %v1765 = vadd.f32 0.0, %v1764
        %1766 = vmatprep.mubr.f32.mxu0 0.0
        %1767 = vmatmul.mubr.f32.gmra.mrb[0].mxu0 %v600
        %v1768 = vpop.f32.mrb[0].mxu0
        %v1769 = vadd.f32 0.0, %v1768
        %v1770 = vpop.f32.mrb[0].mxu0
        %v1771 = vadd.f32 0.0, %v1770
        %1772 = vmatprep.mubr.f32.mxu0 0.0
        %1773 = vmatmul.mubr.f32.gmra.mrb[0].mxu0 %v603
        %v1774 = vpop.f32.mrb[0].mxu0
        %v1775 = vadd.f32 0.0, %v1774
        %v1776 = vpop.f32.mrb[0].mxu0
        %v1777 = vadd.f32 0.0, %v1776
        %1778 = vmatprep.mubr.f32.mxu0 0.0
        %1779 = vmatmul.mubr.f32.gmra.mrb[0].mxu0 %v606
        %v1780 = vpop.f32.mrb[0].mxu0
        %v1781 = vadd.f32 0.0, %v1780
        %v1782 = vpop.f32.mrb[0].mxu0
        %v1783 = vadd.f32 0.0, %v1782
        %1784 = vmatprep.mubr.f32.mxu0 0.0
        %1785 = vmatmul.mubr.f32.gmra.mrb[0].mxu0 %v609
        %v1786 = vpop.f32.mrb[0].mxu0
        %v1787 = vadd.f32 0.0, %v1786
        %v1788 = vpop.f32.mrb[0].mxu0
        %v1789 = vadd.f32 0.0, %v1788
        %1790 = vmatprep.mubr.f32.mxu0 0.0
        %1791 = vmatmul.mubr.f32.gmra.mrb[0].mxu0 %v612
        %v1792 = vpop.f32.mrb[0].mxu0
        %v1793 = vadd.f32 0.0, %v1792
        %v1794 = vpop.f32.mrb[0].mxu0
        %v1795 = vadd.f32 0.0, %v1794
        %1796 = vmatprep.mubr.f32.mxu0 0.0
        %1797 = vmatmul.mubr.f32.gmra.mrb[0].mxu0 %v615
        %v1798 = vpop.f32.mrb[0].mxu0
        %v1799 = vadd.f32 0.0, %v1798
        %v1800 = vpop.f32.mrb[0].mxu0
        %v1801 = vadd.f32 0.0, %v1800
        %1802 = vmatprep.mubr.f32.mxu0 0.0
        %1803 = vmatmul.mubr.f32.gmra.mrb[0].mxu0 %v618
        %v1804 = vpop.f32.mrb[0].mxu0
        %v1805 = vadd.f32 0.0, %v1804
        %v1806 = vpop.f32.mrb[0].mxu0
        %v1807 = vadd.f32 0.0, %v1806
        %1808 = vmatprep.mubr.f32.mxu0 0.0
        %1809 = vmatmul.mubr.f32.gmra.mrb[0].mxu0 %v621
        %v1810 = vpop.f32.mrb[0].mxu0
        %v1811 = vadd.f32 0.0, %v1810
        %v1812 = vpop.f32.mrb[0].mxu0
        %v1813 = vadd.f32 0.0, %v1812
        %1814 = vmatprep.mubr.f32.mxu0 0.0
        %1815 = vmatmul.mubr.f32.gmra.mrb[0].mxu0 %v624
        %v1816 = vpop.f32.mrb[0].mxu0
        %v1817 = vadd.f32 0.0, %v1816
        %v1818 = vpop.f32.mrb[0].mxu0
        %v1819 = vadd.f32 0.0, %v1818
        %1820 = vmatprep.mubr.f32.mxu0 0.0
        %1821 = vmatmul.mubr.f32.gmra.mrb[0].mxu0 %v627
        %v1822 = vpop.f32.mrb[0].mxu0
        %v1823 = vadd.f32 0.0, %v1822
        %v1824 = vpop.f32.mrb[0].mxu0
        %v1825 = vadd.f32 0.0, %v1824
        %1826 = vmatprep.mubr.f32.mxu0 0.0
        %1827 = vmatmul.mubr.f32.gmra.mrb[0].mxu0 %v630
        %v1828 = vpop.f32.mrb[0].mxu0
        %v1829 = vadd.f32 0.0, %v1828
        %v1830 = vpop.f32.mrb[0].mxu0
        %v1831 = vadd.f32 0.0, %v1830
        %1832 = vmatprep.mubr.f32.mxu0 0.0
        %1833 = vmatmul.mubr.f32.gmra.mrb[0].mxu0 %v633
        %v1834 = vpop.f32.mrb[0].mxu0
        %v1835 = vadd.f32 0.0, %v1834
        %v1836 = vpop.f32.mrb[0].mxu0
        %v1837 = vadd.f32 0.0, %v1836
        %1838 = vmatprep.mubr.f32.mxu0 0.0
        %1839 = vmatmul.mubr.f32.gmra.mrb[0].mxu0 %v636
        %v1840 = vpop.f32.mrb[0].mxu0
        %v1841 = vadd.f32 0.0, %v1840
        %v1842 = vpop.f32.mrb[0].mxu0
        %v1843 = vadd.f32 0.0, %v1842
        %1844 = vmatprep.mubr.f32.mxu0 0.0
        %1845 = vmatmul.mubr.f32.gmra.mrb[0].mxu0 %v639
        %v1846 = vpop.f32.mrb[0].mxu0
        %v1847 = vadd.f32 0.0, %v1846
        %v1848 = vpop.f32.mrb[0].mxu0
        %v1849 = vadd.f32 0.0, %v1848
        %1850 = vmatprep.mubr.f32.mxu0 0.0
        %1851 = vmatmul.mubr.f32.gmra.mrb[0].mxu0 %v642
        %v1852 = vpop.f32.mrb[0].mxu0
        %v1853 = vadd.f32 0.0, %v1852
        %v1854 = vpop.f32.mrb[0].mxu0
        %v1855 = vadd.f32 0.0, %v1854
        %1856 = vmatprep.mubr.f32.mxu0 0.0
        %1857 = vmatmul.mubr.f32.gmra.mrb[0].mxu0 %v645
        %v1858 = vpop.f32.mrb[0].mxu0
        %v1859 = vadd.f32 0.0, %v1858
        %v1860 = vpop.f32.mrb[0].mxu0
        %v1861 = vadd.f32 0.0, %v1860
        %1862 = vmatprep.mubr.f32.mxu0 0.0
        %1863 = vmatmul.mubr.f32.gmra.mrb[0].mxu0 %v1622
        %v1864 = vpop.f32.mrb[0].mxu0
        %v1865 = vadd.f32 0.0, %v1864
        %v1866 = vpop.f32.mrb[0].mxu0
        %v1867 = vadd.f32 0.0, %v1866
        %1868 = vdwg.mxu0
        %1869 = vmatprep.subr.mxu0 %v1608
        %1870 = vmatpush1.msra.mxu0 %v1607
        %1871 = vmatprep.subr.mxu0 %v1612
        %1872 = vmatpush1.msra.mxu0 %v1611
        %1873 = vmatprep.subr.mxu0 %v1616
        %1874 = vmatpush1.msra.mxu0 %v1615
        %1875 = vmatprep.subr.mxu0 %v1634
        %1876 = vmatpush1.msra.mxu0 %v1631
        %1877 = vmatprep.subr.mxu0 0.0
        %1878 = vmatpush1.msra.mxu0 0.0
        %1879 = vmatprep.subr.mxu0 0.0
        %1880 = vmatpush1.msra.mxu0 0.0
        %1881 = vmatprep.subr.mxu0 0.0
        %1882 = vmatpush1.msra.mxu0 0.0
        %1883 = vmatprep.subr.mxu0 0.0
        %1884 = vmatpush1.msra.mxu0 0.0
        %1885 = vmatprep.subr.mxu0 0.0
        %1886 = vmatpush1.msra.mxu0 0.0
        %1887 = vmatprep.subr.mxu0 0.0
        %1888 = vmatpush1.msra.mxu0 0.0
        %1889 = vmatprep.subr.mxu0 0.0
        %1890 = vmatpush1.msra.mxu0 0.0
        %1891 = vmatprep.subr.mxu0 0.0
        %1892 = vmatpush1.msra.mxu0 0.0
        %1893 = vmatprep.subr.mxu0 0.0
        %1894 = vmatpush1.msra.mxu0 0.0
        %1895 = vmatprep.subr.mxu0 0.0
        %1896 = vmatpush1.msra.mxu0 0.0
        %1897 = vmatprep.subr.mxu0 0.0
        %1898 = vmatpush1.msra.mxu0 0.0
        %1899 = vmatprep.subr.mxu0 0.0
        %1900 = vmatpush1.msra.mxu0 0.0
        %1901 = vmatprep.subr.mxu0 0.0
        %1902 = vmatpush1.msra.mxu0 0.0
        %1903 = vmatprep.subr.mxu0 0.0
        %1904 = vmatpush1.msra.mxu0 0.0
        %1905 = vmatprep.subr.mxu0 0.0
        %1906 = vmatpush1.msra.mxu0 0.0
        %1907 = vmatprep.subr.mxu0 0.0
        %1908 = vmatpush1.msra.mxu0 0.0
        %1909 = vmatprep.subr.mxu0 0.0
        %1910 = vmatpush1.msra.mxu0 0.0
        %1911 = vmatprep.subr.mxu0 0.0
        %1912 = vmatpush1.msra.mxu0 0.0
        %1913 = vmatprep.subr.mxu0 0.0
        %1914 = vmatpush1.msra.mxu0 0.0
        %1915 = vmatprep.subr.mxu0 0.0
        %1916 = vmatpush1.msra.mxu0 0.0
        %1917 = vmatprep.subr.mxu0 0.0
        %1918 = vmatpush1.msra.mxu0 0.0
        %1919 = vmatprep.subr.mxu0 0.0
        %1920 = vmatpush1.msra.mxu0 0.0
        %1921 = vmatprep.subr.mxu0 0.0
        %1922 = vmatpush1.msra.mxu0 0.0
        %1923 = vmatprep.subr.mxu0 0.0
        %1924 = vmatpush1.msra.mxu0 0.0
        %1925 = vmatprep.subr.mxu0 0.0
        %1926 = vmatpush1.msra.mxu0 0.0
        %1927 = vmatprep.subr.mxu0 0.0
        %1928 = vmatpush1.msra.mxu0 0.0
        %1929 = vmatprep.subr.mxu0 0.0
        %1930 = vmatpush1.msra.mxu0 0.0
        %1931 = vmatprep.subr.mxu0 0.0
        %1932 = vmatpush1.msra.mxu0 0.0
        %1933 = vmatprep.mubr.f32.mxu0 0.0
        %1934 = vmatmul.mubr.f32.gmra.mrb[0].mxu0 %v567
        %v1935 = vpop.f32.mrb[0].mxu0
        %v1936 = vadd.f32 0.0, %v1935
        %v1937 = vpop.f32.mrb[0].mxu0
        %v1938 = vadd.f32 0.0, %v1937
        %1939 = vmatprep.mubr.f32.mxu0 0.0
        %1940 = vmatmul.mubr.f32.gmra.mrb[0].mxu0 %v570
        %v1941 = vpop.f32.mrb[0].mxu0
        %v1942 = vadd.f32 0.0, %v1941
        %v1943 = vpop.f32.mrb[0].mxu0
        %v1944 = vadd.f32 0.0, %v1943
        %1945 = vmatprep.mubr.f32.mxu0 0.0
        %1946 = vmatmul.mubr.f32.gmra.mrb[0].mxu0 %v573
        %v1947 = vpop.f32.mrb[0].mxu0
        %v1948 = vadd.f32 0.0, %v1947
        %v1949 = vpop.f32.mrb[0].mxu0
        %v1950 = vadd.f32 0.0, %v1949
        %1951 = vmatprep.mubr.f32.mxu0 0.0
        %1952 = vmatmul.mubr.f32.gmra.mrb[0].mxu0 %v576
        %v1953 = vpop.f32.mrb[0].mxu0
        %v1954 = vadd.f32 0.0, %v1953
        %v1955 = vpop.f32.mrb[0].mxu0
        %v1956 = vadd.f32 0.0, %v1955
        %1957 = vmatprep.mubr.f32.mxu0 0.0
        %1958 = vmatmul.mubr.f32.gmra.mrb[0].mxu0 %v579
        %v1959 = vpop.f32.mrb[0].mxu0
        %v1960 = vadd.f32 0.0, %v1959
        %v1961 = vpop.f32.mrb[0].mxu0
        %v1962 = vadd.f32 0.0, %v1961
        %1963 = vmatprep.mubr.f32.mxu0 0.0
        %1964 = vmatmul.mubr.f32.gmra.mrb[0].mxu0 %v582
        %v1965 = vpop.f32.mrb[0].mxu0
        %v1966 = vadd.f32 0.0, %v1965
        %v1967 = vpop.f32.mrb[0].mxu0
        %v1968 = vadd.f32 0.0, %v1967
        %1969 = vmatprep.mubr.f32.mxu0 0.0
        %1970 = vmatmul.mubr.f32.gmra.mrb[0].mxu0 %v585
        %v1971 = vpop.f32.mrb[0].mxu0
        %v1972 = vadd.f32 0.0, %v1971
        %v1973 = vpop.f32.mrb[0].mxu0
        %v1974 = vadd.f32 0.0, %v1973
        %1975 = vmatprep.mubr.f32.mxu0 0.0
        %1976 = vmatmul.mubr.f32.gmra.mrb[0].mxu0 %v588
        %v1977 = vpop.f32.mrb[0].mxu0
        %v1978 = vadd.f32 0.0, %v1977
        %v1979 = vpop.f32.mrb[0].mxu0
        %v1980 = vadd.f32 0.0, %v1979
        %1981 = vmatprep.mubr.f32.mxu0 0.0
        %1982 = vmatmul.mubr.f32.gmra.mrb[0].mxu0 %v591
        %v1983 = vpop.f32.mrb[0].mxu0
        %v1984 = vadd.f32 0.0, %v1983
        %v1985 = vpop.f32.mrb[0].mxu0
        %v1986 = vadd.f32 0.0, %v1985
        %1987 = vmatprep.mubr.f32.mxu0 0.0
        %1988 = vmatmul.mubr.f32.gmra.mrb[0].mxu0 %v594
        %v1989 = vpop.f32.mrb[0].mxu0
        %v1990 = vadd.f32 0.0, %v1989
        %v1991 = vpop.f32.mrb[0].mxu0
        %v1992 = vadd.f32 0.0, %v1991
        %1993 = vmatprep.mubr.f32.mxu0 0.0
        %1994 = vmatmul.mubr.f32.gmra.mrb[0].mxu0 %v597
        %v1995 = vpop.f32.mrb[0].mxu0
        %v1996 = vadd.f32 0.0, %v1995
        %v1997 = vpop.f32.mrb[0].mxu0
        %v1998 = vadd.f32 0.0, %v1997
        %1999 = vmatprep.mubr.f32.mxu0 0.0
        %2000 = vmatmul.mubr.f32.gmra.mrb[0].mxu0 %v600
        %v2001 = vpop.f32.mrb[0].mxu0
        %v2002 = vadd.f32 0.0, %v2001
        %v2003 = vpop.f32.mrb[0].mxu0
        %v2004 = vadd.f32 0.0, %v2003
        %2005 = vmatprep.mubr.f32.mxu0 0.0
        %2006 = vmatmul.mubr.f32.gmra.mrb[0].mxu0 %v603
        %v2007 = vpop.f32.mrb[0].mxu0
        %v2008 = vadd.f32 0.0, %v2007
        %v2009 = vpop.f32.mrb[0].mxu0
        %v2010 = vadd.f32 0.0, %v2009
        %2011 = vmatprep.mubr.f32.mxu0 0.0
        %2012 = vmatmul.mubr.f32.gmra.mrb[0].mxu0 %v606
        %v2013 = vpop.f32.mrb[0].mxu0
        %v2014 = vadd.f32 0.0, %v2013
        %v2015 = vpop.f32.mrb[0].mxu0
        %v2016 = vadd.f32 0.0, %v2015
        %2017 = vmatprep.mubr.f32.mxu0 0.0
        %2018 = vmatmul.mubr.f32.gmra.mrb[0].mxu0 %v609
        %v2019 = vpop.f32.mrb[0].mxu0
        %v2020 = vadd.f32 0.0, %v2019
        %v2021 = vpop.f32.mrb[0].mxu0
        %v2022 = vadd.f32 0.0, %v2021
        %2023 = vmatprep.mubr.f32.mxu0 0.0
        %2024 = vmatmul.mubr.f32.gmra.mrb[0].mxu0 %v612
        %v2025 = vpop.f32.mrb[0].mxu0
        %v2026 = vadd.f32 0.0, %v2025
        %v2027 = vpop.f32.mrb[0].mxu0
        %v2028 = vadd.f32 0.0, %v2027
        %2029 = vmatprep.mubr.f32.mxu0 0.0
        %2030 = vmatmul.mubr.f32.gmra.mrb[0].mxu0 %v615
        %v2031 = vpop.f32.mrb[0].mxu0
        %v2032 = vadd.f32 0.0, %v2031
        %v2033 = vpop.f32.mrb[0].mxu0
        %v2034 = vadd.f32 0.0, %v2033
        %2035 = vmatprep.mubr.f32.mxu0 0.0
        %2036 = vmatmul.mubr.f32.gmra.mrb[0].mxu0 %v618
        %v2037 = vpop.f32.mrb[0].mxu0
        %v2038 = vadd.f32 0.0, %v2037
        %v2039 = vpop.f32.mrb[0].mxu0
        %v2040 = vadd.f32 0.0, %v2039
        %2041 = vmatprep.mubr.f32.mxu0 0.0
        %2042 = vmatmul.mubr.f32.gmra.mrb[0].mxu0 %v621
        %v2043 = vpop.f32.mrb[0].mxu0
        %v2044 = vadd.f32 0.0, %v2043
        %v2045 = vpop.f32.mrb[0].mxu0
        %v2046 = vadd.f32 0.0, %v2045
        %2047 = vmatprep.mubr.f32.mxu0 0.0
        %2048 = vmatmul.mubr.f32.gmra.mrb[0].mxu0 %v624
        %v2049 = vpop.f32.mrb[0].mxu0
        %v2050 = vadd.f32 0.0, %v2049
        %v2051 = vpop.f32.mrb[0].mxu0
        %v2052 = vadd.f32 0.0, %v2051
        %2053 = vmatprep.mubr.f32.mxu0 0.0
        %2054 = vmatmul.mubr.f32.gmra.mrb[0].mxu0 %v627
        %v2055 = vpop.f32.mrb[0].mxu0
        %v2056 = vadd.f32 0.0, %v2055
        %v2057 = vpop.f32.mrb[0].mxu0
        %v2058 = vadd.f32 0.0, %v2057
        %2059 = vmatprep.mubr.f32.mxu0 0.0
        %2060 = vmatmul.mubr.f32.gmra.mrb[0].mxu0 %v630
        %v2061 = vpop.f32.mrb[0].mxu0
        %v2062 = vadd.f32 0.0, %v2061
        %v2063 = vpop.f32.mrb[0].mxu0
        %v2064 = vadd.f32 0.0, %v2063
        %2065 = vmatprep.mubr.f32.mxu0 0.0
        %2066 = vmatmul.mubr.f32.gmra.mrb[0].mxu0 %v633
        %v2067 = vpop.f32.mrb[0].mxu0
        %v2068 = vadd.f32 0.0, %v2067
        %v2069 = vpop.f32.mrb[0].mxu0
        %v2070 = vadd.f32 0.0, %v2069
        %2071 = vmatprep.mubr.f32.mxu0 0.0
        %2072 = vmatmul.mubr.f32.gmra.mrb[0].mxu0 %v636
        %v2073 = vpop.f32.mrb[0].mxu0
        %v2074 = vadd.f32 0.0, %v2073
        %v2075 = vpop.f32.mrb[0].mxu0
        %v2076 = vadd.f32 0.0, %v2075
        %2077 = vmatprep.mubr.f32.mxu0 0.0
        %2078 = vmatmul.mubr.f32.gmra.mrb[0].mxu0 %v639
        %v2079 = vpop.f32.mrb[0].mxu0
        %v2080 = vadd.f32 0.0, %v2079
        %v2081 = vpop.f32.mrb[0].mxu0
        %v2082 = vadd.f32 0.0, %v2081
        %2083 = vmatprep.mubr.f32.mxu0 0.0
        %2084 = vmatmul.mubr.f32.gmra.mrb[0].mxu0 %v642
        %v2085 = vpop.f32.mrb[0].mxu0
        %v2086 = vadd.f32 0.0, %v2085
        %v2087 = vpop.f32.mrb[0].mxu0
        %v2088 = vadd.f32 0.0, %v2087
        %2089 = vmatprep.mubr.f32.mxu0 0.0
        %2090 = vmatmul.mubr.f32.gmra.mrb[0].mxu0 %v645
        %v2091 = vpop.f32.mrb[0].mxu0
        %v2092 = vadd.f32 0.0, %v2091
        %v2093 = vpop.f32.mrb[0].mxu0
        %v2094 = vadd.f32 0.0, %v2093
        %2095 = vmatprep.mubr.f32.mxu0 0.0
        %2096 = vmatmul.mubr.f32.gmra.mrb[0].mxu0 %v1622
        %v2097 = vpop.f32.mrb[0].mxu0
        %v2098 = vadd.f32 0.0, %v2097
        %v2099 = vpop.f32.mrb[0].mxu0
        %v2100 = vadd.f32 0.0, %v2099
        %2101 = vdwg.mxu0
        %v2102 = vadd.f32 %v1205, %v1703
        %v2103 = vadd.f32 %v1207, %v1705
        %v2104 = vadd.f32 %v1438, %v1936
        %v2105 = vadd.f32 %v1440, %v1938
        %v2106 = vadd.f32 %v1211, %v1709
        %v2107 = vadd.f32 %v1213, %v1711
        %v2108 = vadd.f32 %v1444, %v1942
        %v2109 = vadd.f32 %v1446, %v1944
        %v2110 = vadd.f32 %v1217, %v1715
        %v2111 = vadd.f32 %v1219, %v1717
        %v2112 = vadd.f32 %v1450, %v1948
        %v2113 = vadd.f32 %v1452, %v1950
        %v2114 = vadd.f32 %v1223, %v1721
        %v2115 = vadd.f32 %v1225, %v1723
        %v2116 = vadd.f32 %v1456, %v1954
        %v2117 = vadd.f32 %v1458, %v1956
        %v2118 = vadd.f32 %v1229, %v1727
        %v2119 = vadd.f32 %v1231, %v1729
        %v2120 = vadd.f32 %v1462, %v1960
        %v2121 = vadd.f32 %v1464, %v1962
        %v2122 = vadd.f32 %v1235, %v1733
        %v2123 = vadd.f32 %v1237, %v1735
        %v2124 = vadd.f32 %v1468, %v1966
        %v2125 = vadd.f32 %v1470, %v1968
        %v2126 = vadd.f32 %v1241, %v1739
        %v2127 = vadd.f32 %v1243, %v1741
        %v2128 = vadd.f32 %v1474, %v1972
        %v2129 = vadd.f32 %v1476, %v1974
        %v2130 = vadd.f32 %v1247, %v1745
        %v2131 = vadd.f32 %v1249, %v1747
        %v2132 = vadd.f32 %v1480, %v1978
        %v2133 = vadd.f32 %v1482, %v1980
        %v2134 = vadd.f32 %v1253, %v1751
        %v2135 = vadd.f32 %v1255, %v1753
        %v2136 = vadd.f32 %v1486, %v1984
        %v2137 = vadd.f32 %v1488, %v1986
        %v2138 = vadd.f32 %v1259, %v1757
        %v2139 = vadd.f32 %v1261, %v1759
        %v2140 = vadd.f32 %v1492, %v1990
        %v2141 = vadd.f32 %v1494, %v1992
        %v2142 = vadd.f32 %v1265, %v1763
        %v2143 = vadd.f32 %v1267, %v1765
        %v2144 = vadd.f32 %v1498, %v1996
        %v2145 = vadd.f32 %v1500, %v1998
        %v2146 = vadd.f32 %v1271, %v1769
        %v2147 = vadd.f32 %v1273, %v1771
        %v2148 = vadd.f32 %v1504, %v2002
        %v2149 = vadd.f32 %v1506, %v2004
        %v2150 = vadd.f32 %v1277, %v1775
        %v2151 = vadd.f32 %v1279, %v1777
        %v2152 = vadd.f32 %v1510, %v2008
        %v2153 = vadd.f32 %v1512, %v2010
        %v2154 = vadd.f32 %v1283, %v1781
        %v2155 = vadd.f32 %v1285, %v1783
        %v2156 = vadd.f32 %v1516, %v2014
        %v2157 = vadd.f32 %v1518, %v2016
        %v2158 = vadd.f32 %v1289, %v1787
        %v2159 = vadd.f32 %v1291, %v1789
        %v2160 = vadd.f32 %v1522, %v2020
        %v2161 = vadd.f32 %v1524, %v2022
        %v2162 = vadd.f32 %v1295, %v1793
        %v2163 = vadd.f32 %v1297, %v1795
        %v2164 = vadd.f32 %v1528, %v2026
        %v2165 = vadd.f32 %v1530, %v2028
        %v2166 = vadd.f32 %v1301, %v1799
        %v2167 = vadd.f32 %v1303, %v1801
        %v2168 = vadd.f32 %v1534, %v2032
        %v2169 = vadd.f32 %v1536, %v2034
        %v2170 = vadd.f32 %v1307, %v1805
        %v2171 = vadd.f32 %v1309, %v1807
        %v2172 = vadd.f32 %v1540, %v2038
        %v2173 = vadd.f32 %v1542, %v2040
        %v2174 = vadd.f32 %v1313, %v1811
        %v2175 = vadd.f32 %v1315, %v1813
        %v2176 = vadd.f32 %v1546, %v2044
        %v2177 = vadd.f32 %v1548, %v2046
        %v2178 = vadd.f32 %v1319, %v1817
        %v2179 = vadd.f32 %v1321, %v1819
        %v2180 = vadd.f32 %v1552, %v2050
        %v2181 = vadd.f32 %v1554, %v2052
        %v2182 = vadd.f32 %v1325, %v1823
        %v2183 = vadd.f32 %v1327, %v1825
        %v2184 = vadd.f32 %v1558, %v2056
        %v2185 = vadd.f32 %v1560, %v2058
        %v2186 = vadd.f32 %v1331, %v1829
        %v2187 = vadd.f32 %v1333, %v1831
        %v2188 = vadd.f32 %v1564, %v2062
        %v2189 = vadd.f32 %v1566, %v2064
        %v2190 = vadd.f32 %v1337, %v1835
        %v2191 = vadd.f32 %v1339, %v1837
        %v2192 = vadd.f32 %v1570, %v2068
        %v2193 = vadd.f32 %v1572, %v2070
        %v2194 = vadd.f32 %v1343, %v1841
        %v2195 = vadd.f32 %v1345, %v1843
        %v2196 = vadd.f32 %v1576, %v2074
        %v2197 = vadd.f32 %v1578, %v2076
        %v2198 = vadd.f32 %v1349, %v1847
        %v2199 = vadd.f32 %v1351, %v1849
        %v2200 = vadd.f32 %v1582, %v2080
        %v2201 = vadd.f32 %v1584, %v2082
        %v2202 = vadd.f32 %v1355, %v1853
        %v2203 = vadd.f32 %v1357, %v1855
        %v2204 = vadd.f32 %v1588, %v2086
        %v2205 = vadd.f32 %v1590, %v2088
        %v2206 = vadd.f32 %v1361, %v1859
        %v2207 = vadd.f32 %v1363, %v1861
        %v2208 = vadd.f32 %v1594, %v2092
        %v2209 = vadd.f32 %v1596, %v2094
        %v2210 = vadd.f32 %v1367, %v1865
        %v2211 = vadd.f32 %v1369, %v1867
        %v2212 = vadd.f32 %v1600, %v2098
        %v2213 = vadd.f32 %v1602, %v2100
        %s2214 = scalar_lea.vmem [#allocation3], 384
        %v2215 = vld [vmem:[%s2214] sm:$0xff]
        %v2216 = vld [vmem:[%s2214 + $0x8] sm:$0xff]
        %v2217 = vld [vmem:[%s2214 + $0x10] sm:$0xff]
        %v2218 = vld [vmem:[%s2214 + $0x18] sm:$0xff]
        %v2219 = vld [vmem:[%s2214 + $0x20] sm:$0xff]
        %v2220 = vld [vmem:[%s2214 + $0x28] sm:$0xff]
        %v2221 = vld [vmem:[%s2214 + $0x30] sm:$0xff]
        %v2222 = vld [vmem:[%s2214 + $0x38] sm:$0xff]
        %v2223 = vld [vmem:[%s2214 + $0x40] sm:$0xff]
        %v2224 = vld [vmem:[%s2214 + $0x48] sm:$0xff]
        %v2225 = vld [vmem:[%s2214 + $0x50] sm:$0xff]
        %v2226 = vld [vmem:[%s2214 + $0x58] sm:$0xff]
        %v2227 = vld [vmem:[%s2214 + $0x60] sm:$0xf]
        %v2228 = vld [vmem:[%s2214 + $0x68] sm:$0xf]
        %v2229 = vld [vmem:[%s2214 + $0x70] sm:$0xf]
        %v2230 = vld [vmem:[%s2214 + $0x78] sm:$0xf]
        %v2232 = vsel %vm647, %v2227, 0
        %v2235 = vsel %vm647, %v2228, 0
        %v2238 = vsel %vm647, %v2229, 0
        %v2241 = vsel %vm647, %v2230, 0
        %2243 = vmatprep.subr.mxu0 %v2216
        %2244 = vmatpush1.msra.mxu0 %v2215
        %2245 = vmatprep.subr.mxu0 %v2220
        %2246 = vmatpush1.msra.mxu0 %v2219
        %2247 = vmatprep.subr.mxu0 %v2224
        %2248 = vmatpush1.msra.mxu0 %v2223
        %2249 = vmatprep.subr.mxu0 %v2235
        %2250 = vmatpush1.msra.mxu0 %v2232
        %2251 = vmatprep.subr.mxu0 0.0
        %2252 = vmatpush1.msra.mxu0 0.0
        %2253 = vmatprep.subr.mxu0 0.0
        %2254 = vmatpush1.msra.mxu0 0.0
        %2255 = vmatprep.subr.mxu0 0.0
        %2256 = vmatpush1.msra.mxu0 0.0
        %2257 = vmatprep.subr.mxu0 0.0
        %2258 = vmatpush1.msra.mxu0 0.0
        %2259 = vmatprep.subr.mxu0 0.0
        %2260 = vmatpush1.msra.mxu0 0.0
        %2261 = vmatprep.subr.mxu0 0.0
        %2262 = vmatpush1.msra.mxu0 0.0
        %2263 = vmatprep.subr.mxu0 0.0
        %2264 = vmatpush1.msra.mxu0 0.0
        %2265 = vmatprep.subr.mxu0 0.0
        %2266 = vmatpush1.msra.mxu0 0.0
        %2267 = vmatprep.subr.mxu0 0.0
        %2268 = vmatpush1.msra.mxu0 0.0
        %2269 = vmatprep.subr.mxu0 0.0
        %2270 = vmatpush1.msra.mxu0 0.0
        %2271 = vmatprep.subr.mxu0 0.0
        %2272 = vmatpush1.msra.mxu0 0.0
        %2273 = vmatprep.subr.mxu0 0.0
        %2274 = vmatpush1.msra.mxu0 0.0
        %2275 = vmatprep.subr.mxu0 0.0
        %2276 = vmatpush1.msra.mxu0 0.0
        %2277 = vmatprep.subr.mxu0 0.0
        %2278 = vmatpush1.msra.mxu0 0.0
        %2279 = vmatprep.subr.mxu0 0.0
        %2280 = vmatpush1.msra.mxu0 0.0
        %2281 = vmatprep.subr.mxu0 0.0
        %2282 = vmatpush1.msra.mxu0 0.0
        %2283 = vmatprep.subr.mxu0 0.0
        %2284 = vmatpush1.msra.mxu0 0.0
        %2285 = vmatprep.subr.mxu0 0.0
        %2286 = vmatpush1.msra.mxu0 0.0
        %2287 = vmatprep.subr.mxu0 0.0
        %2288 = vmatpush1.msra.mxu0 0.0
        %2289 = vmatprep.subr.mxu0 0.0
        %2290 = vmatpush1.msra.mxu0 0.0
        %2291 = vmatprep.subr.mxu0 0.0
        %2292 = vmatpush1.msra.mxu0 0.0
        %2293 = vmatprep.subr.mxu0 0.0
        %2294 = vmatpush1.msra.mxu0 0.0
        %2295 = vmatprep.subr.mxu0 0.0
        %2296 = vmatpush1.msra.mxu0 0.0
        %2297 = vmatprep.subr.mxu0 0.0
        %2298 = vmatpush1.msra.mxu0 0.0
        %2299 = vmatprep.subr.mxu0 0.0
        %2300 = vmatpush1.msra.mxu0 0.0
        %2301 = vmatprep.subr.mxu0 0.0
        %2302 = vmatpush1.msra.mxu0 0.0
        %2303 = vmatprep.subr.mxu0 0.0
        %2304 = vmatpush1.msra.mxu0 0.0
        %2305 = vmatprep.subr.mxu0 0.0
        %2306 = vmatpush1.msra.mxu0 0.0
        %2307 = vmatprep.mubr.f32.mxu0 0.0
        %2308 = vmatmul.mubr.f32.gmra.mrb[0].mxu0 %v570
        %v2309 = vpop.f32.mrb[0].mxu0
        %v2310 = vadd.f32 0.0, %v2309
        %v2311 = vpop.f32.mrb[0].mxu0
        %v2312 = vadd.f32 0.0, %v2311
        %2313 = vmatprep.mubr.f32.mxu0 0.0
        %2314 = vmatmul.mubr.f32.gmra.mrb[0].mxu0 %v573
        %v2315 = vpop.f32.mrb[0].mxu0
        %v2316 = vadd.f32 0.0, %v2315
        %v2317 = vpop.f32.mrb[0].mxu0
        %v2318 = vadd.f32 0.0, %v2317
        %2319 = vmatprep.mubr.f32.mxu0 0.0
        %2320 = vmatmul.mubr.f32.gmra.mrb[0].mxu0 %v576
        %v2321 = vpop.f32.mrb[0].mxu0
        %v2322 = vadd.f32 0.0, %v2321
        %v2323 = vpop.f32.mrb[0].mxu0
        %v2324 = vadd.f32 0.0, %v2323
        %2325 = vmatprep.mubr.f32.mxu0 0.0
        %2326 = vmatmul.mubr.f32.gmra.mrb[0].mxu0 %v579
        %v2327 = vpop.f32.mrb[0].mxu0
        %v2328 = vadd.f32 0.0, %v2327
        %v2329 = vpop.f32.mrb[0].mxu0
        %v2330 = vadd.f32 0.0, %v2329
        %2331 = vmatprep.mubr.f32.mxu0 0.0
        %2332 = vmatmul.mubr.f32.gmra.mrb[0].mxu0 %v582
        %v2333 = vpop.f32.mrb[0].mxu0
        %v2334 = vadd.f32 0.0, %v2333
        %v2335 = vpop.f32.mrb[0].mxu0
        %v2336 = vadd.f32 0.0, %v2335
        %2337 = vmatprep.mubr.f32.mxu0 0.0
        %2338 = vmatmul.mubr.f32.gmra.mrb[0].mxu0 %v585
        %v2339 = vpop.f32.mrb[0].mxu0
        %v2340 = vadd.f32 0.0, %v2339
        %v2341 = vpop.f32.mrb[0].mxu0
        %v2342 = vadd.f32 0.0, %v2341
        %2343 = vmatprep.mubr.f32.mxu0 0.0
        %2344 = vmatmul.mubr.f32.gmra.mrb[0].mxu0 %v588
        %v2345 = vpop.f32.mrb[0].mxu0
        %v2346 = vadd.f32 0.0, %v2345
        %v2347 = vpop.f32.mrb[0].mxu0
        %v2348 = vadd.f32 0.0, %v2347
        %2349 = vmatprep.mubr.f32.mxu0 0.0
        %2350 = vmatmul.mubr.f32.gmra.mrb[0].mxu0 %v591
        %v2351 = vpop.f32.mrb[0].mxu0
        %v2352 = vadd.f32 0.0, %v2351
        %v2353 = vpop.f32.mrb[0].mxu0
        %v2354 = vadd.f32 0.0, %v2353
        %2355 = vmatprep.mubr.f32.mxu0 0.0
        %2356 = vmatmul.mubr.f32.gmra.mrb[0].mxu0 %v594
        %v2357 = vpop.f32.mrb[0].mxu0
        %v2358 = vadd.f32 0.0, %v2357
        %v2359 = vpop.f32.mrb[0].mxu0
        %v2360 = vadd.f32 0.0, %v2359
        %2361 = vmatprep.mubr.f32.mxu0 0.0
        %2362 = vmatmul.mubr.f32.gmra.mrb[0].mxu0 %v597
        %v2363 = vpop.f32.mrb[0].mxu0
        %v2364 = vadd.f32 0.0, %v2363
        %v2365 = vpop.f32.mrb[0].mxu0
        %v2366 = vadd.f32 0.0, %v2365
        %2367 = vmatprep.mubr.f32.mxu0 0.0
        %2368 = vmatmul.mubr.f32.gmra.mrb[0].mxu0 %v600
        %v2369 = vpop.f32.mrb[0].mxu0
        %v2370 = vadd.f32 0.0, %v2369
        %v2371 = vpop.f32.mrb[0].mxu0
        %v2372 = vadd.f32 0.0, %v2371
        %2373 = vmatprep.mubr.f32.mxu0 0.0
        %2374 = vmatmul.mubr.f32.gmra.mrb[0].mxu0 %v603
        %v2375 = vpop.f32.mrb[0].mxu0
        %v2376 = vadd.f32 0.0, %v2375
        %v2377 = vpop.f32.mrb[0].mxu0
        %v2378 = vadd.f32 0.0, %v2377
        %2379 = vmatprep.mubr.f32.mxu0 0.0
        %2380 = vmatmul.mubr.f32.gmra.mrb[0].mxu0 %v606
        %v2381 = vpop.f32.mrb[0].mxu0
        %v2382 = vadd.f32 0.0, %v2381
        %v2383 = vpop.f32.mrb[0].mxu0
        %v2384 = vadd.f32 0.0, %v2383
        %2385 = vmatprep.mubr.f32.mxu0 0.0
        %2386 = vmatmul.mubr.f32.gmra.mrb[0].mxu0 %v609
        %v2387 = vpop.f32.mrb[0].mxu0
        %v2388 = vadd.f32 0.0, %v2387
        %v2389 = vpop.f32.mrb[0].mxu0
        %v2390 = vadd.f32 0.0, %v2389
        %2391 = vmatprep.mubr.f32.mxu0 0.0
        %2392 = vmatmul.mubr.f32.gmra.mrb[0].mxu0 %v612
        %v2393 = vpop.f32.mrb[0].mxu0
        %v2394 = vadd.f32 0.0, %v2393
        %v2395 = vpop.f32.mrb[0].mxu0
        %v2396 = vadd.f32 0.0, %v2395
        %2397 = vmatprep.mubr.f32.mxu0 0.0
        %2398 = vmatmul.mubr.f32.gmra.mrb[0].mxu0 %v615
        %v2399 = vpop.f32.mrb[0].mxu0
        %v2400 = vadd.f32 0.0, %v2399
        %v2401 = vpop.f32.mrb[0].mxu0
        %v2402 = vadd.f32 0.0, %v2401
        %2403 = vmatprep.mubr.f32.mxu0 0.0
        %2404 = vmatmul.mubr.f32.gmra.mrb[0].mxu0 %v618
        %v2405 = vpop.f32.mrb[0].mxu0
        %v2406 = vadd.f32 0.0, %v2405
        %v2407 = vpop.f32.mrb[0].mxu0
        %v2408 = vadd.f32 0.0, %v2407
        %2409 = vmatprep.mubr.f32.mxu0 0.0
        %2410 = vmatmul.mubr.f32.gmra.mrb[0].mxu0 %v621
        %v2411 = vpop.f32.mrb[0].mxu0
        %v2412 = vadd.f32 0.0, %v2411
        %v2413 = vpop.f32.mrb[0].mxu0
        %v2414 = vadd.f32 0.0, %v2413
        %2415 = vmatprep.mubr.f32.mxu0 0.0
        %2416 = vmatmul.mubr.f32.gmra.mrb[0].mxu0 %v624
        %v2417 = vpop.f32.mrb[0].mxu0
        %v2418 = vadd.f32 0.0, %v2417
        %v2419 = vpop.f32.mrb[0].mxu0
        %v2420 = vadd.f32 0.0, %v2419
        %2421 = vmatprep.mubr.f32.mxu0 0.0
        %2422 = vmatmul.mubr.f32.gmra.mrb[0].mxu0 %v627
        %v2423 = vpop.f32.mrb[0].mxu0
        %v2424 = vadd.f32 0.0, %v2423
        %v2425 = vpop.f32.mrb[0].mxu0
        %v2426 = vadd.f32 0.0, %v2425
        %2427 = vmatprep.mubr.f32.mxu0 0.0
        %2428 = vmatmul.mubr.f32.gmra.mrb[0].mxu0 %v630
        %v2429 = vpop.f32.mrb[0].mxu0
        %v2430 = vadd.f32 0.0, %v2429
        %v2431 = vpop.f32.mrb[0].mxu0
        %v2432 = vadd.f32 0.0, %v2431
        %2433 = vmatprep.mubr.f32.mxu0 0.0
        %2434 = vmatmul.mubr.f32.gmra.mrb[0].mxu0 %v633
        %v2435 = vpop.f32.mrb[0].mxu0
        %v2436 = vadd.f32 0.0, %v2435
        %v2437 = vpop.f32.mrb[0].mxu0
        %v2438 = vadd.f32 0.0, %v2437
        %2439 = vmatprep.mubr.f32.mxu0 0.0
        %2440 = vmatmul.mubr.f32.gmra.mrb[0].mxu0 %v636
        %v2441 = vpop.f32.mrb[0].mxu0
        %v2442 = vadd.f32 0.0, %v2441
        %v2443 = vpop.f32.mrb[0].mxu0
        %v2444 = vadd.f32 0.0, %v2443
        %2445 = vmatprep.mubr.f32.mxu0 0.0
        %2446 = vmatmul.mubr.f32.gmra.mrb[0].mxu0 %v639
        %v2447 = vpop.f32.mrb[0].mxu0
        %v2448 = vadd.f32 0.0, %v2447
        %v2449 = vpop.f32.mrb[0].mxu0
        %v2450 = vadd.f32 0.0, %v2449
        %2451 = vmatprep.mubr.f32.mxu0 0.0
        %2452 = vmatmul.mubr.f32.gmra.mrb[0].mxu0 %v642
        %v2453 = vpop.f32.mrb[0].mxu0
        %v2454 = vadd.f32 0.0, %v2453
        %v2455 = vpop.f32.mrb[0].mxu0
        %v2456 = vadd.f32 0.0, %v2455
        %2457 = vmatprep.mubr.f32.mxu0 0.0
        %2458 = vmatmul.mubr.f32.gmra.mrb[0].mxu0 %v645
        %v2459 = vpop.f32.mrb[0].mxu0
        %v2460 = vadd.f32 0.0, %v2459
        %v2461 = vpop.f32.mrb[0].mxu0
        %v2462 = vadd.f32 0.0, %v2461
        %2463 = vmatprep.mubr.f32.mxu0 0.0
        %2464 = vmatmul.mubr.f32.gmra.mrb[0].mxu0 %v1622
        %v2465 = vpop.f32.mrb[0].mxu0
        %v2466 = vadd.f32 0.0, %v2465
        %v2467 = vpop.f32.mrb[0].mxu0
        %v2468 = vadd.f32 0.0, %v2467
        %2469 = vmatprep.mubr.f32.mxu0 0.0
        %2470 = vmatmul.mubr.f32.gmra.mrb[0].mxu0 %v564
        %v2471 = vpop.f32.mrb[0].mxu0
        %v2472 = vadd.f32 0.0, %v2471
        %v2473 = vpop.f32.mrb[0].mxu0
        %v2474 = vadd.f32 0.0, %v2473
        %2475 = vdwg.mxu0
        %2476 = vmatprep.subr.mxu0 %v2218
        %2477 = vmatpush1.msra.mxu0 %v2217
        %2478 = vmatprep.subr.mxu0 %v2222
        %2479 = vmatpush1.msra.mxu0 %v2221
        %2480 = vmatprep.subr.mxu0 %v2226
        %2481 = vmatpush1.msra.mxu0 %v2225
        %2482 = vmatprep.subr.mxu0 %v2241
        %2483 = vmatpush1.msra.mxu0 %v2238
        %2484 = vmatprep.subr.mxu0 0.0
        %2485 = vmatpush1.msra.mxu0 0.0
        %2486 = vmatprep.subr.mxu0 0.0
        %2487 = vmatpush1.msra.mxu0 0.0
        %2488 = vmatprep.subr.mxu0 0.0
        %2489 = vmatpush1.msra.mxu0 0.0
        %2490 = vmatprep.subr.mxu0 0.0
        %2491 = vmatpush1.msra.mxu0 0.0
        %2492 = vmatprep.subr.mxu0 0.0
        %2493 = vmatpush1.msra.mxu0 0.0
        %2494 = vmatprep.subr.mxu0 0.0
        %2495 = vmatpush1.msra.mxu0 0.0
        %2496 = vmatprep.subr.mxu0 0.0
        %2497 = vmatpush1.msra.mxu0 0.0
        %2498 = vmatprep.subr.mxu0 0.0
        %2499 = vmatpush1.msra.mxu0 0.0
        %2500 = vmatprep.subr.mxu0 0.0
        %2501 = vmatpush1.msra.mxu0 0.0
        %2502 = vmatprep.subr.mxu0 0.0
        %2503 = vmatpush1.msra.mxu0 0.0
        %2504 = vmatprep.subr.mxu0 0.0
        %2505 = vmatpush1.msra.mxu0 0.0
        %2506 = vmatprep.subr.mxu0 0.0
        %2507 = vmatpush1.msra.mxu0 0.0
        %2508 = vmatprep.subr.mxu0 0.0
        %2509 = vmatpush1.msra.mxu0 0.0
        %2510 = vmatprep.subr.mxu0 0.0
        %2511 = vmatpush1.msra.mxu0 0.0
        %2512 = vmatprep.subr.mxu0 0.0
        %2513 = vmatpush1.msra.mxu0 0.0
        %2514 = vmatprep.subr.mxu0 0.0
        %2515 = vmatpush1.msra.mxu0 0.0
        %2516 = vmatprep.subr.mxu0 0.0
        %2517 = vmatpush1.msra.mxu0 0.0
        %2518 = vmatprep.subr.mxu0 0.0
        %2519 = vmatpush1.msra.mxu0 0.0
        %2520 = vmatprep.subr.mxu0 0.0
        %2521 = vmatpush1.msra.mxu0 0.0
        %2522 = vmatprep.subr.mxu0 0.0
        %2523 = vmatpush1.msra.mxu0 0.0
        %2524 = vmatprep.subr.mxu0 0.0
        %2525 = vmatpush1.msra.mxu0 0.0
        %2526 = vmatprep.subr.mxu0 0.0
        %2527 = vmatpush1.msra.mxu0 0.0
        %2528 = vmatprep.subr.mxu0 0.0
        %2529 = vmatpush1.msra.mxu0 0.0
        %2530 = vmatprep.subr.mxu0 0.0
        %2531 = vmatpush1.msra.mxu0 0.0
        %2532 = vmatprep.subr.mxu0 0.0
        %2533 = vmatpush1.msra.mxu0 0.0
        %2534 = vmatprep.subr.mxu0 0.0
        %2535 = vmatpush1.msra.mxu0 0.0
        %2536 = vmatprep.subr.mxu0 0.0
        %2537 = vmatpush1.msra.mxu0 0.0
        %2538 = vmatprep.subr.mxu0 0.0
        %2539 = vmatpush1.msra.mxu0 0.0
        %2540 = vmatprep.mubr.f32.mxu0 0.0
        %2541 = vmatmul.mubr.f32.gmra.mrb[0].mxu0 %v570
        %v2542 = vpop.f32.mrb[0].mxu0
        %v2543 = vadd.f32 0.0, %v2542
        %v2544 = vpop.f32.mrb[0].mxu0
        %v2545 = vadd.f32 0.0, %v2544
        %2546 = vmatprep.mubr.f32.mxu0 0.0
        %2547 = vmatmul.mubr.f32.gmra.mrb[0].mxu0 %v573
        %v2548 = vpop.f32.mrb[0].mxu0
        %v2549 = vadd.f32 0.0, %v2548
        %v2550 = vpop.f32.mrb[0].mxu0
        %v2551 = vadd.f32 0.0, %v2550
        %2552 = vmatprep.mubr.f32.mxu0 0.0
        %2553 = vmatmul.mubr.f32.gmra.mrb[0].mxu0 %v576
        %v2554 = vpop.f32.mrb[0].mxu0
        %v2555 = vadd.f32 0.0, %v2554
        %v2556 = vpop.f32.mrb[0].mxu0
        %v2557 = vadd.f32 0.0, %v2556
        %2558 = vmatprep.mubr.f32.mxu0 0.0
        %2559 = vmatmul.mubr.f32.gmra.mrb[0].mxu0 %v579
        %v2560 = vpop.f32.mrb[0].mxu0
        %v2561 = vadd.f32 0.0, %v2560
        %v2562 = vpop.f32.mrb[0].mxu0
        %v2563 = vadd.f32 0.0, %v2562
        %2564 = vmatprep.mubr.f32.mxu0 0.0
        %2565 = vmatmul.mubr.f32.gmra.mrb[0].mxu0 %v582
        %v2566 = vpop.f32.mrb[0].mxu0
        %v2567 = vadd.f32 0.0, %v2566
        %v2568 = vpop.f32.mrb[0].mxu0
        %v2569 = vadd.f32 0.0, %v2568
        %2570 = vmatprep.mubr.f32.mxu0 0.0
        %2571 = vmatmul.mubr.f32.gmra.mrb[0].mxu0 %v585
        %v2572 = vpop.f32.mrb[0].mxu0
        %v2573 = vadd.f32 0.0, %v2572
        %v2574 = vpop.f32.mrb[0].mxu0
        %v2575 = vadd.f32 0.0, %v2574
        %2576 = vmatprep.mubr.f32.mxu0 0.0
        %2577 = vmatmul.mubr.f32.gmra.mrb[0].mxu0 %v588
        %v2578 = vpop.f32.mrb[0].mxu0
        %v2579 = vadd.f32 0.0, %v2578
        %v2580 = vpop.f32.mrb[0].mxu0
        %v2581 = vadd.f32 0.0, %v2580
        %2582 = vmatprep.mubr.f32.mxu0 0.0
        %2583 = vmatmul.mubr.f32.gmra.mrb[0].mxu0 %v591
        %v2584 = vpop.f32.mrb[0].mxu0
        %v2585 = vadd.f32 0.0, %v2584
        %v2586 = vpop.f32.mrb[0].mxu0
        %v2587 = vadd.f32 0.0, %v2586
        %2588 = vmatprep.mubr.f32.mxu0 0.0
        %2589 = vmatmul.mubr.f32.gmra.mrb[0].mxu0 %v594
        %v2590 = vpop.f32.mrb[0].mxu0
        %v2591 = vadd.f32 0.0, %v2590
        %v2592 = vpop.f32.mrb[0].mxu0
        %v2593 = vadd.f32 0.0, %v2592
        %2594 = vmatprep.mubr.f32.mxu0 0.0
        %2595 = vmatmul.mubr.f32.gmra.mrb[0].mxu0 %v597
        %v2596 = vpop.f32.mrb[0].mxu0
        %v2597 = vadd.f32 0.0, %v2596
        %v2598 = vpop.f32.mrb[0].mxu0
        %v2599 = vadd.f32 0.0, %v2598
        %2600 = vmatprep.mubr.f32.mxu0 0.0
        %2601 = vmatmul.mubr.f32.gmra.mrb[0].mxu0 %v600
        %v2602 = vpop.f32.mrb[0].mxu0
        %v2603 = vadd.f32 0.0, %v2602
        %v2604 = vpop.f32.mrb[0].mxu0
        %v2605 = vadd.f32 0.0, %v2604
        %2606 = vmatprep.mubr.f32.mxu0 0.0
        %2607 = vmatmul.mubr.f32.gmra.mrb[0].mxu0 %v603
        %v2608 = vpop.f32.mrb[0].mxu0
        %v2609 = vadd.f32 0.0, %v2608
        %v2610 = vpop.f32.mrb[0].mxu0
        %v2611 = vadd.f32 0.0, %v2610
        %2612 = vmatprep.mubr.f32.mxu0 0.0
        %2613 = vmatmul.mubr.f32.gmra.mrb[0].mxu0 %v606
        %v2614 = vpop.f32.mrb[0].mxu0
        %v2615 = vadd.f32 0.0, %v2614
        %v2616 = vpop.f32.mrb[0].mxu0
        %v2617 = vadd.f32 0.0, %v2616
        %2618 = vmatprep.mubr.f32.mxu0 0.0
        %2619 = vmatmul.mubr.f32.gmra.mrb[0].mxu0 %v609
        %v2620 = vpop.f32.mrb[0].mxu0
        %v2621 = vadd.f32 0.0, %v2620
        %v2622 = vpop.f32.mrb[0].mxu0
        %v2623 = vadd.f32 0.0, %v2622
        %2624 = vmatprep.mubr.f32.mxu0 0.0
        %2625 = vmatmul.mubr.f32.gmra.mrb[0].mxu0 %v612
        %v2626 = vpop.f32.mrb[0].mxu0
        %v2627 = vadd.f32 0.0, %v2626
        %v2628 = vpop.f32.mrb[0].mxu0
        %v2629 = vadd.f32 0.0, %v2628
        %2630 = vmatprep.mubr.f32.mxu0 0.0
        %2631 = vmatmul.mubr.f32.gmra.mrb[0].mxu0 %v615
        %v2632 = vpop.f32.mrb[0].mxu0
        %v2633 = vadd.f32 0.0, %v2632
        %v2634 = vpop.f32.mrb[0].mxu0
        %v2635 = vadd.f32 0.0, %v2634
        %2636 = vmatprep.mubr.f32.mxu0 0.0
        %2637 = vmatmul.mubr.f32.gmra.mrb[0].mxu0 %v618
        %v2638 = vpop.f32.mrb[0].mxu0
        %v2639 = vadd.f32 0.0, %v2638
        %v2640 = vpop.f32.mrb[0].mxu0
        %v2641 = vadd.f32 0.0, %v2640
        %2642 = vmatprep.mubr.f32.mxu0 0.0
        %2643 = vmatmul.mubr.f32.gmra.mrb[0].mxu0 %v621
        %v2644 = vpop.f32.mrb[0].mxu0
        %v2645 = vadd.f32 0.0, %v2644
        %v2646 = vpop.f32.mrb[0].mxu0
        %v2647 = vadd.f32 0.0, %v2646
        %2648 = vmatprep.mubr.f32.mxu0 0.0
        %2649 = vmatmul.mubr.f32.gmra.mrb[0].mxu0 %v624
        %v2650 = vpop.f32.mrb[0].mxu0
        %v2651 = vadd.f32 0.0, %v2650
        %v2652 = vpop.f32.mrb[0].mxu0
        %v2653 = vadd.f32 0.0, %v2652
        %2654 = vmatprep.mubr.f32.mxu0 0.0
        %2655 = vmatmul.mubr.f32.gmra.mrb[0].mxu0 %v627
        %v2656 = vpop.f32.mrb[0].mxu0
        %v2657 = vadd.f32 0.0, %v2656
        %v2658 = vpop.f32.mrb[0].mxu0
        %v2659 = vadd.f32 0.0, %v2658
        %2660 = vmatprep.mubr.f32.mxu0 0.0
        %2661 = vmatmul.mubr.f32.gmra.mrb[0].mxu0 %v630
        %v2662 = vpop.f32.mrb[0].mxu0
        %v2663 = vadd.f32 0.0, %v2662
        %v2664 = vpop.f32.mrb[0].mxu0
        %v2665 = vadd.f32 0.0, %v2664
        %2666 = vmatprep.mubr.f32.mxu0 0.0
        %2667 = vmatmul.mubr.f32.gmra.mrb[0].mxu0 %v633
        %v2668 = vpop.f32.mrb[0].mxu0
        %v2669 = vadd.f32 0.0, %v2668
        %v2670 = vpop.f32.mrb[0].mxu0
        %v2671 = vadd.f32 0.0, %v2670
        %2672 = vmatprep.mubr.f32.mxu0 0.0
        %2673 = vmatmul.mubr.f32.gmra.mrb[0].mxu0 %v636
        %v2674 = vpop.f32.mrb[0].mxu0
        %v2675 = vadd.f32 0.0, %v2674
        %v2676 = vpop.f32.mrb[0].mxu0
        %v2677 = vadd.f32 0.0, %v2676
        %2678 = vmatprep.mubr.f32.mxu0 0.0
        %2679 = vmatmul.mubr.f32.gmra.mrb[0].mxu0 %v639
        %v2680 = vpop.f32.mrb[0].mxu0
        %v2681 = vadd.f32 0.0, %v2680
        %v2682 = vpop.f32.mrb[0].mxu0
        %v2683 = vadd.f32 0.0, %v2682
        %2684 = vmatprep.mubr.f32.mxu0 0.0
        %2685 = vmatmul.mubr.f32.gmra.mrb[0].mxu0 %v642
        %v2686 = vpop.f32.mrb[0].mxu0
        %v2687 = vadd.f32 0.0, %v2686
        %v2688 = vpop.f32.mrb[0].mxu0
        %v2689 = vadd.f32 0.0, %v2688
        %2690 = vmatprep.mubr.f32.mxu0 0.0
        %2691 = vmatmul.mubr.f32.gmra.mrb[0].mxu0 %v645
        %v2692 = vpop.f32.mrb[0].mxu0
        %v2693 = vadd.f32 0.0, %v2692
        %v2694 = vpop.f32.mrb[0].mxu0
        %v2695 = vadd.f32 0.0, %v2694
        %2696 = vmatprep.mubr.f32.mxu0 0.0
        %2697 = vmatmul.mubr.f32.gmra.mrb[0].mxu0 %v1622
        %v2698 = vpop.f32.mrb[0].mxu0
        %v2699 = vadd.f32 0.0, %v2698
        %v2700 = vpop.f32.mrb[0].mxu0
        %v2701 = vadd.f32 0.0, %v2700
        %2702 = vmatprep.mubr.f32.mxu0 0.0
        %2703 = vmatmul.mubr.f32.gmra.mrb[0].mxu0 %v564
        %v2704 = vpop.f32.mrb[0].mxu0
        %v2705 = vadd.f32 0.0, %v2704
        %v2706 = vpop.f32.mrb[0].mxu0
        %v2707 = vadd.f32 0.0, %v2706
        %2708 = vdwg.mxu0
        %v2709 = vadd.f32 %v2102, %v2310
        %v2710 = vadd.f32 %v2103, %v2312
        %v2711 = vadd.f32 %v2104, %v2543
        %v2712 = vadd.f32 %v2105, %v2545
        %v2713 = vadd.f32 %v2106, %v2316
        %v2714 = vadd.f32 %v2107, %v2318
        %v2715 = vadd.f32 %v2108, %v2549
        %v2716 = vadd.f32 %v2109, %v2551
        %v2717 = vadd.f32 %v2110, %v2322
        %v2718 = vadd.f32 %v2111, %v2324
        %v2719 = vadd.f32 %v2112, %v2555
        %v2720 = vadd.f32 %v2113, %v2557
        %v2721 = vadd.f32 %v2114, %v2328
        %v2722 = vadd.f32 %v2115, %v2330
        %v2723 = vadd.f32 %v2116, %v2561
        %v2724 = vadd.f32 %v2117, %v2563
        %v2725 = vadd.f32 %v2118, %v2334
        %v2726 = vadd.f32 %v2119, %v2336
        %v2727 = vadd.f32 %v2120, %v2567
        %v2728 = vadd.f32 %v2121, %v2569
        %v2729 = vadd.f32 %v2122, %v2340
        %v2730 = vadd.f32 %v2123, %v2342
        %v2731 = vadd.f32 %v2124, %v2573
        %v2732 = vadd.f32 %v2125, %v2575
        %v2733 = vadd.f32 %v2126, %v2346
        %v2734 = vadd.f32 %v2127, %v2348
        %v2735 = vadd.f32 %v2128, %v2579
        %v2736 = vadd.f32 %v2129, %v2581
        %v2737 = vadd.f32 %v2130, %v2352
        %v2738 = vadd.f32 %v2131, %v2354
        %v2739 = vadd.f32 %v2132, %v2585
        %v2740 = vadd.f32 %v2133, %v2587
        %v2741 = vadd.f32 %v2134, %v2358
        %v2742 = vadd.f32 %v2135, %v2360
        %v2743 = vadd.f32 %v2136, %v2591
        %v2744 = vadd.f32 %v2137, %v2593
        %v2745 = vadd.f32 %v2138, %v2364
        %v2746 = vadd.f32 %v2139, %v2366
        %v2747 = vadd.f32 %v2140, %v2597
        %v2748 = vadd.f32 %v2141, %v2599
        %v2749 = vadd.f32 %v2142, %v2370
        %v2750 = vadd.f32 %v2143, %v2372
        %v2751 = vadd.f32 %v2144, %v2603
        %v2752 = vadd.f32 %v2145, %v2605
        %v2753 = vadd.f32 %v2146, %v2376
        %v2754 = vadd.f32 %v2147, %v2378
        %v2755 = vadd.f32 %v2148, %v2609
        %v2756 = vadd.f32 %v2149, %v2611
        %v2757 = vadd.f32 %v2150, %v2382
        %v2758 = vadd.f32 %v2151, %v2384
        %v2759 = vadd.f32 %v2152, %v2615
        %v2760 = vadd.f32 %v2153, %v2617
        %v2761 = vadd.f32 %v2154, %v2388
        %v2762 = vadd.f32 %v2155, %v2390
        %v2763 = vadd.f32 %v2156, %v2621
        %v2764 = vadd.f32 %v2157, %v2623
        %v2765 = vadd.f32 %v2158, %v2394
        %v2766 = vadd.f32 %v2159, %v2396
        %v2767 = vadd.f32 %v2160, %v2627
        %v2768 = vadd.f32 %v2161, %v2629
        %v2769 = vadd.f32 %v2162, %v2400
        %v2770 = vadd.f32 %v2163, %v2402
        %v2771 = vadd.f32 %v2164, %v2633
        %v2772 = vadd.f32 %v2165, %v2635
        %v2773 = vadd.f32 %v2166, %v2406
        %v2774 = vadd.f32 %v2167, %v2408
        %v2775 = vadd.f32 %v2168, %v2639
        %v2776 = vadd.f32 %v2169, %v2641
        %v2777 = vadd.f32 %v2170, %v2412
        %v2778 = vadd.f32 %v2171, %v2414
        %v2779 = vadd.f32 %v2172, %v2645
        %v2780 = vadd.f32 %v2173, %v2647
        %v2781 = vadd.f32 %v2174, %v2418
        %v2782 = vadd.f32 %v2175, %v2420
        %v2783 = vadd.f32 %v2176, %v2651
        %v2784 = vadd.f32 %v2177, %v2653
        %v2785 = vadd.f32 %v2178, %v2424
        %v2786 = vadd.f32 %v2179, %v2426
        %v2787 = vadd.f32 %v2180, %v2657
        %v2788 = vadd.f32 %v2181, %v2659
        %v2789 = vadd.f32 %v2182, %v2430
        %v2790 = vadd.f32 %v2183, %v2432
        %v2791 = vadd.f32 %v2184, %v2663
        %v2792 = vadd.f32 %v2185, %v2665
        %v2793 = vadd.f32 %v2186, %v2436
        %v2794 = vadd.f32 %v2187, %v2438
        %v2795 = vadd.f32 %v2188, %v2669
        %v2796 = vadd.f32 %v2189, %v2671
        %v2797 = vadd.f32 %v2190, %v2442
        %v2798 = vadd.f32 %v2191, %v2444
        %v2799 = vadd.f32 %v2192, %v2675
        %v2800 = vadd.f32 %v2193, %v2677
        %v2801 = vadd.f32 %v2194, %v2448
        %v2802 = vadd.f32 %v2195, %v2450
        %v2803 = vadd.f32 %v2196, %v2681
        %v2804 = vadd.f32 %v2197, %v2683
        %v2805 = vadd.f32 %v2198, %v2454
        %v2806 = vadd.f32 %v2199, %v2456
        %v2807 = vadd.f32 %v2200, %v2687
        %v2808 = vadd.f32 %v2201, %v2689
        %v2809 = vadd.f32 %v2202, %v2460
        %v2810 = vadd.f32 %v2203, %v2462
        %v2811 = vadd.f32 %v2204, %v2693
        %v2812 = vadd.f32 %v2205, %v2695
        %v2813 = vadd.f32 %v2206, %v2466
        %v2814 = vadd.f32 %v2207, %v2468
        %v2815 = vadd.f32 %v2208, %v2699
        %v2816 = vadd.f32 %v2209, %v2701
        %v2817 = vadd.f32 %v2210, %v2472
        %v2818 = vadd.f32 %v2211, %v2474
        %v2819 = vadd.f32 %v2212, %v2705
        %v2820 = vadd.f32 %v2213, %v2707
        %s2821 = scalar_lea.vmem [#allocation3], 512
        %v2822 = vld [vmem:[%s2821] sm:$0xff]
        %v2823 = vld [vmem:[%s2821 + $0x8] sm:$0xff]
        %v2824 = vld [vmem:[%s2821 + $0x10] sm:$0xff]
        %v2825 = vld [vmem:[%s2821 + $0x18] sm:$0xff]
        %v2826 = vld [vmem:[%s2821 + $0x20] sm:$0xff]
        %v2827 = vld [vmem:[%s2821 + $0x28] sm:$0xff]
        %v2828 = vld [vmem:[%s2821 + $0x30] sm:$0xff]
        %v2829 = vld [vmem:[%s2821 + $0x38] sm:$0xff]
        %v2830 = vld [vmem:[%s2821 + $0x40] sm:$0xff]
        %v2831 = vld [vmem:[%s2821 + $0x48] sm:$0xff]
        %v2832 = vld [vmem:[%s2821 + $0x50] sm:$0xff]
        %v2833 = vld [vmem:[%s2821 + $0x58] sm:$0xff]
        %v2834 = vld [vmem:[%s2821 + $0x60] sm:$0xf]
        %v2835 = vld [vmem:[%s2821 + $0x68] sm:$0xf]
        %v2836 = vld [vmem:[%s2821 + $0x70] sm:$0xf]
        %v2837 = vld [vmem:[%s2821 + $0x78] sm:$0xf]
        %v2839 = vsel %vm647, %v2834, 0
        %v2842 = vsel %vm647, %v2835, 0
        %v2845 = vsel %vm647, %v2836, 0
        %v2848 = vsel %vm647, %v2837, 0
        %2850 = vmatprep.subr.mxu0 %v2823
        %2851 = vmatpush1.msra.mxu0 %v2822
        %2852 = vmatprep.subr.mxu0 %v2827
        %2853 = vmatpush1.msra.mxu0 %v2826
        %2854 = vmatprep.subr.mxu0 %v2831
        %2855 = vmatpush1.msra.mxu0 %v2830
        %2856 = vmatprep.subr.mxu0 %v2842
        %2857 = vmatpush1.msra.mxu0 %v2839
        %2858 = vmatprep.subr.mxu0 0.0
        %2859 = vmatpush1.msra.mxu0 0.0
        %2860 = vmatprep.subr.mxu0 0.0
        %2861 = vmatpush1.msra.mxu0 0.0
        %2862 = vmatprep.subr.mxu0 0.0
        %2863 = vmatpush1.msra.mxu0 0.0
        %2864 = vmatprep.subr.mxu0 0.0
        %2865 = vmatpush1.msra.mxu0 0.0
        %2866 = vmatprep.subr.mxu0 0.0
        %2867 = vmatpush1.msra.mxu0 0.0
        %2868 = vmatprep.subr.mxu0 0.0
        %2869 = vmatpush1.msra.mxu0 0.0
        %2870 = vmatprep.subr.mxu0 0.0
        %2871 = vmatpush1.msra.mxu0 0.0
        %2872 = vmatprep.subr.mxu0 0.0
        %2873 = vmatpush1.msra.mxu0 0.0
        %2874 = vmatprep.subr.mxu0 0.0
        %2875 = vmatpush1.msra.mxu0 0.0
        %2876 = vmatprep.subr.mxu0 0.0
        %2877 = vmatpush1.msra.mxu0 0.0
        %2878 = vmatprep.subr.mxu0 0.0
        %2879 = vmatpush1.msra.mxu0 0.0
        %2880 = vmatprep.subr.mxu0 0.0
        %2881 = vmatpush1.msra.mxu0 0.0
        %2882 = vmatprep.subr.mxu0 0.0
        %2883 = vmatpush1.msra.mxu0 0.0
        %2884 = vmatprep.subr.mxu0 0.0
        %2885 = vmatpush1.msra.mxu0 0.0
        %2886 = vmatprep.subr.mxu0 0.0
        %2887 = vmatpush1.msra.mxu0 0.0
        %2888 = vmatprep.subr.mxu0 0.0
        %2889 = vmatpush1.msra.mxu0 0.0
        %2890 = vmatprep.subr.mxu0 0.0
        %2891 = vmatpush1.msra.mxu0 0.0
        %2892 = vmatprep.subr.mxu0 0.0
        %2893 = vmatpush1.msra.mxu0 0.0
        %2894 = vmatprep.subr.mxu0 0.0
        %2895 = vmatpush1.msra.mxu0 0.0
        %2896 = vmatprep.subr.mxu0 0.0
        %2897 = vmatpush1.msra.mxu0 0.0
        %2898 = vmatprep.subr.mxu0 0.0
        %2899 = vmatpush1.msra.mxu0 0.0
        %2900 = vmatprep.subr.mxu0 0.0
        %2901 = vmatpush1.msra.mxu0 0.0
        %2902 = vmatprep.subr.mxu0 0.0
        %2903 = vmatpush1.msra.mxu0 0.0
        %2904 = vmatprep.subr.mxu0 0.0
        %2905 = vmatpush1.msra.mxu0 0.0
        %2906 = vmatprep.subr.mxu0 0.0
        %2907 = vmatpush1.msra.mxu0 0.0
        %2908 = vmatprep.subr.mxu0 0.0
        %2909 = vmatpush1.msra.mxu0 0.0
        %2910 = vmatprep.subr.mxu0 0.0
        %2911 = vmatpush1.msra.mxu0 0.0
        %2912 = vmatprep.subr.mxu0 0.0
        %2913 = vmatpush1.msra.mxu0 0.0
        %2914 = vmatprep.mubr.f32.mxu0 0.0
        %2915 = vmatmul.mubr.f32.gmra.mrb[0].mxu0 %v573
        %v2916 = vpop.f32.mrb[0].mxu0
        %v2917 = vadd.f32 0.0, %v2916
        %v2918 = vpop.f32.mrb[0].mxu0
        %v2919 = vadd.f32 0.0, %v2918
        %2920 = vmatprep.mubr.f32.mxu0 0.0
        %2921 = vmatmul.mubr.f32.gmra.mrb[0].mxu0 %v576
        %v2922 = vpop.f32.mrb[0].mxu0
        %v2923 = vadd.f32 0.0, %v2922
        %v2924 = vpop.f32.mrb[0].mxu0
        %v2925 = vadd.f32 0.0, %v2924
        %2926 = vmatprep.mubr.f32.mxu0 0.0
        %2927 = vmatmul.mubr.f32.gmra.mrb[0].mxu0 %v579
        %v2928 = vpop.f32.mrb[0].mxu0
        %v2929 = vadd.f32 0.0, %v2928
        %v2930 = vpop.f32.mrb[0].mxu0
        %v2931 = vadd.f32 0.0, %v2930
        %2932 = vmatprep.mubr.f32.mxu0 0.0
        %2933 = vmatmul.mubr.f32.gmra.mrb[0].mxu0 %v582
        %v2934 = vpop.f32.mrb[0].mxu0
        %v2935 = vadd.f32 0.0, %v2934
        %v2936 = vpop.f32.mrb[0].mxu0
        %v2937 = vadd.f32 0.0, %v2936
        %2938 = vmatprep.mubr.f32.mxu0 0.0
        %2939 = vmatmul.mubr.f32.gmra.mrb[0].mxu0 %v585
        %v2940 = vpop.f32.mrb[0].mxu0
        %v2941 = vadd.f32 0.0, %v2940
        %v2942 = vpop.f32.mrb[0].mxu0
        %v2943 = vadd.f32 0.0, %v2942
        %2944 = vmatprep.mubr.f32.mxu0 0.0
        %2945 = vmatmul.mubr.f32.gmra.mrb[0].mxu0 %v588
        %v2946 = vpop.f32.mrb[0].mxu0
        %v2947 = vadd.f32 0.0, %v2946
        %v2948 = vpop.f32.mrb[0].mxu0
        %v2949 = vadd.f32 0.0, %v2948
        %2950 = vmatprep.mubr.f32.mxu0 0.0
        %2951 = vmatmul.mubr.f32.gmra.mrb[0].mxu0 %v591
        %v2952 = vpop.f32.mrb[0].mxu0
        %v2953 = vadd.f32 0.0, %v2952
        %v2954 = vpop.f32.mrb[0].mxu0
        %v2955 = vadd.f32 0.0, %v2954
        %2956 = vmatprep.mubr.f32.mxu0 0.0
        %2957 = vmatmul.mubr.f32.gmra.mrb[0].mxu0 %v594
        %v2958 = vpop.f32.mrb[0].mxu0
        %v2959 = vadd.f32 0.0, %v2958
        %v2960 = vpop.f32.mrb[0].mxu0
        %v2961 = vadd.f32 0.0, %v2960
        %2962 = vmatprep.mubr.f32.mxu0 0.0
        %2963 = vmatmul.mubr.f32.gmra.mrb[0].mxu0 %v597
        %v2964 = vpop.f32.mrb[0].mxu0
        %v2965 = vadd.f32 0.0, %v2964
        %v2966 = vpop.f32.mrb[0].mxu0
        %v2967 = vadd.f32 0.0, %v2966
        %2968 = vmatprep.mubr.f32.mxu0 0.0
        %2969 = vmatmul.mubr.f32.gmra.mrb[0].mxu0 %v600
        %v2970 = vpop.f32.mrb[0].mxu0
        %v2971 = vadd.f32 0.0, %v2970
        %v2972 = vpop.f32.mrb[0].mxu0
        %v2973 = vadd.f32 0.0, %v2972
        %2974 = vmatprep.mubr.f32.mxu0 0.0
        %2975 = vmatmul.mubr.f32.gmra.mrb[0].mxu0 %v603
        %v2976 = vpop.f32.mrb[0].mxu0
        %v2977 = vadd.f32 0.0, %v2976
        %v2978 = vpop.f32.mrb[0].mxu0
        %v2979 = vadd.f32 0.0, %v2978
        %2980 = vmatprep.mubr.f32.mxu0 0.0
        %2981 = vmatmul.mubr.f32.gmra.mrb[0].mxu0 %v606
        %v2982 = vpop.f32.mrb[0].mxu0
        %v2983 = vadd.f32 0.0, %v2982
        %v2984 = vpop.f32.mrb[0].mxu0
        %v2985 = vadd.f32 0.0, %v2984
        %2986 = vmatprep.mubr.f32.mxu0 0.0
        %2987 = vmatmul.mubr.f32.gmra.mrb[0].mxu0 %v609
        %v2988 = vpop.f32.mrb[0].mxu0
        %v2989 = vadd.f32 0.0, %v2988
        %v2990 = vpop.f32.mrb[0].mxu0
        %v2991 = vadd.f32 0.0, %v2990
        %2992 = vmatprep.mubr.f32.mxu0 0.0
        %2993 = vmatmul.mubr.f32.gmra.mrb[0].mxu0 %v612
        %v2994 = vpop.f32.mrb[0].mxu0
        %v2995 = vadd.f32 0.0, %v2994
        %v2996 = vpop.f32.mrb[0].mxu0
        %v2997 = vadd.f32 0.0, %v2996
        %2998 = vmatprep.mubr.f32.mxu0 0.0
        %2999 = vmatmul.mubr.f32.gmra.mrb[0].mxu0 %v615
        %v3000 = vpop.f32.mrb[0].mxu0
        %v3001 = vadd.f32 0.0, %v3000
        %v3002 = vpop.f32.mrb[0].mxu0
        %v3003 = vadd.f32 0.0, %v3002
        %3004 = vmatprep.mubr.f32.mxu0 0.0
        %3005 = vmatmul.mubr.f32.gmra.mrb[0].mxu0 %v618
        %v3006 = vpop.f32.mrb[0].mxu0
        %v3007 = vadd.f32 0.0, %v3006
        %v3008 = vpop.f32.mrb[0].mxu0
        %v3009 = vadd.f32 0.0, %v3008
        %3010 = vmatprep.mubr.f32.mxu0 0.0
        %3011 = vmatmul.mubr.f32.gmra.mrb[0].mxu0 %v621
        %v3012 = vpop.f32.mrb[0].mxu0
        %v3013 = vadd.f32 0.0, %v3012
        %v3014 = vpop.f32.mrb[0].mxu0
        %v3015 = vadd.f32 0.0, %v3014
        %3016 = vmatprep.mubr.f32.mxu0 0.0
        %3017 = vmatmul.mubr.f32.gmra.mrb[0].mxu0 %v624
        %v3018 = vpop.f32.mrb[0].mxu0
        %v3019 = vadd.f32 0.0, %v3018
        %v3020 = vpop.f32.mrb[0].mxu0
        %v3021 = vadd.f32 0.0, %v3020
        %3022 = vmatprep.mubr.f32.mxu0 0.0
        %3023 = vmatmul.mubr.f32.gmra.mrb[0].mxu0 %v627
        %v3024 = vpop.f32.mrb[0].mxu0
        %v3025 = vadd.f32 0.0, %v3024
        %v3026 = vpop.f32.mrb[0].mxu0
        %v3027 = vadd.f32 0.0, %v3026
        %3028 = vmatprep.mubr.f32.mxu0 0.0
        %3029 = vmatmul.mubr.f32.gmra.mrb[0].mxu0 %v630
        %v3030 = vpop.f32.mrb[0].mxu0
        %v3031 = vadd.f32 0.0, %v3030
        %v3032 = vpop.f32.mrb[0].mxu0
        %v3033 = vadd.f32 0.0, %v3032
        %3034 = vmatprep.mubr.f32.mxu0 0.0
        %3035 = vmatmul.mubr.f32.gmra.mrb[0].mxu0 %v633
        %v3036 = vpop.f32.mrb[0].mxu0
        %v3037 = vadd.f32 0.0, %v3036
        %v3038 = vpop.f32.mrb[0].mxu0
        %v3039 = vadd.f32 0.0, %v3038
        %3040 = vmatprep.mubr.f32.mxu0 0.0
        %3041 = vmatmul.mubr.f32.gmra.mrb[0].mxu0 %v636
        %v3042 = vpop.f32.mrb[0].mxu0
        %v3043 = vadd.f32 0.0, %v3042
        %v3044 = vpop.f32.mrb[0].mxu0
        %v3045 = vadd.f32 0.0, %v3044
        %3046 = vmatprep.mubr.f32.mxu0 0.0
        %3047 = vmatmul.mubr.f32.gmra.mrb[0].mxu0 %v639
        %v3048 = vpop.f32.mrb[0].mxu0
        %v3049 = vadd.f32 0.0, %v3048
        %v3050 = vpop.f32.mrb[0].mxu0
        %v3051 = vadd.f32 0.0, %v3050
        %3052 = vmatprep.mubr.f32.mxu0 0.0
        %3053 = vmatmul.mubr.f32.gmra.mrb[0].mxu0 %v642
        %v3054 = vpop.f32.mrb[0].mxu0
        %v3055 = vadd.f32 0.0, %v3054
        %v3056 = vpop.f32.mrb[0].mxu0
        %v3057 = vadd.f32 0.0, %v3056
        %3058 = vmatprep.mubr.f32.mxu0 0.0
        %3059 = vmatmul.mubr.f32.gmra.mrb[0].mxu0 %v645
        %v3060 = vpop.f32.mrb[0].mxu0
        %v3061 = vadd.f32 0.0, %v3060
        %v3062 = vpop.f32.mrb[0].mxu0
        %v3063 = vadd.f32 0.0, %v3062
        %3064 = vmatprep.mubr.f32.mxu0 0.0
        %3065 = vmatmul.mubr.f32.gmra.mrb[0].mxu0 %v1622
        %v3066 = vpop.f32.mrb[0].mxu0
        %v3067 = vadd.f32 0.0, %v3066
        %v3068 = vpop.f32.mrb[0].mxu0
        %v3069 = vadd.f32 0.0, %v3068
        %3070 = vmatprep.mubr.f32.mxu0 0.0
        %3071 = vmatmul.mubr.f32.gmra.mrb[0].mxu0 %v564
        %v3072 = vpop.f32.mrb[0].mxu0
        %v3073 = vadd.f32 0.0, %v3072
        %v3074 = vpop.f32.mrb[0].mxu0
        %v3075 = vadd.f32 0.0, %v3074
        %3076 = vmatprep.mubr.f32.mxu0 0.0
        %3077 = vmatmul.mubr.f32.gmra.mrb[0].mxu0 %v564
        %v3078 = vpop.f32.mrb[0].mxu0
        %v3079 = vadd.f32 0.0, %v3078
        %v3080 = vpop.f32.mrb[0].mxu0
        %v3081 = vadd.f32 0.0, %v3080
        %3082 = vdwg.mxu0
        %3083 = vmatprep.subr.mxu0 %v2825
        %3084 = vmatpush1.msra.mxu0 %v2824
        %3085 = vmatprep.subr.mxu0 %v2829
        %3086 = vmatpush1.msra.mxu0 %v2828
        %3087 = vmatprep.subr.mxu0 %v2833
        %3088 = vmatpush1.msra.mxu0 %v2832
        %3089 = vmatprep.subr.mxu0 %v2848
        %3090 = vmatpush1.msra.mxu0 %v2845
        %3091 = vmatprep.subr.mxu0 0.0
        %3092 = vmatpush1.msra.mxu0 0.0
        %3093 = vmatprep.subr.mxu0 0.0
        %3094 = vmatpush1.msra.mxu0 0.0
        %3095 = vmatprep.subr.mxu0 0.0
        %3096 = vmatpush1.msra.mxu0 0.0
        %3097 = vmatprep.subr.mxu0 0.0
        %3098 = vmatpush1.msra.mxu0 0.0
        %3099 = vmatprep.subr.mxu0 0.0
        %3100 = vmatpush1.msra.mxu0 0.0
        %3101 = vmatprep.subr.mxu0 0.0
        %3102 = vmatpush1.msra.mxu0 0.0
        %3103 = vmatprep.subr.mxu0 0.0
        %3104 = vmatpush1.msra.mxu0 0.0
        %3105 = vmatprep.subr.mxu0 0.0
        %3106 = vmatpush1.msra.mxu0 0.0
        %3107 = vmatprep.subr.mxu0 0.0
        %3108 = vmatpush1.msra.mxu0 0.0
        %3109 = vmatprep.subr.mxu0 0.0
        %3110 = vmatpush1.msra.mxu0 0.0
        %3111 = vmatprep.subr.mxu0 0.0
        %3112 = vmatpush1.msra.mxu0 0.0
        %3113 = vmatprep.subr.mxu0 0.0
        %3114 = vmatpush1.msra.mxu0 0.0
        %3115 = vmatprep.subr.mxu0 0.0
        %3116 = vmatpush1.msra.mxu0 0.0
        %3117 = vmatprep.subr.mxu0 0.0
        %3118 = vmatpush1.msra.mxu0 0.0
        %3119 = vmatprep.subr.mxu0 0.0
        %3120 = vmatpush1.msra.mxu0 0.0
        %3121 = vmatprep.subr.mxu0 0.0
        %3122 = vmatpush1.msra.mxu0 0.0
        %3123 = vmatprep.subr.mxu0 0.0
        %3124 = vmatpush1.msra.mxu0 0.0
        %3125 = vmatprep.subr.mxu0 0.0
        %3126 = vmatpush1.msra.mxu0 0.0
        %3127 = vmatprep.subr.mxu0 0.0
        %3128 = vmatpush1.msra.mxu0 0.0
        %3129 = vmatprep.subr.mxu0 0.0
        %3130 = vmatpush1.msra.mxu0 0.0
        %3131 = vmatprep.subr.mxu0 0.0
        %3132 = vmatpush1.msra.mxu0 0.0
        %3133 = vmatprep.subr.mxu0 0.0
        %3134 = vmatpush1.msra.mxu0 0.0
        %3135 = vmatprep.subr.mxu0 0.0
        %3136 = vmatpush1.msra.mxu0 0.0
        %3137 = vmatprep.subr.mxu0 0.0
        %3138 = vmatpush1.msra.mxu0 0.0
        %3139 = vmatprep.subr.mxu0 0.0
        %3140 = vmatpush1.msra.mxu0 0.0
        %3141 = vmatprep.subr.mxu0 0.0
        %3142 = vmatpush1.msra.mxu0 0.0
        %3143 = vmatprep.subr.mxu0 0.0
        %3144 = vmatpush1.msra.mxu0 0.0
        %3145 = vmatprep.subr.mxu0 0.0
        %3146 = vmatpush1.msra.mxu0 0.0
        %3147 = vmatprep.mubr.f32.mxu0 0.0
        %3148 = vmatmul.mubr.f32.gmra.mrb[0].mxu0 %v573
        %v3149 = vpop.f32.mrb[0].mxu0
        %v3150 = vadd.f32 0.0, %v3149
        %v3151 = vpop.f32.mrb[0].mxu0
        %v3152 = vadd.f32 0.0, %v3151
        %3153 = vmatprep.mubr.f32.mxu0 0.0
        %3154 = vmatmul.mubr.f32.gmra.mrb[0].mxu0 %v576
        %v3155 = vpop.f32.mrb[0].mxu0
        %v3156 = vadd.f32 0.0, %v3155
        %v3157 = vpop.f32.mrb[0].mxu0
        %v3158 = vadd.f32 0.0, %v3157
        %3159 = vmatprep.mubr.f32.mxu0 0.0
        %3160 = vmatmul.mubr.f32.gmra.mrb[0].mxu0 %v579
        %v3161 = vpop.f32.mrb[0].mxu0
        %v3162 = vadd.f32 0.0, %v3161
        %v3163 = vpop.f32.mrb[0].mxu0
        %v3164 = vadd.f32 0.0, %v3163
        %3165 = vmatprep.mubr.f32.mxu0 0.0
        %3166 = vmatmul.mubr.f32.gmra.mrb[0].mxu0 %v582
        %v3167 = vpop.f32.mrb[0].mxu0
        %v3168 = vadd.f32 0.0, %v3167
        %v3169 = vpop.f32.mrb[0].mxu0
        %v3170 = vadd.f32 0.0, %v3169
        %3171 = vmatprep.mubr.f32.mxu0 0.0
        %3172 = vmatmul.mubr.f32.gmra.mrb[0].mxu0 %v585
        %v3173 = vpop.f32.mrb[0].mxu0
        %v3174 = vadd.f32 0.0, %v3173
        %v3175 = vpop.f32.mrb[0].mxu0
        %v3176 = vadd.f32 0.0, %v3175
        %3177 = vmatprep.mubr.f32.mxu0 0.0
        %3178 = vmatmul.mubr.f32.gmra.mrb[0].mxu0 %v588
        %v3179 = vpop.f32.mrb[0].mxu0
        %v3180 = vadd.f32 0.0, %v3179
        %v3181 = vpop.f32.mrb[0].mxu0
        %v3182 = vadd.f32 0.0, %v3181
        %3183 = vmatprep.mubr.f32.mxu0 0.0
        %3184 = vmatmul.mubr.f32.gmra.mrb[0].mxu0 %v591
        %v3185 = vpop.f32.mrb[0].mxu0
        %v3186 = vadd.f32 0.0, %v3185
        %v3187 = vpop.f32.mrb[0].mxu0
        %v3188 = vadd.f32 0.0, %v3187
        %3189 = vmatprep.mubr.f32.mxu0 0.0
        %3190 = vmatmul.mubr.f32.gmra.mrb[0].mxu0 %v594
        %v3191 = vpop.f32.mrb[0].mxu0
        %v3192 = vadd.f32 0.0, %v3191
        %v3193 = vpop.f32.mrb[0].mxu0
        %v3194 = vadd.f32 0.0, %v3193
        %3195 = vmatprep.mubr.f32.mxu0 0.0
        %3196 = vmatmul.mubr.f32.gmra.mrb[0].mxu0 %v597
        %v3197 = vpop.f32.mrb[0].mxu0
        %v3198 = vadd.f32 0.0, %v3197
        %v3199 = vpop.f32.mrb[0].mxu0
        %v3200 = vadd.f32 0.0, %v3199
        %3201 = vmatprep.mubr.f32.mxu0 0.0
        %3202 = vmatmul.mubr.f32.gmra.mrb[0].mxu0 %v600
        %v3203 = vpop.f32.mrb[0].mxu0
        %v3204 = vadd.f32 0.0, %v3203
        %v3205 = vpop.f32.mrb[0].mxu0
        %v3206 = vadd.f32 0.0, %v3205
        %3207 = vmatprep.mubr.f32.mxu0 0.0
        %3208 = vmatmul.mubr.f32.gmra.mrb[0].mxu0 %v603
        %v3209 = vpop.f32.mrb[0].mxu0
        %v3210 = vadd.f32 0.0, %v3209
        %v3211 = vpop.f32.mrb[0].mxu0
        %v3212 = vadd.f32 0.0, %v3211
        %3213 = vmatprep.mubr.f32.mxu0 0.0
        %3214 = vmatmul.mubr.f32.gmra.mrb[0].mxu0 %v606
        %v3215 = vpop.f32.mrb[0].mxu0
        %v3216 = vadd.f32 0.0, %v3215
        %v3217 = vpop.f32.mrb[0].mxu0
        %v3218 = vadd.f32 0.0, %v3217
        %3219 = vmatprep.mubr.f32.mxu0 0.0
        %3220 = vmatmul.mubr.f32.gmra.mrb[0].mxu0 %v609
        %v3221 = vpop.f32.mrb[0].mxu0
        %v3222 = vadd.f32 0.0, %v3221
        %v3223 = vpop.f32.mrb[0].mxu0
        %v3224 = vadd.f32 0.0, %v3223
        %3225 = vmatprep.mubr.f32.mxu0 0.0
        %3226 = vmatmul.mubr.f32.gmra.mrb[0].mxu0 %v612
        %v3227 = vpop.f32.mrb[0].mxu0
        %v3228 = vadd.f32 0.0, %v3227
        %v3229 = vpop.f32.mrb[0].mxu0
        %v3230 = vadd.f32 0.0, %v3229
        %3231 = vmatprep.mubr.f32.mxu0 0.0
        %3232 = vmatmul.mubr.f32.gmra.mrb[0].mxu0 %v615
        %v3233 = vpop.f32.mrb[0].mxu0
        %v3234 = vadd.f32 0.0, %v3233
        %v3235 = vpop.f32.mrb[0].mxu0
        %v3236 = vadd.f32 0.0, %v3235
        %3237 = vmatprep.mubr.f32.mxu0 0.0
        %3238 = vmatmul.mubr.f32.gmra.mrb[0].mxu0 %v618
        %v3239 = vpop.f32.mrb[0].mxu0
        %v3240 = vadd.f32 0.0, %v3239
        %v3241 = vpop.f32.mrb[0].mxu0
        %v3242 = vadd.f32 0.0, %v3241
        %3243 = vmatprep.mubr.f32.mxu0 0.0
        %3244 = vmatmul.mubr.f32.gmra.mrb[0].mxu0 %v621
        %v3245 = vpop.f32.mrb[0].mxu0
        %v3246 = vadd.f32 0.0, %v3245
        %v3247 = vpop.f32.mrb[0].mxu0
        %v3248 = vadd.f32 0.0, %v3247
        %3249 = vmatprep.mubr.f32.mxu0 0.0
        %3250 = vmatmul.mubr.f32.gmra.mrb[0].mxu0 %v624
        %v3251 = vpop.f32.mrb[0].mxu0
        %v3252 = vadd.f32 0.0, %v3251
        %v3253 = vpop.f32.mrb[0].mxu0
        %v3254 = vadd.f32 0.0, %v3253
        %3255 = vmatprep.mubr.f32.mxu0 0.0
        %3256 = vmatmul.mubr.f32.gmra.mrb[0].mxu0 %v627
        %v3257 = vpop.f32.mrb[0].mxu0
        %v3258 = vadd.f32 0.0, %v3257
        %v3259 = vpop.f32.mrb[0].mxu0
        %v3260 = vadd.f32 0.0, %v3259
        %3261 = vmatprep.mubr.f32.mxu0 0.0
        %3262 = vmatmul.mubr.f32.gmra.mrb[0].mxu0 %v630
        %v3263 = vpop.f32.mrb[0].mxu0
        %v3264 = vadd.f32 0.0, %v3263
        %v3265 = vpop.f32.mrb[0].mxu0
        %v3266 = vadd.f32 0.0, %v3265
        %3267 = vmatprep.mubr.f32.mxu0 0.0
        %3268 = vmatmul.mubr.f32.gmra.mrb[0].mxu0 %v633
        %v3269 = vpop.f32.mrb[0].mxu0
        %v3270 = vadd.f32 0.0, %v3269
        %v3271 = vpop.f32.mrb[0].mxu0
        %v3272 = vadd.f32 0.0, %v3271
        %3273 = vmatprep.mubr.f32.mxu0 0.0
        %3274 = vmatmul.mubr.f32.gmra.mrb[0].mxu0 %v636
        %v3275 = vpop.f32.mrb[0].mxu0
        %v3276 = vadd.f32 0.0, %v3275
        %v3277 = vpop.f32.mrb[0].mxu0
        %v3278 = vadd.f32 0.0, %v3277
        %3279 = vmatprep.mubr.f32.mxu0 0.0
        %3280 = vmatmul.mubr.f32.gmra.mrb[0].mxu0 %v639
        %v3281 = vpop.f32.mrb[0].mxu0
        %v3282 = vadd.f32 0.0, %v3281
        %v3283 = vpop.f32.mrb[0].mxu0
        %v3284 = vadd.f32 0.0, %v3283
        %3285 = vmatprep.mubr.f32.mxu0 0.0
        %3286 = vmatmul.mubr.f32.gmra.mrb[0].mxu0 %v642
        %v3287 = vpop.f32.mrb[0].mxu0
        %v3288 = vadd.f32 0.0, %v3287
        %v3289 = vpop.f32.mrb[0].mxu0
        %v3290 = vadd.f32 0.0, %v3289
        %3291 = vmatprep.mubr.f32.mxu0 0.0
        %3292 = vmatmul.mubr.f32.gmra.mrb[0].mxu0 %v645
        %v3293 = vpop.f32.mrb[0].mxu0
        %v3294 = vadd.f32 0.0, %v3293
        %v3295 = vpop.f32.mrb[0].mxu0
        %v3296 = vadd.f32 0.0, %v3295
        %3297 = vmatprep.mubr.f32.mxu0 0.0
        %3298 = vmatmul.mubr.f32.gmra.mrb[0].mxu0 %v1622
        %v3299 = vpop.f32.mrb[0].mxu0
        %v3300 = vadd.f32 0.0, %v3299
        %v3301 = vpop.f32.mrb[0].mxu0
        %v3302 = vadd.f32 0.0, %v3301
        %3303 = vmatprep.mubr.f32.mxu0 0.0
        %3304 = vmatmul.mubr.f32.gmra.mrb[0].mxu0 %v564
        %v3305 = vpop.f32.mrb[0].mxu0
        %v3306 = vadd.f32 0.0, %v3305
        %v3307 = vpop.f32.mrb[0].mxu0
        %v3308 = vadd.f32 0.0, %v3307
        %3309 = vmatprep.mubr.f32.mxu0 0.0
        %3310 = vmatmul.mubr.f32.gmra.mrb[0].mxu0 %v564
        %v3311 = vpop.f32.mrb[0].mxu0
        %v3312 = vadd.f32 0.0, %v3311
        %v3313 = vpop.f32.mrb[0].mxu0
        %v3314 = vadd.f32 0.0, %v3313
        %3315 = vdwg.mxu0
        %v3316 = vadd.f32 %v2709, %v2917
        %v3317 = vadd.f32 %v2710, %v2919
        %v3318 = vadd.f32 %v2711, %v3150
        %v3319 = vadd.f32 %v2712, %v3152
        %v3320 = vadd.f32 %v2713, %v2923
        %v3321 = vadd.f32 %v2714, %v2925
        %v3322 = vadd.f32 %v2715, %v3156
        %v3323 = vadd.f32 %v2716, %v3158
        %v3324 = vadd.f32 %v2717, %v2929
        %v3325 = vadd.f32 %v2718, %v2931
        %v3326 = vadd.f32 %v2719, %v3162
        %v3327 = vadd.f32 %v2720, %v3164
        %v3328 = vadd.f32 %v2721, %v2935
        %v3329 = vadd.f32 %v2722, %v2937
        %v3330 = vadd.f32 %v2723, %v3168
        %v3331 = vadd.f32 %v2724, %v3170
        %v3332 = vadd.f32 %v2725, %v2941
        %v3333 = vadd.f32 %v2726, %v2943
        %v3334 = vadd.f32 %v2727, %v3174
        %v3335 = vadd.f32 %v2728, %v3176
        %v3336 = vadd.f32 %v2729, %v2947
        %v3337 = vadd.f32 %v2730, %v2949
        %v3338 = vadd.f32 %v2731, %v3180
        %v3339 = vadd.f32 %v2732, %v3182
        %v3340 = vadd.f32 %v2733, %v2953
        %v3341 = vadd.f32 %v2734, %v2955
        %v3342 = vadd.f32 %v2735, %v3186
        %v3343 = vadd.f32 %v2736, %v3188
        %v3344 = vadd.f32 %v2737, %v2959
        %v3345 = vadd.f32 %v2738, %v2961
        %v3346 = vadd.f32 %v2739, %v3192
        %v3347 = vadd.f32 %v2740, %v3194
        %v3348 = vadd.f32 %v2741, %v2965
        %v3349 = vadd.f32 %v2742, %v2967
        %v3350 = vadd.f32 %v2743, %v3198
        %v3351 = vadd.f32 %v2744, %v3200
        %v3352 = vadd.f32 %v2745, %v2971
        %v3353 = vadd.f32 %v2746, %v2973
        %v3354 = vadd.f32 %v2747, %v3204
        %v3355 = vadd.f32 %v2748, %v3206
        %v3356 = vadd.f32 %v2749, %v2977
        %v3357 = vadd.f32 %v2750, %v2979
        %v3358 = vadd.f32 %v2751, %v3210
        %v3359 = vadd.f32 %v2752, %v3212
        %v3360 = vadd.f32 %v2753, %v2983
        %v3361 = vadd.f32 %v2754, %v2985
        %v3362 = vadd.f32 %v2755, %v3216
        %v3363 = vadd.f32 %v2756, %v3218
        %v3364 = vadd.f32 %v2757, %v2989
        %v3365 = vadd.f32 %v2758, %v2991
        %v3366 = vadd.f32 %v2759, %v3222
        %v3367 = vadd.f32 %v2760, %v3224
        %v3368 = vadd.f32 %v2761, %v2995
        %v3369 = vadd.f32 %v2762, %v2997
        %v3370 = vadd.f32 %v2763, %v3228
        %v3371 = vadd.f32 %v2764, %v3230
        %v3372 = vadd.f32 %v2765, %v3001
        %v3373 = vadd.f32 %v2766, %v3003
        %v3374 = vadd.f32 %v2767, %v3234
        %v3375 = vadd.f32 %v2768, %v3236
        %v3376 = vadd.f32 %v2769, %v3007
        %v3377 = vadd.f32 %v2770, %v3009
        %v3378 = vadd.f32 %v2771, %v3240
        %v3379 = vadd.f32 %v2772, %v3242
        %v3380 = vadd.f32 %v2773, %v3013
        %v3381 = vadd.f32 %v2774, %v3015
        %v3382 = vadd.f32 %v2775, %v3246
        %v3383 = vadd.f32 %v2776, %v3248
        %v3384 = vadd.f32 %v2777, %v3019
        %v3385 = vadd.f32 %v2778, %v3021
        %v3386 = vadd.f32 %v2779, %v3252
        %v3387 = vadd.f32 %v2780, %v3254
        %v3388 = vadd.f32 %v2781, %v3025
        %v3389 = vadd.f32 %v2782, %v3027
        %v3390 = vadd.f32 %v2783, %v3258
        %v3391 = vadd.f32 %v2784, %v3260
        %v3392 = vadd.f32 %v2785, %v3031
        %v3393 = vadd.f32 %v2786, %v3033
        %v3394 = vadd.f32 %v2787, %v3264
        %v3395 = vadd.f32 %v2788, %v3266
        %v3396 = vadd.f32 %v2789, %v3037
        %v3397 = vadd.f32 %v2790, %v3039
        %v3398 = vadd.f32 %v2791, %v3270
        %v3399 = vadd.f32 %v2792, %v3272
        %v3400 = vadd.f32 %v2793, %v3043
        %v3401 = vadd.f32 %v2794, %v3045
        %v3402 = vadd.f32 %v2795, %v3276
        %v3403 = vadd.f32 %v2796, %v3278
        %v3404 = vadd.f32 %v2797, %v3049
        %v3405 = vadd.f32 %v2798, %v3051
        %v3406 = vadd.f32 %v2799, %v3282
        %v3407 = vadd.f32 %v2800, %v3284
        %v3408 = vadd.f32 %v2801, %v3055
        %v3409 = vadd.f32 %v2802, %v3057
        %v3410 = vadd.f32 %v2803, %v3288
        %v3411 = vadd.f32 %v2804, %v3290
        %v3412 = vadd.f32 %v2805, %v3061
        %v3413 = vadd.f32 %v2806, %v3063
        %v3414 = vadd.f32 %v2807, %v3294
        %v3415 = vadd.f32 %v2808, %v3296
        %v3416 = vadd.f32 %v2809, %v3067
        %v3417 = vadd.f32 %v2810, %v3069
        %v3418 = vadd.f32 %v2811, %v3300
        %v3419 = vadd.f32 %v2812, %v3302
        %v3420 = vadd.f32 %v2813, %v3073
        %v3421 = vadd.f32 %v2814, %v3075
        %v3422 = vadd.f32 %v2815, %v3306
        %v3423 = vadd.f32 %v2816, %v3308
        %v3424 = vadd.f32 %v2817, %v3079
        %v3425 = vadd.f32 %v2818, %v3081
        %v3426 = vadd.f32 %v2819, %v3312
        %v3427 = vadd.f32 %v2820, %v3314
        %v3428 = vld [vmem:[#allocation6] sm:$0xf]
        %v3430 = vlaneseq
        %v3431 = vshrl.u32 %v3430, 7
        %v3432 = vsub.s32 0, %v3431
        %v3433 = vrot.slane %v3428, %v3432
        %v3434 = vlaneseq
        %v3435 = vshrl.u32 %v3434, 7
        %v3436 = vsub.s32 1, %v3435
        %v3437 = vrot.slane %v3428, %v3436
        %v3438 = vlaneseq
        %v3439 = vshrl.u32 %v3438, 7
        %v3440 = vsub.s32 2, %v3439
        %v3441 = vrot.slane %v3428, %v3440
        %v3442 = vlaneseq
        %v3443 = vshrl.u32 %v3442, 7
        %v3444 = vsub.s32 3, %v3443
        %v3445 = vrot.slane %v3428, %v3444
        %v3450 = vadd.f32 %v3316, %v3433
        %v3451 = vadd.f32 %v3317, %v3437
        %v3452 = vadd.f32 %v3318, %v3441
        %v3453 = vadd.f32 %v3319, %v3445
        %v3454 = vadd.f32 %v3320, %v3433
        %v3455 = vadd.f32 %v3321, %v3437
        %v3456 = vadd.f32 %v3322, %v3441
        %v3457 = vadd.f32 %v3323, %v3445
        %v3458 = vadd.f32 %v3324, %v3433
        %v3459 = vadd.f32 %v3325, %v3437
        %v3460 = vadd.f32 %v3326, %v3441
        %v3461 = vadd.f32 %v3327, %v3445
        %v3462 = vadd.f32 %v3328, %v3433
        %v3463 = vadd.f32 %v3329, %v3437
        %v3464 = vadd.f32 %v3330, %v3441
        %v3465 = vadd.f32 %v3331, %v3445
        %v3466 = vadd.f32 %v3332, %v3433
        %v3467 = vadd.f32 %v3333, %v3437
        %v3468 = vadd.f32 %v3334, %v3441
        %v3469 = vadd.f32 %v3335, %v3445
        %v3470 = vadd.f32 %v3336, %v3433
        %v3471 = vadd.f32 %v3337, %v3437
        %v3472 = vadd.f32 %v3338, %v3441
        %v3473 = vadd.f32 %v3339, %v3445
        %v3474 = vadd.f32 %v3340, %v3433
        %v3475 = vadd.f32 %v3341, %v3437
        %v3476 = vadd.f32 %v3342, %v3441
        %v3477 = vadd.f32 %v3343, %v3445
        %v3478 = vadd.f32 %v3344, %v3433
        %v3479 = vadd.f32 %v3345, %v3437
        %v3480 = vadd.f32 %v3346, %v3441
        %v3481 = vadd.f32 %v3347, %v3445
        %v3482 = vadd.f32 %v3348, %v3433
        %v3483 = vadd.f32 %v3349, %v3437
        %v3484 = vadd.f32 %v3350, %v3441
        %v3485 = vadd.f32 %v3351, %v3445
        %v3486 = vadd.f32 %v3352, %v3433
        %v3487 = vadd.f32 %v3353, %v3437
        %v3488 = vadd.f32 %v3354, %v3441
        %v3489 = vadd.f32 %v3355, %v3445
        %v3490 = vadd.f32 %v3356, %v3433
        %v3491 = vadd.f32 %v3357, %v3437
        %v3492 = vadd.f32 %v3358, %v3441
        %v3493 = vadd.f32 %v3359, %v3445
        %v3494 = vadd.f32 %v3360, %v3433
        %v3495 = vadd.f32 %v3361, %v3437
        %v3496 = vadd.f32 %v3362, %v3441
        %v3497 = vadd.f32 %v3363, %v3445
        %v3498 = vadd.f32 %v3364, %v3433
        %v3499 = vadd.f32 %v3365, %v3437
        %v3500 = vadd.f32 %v3366, %v3441
        %v3501 = vadd.f32 %v3367, %v3445
        %v3502 = vadd.f32 %v3368, %v3433
        %v3503 = vadd.f32 %v3369, %v3437
        %v3504 = vadd.f32 %v3370, %v3441
        %v3505 = vadd.f32 %v3371, %v3445
        %v3506 = vadd.f32 %v3372, %v3433
        %v3507 = vadd.f32 %v3373, %v3437
        %v3508 = vadd.f32 %v3374, %v3441
        %v3509 = vadd.f32 %v3375, %v3445
        %v3510 = vadd.f32 %v3376, %v3433
        %v3511 = vadd.f32 %v3377, %v3437
        %v3512 = vadd.f32 %v3378, %v3441
        %v3513 = vadd.f32 %v3379, %v3445
        %v3514 = vadd.f32 %v3380, %v3433
        %v3515 = vadd.f32 %v3381, %v3437
        %v3516 = vadd.f32 %v3382, %v3441
        %v3517 = vadd.f32 %v3383, %v3445
        %v3518 = vadd.f32 %v3384, %v3433
        %v3519 = vadd.f32 %v3385, %v3437
        %v3520 = vadd.f32 %v3386, %v3441
        %v3521 = vadd.f32 %v3387, %v3445
        %v3522 = vadd.f32 %v3388, %v3433
        %v3523 = vadd.f32 %v3389, %v3437
        %v3524 = vadd.f32 %v3390, %v3441
        %v3525 = vadd.f32 %v3391, %v3445
        %v3526 = vadd.f32 %v3392, %v3433
        %v3527 = vadd.f32 %v3393, %v3437
        %v3528 = vadd.f32 %v3394, %v3441
        %v3529 = vadd.f32 %v3395, %v3445
        %v3530 = vadd.f32 %v3396, %v3433
        %v3531 = vadd.f32 %v3397, %v3437
        %v3532 = vadd.f32 %v3398, %v3441
        %v3533 = vadd.f32 %v3399, %v3445
        %v3534 = vadd.f32 %v3400, %v3433
        %v3535 = vadd.f32 %v3401, %v3437
        %v3536 = vadd.f32 %v3402, %v3441
        %v3537 = vadd.f32 %v3403, %v3445
        %v3538 = vadd.f32 %v3404, %v3433
        %v3539 = vadd.f32 %v3405, %v3437
        %v3540 = vadd.f32 %v3406, %v3441
        %v3541 = vadd.f32 %v3407, %v3445
        %v3542 = vadd.f32 %v3408, %v3433
        %v3543 = vadd.f32 %v3409, %v3437
        %v3544 = vadd.f32 %v3410, %v3441
        %v3545 = vadd.f32 %v3411, %v3445
        %v3546 = vadd.f32 %v3412, %v3433
        %v3547 = vadd.f32 %v3413, %v3437
        %v3548 = vadd.f32 %v3414, %v3441
        %v3549 = vadd.f32 %v3415, %v3445
        %v3550 = vadd.f32 %v3416, %v3433
        %v3551 = vadd.f32 %v3417, %v3437
        %v3552 = vadd.f32 %v3418, %v3441
        %v3553 = vadd.f32 %v3419, %v3445
        %v3554 = vadd.f32 %v3420, %v3433
        %v3555 = vadd.f32 %v3421, %v3437
        %v3556 = vadd.f32 %v3422, %v3441
        %v3557 = vadd.f32 %v3423, %v3445
        %v3558 = vadd.f32 %v3424, %v3433
        %v3559 = vadd.f32 %v3425, %v3437
        %v3560 = vadd.f32 %v3426, %v3441
        %v3561 = vadd.f32 %v3427, %v3445
        %v3562 = vmax.f32 %v3450, 0.0
        %v3563 = vmax.f32 %v3451, 0.0
        %v3564 = vmax.f32 %v3452, 0.0
        %v3565 = vmax.f32 %v3453, 0.0
        %v3566 = vmax.f32 %v3454, 0.0
        %v3567 = vmax.f32 %v3455, 0.0
        %v3568 = vmax.f32 %v3456, 0.0
        %v3569 = vmax.f32 %v3457, 0.0
        %v3570 = vmax.f32 %v3458, 0.0
        %v3571 = vmax.f32 %v3459, 0.0
        %v3572 = vmax.f32 %v3460, 0.0
        %v3573 = vmax.f32 %v3461, 0.0
        %v3574 = vmax.f32 %v3462, 0.0
        %v3575 = vmax.f32 %v3463, 0.0
        %v3576 = vmax.f32 %v3464, 0.0
        %v3577 = vmax.f32 %v3465, 0.0
        %v3578 = vmax.f32 %v3466, 0.0
        %v3579 = vmax.f32 %v3467, 0.0
        %v3580 = vmax.f32 %v3468, 0.0
        %v3581 = vmax.f32 %v3469, 0.0
        %v3582 = vmax.f32 %v3470, 0.0
        %v3583 = vmax.f32 %v3471, 0.0
        %v3584 = vmax.f32 %v3472, 0.0
        %v3585 = vmax.f32 %v3473, 0.0
        %v3586 = vmax.f32 %v3474, 0.0
        %v3587 = vmax.f32 %v3475, 0.0
        %v3588 = vmax.f32 %v3476, 0.0
        %v3589 = vmax.f32 %v3477, 0.0
        %v3590 = vmax.f32 %v3478, 0.0
        %v3591 = vmax.f32 %v3479, 0.0
        %v3592 = vmax.f32 %v3480, 0.0
        %v3593 = vmax.f32 %v3481, 0.0
        %v3594 = vmax.f32 %v3482, 0.0
        %v3595 = vmax.f32 %v3483, 0.0
        %v3596 = vmax.f32 %v3484, 0.0
        %v3597 = vmax.f32 %v3485, 0.0
        %v3598 = vmax.f32 %v3486, 0.0
        %v3599 = vmax.f32 %v3487, 0.0
        %v3600 = vmax.f32 %v3488, 0.0
        %v3601 = vmax.f32 %v3489, 0.0
        %v3602 = vmax.f32 %v3490, 0.0
        %v3603 = vmax.f32 %v3491, 0.0
        %v3604 = vmax.f32 %v3492, 0.0
        %v3605 = vmax.f32 %v3493, 0.0
        %v3606 = vmax.f32 %v3494, 0.0
        %v3607 = vmax.f32 %v3495, 0.0
        %v3608 = vmax.f32 %v3496, 0.0
        %v3609 = vmax.f32 %v3497, 0.0
        %v3610 = vmax.f32 %v3498, 0.0
        %v3611 = vmax.f32 %v3499, 0.0
        %v3612 = vmax.f32 %v3500, 0.0
        %v3613 = vmax.f32 %v3501, 0.0
        %v3614 = vmax.f32 %v3502, 0.0
        %v3615 = vmax.f32 %v3503, 0.0
        %v3616 = vmax.f32 %v3504, 0.0
        %v3617 = vmax.f32 %v3505, 0.0
        %v3618 = vmax.f32 %v3506, 0.0
        %v3619 = vmax.f32 %v3507, 0.0
        %v3620 = vmax.f32 %v3508, 0.0
        %v3621 = vmax.f32 %v3509, 0.0
        %v3622 = vmax.f32 %v3510, 0.0
        %v3623 = vmax.f32 %v3511, 0.0
        %v3624 = vmax.f32 %v3512, 0.0
        %v3625 = vmax.f32 %v3513, 0.0
        %v3626 = vmax.f32 %v3514, 0.0
        %v3627 = vmax.f32 %v3515, 0.0
        %v3628 = vmax.f32 %v3516, 0.0
        %v3629 = vmax.f32 %v3517, 0.0
        %v3630 = vmax.f32 %v3518, 0.0
        %v3631 = vmax.f32 %v3519, 0.0
        %v3632 = vmax.f32 %v3520, 0.0
        %v3633 = vmax.f32 %v3521, 0.0
        %v3634 = vmax.f32 %v3522, 0.0
        %v3635 = vmax.f32 %v3523, 0.0
        %v3636 = vmax.f32 %v3524, 0.0
        %v3637 = vmax.f32 %v3525, 0.0
        %v3638 = vmax.f32 %v3526, 0.0
        %v3639 = vmax.f32 %v3527, 0.0
        %v3640 = vmax.f32 %v3528, 0.0
        %v3641 = vmax.f32 %v3529, 0.0
        %v3642 = vmax.f32 %v3530, 0.0
        %v3643 = vmax.f32 %v3531, 0.0
        %v3644 = vmax.f32 %v3532, 0.0
        %v3645 = vmax.f32 %v3533, 0.0
        %v3646 = vmax.f32 %v3534, 0.0
        %v3647 = vmax.f32 %v3535, 0.0
        %v3648 = vmax.f32 %v3536, 0.0
        %v3649 = vmax.f32 %v3537, 0.0
        %v3650 = vmax.f32 %v3538, 0.0
        %v3651 = vmax.f32 %v3539, 0.0
        %v3652 = vmax.f32 %v3540, 0.0
        %v3653 = vmax.f32 %v3541, 0.0
        %v3654 = vmax.f32 %v3542, 0.0
        %v3655 = vmax.f32 %v3543, 0.0
        %v3656 = vmax.f32 %v3544, 0.0
        %v3657 = vmax.f32 %v3545, 0.0
        %v3658 = vmax.f32 %v3546, 0.0
        %v3659 = vmax.f32 %v3547, 0.0
        %v3660 = vmax.f32 %v3548, 0.0
        %v3661 = vmax.f32 %v3549, 0.0
        %v3662 = vmax.f32 %v3550, 0.0
        %v3663 = vmax.f32 %v3551, 0.0
        %v3664 = vmax.f32 %v3552, 0.0
        %v3665 = vmax.f32 %v3553, 0.0
        %v3666 = vmax.f32 %v3554, 0.0
        %v3667 = vmax.f32 %v3555, 0.0
        %v3668 = vmax.f32 %v3556, 0.0
        %v3669 = vmax.f32 %v3557, 0.0
        %v3670 = vmax.f32 %v3558, 0.0
        %v3671 = vmax.f32 %v3559, 0.0
        %v3672 = vmax.f32 %v3560, 0.0
        %v3673 = vmax.f32 %v3561, 0.0
        %v3674 = vmax.f32 %v3562, %v3566
        %v3675 = vmax.f32 %v3563, %v3567
        %v3676 = vmax.f32 %v3564, %v3568
        %v3677 = vmax.f32 %v3565, %v3569
        %v3678 = vmax.f32 %v3570, %v3574
        %v3679 = vmax.f32 %v3571, %v3575
        %v3680 = vmax.f32 %v3572, %v3576
        %v3681 = vmax.f32 %v3573, %v3577
        %v3682 = vmax.f32 %v3578, %v3582
        %v3683 = vmax.f32 %v3579, %v3583
        %v3684 = vmax.f32 %v3580, %v3584
        %v3685 = vmax.f32 %v3581, %v3585
        %v3686 = vmax.f32 %v3586, %v3590
        %v3687 = vmax.f32 %v3587, %v3591
        %v3688 = vmax.f32 %v3588, %v3592
        %v3689 = vmax.f32 %v3589, %v3593
        %v3690 = vmax.f32 %v3594, %v3598
        %v3691 = vmax.f32 %v3595, %v3599
        %v3692 = vmax.f32 %v3596, %v3600
        %v3693 = vmax.f32 %v3597, %v3601
        %v3694 = vmax.f32 %v3602, %v3606
        %v3695 = vmax.f32 %v3603, %v3607
        %v3696 = vmax.f32 %v3604, %v3608
        %v3697 = vmax.f32 %v3605, %v3609
        %v3698 = vmax.f32 %v3610, %v3614
        %v3699 = vmax.f32 %v3611, %v3615
        %v3700 = vmax.f32 %v3612, %v3616
        %v3701 = vmax.f32 %v3613, %v3617
        %v3702 = vmax.f32 %v3618, %v3622
        %v3703 = vmax.f32 %v3619, %v3623
        %v3704 = vmax.f32 %v3620, %v3624
        %v3705 = vmax.f32 %v3621, %v3625
        %v3706 = vmax.f32 %v3626, %v3630
        %v3707 = vmax.f32 %v3627, %v3631
        %v3708 = vmax.f32 %v3628, %v3632
        %v3709 = vmax.f32 %v3629, %v3633
        %v3710 = vmax.f32 %v3634, %v3638
        %v3711 = vmax.f32 %v3635, %v3639
        %v3712 = vmax.f32 %v3636, %v3640
        %v3713 = vmax.f32 %v3637, %v3641
        %v3714 = vmax.f32 %v3642, %v3646
        %v3715 = vmax.f32 %v3643, %v3647
        %v3716 = vmax.f32 %v3644, %v3648
        %v3717 = vmax.f32 %v3645, %v3649
        %v3718 = vmax.f32 %v3650, %v3654
        %v3719 = vmax.f32 %v3651, %v3655
        %v3720 = vmax.f32 %v3652, %v3656
        %v3721 = vmax.f32 %v3653, %v3657
        %v3722 = vmax.f32 %v3658, %v3662
        %v3723 = vmax.f32 %v3659, %v3663
        %v3724 = vmax.f32 %v3660, %v3664
        %v3725 = vmax.f32 %v3661, %v3665
        %v3726 = vmax.f32 %v3666, %v3670
        %v3727 = vmax.f32 %v3667, %v3671
        %v3728 = vmax.f32 %v3668, %v3672
        %v3729 = vmax.f32 %v3669, %v3673
        %3786 = vrot.lane.b32.xlu0 %v3674, 112
        %v3787 = vpop.permute.xlu0 %3786
        %3788 = vrot.lane.b32.xlu0 %v3675, 112
        %v3789 = vpop.permute.xlu0 %3788
        %3790 = vrot.lane.b32.xlu0 %v3676, 112
        %v3791 = vpop.permute.xlu0 %3790
        %3792 = vrot.lane.b32.xlu0 %v3677, 112
        %v3793 = vpop.permute.xlu0 %3792
        %3794 = vrot.lane.b32.xlu0 %v3678, 112
        %v3795 = vpop.permute.xlu0 %3794
        %3796 = vrot.lane.b32.xlu0 %v3679, 112
        %v3797 = vpop.permute.xlu0 %3796
        %3798 = vrot.lane.b32.xlu0 %v3680, 112
        %v3799 = vpop.permute.xlu0 %3798
        %3800 = vrot.lane.b32.xlu0 %v3681, 112
        %v3801 = vpop.permute.xlu0 %3800
        %3802 = vrot.lane.b32.xlu0 %v3682, 112
        %v3803 = vpop.permute.xlu0 %3802
        %3804 = vrot.lane.b32.xlu0 %v3683, 112
        %v3805 = vpop.permute.xlu0 %3804
        %3806 = vrot.lane.b32.xlu0 %v3684, 112
        %v3807 = vpop.permute.xlu0 %3806
        %3808 = vrot.lane.b32.xlu0 %v3685, 112
        %v3809 = vpop.permute.xlu0 %3808
        %3810 = vrot.lane.b32.xlu0 %v3686, 112
        %v3811 = vpop.permute.xlu0 %3810
        %3812 = vrot.lane.b32.xlu0 %v3687, 112
        %v3813 = vpop.permute.xlu0 %3812
        %3814 = vrot.lane.b32.xlu0 %v3688, 112
        %v3815 = vpop.permute.xlu0 %3814
        %3816 = vrot.lane.b32.xlu0 %v3689, 112
        %v3817 = vpop.permute.xlu0 %3816
        %3818 = vrot.lane.b32.xlu0 %v3690, 112
        %v3819 = vpop.permute.xlu0 %3818
        %3820 = vrot.lane.b32.xlu0 %v3691, 112
        %v3821 = vpop.permute.xlu0 %3820
        %3822 = vrot.lane.b32.xlu0 %v3692, 112
        %v3823 = vpop.permute.xlu0 %3822
        %3824 = vrot.lane.b32.xlu0 %v3693, 112
        %v3825 = vpop.permute.xlu0 %3824
        %3826 = vrot.lane.b32.xlu0 %v3694, 112
        %v3827 = vpop.permute.xlu0 %3826
        %3828 = vrot.lane.b32.xlu0 %v3695, 112
        %v3829 = vpop.permute.xlu0 %3828
        %3830 = vrot.lane.b32.xlu0 %v3696, 112
        %v3831 = vpop.permute.xlu0 %3830
        %3832 = vrot.lane.b32.xlu0 %v3697, 112
        %v3833 = vpop.permute.xlu0 %3832
        %3834 = vrot.lane.b32.xlu0 %v3698, 112
        %v3835 = vpop.permute.xlu0 %3834
        %3836 = vrot.lane.b32.xlu0 %v3699, 112
        %v3837 = vpop.permute.xlu0 %3836
        %3838 = vrot.lane.b32.xlu0 %v3700, 112
        %v3839 = vpop.permute.xlu0 %3838
        %3840 = vrot.lane.b32.xlu0 %v3701, 112
        %v3841 = vpop.permute.xlu0 %3840
        %3842 = vrot.lane.b32.xlu0 %v3702, 112
        %v3843 = vpop.permute.xlu0 %3842
        %3844 = vrot.lane.b32.xlu0 %v3703, 112
        %v3845 = vpop.permute.xlu0 %3844
        %3846 = vrot.lane.b32.xlu0 %v3704, 112
        %v3847 = vpop.permute.xlu0 %3846
        %3848 = vrot.lane.b32.xlu0 %v3705, 112
        %v3849 = vpop.permute.xlu0 %3848
        %3850 = vrot.lane.b32.xlu0 %v3706, 112
        %v3851 = vpop.permute.xlu0 %3850
        %3852 = vrot.lane.b32.xlu0 %v3707, 112
        %v3853 = vpop.permute.xlu0 %3852
        %3854 = vrot.lane.b32.xlu0 %v3708, 112
        %v3855 = vpop.permute.xlu0 %3854
        %3856 = vrot.lane.b32.xlu0 %v3709, 112
        %v3857 = vpop.permute.xlu0 %3856
        %3858 = vrot.lane.b32.xlu0 %v3710, 112
        %v3859 = vpop.permute.xlu0 %3858
        %3860 = vrot.lane.b32.xlu0 %v3711, 112
        %v3861 = vpop.permute.xlu0 %3860
        %3862 = vrot.lane.b32.xlu0 %v3712, 112
        %v3863 = vpop.permute.xlu0 %3862
        %3864 = vrot.lane.b32.xlu0 %v3713, 112
        %v3865 = vpop.permute.xlu0 %3864
        %3866 = vrot.lane.b32.xlu0 %v3714, 112
        %v3867 = vpop.permute.xlu0 %3866
        %3868 = vrot.lane.b32.xlu0 %v3715, 112
        %v3869 = vpop.permute.xlu0 %3868
        %3870 = vrot.lane.b32.xlu0 %v3716, 112
        %v3871 = vpop.permute.xlu0 %3870
        %3872 = vrot.lane.b32.xlu0 %v3717, 112
        %v3873 = vpop.permute.xlu0 %3872
        %3874 = vrot.lane.b32.xlu0 %v3718, 112
        %v3875 = vpop.permute.xlu0 %3874
        %3876 = vrot.lane.b32.xlu0 %v3719, 112
        %v3877 = vpop.permute.xlu0 %3876
        %3878 = vrot.lane.b32.xlu0 %v3720, 112
        %v3879 = vpop.permute.xlu0 %3878
        %3880 = vrot.lane.b32.xlu0 %v3721, 112
        %v3881 = vpop.permute.xlu0 %3880
        %3882 = vrot.lane.b32.xlu0 %v3722, 112
        %v3883 = vpop.permute.xlu0 %3882
        %3884 = vrot.lane.b32.xlu0 %v3723, 112
        %v3885 = vpop.permute.xlu0 %3884
        %3886 = vrot.lane.b32.xlu0 %v3724, 112
        %v3887 = vpop.permute.xlu0 %3886
        %3888 = vrot.lane.b32.xlu0 %v3725, 112
        %v3889 = vpop.permute.xlu0 %3888
        %3890 = vrot.lane.b32.xlu0 %v3726, 112
        %v3891 = vpop.permute.xlu0 %3890
        %3892 = vrot.lane.b32.xlu0 %v3727, 112
        %v3893 = vpop.permute.xlu0 %3892
        %3894 = vrot.lane.b32.xlu0 %v3728, 112
        %v3895 = vpop.permute.xlu0 %3894
        %3896 = vrot.lane.b32.xlu0 %v3729, 112
        %v3897 = vpop.permute.xlu0 %3896
        %vm3898 = vcmask 916480
        %v3899 = vsel %vm3898, %v3787, %v3789
        %v3900 = vsel %vm3898, %v3789, %v3791
        %v3901 = vsel %vm3898, %v3791, %v3793
        %v3902 = vsel %vm3898, %v3795, %v3797
        %v3903 = vsel %vm3898, %v3797, %v3799
        %v3904 = vsel %vm3898, %v3799, %v3801
        %v3905 = vsel %vm3898, %v3803, %v3805
        %v3906 = vsel %vm3898, %v3805, %v3807
        %v3907 = vsel %vm3898, %v3807, %v3809
        %v3908 = vsel %vm3898, %v3811, %v3813
        %v3909 = vsel %vm3898, %v3813, %v3815
        %v3910 = vsel %vm3898, %v3815, %v3817
        %v3911 = vsel %vm3898, %v3819, %v3821
        %v3912 = vsel %vm3898, %v3821, %v3823
        %v3913 = vsel %vm3898, %v3823, %v3825
        %v3914 = vsel %vm3898, %v3827, %v3829
        %v3915 = vsel %vm3898, %v3829, %v3831
        %v3916 = vsel %vm3898, %v3831, %v3833
        %v3917 = vsel %vm3898, %v3835, %v3837
        %v3918 = vsel %vm3898, %v3837, %v3839
        %v3919 = vsel %vm3898, %v3839, %v3841
        %v3920 = vsel %vm3898, %v3843, %v3845
        %v3921 = vsel %vm3898, %v3845, %v3847
        %v3922 = vsel %vm3898, %v3847, %v3849
        %v3923 = vsel %vm3898, %v3851, %v3853
        %v3924 = vsel %vm3898, %v3853, %v3855
        %v3925 = vsel %vm3898, %v3855, %v3857
        %v3926 = vsel %vm3898, %v3859, %v3861
        %v3927 = vsel %vm3898, %v3861, %v3863
        %v3928 = vsel %vm3898, %v3863, %v3865
        %v3929 = vsel %vm3898, %v3867, %v3869
        %v3930 = vsel %vm3898, %v3869, %v3871
        %v3931 = vsel %vm3898, %v3871, %v3873
        %v3932 = vsel %vm3898, %v3875, %v3877
        %v3933 = vsel %vm3898, %v3877, %v3879
        %v3934 = vsel %vm3898, %v3879, %v3881
        %v3935 = vsel %vm3898, %v3883, %v3885
        %v3936 = vsel %vm3898, %v3885, %v3887
        %v3937 = vsel %vm3898, %v3887, %v3889
        %v3938 = vsel %vm3898, %v3891, %v3893
        %v3939 = vsel %vm3898, %v3893, %v3895
        %v3940 = vsel %vm3898, %v3895, %v3897
        %v3997 = vmax.f32 %v3674, %v3899
        %v3998 = vmax.f32 %v3675, %v3900
        %v3999 = vmax.f32 %v3676, %v3901
        %v4000 = vmax.f32 %v3677, %v3793
        %v4001 = vmax.f32 %v3678, %v3902
        %v4002 = vmax.f32 %v3679, %v3903
        %v4003 = vmax.f32 %v3680, %v3904
        %v4004 = vmax.f32 %v3681, %v3801
        %v4005 = vmax.f32 %v3682, %v3905
        %v4006 = vmax.f32 %v3683, %v3906
        %v4007 = vmax.f32 %v3684, %v3907
        %v4008 = vmax.f32 %v3685, %v3809
        %v4009 = vmax.f32 %v3686, %v3908
        %v4010 = vmax.f32 %v3687, %v3909
        %v4011 = vmax.f32 %v3688, %v3910
        %v4012 = vmax.f32 %v3689, %v3817
        %v4013 = vmax.f32 %v3690, %v3911
        %v4014 = vmax.f32 %v3691, %v3912
        %v4015 = vmax.f32 %v3692, %v3913
        %v4016 = vmax.f32 %v3693, %v3825
        %v4017 = vmax.f32 %v3694, %v3914
        %v4018 = vmax.f32 %v3695, %v3915
        %v4019 = vmax.f32 %v3696, %v3916
        %v4020 = vmax.f32 %v3697, %v3833
        %v4021 = vmax.f32 %v3698, %v3917
        %v4022 = vmax.f32 %v3699, %v3918
        %v4023 = vmax.f32 %v3700, %v3919
        %v4024 = vmax.f32 %v3701, %v3841
        %v4025 = vmax.f32 %v3702, %v3920
        %v4026 = vmax.f32 %v3703, %v3921
        %v4027 = vmax.f32 %v3704, %v3922
        %v4028 = vmax.f32 %v3705, %v3849
        %v4029 = vmax.f32 %v3706, %v3923
        %v4030 = vmax.f32 %v3707, %v3924
        %v4031 = vmax.f32 %v3708, %v3925
        %v4032 = vmax.f32 %v3709, %v3857
        %v4033 = vmax.f32 %v3710, %v3926
        %v4034 = vmax.f32 %v3711, %v3927
        %v4035 = vmax.f32 %v3712, %v3928
        %v4036 = vmax.f32 %v3713, %v3865
        %v4037 = vmax.f32 %v3714, %v3929
        %v4038 = vmax.f32 %v3715, %v3930
        %v4039 = vmax.f32 %v3716, %v3931
        %v4040 = vmax.f32 %v3717, %v3873
        %v4041 = vmax.f32 %v3718, %v3932
        %v4042 = vmax.f32 %v3719, %v3933
        %v4043 = vmax.f32 %v3720, %v3934
        %v4044 = vmax.f32 %v3721, %v3881
        %v4045 = vmax.f32 %v3722, %v3935
        %v4046 = vmax.f32 %v3723, %v3936
        %v4047 = vmax.f32 %v3724, %v3937
        %v4048 = vmax.f32 %v3725, %v3889
        %v4049 = vmax.f32 %v3726, %v3938
        %v4050 = vmax.f32 %v3727, %v3939
        %v4051 = vmax.f32 %v3728, %v3940
        %v4052 = vmax.f32 %v3729, %v3897
        %v4053 = vld [vmem:[#allocation8] sm:$0xff]
        %v4054 = vld [vmem:[#allocation8 + $0x8] sm:$0xff]
        %v4055 = vld [vmem:[#allocation8 + $0x10] sm:$0xff]
        %v4056 = vld [vmem:[#allocation8 + $0x18] sm:$0xff]
        %v4057 = vld [vmem:[#allocation8 + $0x20] sm:$0xff]
        %v4058 = vld [vmem:[#allocation8 + $0x28] sm:$0xff]
        %v4059 = vld [vmem:[#allocation8 + $0x30] sm:$0xff]
        %v4060 = vld [vmem:[#allocation8 + $0x38] sm:$0xff]
        %v4061 = vld [vmem:[#allocation8 + $0x40] sm:$0xff]
        %v4062 = vld [vmem:[#allocation8 + $0x48] sm:$0xff]
        %v4063 = vld [vmem:[#allocation8 + $0x50] sm:$0xff]
        %v4064 = vld [vmem:[#allocation8 + $0x58] sm:$0xff]
        %v4065 = vld [vmem:[#allocation8 + $0x60] sm:$0xff]
        %v4066 = vld [vmem:[#allocation8 + $0x68] sm:$0xff]
        %v4067 = vld [vmem:[#allocation8 + $0x70] sm:$0xff]
        %v4068 = vld [vmem:[#allocation8 + $0x78] sm:$0xff]
        %v4069 = vld [vmem:[#allocation8 + $0x80] sm:$0xff]
        %v4070 = vld [vmem:[#allocation8 + $0x88] sm:$0xff]
        %v4071 = vld [vmem:[#allocation8 + $0x90] sm:$0xff]
        %v4072 = vld [vmem:[#allocation8 + $0x98] sm:$0xff]
        %v4073 = vld [vmem:[#allocation8 + $0xa0] sm:$0xff]
        %v4074 = vld [vmem:[#allocation8 + $0xa8] sm:$0xff]
        %v4075 = vld [vmem:[#allocation8 + $0xb0] sm:$0xff]
        %v4076 = vld [vmem:[#allocation8 + $0xb8] sm:$0xff]
        %v4077 = vld [vmem:[#allocation8 + $0xc0] sm:$0xff]
        %v4078 = vld [vmem:[#allocation8 + $0xc8] sm:$0xff]
        %v4079 = vld [vmem:[#allocation8 + $0xd0] sm:$0xff]
        %v4080 = vld [vmem:[#allocation8 + $0xd8] sm:$0xff]
        %v4081 = vld [vmem:[#allocation8 + $0xe0] sm:$0xff]
        %v4082 = vld [vmem:[#allocation8 + $0xe8] sm:$0xff]
        %v4083 = vld [vmem:[#allocation8 + $0xf0] sm:$0xff]
        %v4084 = vld [vmem:[#allocation8 + $0xf8] sm:$0xff]
        %v4085 = vld [vmem:[#allocation8 + $0x100] sm:$0xff]
        %v4086 = vld [vmem:[#allocation8 + $0x108] sm:$0xff]
        %v4087 = vld [vmem:[#allocation8 + $0x110] sm:$0xff]
        %v4088 = vld [vmem:[#allocation8 + $0x118] sm:$0xff]
        %v4089 = vld [vmem:[#allocation8 + $0x120] sm:$0xff]
        %v4090 = vld [vmem:[#allocation8 + $0x128] sm:$0xff]
        %v4091 = vld [vmem:[#allocation8 + $0x130] sm:$0xff]
        %v4092 = vld [vmem:[#allocation8 + $0x138] sm:$0xff]
        %v4093 = vld [vmem:[#allocation8 + $0x140] sm:$0xff]
        %v4094 = vld [vmem:[#allocation8 + $0x148] sm:$0xff]
        %v4095 = vld [vmem:[#allocation8 + $0x150] sm:$0xff]
        %v4096 = vld [vmem:[#allocation8 + $0x158] sm:$0xff]
        %v4097 = vld [vmem:[#allocation8 + $0x160] sm:$0xff]
        %v4098 = vld [vmem:[#allocation8 + $0x168] sm:$0xff]
        %v4099 = vld [vmem:[#allocation8 + $0x170] sm:$0xff]
        %v4100 = vld [vmem:[#allocation8 + $0x178] sm:$0xff]
        %v4101 = vld [vmem:[#allocation8 + $0x180] sm:$0xff]
        %v4102 = vld [vmem:[#allocation8 + $0x188] sm:$0xff]
        %v4103 = vld [vmem:[#allocation8 + $0x190] sm:$0xff]
        %v4104 = vld [vmem:[#allocation8 + $0x198] sm:$0xff]
        %v4105 = vld [vmem:[#allocation8 + $0x1a0] sm:$0xff]
        %v4106 = vld [vmem:[#allocation8 + $0x1a8] sm:$0xff]
        %v4107 = vld [vmem:[#allocation8 + $0x1b0] sm:$0xff]
        %v4108 = vld [vmem:[#allocation8 + $0x1b8] sm:$0xff]
        %v4109 = vld [vmem:[#allocation8 + $0x1c0] sm:$0xff]
        %v4110 = vld [vmem:[#allocation8 + $0x1c8] sm:$0xff]
        %v4111 = vld [vmem:[#allocation8 + $0x1d0] sm:$0xff]
        %v4112 = vld [vmem:[#allocation8 + $0x1d8] sm:$0xff]
        %v4113 = vld [vmem:[#allocation8 + $0x1e0] sm:$0xff]
        %v4114 = vld [vmem:[#allocation8 + $0x1e8] sm:$0xff]
        %v4115 = vld [vmem:[#allocation8 + $0x1f0] sm:$0xff]
        %v4116 = vld [vmem:[#allocation8 + $0x1f8] sm:$0xff]
        %v4117 = vld [vmem:[#allocation8 + $0x200] sm:$0xff]
        %v4118 = vld [vmem:[#allocation8 + $0x208] sm:$0xff]
        %v4119 = vld [vmem:[#allocation8 + $0x210] sm:$0xff]
        %v4120 = vld [vmem:[#allocation8 + $0x218] sm:$0xff]
        %v4121 = vld [vmem:[#allocation8 + $0x220] sm:$0xff]
        %v4122 = vld [vmem:[#allocation8 + $0x228] sm:$0xff]
        %v4123 = vld [vmem:[#allocation8 + $0x230] sm:$0xff]
        %v4124 = vld [vmem:[#allocation8 + $0x238] sm:$0xff]
        %v4125 = vld [vmem:[#allocation8 + $0x240] sm:$0xff]
        %v4126 = vld [vmem:[#allocation8 + $0x248] sm:$0xff]
        %v4127 = vld [vmem:[#allocation8 + $0x250] sm:$0xff]
        %v4128 = vld [vmem:[#allocation8 + $0x258] sm:$0xff]
        %v4129 = vld [vmem:[#allocation8 + $0x260] sm:$0xff]
        %v4130 = vld [vmem:[#allocation8 + $0x268] sm:$0xff]
        %v4131 = vld [vmem:[#allocation8 + $0x270] sm:$0xff]
        %v4132 = vld [vmem:[#allocation8 + $0x278] sm:$0xff]
        %v4133 = vld [vmem:[#allocation8 + $0x280] sm:$0xff]
        %v4134 = vld [vmem:[#allocation8 + $0x288] sm:$0xff]
        %v4135 = vld [vmem:[#allocation8 + $0x290] sm:$0xff]
        %v4136 = vld [vmem:[#allocation8 + $0x298] sm:$0xff]
        %v4137 = vld [vmem:[#allocation8 + $0x2a0] sm:$0xff]
        %v4138 = vld [vmem:[#allocation8 + $0x2a8] sm:$0xff]
        %v4139 = vld [vmem:[#allocation8 + $0x2b0] sm:$0xff]
        %v4140 = vld [vmem:[#allocation8 + $0x2b8] sm:$0xff]
        %v4141 = vld [vmem:[#allocation8 + $0x2c0] sm:$0xff]
        %v4142 = vld [vmem:[#allocation8 + $0x2c8] sm:$0xff]
        %v4143 = vld [vmem:[#allocation8 + $0x2d0] sm:$0xff]
        %v4144 = vld [vmem:[#allocation8 + $0x2d8] sm:$0xff]
        %v4145 = vld [vmem:[#allocation8 + $0x2e0] sm:$0xff]
        %v4146 = vld [vmem:[#allocation8 + $0x2e8] sm:$0xff]
        %v4147 = vld [vmem:[#allocation8 + $0x2f0] sm:$0xff]
        %v4148 = vld [vmem:[#allocation8 + $0x2f8] sm:$0xff]
        %v4149 = vld [vmem:[#allocation8 + $0x300] sm:$0xff]
        %v4150 = vld [vmem:[#allocation8 + $0x308] sm:$0xff]
        %v4151 = vld [vmem:[#allocation8 + $0x310] sm:$0xff]
        %v4152 = vld [vmem:[#allocation8 + $0x318] sm:$0xff]
        %v4153 = vld [vmem:[#allocation8 + $0x320] sm:$0xff]
        %v4154 = vld [vmem:[#allocation8 + $0x328] sm:$0xff]
        %v4155 = vld [vmem:[#allocation8 + $0x330] sm:$0xff]
        %v4156 = vld [vmem:[#allocation8 + $0x338] sm:$0xff]
        %v4157 = vld [vmem:[#allocation8 + $0x340] sm:$0xff]
        %v4158 = vld [vmem:[#allocation8 + $0x348] sm:$0xff]
        %v4159 = vld [vmem:[#allocation8 + $0x350] sm:$0xff]
        %v4160 = vld [vmem:[#allocation8 + $0x358] sm:$0xff]
        %v4161 = vld [vmem:[#allocation8 + $0x360] sm:$0xff]
        %v4162 = vld [vmem:[#allocation8 + $0x368] sm:$0xff]
        %v4163 = vld [vmem:[#allocation8 + $0x370] sm:$0xff]
        %v4164 = vld [vmem:[#allocation8 + $0x378] sm:$0xff]
        %v4165 = vld [vmem:[#allocation8 + $0x380] sm:$0xff]
        %v4166 = vld [vmem:[#allocation8 + $0x388] sm:$0xff]
        %v4167 = vld [vmem:[#allocation8 + $0x390] sm:$0xff]
        %v4168 = vld [vmem:[#allocation8 + $0x398] sm:$0xff]
        %v4169 = vld [vmem:[#allocation8 + $0x3a0] sm:$0xff]
        %v4170 = vld [vmem:[#allocation8 + $0x3a8] sm:$0xff]
        %v4171 = vld [vmem:[#allocation8 + $0x3b0] sm:$0xff]
        %v4172 = vld [vmem:[#allocation8 + $0x3b8] sm:$0xff]
        %v4173 = vld [vmem:[#allocation8 + $0x3c0] sm:$0xff]
        %v4174 = vld [vmem:[#allocation8 + $0x3c8] sm:$0xff]
        %v4175 = vld [vmem:[#allocation8 + $0x3d0] sm:$0xff]
        %v4176 = vld [vmem:[#allocation8 + $0x3d8] sm:$0xff]
        %v4177 = vld [vmem:[#allocation8 + $0x3e0] sm:$0xff]
        %v4178 = vld [vmem:[#allocation8 + $0x3e8] sm:$0xff]
        %v4179 = vld [vmem:[#allocation8 + $0x3f0] sm:$0xff]
        %v4180 = vld [vmem:[#allocation8 + $0x3f8] sm:$0xff]
        %v4181 = vld [vmem:[#allocation8 + $0x400] sm:$0xff]
        %v4182 = vld [vmem:[#allocation8 + $0x408] sm:$0xff]
        %v4183 = vld [vmem:[#allocation8 + $0x410] sm:$0xff]
        %v4184 = vld [vmem:[#allocation8 + $0x418] sm:$0xff]
        %v4185 = vld [vmem:[#allocation8 + $0x420] sm:$0xff]
        %v4186 = vld [vmem:[#allocation8 + $0x428] sm:$0xff]
        %v4187 = vld [vmem:[#allocation8 + $0x430] sm:$0xff]
        %v4188 = vld [vmem:[#allocation8 + $0x438] sm:$0xff]
        %v4189 = vld [vmem:[#allocation8 + $0x440] sm:$0xff]
        %v4190 = vld [vmem:[#allocation8 + $0x448] sm:$0xff]
        %v4191 = vld [vmem:[#allocation8 + $0x450] sm:$0xff]
        %v4192 = vld [vmem:[#allocation8 + $0x458] sm:$0xff]
        %v4193 = vld [vmem:[#allocation8 + $0x460] sm:$0xff]
        %v4194 = vld [vmem:[#allocation8 + $0x468] sm:$0xff]
        %v4195 = vld [vmem:[#allocation8 + $0x470] sm:$0xff]
        %v4196 = vld [vmem:[#allocation8 + $0x478] sm:$0xff]
        %v4197 = vld [vmem:[#allocation8 + $0x480] sm:$0xff]
        %v4198 = vld [vmem:[#allocation8 + $0x488] sm:$0xff]
        %v4199 = vld [vmem:[#allocation8 + $0x490] sm:$0xff]
        %v4200 = vld [vmem:[#allocation8 + $0x498] sm:$0xff]
        %v4201 = vld [vmem:[#allocation8 + $0x4a0] sm:$0xff]
        %v4202 = vld [vmem:[#allocation8 + $0x4a8] sm:$0xff]
        %v4203 = vld [vmem:[#allocation8 + $0x4b0] sm:$0xff]
        %v4204 = vld [vmem:[#allocation8 + $0x4b8] sm:$0xff]
        %v4205 = vld [vmem:[#allocation8 + $0x4c0] sm:$0xff]
        %v4206 = vld [vmem:[#allocation8 + $0x4c8] sm:$0xff]
        %v4207 = vld [vmem:[#allocation8 + $0x4d0] sm:$0xff]
        %v4208 = vld [vmem:[#allocation8 + $0x4d8] sm:$0xff]
        %v4209 = vld [vmem:[#allocation8 + $0x4e0] sm:$0xff]
        %v4210 = vld [vmem:[#allocation8 + $0x4e8] sm:$0xff]
        %v4211 = vld [vmem:[#allocation8 + $0x4f0] sm:$0xff]
        %v4212 = vld [vmem:[#allocation8 + $0x4f8] sm:$0xff]
        %v4213 = vld [vmem:[#allocation8 + $0x500] sm:$0xff]
        %v4214 = vld [vmem:[#allocation8 + $0x508] sm:$0xff]
        %v4215 = vld [vmem:[#allocation8 + $0x510] sm:$0xff]
        %v4216 = vld [vmem:[#allocation8 + $0x518] sm:$0xff]
        %v4217 = vld [vmem:[#allocation8 + $0x520] sm:$0xff]
        %v4218 = vld [vmem:[#allocation8 + $0x528] sm:$0xff]
        %v4219 = vld [vmem:[#allocation8 + $0x530] sm:$0xff]
        %v4220 = vld [vmem:[#allocation8 + $0x538] sm:$0xff]
        %v4221 = vld [vmem:[#allocation8 + $0x540] sm:$0xff]
        %v4222 = vld [vmem:[#allocation8 + $0x548] sm:$0xff]
        %v4223 = vld [vmem:[#allocation8 + $0x550] sm:$0xff]
        %v4224 = vld [vmem:[#allocation8 + $0x558] sm:$0xff]
        %v4225 = vld [vmem:[#allocation8 + $0x560] sm:$0xff]
        %v4226 = vld [vmem:[#allocation8 + $0x568] sm:$0xff]
        %v4227 = vld [vmem:[#allocation8 + $0x570] sm:$0xff]
        %v4228 = vld [vmem:[#allocation8 + $0x578] sm:$0xff]
        %v4229 = vld [vmem:[#allocation8 + $0x580] sm:$0xff]
        %v4230 = vld [vmem:[#allocation8 + $0x588] sm:$0xff]
        %v4231 = vld [vmem:[#allocation8 + $0x590] sm:$0xff]
        %v4232 = vld [vmem:[#allocation8 + $0x598] sm:$0xff]
        %v4233 = vld [vmem:[#allocation8 + $0x5a0] sm:$0xff]
        %v4234 = vld [vmem:[#allocation8 + $0x5a8] sm:$0xff]
        %v4235 = vld [vmem:[#allocation8 + $0x5b0] sm:$0xff]
        %v4236 = vld [vmem:[#allocation8 + $0x5b8] sm:$0xff]
        %v4237 = vld [vmem:[#allocation8 + $0x5c0] sm:$0xff]
        %v4238 = vld [vmem:[#allocation8 + $0x5c8] sm:$0xff]
        %v4239 = vld [vmem:[#allocation8 + $0x5d0] sm:$0xff]
        %v4240 = vld [vmem:[#allocation8 + $0x5d8] sm:$0xff]
        %v4241 = vld [vmem:[#allocation8 + $0x5e0] sm:$0xff]
        %v4242 = vld [vmem:[#allocation8 + $0x5e8] sm:$0xff]
        %v4243 = vld [vmem:[#allocation8 + $0x5f0] sm:$0xff]
        %v4244 = vld [vmem:[#allocation8 + $0x5f8] sm:$0xff]
        %v4245 = vld [vmem:[#allocation8 + $0x600] sm:$0xff]
        %v4246 = vld [vmem:[#allocation8 + $0x608] sm:$0xff]
        %v4247 = vld [vmem:[#allocation8 + $0x610] sm:$0xff]
        %v4248 = vld [vmem:[#allocation8 + $0x618] sm:$0xff]
        %v4249 = vld [vmem:[#allocation8 + $0x620] sm:$0xff]
        %v4250 = vld [vmem:[#allocation8 + $0x628] sm:$0xff]
        %v4251 = vld [vmem:[#allocation8 + $0x630] sm:$0xff]
        %v4252 = vld [vmem:[#allocation8 + $0x638] sm:$0xff]
        %v4253 = vld [vmem:[#allocation8 + $0x640] sm:$0xff]
        %v4254 = vld [vmem:[#allocation8 + $0x648] sm:$0xff]
        %v4255 = vld [vmem:[#allocation8 + $0x650] sm:$0xff]
        %v4256 = vld [vmem:[#allocation8 + $0x658] sm:$0xff]
        %v4257 = vld [vmem:[#allocation8 + $0x660] sm:$0xff]
        %v4258 = vld [vmem:[#allocation8 + $0x668] sm:$0xff]
        %v4259 = vld [vmem:[#allocation8 + $0x670] sm:$0xff]
        %v4260 = vld [vmem:[#allocation8 + $0x678] sm:$0xff]
        %v4261 = vld [vmem:[#allocation8 + $0x680] sm:$0xff]
        %v4262 = vld [vmem:[#allocation8 + $0x688] sm:$0xff]
        %v4263 = vld [vmem:[#allocation8 + $0x690] sm:$0xff]
        %v4264 = vld [vmem:[#allocation8 + $0x698] sm:$0xff]
        %v4265 = vld [vmem:[#allocation8 + $0x6a0] sm:$0xff]
        %v4266 = vld [vmem:[#allocation8 + $0x6a8] sm:$0xff]
        %v4267 = vld [vmem:[#allocation8 + $0x6b0] sm:$0xff]
        %v4268 = vld [vmem:[#allocation8 + $0x6b8] sm:$0xff]
        %s4269 = scalar_lea.vmem [#allocation8], 1728
        %v4270 = vld [vmem:[%s4269] sm:$0xff]
        %v4271 = vld [vmem:[%s4269 + $0x8] sm:$0xff]
        %v4272 = vld [vmem:[%s4269 + $0x10] sm:$0xff]
        %v4273 = vld [vmem:[%s4269 + $0x18] sm:$0xff]
        %v4274 = vld [vmem:[%s4269 + $0x20] sm:$0xff]
        %v4275 = vld [vmem:[%s4269 + $0x28] sm:$0xff]
        %v4276 = vld [vmem:[%s4269 + $0x30] sm:$0xff]
        %v4277 = vld [vmem:[%s4269 + $0x38] sm:$0xff]
        %v4278 = vld [vmem:[%s4269 + $0x40] sm:$0xff]
        %v4279 = vld [vmem:[%s4269 + $0x48] sm:$0xff]
        %v4280 = vld [vmem:[%s4269 + $0x50] sm:$0xff]
        %v4281 = vld [vmem:[%s4269 + $0x58] sm:$0xff]
        %v4282 = vld [vmem:[%s4269 + $0x60] sm:$0xff]
        %v4283 = vld [vmem:[%s4269 + $0x68] sm:$0xff]
        %v4284 = vld [vmem:[%s4269 + $0x70] sm:$0xff]
        %v4285 = vld [vmem:[%s4269 + $0x78] sm:$0xff]
        %v4286 = vld [vmem:[%s4269 + $0x80] sm:$0xff]
        %v4287 = vld [vmem:[%s4269 + $0x88] sm:$0xff]
        %v4288 = vld [vmem:[%s4269 + $0x90] sm:$0xff]
        %v4289 = vld [vmem:[%s4269 + $0x98] sm:$0xff]
        %v4290 = vld [vmem:[%s4269 + $0xa0] sm:$0xff]
        %v4291 = vld [vmem:[%s4269 + $0xa8] sm:$0xff]
        %v4292 = vld [vmem:[%s4269 + $0xb0] sm:$0xff]
        %v4293 = vld [vmem:[%s4269 + $0xb8] sm:$0xff]
        %v4294 = vld [vmem:[%s4269 + $0xc0] sm:$0xff]
        %v4295 = vld [vmem:[%s4269 + $0xc8] sm:$0xff]
        %v4296 = vld [vmem:[%s4269 + $0xd0] sm:$0xff]
        %v4297 = vld [vmem:[%s4269 + $0xd8] sm:$0xff]
        %v4298 = vld [vmem:[%s4269 + $0xe0] sm:$0xff]
        %v4299 = vld [vmem:[%s4269 + $0xe8] sm:$0xff]
        %v4300 = vld [vmem:[%s4269 + $0xf0] sm:$0xff]
        %v4301 = vld [vmem:[%s4269 + $0xf8] sm:$0xff]
        %v4302 = vld [vmem:[%s4269 + $0x100] sm:$0xff]
        %v4303 = vld [vmem:[%s4269 + $0x108] sm:$0xff]
        %v4304 = vld [vmem:[%s4269 + $0x110] sm:$0xff]
        %v4305 = vld [vmem:[%s4269 + $0x118] sm:$0xff]
        %v4306 = vld [vmem:[%s4269 + $0x120] sm:$0xff]
        %v4307 = vld [vmem:[%s4269 + $0x128] sm:$0xff]
        %v4308 = vld [vmem:[%s4269 + $0x130] sm:$0xff]
        %v4309 = vld [vmem:[%s4269 + $0x138] sm:$0xff]
        %v4310 = vld [vmem:[%s4269 + $0x140] sm:$0xff]
        %v4311 = vld [vmem:[%s4269 + $0x148] sm:$0xff]
        %v4312 = vld [vmem:[%s4269 + $0x150] sm:$0xff]
        %v4313 = vld [vmem:[%s4269 + $0x158] sm:$0xff]
        %v4314 = vld [vmem:[%s4269 + $0x160] sm:$0xff]
        %v4315 = vld [vmem:[%s4269 + $0x168] sm:$0xff]
        %v4316 = vld [vmem:[%s4269 + $0x170] sm:$0xff]
        %v4317 = vld [vmem:[%s4269 + $0x178] sm:$0xff]
        %v4318 = vld [vmem:[%s4269 + $0x180] sm:$0xff]
        %v4319 = vld [vmem:[%s4269 + $0x188] sm:$0xff]
        %v4320 = vld [vmem:[%s4269 + $0x190] sm:$0xff]
        %v4321 = vld [vmem:[%s4269 + $0x198] sm:$0xff]
        %v4322 = vld [vmem:[%s4269 + $0x1a0] sm:$0xff]
        %v4323 = vld [vmem:[%s4269 + $0x1a8] sm:$0xff]
        %v4324 = vld [vmem:[%s4269 + $0x1b0] sm:$0xff]
        %v4325 = vld [vmem:[%s4269 + $0x1b8] sm:$0xff]
        %v4326 = vld [vmem:[%s4269 + $0x1c0] sm:$0xff]
        %v4327 = vld [vmem:[%s4269 + $0x1c8] sm:$0xff]
        %v4328 = vld [vmem:[%s4269 + $0x1d0] sm:$0xff]
        %v4329 = vld [vmem:[%s4269 + $0x1d8] sm:$0xff]
        %v4330 = vld [vmem:[%s4269 + $0x1e0] sm:$0xff]
        %v4331 = vld [vmem:[%s4269 + $0x1e8] sm:$0xff]
        %v4332 = vld [vmem:[%s4269 + $0x1f0] sm:$0xff]
        %v4333 = vld [vmem:[%s4269 + $0x1f8] sm:$0xff]
        %v4334 = vld [vmem:[%s4269 + $0x200] sm:$0xff]
        %v4335 = vld [vmem:[%s4269 + $0x208] sm:$0xff]
        %v4336 = vld [vmem:[%s4269 + $0x210] sm:$0xff]
        %v4337 = vld [vmem:[%s4269 + $0x218] sm:$0xff]
        %v4338 = vld [vmem:[%s4269 + $0x220] sm:$0xff]
        %v4339 = vld [vmem:[%s4269 + $0x228] sm:$0xff]
        %v4340 = vld [vmem:[%s4269 + $0x230] sm:$0xff]
        %v4341 = vld [vmem:[%s4269 + $0x238] sm:$0xff]
        %v4342 = vld [vmem:[%s4269 + $0x240] sm:$0xff]
        %v4343 = vld [vmem:[%s4269 + $0x248] sm:$0xff]
        %v4344 = vld [vmem:[%s4269 + $0x250] sm:$0xff]
        %v4345 = vld [vmem:[%s4269 + $0x258] sm:$0xff]
        %v4346 = vld [vmem:[%s4269 + $0x260] sm:$0xff]
        %v4347 = vld [vmem:[%s4269 + $0x268] sm:$0xff]
        %v4348 = vld [vmem:[%s4269 + $0x270] sm:$0xff]
        %v4349 = vld [vmem:[%s4269 + $0x278] sm:$0xff]
        %v4350 = vld [vmem:[%s4269 + $0x280] sm:$0xff]
        %v4351 = vld [vmem:[%s4269 + $0x288] sm:$0xff]
        %v4352 = vld [vmem:[%s4269 + $0x290] sm:$0xff]
        %v4353 = vld [vmem:[%s4269 + $0x298] sm:$0xff]
        %v4354 = vld [vmem:[%s4269 + $0x2a0] sm:$0xff]
        %v4355 = vld [vmem:[%s4269 + $0x2a8] sm:$0xff]
        %v4356 = vld [vmem:[%s4269 + $0x2b0] sm:$0xff]
        %v4357 = vld [vmem:[%s4269 + $0x2b8] sm:$0xff]
        %v4358 = vld [vmem:[%s4269 + $0x2c0] sm:$0xff]
        %v4359 = vld [vmem:[%s4269 + $0x2c8] sm:$0xff]
        %v4360 = vld [vmem:[%s4269 + $0x2d0] sm:$0xff]
        %v4361 = vld [vmem:[%s4269 + $0x2d8] sm:$0xff]
        %v4362 = vld [vmem:[%s4269 + $0x2e0] sm:$0xff]
        %v4363 = vld [vmem:[%s4269 + $0x2e8] sm:$0xff]
        %v4364 = vld [vmem:[%s4269 + $0x2f0] sm:$0xff]
        %v4365 = vld [vmem:[%s4269 + $0x2f8] sm:$0xff]
        %v4366 = vld [vmem:[%s4269 + $0x300] sm:$0xff]
        %v4367 = vld [vmem:[%s4269 + $0x308] sm:$0xff]
        %v4368 = vld [vmem:[%s4269 + $0x310] sm:$0xff]
        %v4369 = vld [vmem:[%s4269 + $0x318] sm:$0xff]
        %v4370 = vld [vmem:[%s4269 + $0x320] sm:$0xff]
        %v4371 = vld [vmem:[%s4269 + $0x328] sm:$0xff]
        %v4372 = vld [vmem:[%s4269 + $0x330] sm:$0xff]
        %v4373 = vld [vmem:[%s4269 + $0x338] sm:$0xff]
        %v4374 = vld [vmem:[%s4269 + $0x340] sm:$0xff]
        %v4375 = vld [vmem:[%s4269 + $0x348] sm:$0xff]
        %v4376 = vld [vmem:[%s4269 + $0x350] sm:$0xff]
        %v4377 = vld [vmem:[%s4269 + $0x358] sm:$0xff]
        %v4378 = vld [vmem:[%s4269 + $0x360] sm:$0xff]
        %v4379 = vld [vmem:[%s4269 + $0x368] sm:$0xff]
        %v4380 = vld [vmem:[%s4269 + $0x370] sm:$0xff]
        %v4381 = vld [vmem:[%s4269 + $0x378] sm:$0xff]
        %v4382 = vld [vmem:[%s4269 + $0x380] sm:$0xff]
        %v4383 = vld [vmem:[%s4269 + $0x388] sm:$0xff]
        %v4384 = vld [vmem:[%s4269 + $0x390] sm:$0xff]
        %v4385 = vld [vmem:[%s4269 + $0x398] sm:$0xff]
        %v4386 = vld [vmem:[%s4269 + $0x3a0] sm:$0xff]
        %v4387 = vld [vmem:[%s4269 + $0x3a8] sm:$0xff]
        %v4388 = vld [vmem:[%s4269 + $0x3b0] sm:$0xff]
        %v4389 = vld [vmem:[%s4269 + $0x3b8] sm:$0xff]
        %v4390 = vld [vmem:[%s4269 + $0x3c0] sm:$0xff]
        %v4391 = vld [vmem:[%s4269 + $0x3c8] sm:$0xff]
        %v4392 = vld [vmem:[%s4269 + $0x3d0] sm:$0xff]
        %v4393 = vld [vmem:[%s4269 + $0x3d8] sm:$0xff]
        %v4394 = vld [vmem:[%s4269 + $0x3e0] sm:$0xff]
        %v4395 = vld [vmem:[%s4269 + $0x3e8] sm:$0xff]
        %v4396 = vld [vmem:[%s4269 + $0x3f0] sm:$0xff]
        %v4397 = vld [vmem:[%s4269 + $0x3f8] sm:$0xff]
        %v4398 = vld [vmem:[%s4269 + $0x400] sm:$0xff]
        %v4399 = vld [vmem:[%s4269 + $0x408] sm:$0xff]
        %v4400 = vld [vmem:[%s4269 + $0x410] sm:$0xff]
        %v4401 = vld [vmem:[%s4269 + $0x418] sm:$0xff]
        %v4402 = vld [vmem:[%s4269 + $0x420] sm:$0xff]
        %v4403 = vld [vmem:[%s4269 + $0x428] sm:$0xff]
        %v4404 = vld [vmem:[%s4269 + $0x430] sm:$0xff]
        %v4405 = vld [vmem:[%s4269 + $0x438] sm:$0xff]
        %v4406 = vld [vmem:[%s4269 + $0x440] sm:$0xff]
        %v4407 = vld [vmem:[%s4269 + $0x448] sm:$0xff]
        %v4408 = vld [vmem:[%s4269 + $0x450] sm:$0xff]
        %v4409 = vld [vmem:[%s4269 + $0x458] sm:$0xff]
        %v4410 = vld [vmem:[%s4269 + $0x460] sm:$0xff]
        %v4411 = vld [vmem:[%s4269 + $0x468] sm:$0xff]
        %v4412 = vld [vmem:[%s4269 + $0x470] sm:$0xff]
        %v4413 = vld [vmem:[%s4269 + $0x478] sm:$0xff]
        %v4414 = vld [vmem:[%s4269 + $0x480] sm:$0xff]
        %v4415 = vld [vmem:[%s4269 + $0x488] sm:$0xff]
        %v4416 = vld [vmem:[%s4269 + $0x490] sm:$0xff]
        %v4417 = vld [vmem:[%s4269 + $0x498] sm:$0xff]
        %v4418 = vld [vmem:[%s4269 + $0x4a0] sm:$0xff]
        %v4419 = vld [vmem:[%s4269 + $0x4a8] sm:$0xff]
        %v4420 = vld [vmem:[%s4269 + $0x4b0] sm:$0xff]
        %v4421 = vld [vmem:[%s4269 + $0x4b8] sm:$0xff]
        %v4422 = vld [vmem:[%s4269 + $0x4c0] sm:$0xff]
        %v4423 = vld [vmem:[%s4269 + $0x4c8] sm:$0xff]
        %v4424 = vld [vmem:[%s4269 + $0x4d0] sm:$0xff]
        %v4425 = vld [vmem:[%s4269 + $0x4d8] sm:$0xff]
        %v4426 = vld [vmem:[%s4269 + $0x4e0] sm:$0xff]
        %v4427 = vld [vmem:[%s4269 + $0x4e8] sm:$0xff]
        %v4428 = vld [vmem:[%s4269 + $0x4f0] sm:$0xff]
        %v4429 = vld [vmem:[%s4269 + $0x4f8] sm:$0xff]
        %v4430 = vld [vmem:[%s4269 + $0x500] sm:$0xff]
        %v4431 = vld [vmem:[%s4269 + $0x508] sm:$0xff]
        %v4432 = vld [vmem:[%s4269 + $0x510] sm:$0xff]
        %v4433 = vld [vmem:[%s4269 + $0x518] sm:$0xff]
        %v4434 = vld [vmem:[%s4269 + $0x520] sm:$0xff]
        %v4435 = vld [vmem:[%s4269 + $0x528] sm:$0xff]
        %v4436 = vld [vmem:[%s4269 + $0x530] sm:$0xff]
        %v4437 = vld [vmem:[%s4269 + $0x538] sm:$0xff]
        %v4438 = vld [vmem:[%s4269 + $0x540] sm:$0xff]
        %v4439 = vld [vmem:[%s4269 + $0x548] sm:$0xff]
        %v4440 = vld [vmem:[%s4269 + $0x550] sm:$0xff]
        %v4441 = vld [vmem:[%s4269 + $0x558] sm:$0xff]
        %v4442 = vld [vmem:[%s4269 + $0x560] sm:$0xff]
        %v4443 = vld [vmem:[%s4269 + $0x568] sm:$0xff]
        %v4444 = vld [vmem:[%s4269 + $0x570] sm:$0xff]
        %v4445 = vld [vmem:[%s4269 + $0x578] sm:$0xff]
        %v4446 = vld [vmem:[%s4269 + $0x580] sm:$0xff]
        %v4447 = vld [vmem:[%s4269 + $0x588] sm:$0xff]
        %v4448 = vld [vmem:[%s4269 + $0x590] sm:$0xff]
        %v4449 = vld [vmem:[%s4269 + $0x598] sm:$0xff]
        %v4450 = vld [vmem:[%s4269 + $0x5a0] sm:$0xff]
        %v4451 = vld [vmem:[%s4269 + $0x5a8] sm:$0xff]
        %v4452 = vld [vmem:[%s4269 + $0x5b0] sm:$0xff]
        %v4453 = vld [vmem:[%s4269 + $0x5b8] sm:$0xff]
        %v4454 = vld [vmem:[%s4269 + $0x5c0] sm:$0xff]
        %v4455 = vld [vmem:[%s4269 + $0x5c8] sm:$0xff]
        %v4456 = vld [vmem:[%s4269 + $0x5d0] sm:$0xff]
        %v4457 = vld [vmem:[%s4269 + $0x5d8] sm:$0xff]
        %v4458 = vld [vmem:[%s4269 + $0x5e0] sm:$0xff]
        %v4459 = vld [vmem:[%s4269 + $0x5e8] sm:$0xff]
        %v4460 = vld [vmem:[%s4269 + $0x5f0] sm:$0xff]
        %v4461 = vld [vmem:[%s4269 + $0x5f8] sm:$0xff]
        %v4462 = vld [vmem:[%s4269 + $0x600] sm:$0xff]
        %v4463 = vld [vmem:[%s4269 + $0x608] sm:$0xff]
        %v4464 = vld [vmem:[%s4269 + $0x610] sm:$0xff]
        %v4465 = vld [vmem:[%s4269 + $0x618] sm:$0xff]
        %v4466 = vld [vmem:[%s4269 + $0x620] sm:$0xff]
        %v4467 = vld [vmem:[%s4269 + $0x628] sm:$0xff]
        %v4468 = vld [vmem:[%s4269 + $0x630] sm:$0xff]
        %v4469 = vld [vmem:[%s4269 + $0x638] sm:$0xff]
        %v4470 = vld [vmem:[%s4269 + $0x640] sm:$0xff]
        %v4471 = vld [vmem:[%s4269 + $0x648] sm:$0xff]
        %v4472 = vld [vmem:[%s4269 + $0x650] sm:$0xff]
        %v4473 = vld [vmem:[%s4269 + $0x658] sm:$0xff]
        %v4474 = vld [vmem:[%s4269 + $0x660] sm:$0xff]
        %v4475 = vld [vmem:[%s4269 + $0x668] sm:$0xff]
        %v4476 = vld [vmem:[%s4269 + $0x670] sm:$0xff]
        %v4477 = vld [vmem:[%s4269 + $0x678] sm:$0xff]
        %v4478 = vld [vmem:[%s4269 + $0x680] sm:$0xff]
        %v4479 = vld [vmem:[%s4269 + $0x688] sm:$0xff]
        %v4480 = vld [vmem:[%s4269 + $0x690] sm:$0xff]
        %v4481 = vld [vmem:[%s4269 + $0x698] sm:$0xff]
        %v4482 = vld [vmem:[%s4269 + $0x6a0] sm:$0xff]
        %v4483 = vld [vmem:[%s4269 + $0x6a8] sm:$0xff]
        %v4484 = vld [vmem:[%s4269 + $0x6b0] sm:$0xff]
        %v4485 = vld [vmem:[%s4269 + $0x6b8] sm:$0xff]
        %vm4486 = vcmask 392192
        %v4487 = vsel %vm4486, 0.0, 0
        %v4490 = vsel %vm4486, %v4000, 0
        %v4493 = vsel %vm4486, %v4004, 0
        %v4496 = vsel %vm4486, %v4008, 0
        %v4499 = vsel %vm4486, %v4012, 0
        %v4502 = vsel %vm4486, %v4016, 0
        %v4505 = vsel %vm4486, %v4020, 0
        %v4508 = vsel %vm4486, %v4024, 0
        %v4511 = vsel %vm4486, %v4028, 0
        %v4514 = vsel %vm4486, %v4032, 0
        %v4517 = vsel %vm4486, %v4036, 0
        %v4520 = vsel %vm4486, %v4040, 0
        %v4523 = vsel %vm4486, %v4044, 0
        %v4526 = vsel %vm4486, %v4048, 0
        %4528 = vmatprep.subr.mxu0 %v4271
        %4529 = vmatpush1.msra.mxu0 %v4270
        %4530 = vmatprep.subr.mxu0 %v4275
        %4531 = vmatpush1.msra.mxu0 %v4274
        %4532 = vmatprep.subr.mxu0 %v4279
        %4533 = vmatpush1.msra.mxu0 %v4278
        %4534 = vmatprep.subr.mxu0 %v4283
        %4535 = vmatpush1.msra.mxu0 %v4282
        %4536 = vmatprep.subr.mxu0 %v4287
        %4537 = vmatpush1.msra.mxu0 %v4286
        %4538 = vmatprep.subr.mxu0 %v4291
        %4539 = vmatpush1.msra.mxu0 %v4290
        %4540 = vmatprep.subr.mxu0 %v4295
        %4541 = vmatpush1.msra.mxu0 %v4294
        %4542 = vmatprep.subr.mxu0 %v4299
        %4543 = vmatpush1.msra.mxu0 %v4298
        %4544 = vmatprep.subr.mxu0 %v4303
        %4545 = vmatpush1.msra.mxu0 %v4302
        %4546 = vmatprep.subr.mxu0 %v4307
        %4547 = vmatpush1.msra.mxu0 %v4306
        %4548 = vmatprep.subr.mxu0 %v4311
        %4549 = vmatpush1.msra.mxu0 %v4310
        %4550 = vmatprep.subr.mxu0 %v4315
        %4551 = vmatpush1.msra.mxu0 %v4314
        %4552 = vmatprep.subr.mxu0 %v4319
        %4553 = vmatpush1.msra.mxu0 %v4318
        %4554 = vmatprep.subr.mxu0 %v4323
        %4555 = vmatpush1.msra.mxu0 %v4322
        %4556 = vmatprep.subr.mxu0 %v4327
        %4557 = vmatpush1.msra.mxu0 %v4326
        %4558 = vmatprep.subr.mxu0 %v4331
        %4559 = vmatpush1.msra.mxu0 %v4330
        %4560 = vmatprep.subr.mxu0 %v4335
        %4561 = vmatpush1.msra.mxu0 %v4334
        %4562 = vmatprep.subr.mxu0 %v4339
        %4563 = vmatpush1.msra.mxu0 %v4338
        %4564 = vmatprep.subr.mxu0 %v4343
        %4565 = vmatpush1.msra.mxu0 %v4342
        %4566 = vmatprep.subr.mxu0 %v4347
        %4567 = vmatpush1.msra.mxu0 %v4346
        %4568 = vmatprep.subr.mxu0 %v4351
        %4569 = vmatpush1.msra.mxu0 %v4350
        %4570 = vmatprep.subr.mxu0 %v4355
        %4571 = vmatpush1.msra.mxu0 %v4354
        %4572 = vmatprep.subr.mxu0 %v4359
        %4573 = vmatpush1.msra.mxu0 %v4358
        %4574 = vmatprep.subr.mxu0 %v4363
        %4575 = vmatpush1.msra.mxu0 %v4362
        %4576 = vmatprep.subr.mxu0 %v4367
        %4577 = vmatpush1.msra.mxu0 %v4366
        %4578 = vmatprep.subr.mxu0 %v4371
        %4579 = vmatpush1.msra.mxu0 %v4370
        %4580 = vmatprep.subr.mxu0 %v4375
        %4581 = vmatpush1.msra.mxu0 %v4374
        %4582 = vmatprep.subr.mxu0 %v4379
        %4583 = vmatpush1.msra.mxu0 %v4378
        %4584 = vmatprep.subr.mxu0 %v4383
        %4585 = vmatpush1.msra.mxu0 %v4382
        %4586 = vmatprep.subr.mxu0 %v4387
        %4587 = vmatpush1.msra.mxu0 %v4386
        %4588 = vmatprep.subr.mxu0 %v4391
        %4589 = vmatpush1.msra.mxu0 %v4390
        %4590 = vmatprep.subr.mxu0 %v4395
        %4591 = vmatpush1.msra.mxu0 %v4394
        %4592 = vmatprep.mubr.f32.mxu0 0.0
        %4593 = vmatmul.mubr.f32.gmra.mrb[0].mxu0 0.0
        %v4594 = vpop.f32.mrb[0].mxu0
        %v4595 = vadd.f32 0.0, %v4594
        %v4596 = vpop.f32.mrb[0].mxu0
        %v4597 = vadd.f32 0.0, %v4596
        %4598 = vmatprep.mubr.f32.mxu0 %v3998
        %4599 = vmatmul.mubr.f32.gmra.mrb[0].mxu0 %v3997
        %v4600 = vpop.f32.mrb[0].mxu0
        %v4601 = vadd.f32 0.0, %v4600
        %v4602 = vpop.f32.mrb[0].mxu0
        %v4603 = vadd.f32 0.0, %v4602
        %4604 = vmatprep.mubr.f32.mxu0 %v4002
        %4605 = vmatmul.mubr.f32.gmra.mrb[0].mxu0 %v4001
        %v4606 = vpop.f32.mrb[0].mxu0
        %v4607 = vadd.f32 0.0, %v4606
        %v4608 = vpop.f32.mrb[0].mxu0
        %v4609 = vadd.f32 0.0, %v4608
        %4610 = vmatprep.mubr.f32.mxu0 %v4006
        %4611 = vmatmul.mubr.f32.gmra.mrb[0].mxu0 %v4005
        %v4612 = vpop.f32.mrb[0].mxu0
        %v4613 = vadd.f32 0.0, %v4612
        %v4614 = vpop.f32.mrb[0].mxu0
        %v4615 = vadd.f32 0.0, %v4614
        %4616 = vmatprep.mubr.f32.mxu0 %v4010
        %4617 = vmatmul.mubr.f32.gmra.mrb[0].mxu0 %v4009
        %v4618 = vpop.f32.mrb[0].mxu0
        %v4619 = vadd.f32 0.0, %v4618
        %v4620 = vpop.f32.mrb[0].mxu0
        %v4621 = vadd.f32 0.0, %v4620
        %4622 = vmatprep.mubr.f32.mxu0 %v4014
        %4623 = vmatmul.mubr.f32.gmra.mrb[0].mxu0 %v4013
        %v4624 = vpop.f32.mrb[0].mxu0
        %v4625 = vadd.f32 0.0, %v4624
        %v4626 = vpop.f32.mrb[0].mxu0
        %v4627 = vadd.f32 0.0, %v4626
        %4628 = vmatprep.mubr.f32.mxu0 %v4018
        %4629 = vmatmul.mubr.f32.gmra.mrb[0].mxu0 %v4017
        %v4630 = vpop.f32.mrb[0].mxu0
        %v4631 = vadd.f32 0.0, %v4630
        %v4632 = vpop.f32.mrb[0].mxu0
        %v4633 = vadd.f32 0.0, %v4632
        %4634 = vmatprep.mubr.f32.mxu0 %v4022
        %4635 = vmatmul.mubr.f32.gmra.mrb[0].mxu0 %v4021
        %v4636 = vpop.f32.mrb[0].mxu0
        %v4637 = vadd.f32 0.0, %v4636
        %v4638 = vpop.f32.mrb[0].mxu0
        %v4639 = vadd.f32 0.0, %v4638
        %4640 = vmatprep.mubr.f32.mxu0 %v4026
        %4641 = vmatmul.mubr.f32.gmra.mrb[0].mxu0 %v4025
        %v4642 = vpop.f32.mrb[0].mxu0
        %v4643 = vadd.f32 0.0, %v4642
        %v4644 = vpop.f32.mrb[0].mxu0
        %v4645 = vadd.f32 0.0, %v4644
        %4646 = vmatprep.mubr.f32.mxu0 %v4030
        %4647 = vmatmul.mubr.f32.gmra.mrb[0].mxu0 %v4029
        %v4648 = vpop.f32.mrb[0].mxu0
        %v4649 = vadd.f32 0.0, %v4648
        %v4650 = vpop.f32.mrb[0].mxu0
        %v4651 = vadd.f32 0.0, %v4650
        %4652 = vmatprep.mubr.f32.mxu0 %v4034
        %4653 = vmatmul.mubr.f32.gmra.mrb[0].mxu0 %v4033
        %v4654 = vpop.f32.mrb[0].mxu0
        %v4655 = vadd.f32 0.0, %v4654
        %v4656 = vpop.f32.mrb[0].mxu0
        %v4657 = vadd.f32 0.0, %v4656
        %4658 = vmatprep.mubr.f32.mxu0 %v4038
        %4659 = vmatmul.mubr.f32.gmra.mrb[0].mxu0 %v4037
        %v4660 = vpop.f32.mrb[0].mxu0
        %v4661 = vadd.f32 0.0, %v4660
        %v4662 = vpop.f32.mrb[0].mxu0
        %v4663 = vadd.f32 0.0, %v4662
        %4664 = vmatprep.mubr.f32.mxu0 %v4042
        %4665 = vmatmul.mubr.f32.gmra.mrb[0].mxu0 %v4041
        %v4666 = vpop.f32.mrb[0].mxu0
        %v4667 = vadd.f32 0.0, %v4666
        %v4668 = vpop.f32.mrb[0].mxu0
        %v4669 = vadd.f32 0.0, %v4668
        %4670 = vmatprep.mubr.f32.mxu0 %v4046
        %4671 = vmatmul.mubr.f32.gmra.mrb[0].mxu0 %v4045
        %v4672 = vpop.f32.mrb[0].mxu0
        %v4673 = vadd.f32 0.0, %v4672
        %v4674 = vpop.f32.mrb[0].mxu0
        %v4675 = vadd.f32 0.0, %v4674
        %4676 = vdwg.mxu0
        %4677 = vmatprep.subr.mxu0 %v4399
        %4678 = vmatpush1.msra.mxu0 %v4398
        %4679 = vmatprep.subr.mxu0 %v4403
        %4680 = vmatpush1.msra.mxu0 %v4402
        %4681 = vmatprep.subr.mxu0 %v4407
        %4682 = vmatpush1.msra.mxu0 %v4406
        %4683 = vmatprep.subr.mxu0 %v4411
        %4684 = vmatpush1.msra.mxu0 %v4410
        %4685 = vmatprep.subr.mxu0 %v4415
        %4686 = vmatpush1.msra.mxu0 %v4414
        %4687 = vmatprep.subr.mxu0 %v4419
        %4688 = vmatpush1.msra.mxu0 %v4418
        %4689 = vmatprep.subr.mxu0 %v4423
        %4690 = vmatpush1.msra.mxu0 %v4422
        %4691 = vmatprep.subr.mxu0 %v4427
        %4692 = vmatpush1.msra.mxu0 %v4426
        %4693 = vmatprep.subr.mxu0 %v4431
        %4694 = vmatpush1.msra.mxu0 %v4430
        %4695 = vmatprep.subr.mxu0 %v4435
        %4696 = vmatpush1.msra.mxu0 %v4434
        %4697 = vmatprep.subr.mxu0 %v4439
        %4698 = vmatpush1.msra.mxu0 %v4438
        %4699 = vmatprep.subr.mxu0 %v4443
        %4700 = vmatpush1.msra.mxu0 %v4442
        %4701 = vmatprep.subr.mxu0 %v4447
        %4702 = vmatpush1.msra.mxu0 %v4446
        %4703 = vmatprep.subr.mxu0 %v4451
        %4704 = vmatpush1.msra.mxu0 %v4450
        %4705 = vmatprep.subr.mxu0 %v4455
        %4706 = vmatpush1.msra.mxu0 %v4454
        %4707 = vmatprep.subr.mxu0 %v4459
        %4708 = vmatpush1.msra.mxu0 %v4458
        %4709 = vmatprep.subr.mxu0 %v4463
        %4710 = vmatpush1.msra.mxu0 %v4462
        %4711 = vmatprep.subr.mxu0 %v4467
        %4712 = vmatpush1.msra.mxu0 %v4466
        %4713 = vmatprep.subr.mxu0 %v4471
        %4714 = vmatpush1.msra.mxu0 %v4470
        %4715 = vmatprep.subr.mxu0 %v4475
        %4716 = vmatpush1.msra.mxu0 %v4474
        %4717 = vmatprep.subr.mxu0 %v4479
        %4718 = vmatpush1.msra.mxu0 %v4478
        %4719 = vmatprep.subr.mxu0 %v4483
        %4720 = vmatpush1.msra.mxu0 %v4482
        %4721 = vmatprep.subr.mxu0 0.0
        %4722 = vmatpush1.msra.mxu0 0.0
        %4723 = vmatprep.subr.mxu0 0.0
        %4724 = vmatpush1.msra.mxu0 0.0
        %4725 = vmatprep.subr.mxu0 0.0
        %4726 = vmatpush1.msra.mxu0 0.0
        %4727 = vmatprep.subr.mxu0 0.0
        %4728 = vmatpush1.msra.mxu0 0.0
        %4729 = vmatprep.subr.mxu0 0.0
        %4730 = vmatpush1.msra.mxu0 0.0
        %4731 = vmatprep.subr.mxu0 0.0
        %4732 = vmatpush1.msra.mxu0 0.0
        %4733 = vmatprep.subr.mxu0 0.0
        %4734 = vmatpush1.msra.mxu0 0.0
        %4735 = vmatprep.subr.mxu0 0.0
        %4736 = vmatpush1.msra.mxu0 0.0
        %4737 = vmatprep.subr.mxu0 0.0
        %4738 = vmatpush1.msra.mxu0 0.0
        %4739 = vmatprep.subr.mxu0 0.0
        %4740 = vmatpush1.msra.mxu0 0.0
        %4741 = vmatprep.mubr.f32.mxu0 %v4487
        %4742 = vmatmul.mubr.f32.gmra.mrb[0].mxu0 0.0
        %v4743 = vpop.f32.mrb[0].mxu0
        %v4744 = vadd.f32 %v4595, %v4743
        %v4745 = vpop.f32.mrb[0].mxu0
        %v4746 = vadd.f32 %v4597, %v4745
        %4747 = vmatprep.mubr.f32.mxu0 %v4490
        %4748 = vmatmul.mubr.f32.gmra.mrb[0].mxu0 %v3999
        %v4749 = vpop.f32.mrb[0].mxu0
        %v4750 = vadd.f32 %v4601, %v4749
        %v4751 = vpop.f32.mrb[0].mxu0
        %v4752 = vadd.f32 %v4603, %v4751
        %4753 = vmatprep.mubr.f32.mxu0 %v4493
        %4754 = vmatmul.mubr.f32.gmra.mrb[0].mxu0 %v4003
        %v4755 = vpop.f32.mrb[0].mxu0
        %v4756 = vadd.f32 %v4607, %v4755
        %v4757 = vpop.f32.mrb[0].mxu0
        %v4758 = vadd.f32 %v4609, %v4757
        %4759 = vmatprep.mubr.f32.mxu0 %v4496
        %4760 = vmatmul.mubr.f32.gmra.mrb[0].mxu0 %v4007
        %v4761 = vpop.f32.mrb[0].mxu0
        %v4762 = vadd.f32 %v4613, %v4761
        %v4763 = vpop.f32.mrb[0].mxu0
        %v4764 = vadd.f32 %v4615, %v4763
        %4765 = vmatprep.mubr.f32.mxu0 %v4499
        %4766 = vmatmul.mubr.f32.gmra.mrb[0].mxu0 %v4011
        %v4767 = vpop.f32.mrb[0].mxu0
        %v4768 = vadd.f32 %v4619, %v4767
        %v4769 = vpop.f32.mrb[0].mxu0
        %v4770 = vadd.f32 %v4621, %v4769
        %4771 = vmatprep.mubr.f32.mxu0 %v4502
        %4772 = vmatmul.mubr.f32.gmra.mrb[0].mxu0 %v4015
        %v4773 = vpop.f32.mrb[0].mxu0
        %v4774 = vadd.f32 %v4625, %v4773
        %v4775 = vpop.f32.mrb[0].mxu0
        %v4776 = vadd.f32 %v4627, %v4775
        %4777 = vmatprep.mubr.f32.mxu0 %v4505
        %4778 = vmatmul.mubr.f32.gmra.mrb[0].mxu0 %v4019
        %v4779 = vpop.f32.mrb[0].mxu0
        %v4780 = vadd.f32 %v4631, %v4779
        %v4781 = vpop.f32.mrb[0].mxu0
        %v4782 = vadd.f32 %v4633, %v4781
        %4783 = vmatprep.mubr.f32.mxu0 %v4508
        %4784 = vmatmul.mubr.f32.gmra.mrb[0].mxu0 %v4023
        %v4785 = vpop.f32.mrb[0].mxu0
        %v4786 = vadd.f32 %v4637, %v4785
        %v4787 = vpop.f32.mrb[0].mxu0
        %v4788 = vadd.f32 %v4639, %v4787
        %4789 = vmatprep.mubr.f32.mxu0 %v4511
        %4790 = vmatmul.mubr.f32.gmra.mrb[0].mxu0 %v4027
        %v4791 = vpop.f32.mrb[0].mxu0
        %v4792 = vadd.f32 %v4643, %v4791
        %v4793 = vpop.f32.mrb[0].mxu0
        %v4794 = vadd.f32 %v4645, %v4793
        %4795 = vmatprep.mubr.f32.mxu0 %v4514
        %4796 = vmatmul.mubr.f32.gmra.mrb[0].mxu0 %v4031
        %v4797 = vpop.f32.mrb[0].mxu0
        %v4798 = vadd.f32 %v4649, %v4797
        %v4799 = vpop.f32.mrb[0].mxu0
        %v4800 = vadd.f32 %v4651, %v4799
        %4801 = vmatprep.mubr.f32.mxu0 %v4517
        %4802 = vmatmul.mubr.f32.gmra.mrb[0].mxu0 %v4035
        %v4803 = vpop.f32.mrb[0].mxu0
        %v4804 = vadd.f32 %v4655, %v4803
        %v4805 = vpop.f32.mrb[0].mxu0
        %v4806 = vadd.f32 %v4657, %v4805
        %4807 = vmatprep.mubr.f32.mxu0 %v4520
        %4808 = vmatmul.mubr.f32.gmra.mrb[0].mxu0 %v4039
        %v4809 = vpop.f32.mrb[0].mxu0
        %v4810 = vadd.f32 %v4661, %v4809
        %v4811 = vpop.f32.mrb[0].mxu0
        %v4812 = vadd.f32 %v4663, %v4811
        %4813 = vmatprep.mubr.f32.mxu0 %v4523
        %4814 = vmatmul.mubr.f32.gmra.mrb[0].mxu0 %v4043
        %v4815 = vpop.f32.mrb[0].mxu0
        %v4816 = vadd.f32 %v4667, %v4815
        %v4817 = vpop.f32.mrb[0].mxu0
        %v4818 = vadd.f32 %v4669, %v4817
        %4819 = vmatprep.mubr.f32.mxu0 %v4526
        %4820 = vmatmul.mubr.f32.gmra.mrb[0].mxu0 %v4047
        %v4821 = vpop.f32.mrb[0].mxu0
        %v4822 = vadd.f32 %v4673, %v4821
        %v4823 = vpop.f32.mrb[0].mxu0
        %v4824 = vadd.f32 %v4675, %v4823
        %4825 = vdwg.mxu0
        %4826 = vmatprep.subr.mxu0 %v4273
        %4827 = vmatpush1.msra.mxu0 %v4272
        %4828 = vmatprep.subr.mxu0 %v4277
        %4829 = vmatpush1.msra.mxu0 %v4276
        %4830 = vmatprep.subr.mxu0 %v4281
        %4831 = vmatpush1.msra.mxu0 %v4280
        %4832 = vmatprep.subr.mxu0 %v4285
        %4833 = vmatpush1.msra.mxu0 %v4284
        %4834 = vmatprep.subr.mxu0 %v4289
        %4835 = vmatpush1.msra.mxu0 %v4288
        %4836 = vmatprep.subr.mxu0 %v4293
        %4837 = vmatpush1.msra.mxu0 %v4292
        %4838 = vmatprep.subr.mxu0 %v4297
        %4839 = vmatpush1.msra.mxu0 %v4296
        %4840 = vmatprep.subr.mxu0 %v4301
        %4841 = vmatpush1.msra.mxu0 %v4300
        %4842 = vmatprep.subr.mxu0 %v4305
        %4843 = vmatpush1.msra.mxu0 %v4304
        %4844 = vmatprep.subr.mxu0 %v4309
        %4845 = vmatpush1.msra.mxu0 %v4308
        %4846 = vmatprep.subr.mxu0 %v4313
        %4847 = vmatpush1.msra.mxu0 %v4312
        %4848 = vmatprep.subr.mxu0 %v4317
        %4849 = vmatpush1.msra.mxu0 %v4316
        %4850 = vmatprep.subr.mxu0 %v4321
        %4851 = vmatpush1.msra.mxu0 %v4320
        %4852 = vmatprep.subr.mxu0 %v4325
        %4853 = vmatpush1.msra.mxu0 %v4324
        %4854 = vmatprep.subr.mxu0 %v4329
        %4855 = vmatpush1.msra.mxu0 %v4328
        %4856 = vmatprep.subr.mxu0 %v4333
        %4857 = vmatpush1.msra.mxu0 %v4332
        %4858 = vmatprep.subr.mxu0 %v4337
        %4859 = vmatpush1.msra.mxu0 %v4336
        %4860 = vmatprep.subr.mxu0 %v4341
        %4861 = vmatpush1.msra.mxu0 %v4340
        %4862 = vmatprep.subr.mxu0 %v4345
        %4863 = vmatpush1.msra.mxu0 %v4344
        %4864 = vmatprep.subr.mxu0 %v4349
        %4865 = vmatpush1.msra.mxu0 %v4348
        %4866 = vmatprep.subr.mxu0 %v4353
        %4867 = vmatpush1.msra.mxu0 %v4352
        %4868 = vmatprep.subr.mxu0 %v4357
        %4869 = vmatpush1.msra.mxu0 %v4356
        %4870 = vmatprep.subr.mxu0 %v4361
        %4871 = vmatpush1.msra.mxu0 %v4360
        %4872 = vmatprep.subr.mxu0 %v4365
        %4873 = vmatpush1.msra.mxu0 %v4364
        %4874 = vmatprep.subr.mxu0 %v4369
        %4875 = vmatpush1.msra.mxu0 %v4368
        %4876 = vmatprep.subr.mxu0 %v4373
        %4877 = vmatpush1.msra.mxu0 %v4372
        %4878 = vmatprep.subr.mxu0 %v4377
        %4879 = vmatpush1.msra.mxu0 %v4376
        %4880 = vmatprep.subr.mxu0 %v4381
        %4881 = vmatpush1.msra.mxu0 %v4380
        %4882 = vmatprep.subr.mxu0 %v4385
        %4883 = vmatpush1.msra.mxu0 %v4384
        %4884 = vmatprep.subr.mxu0 %v4389
        %4885 = vmatpush1.msra.mxu0 %v4388
        %4886 = vmatprep.subr.mxu0 %v4393
        %4887 = vmatpush1.msra.mxu0 %v4392
        %4888 = vmatprep.subr.mxu0 %v4397
        %4889 = vmatpush1.msra.mxu0 %v4396
        %4890 = vmatprep.mubr.f32.mxu0 0.0
        %4891 = vmatmul.mubr.f32.gmra.mrb[0].mxu0 0.0
        %v4892 = vpop.f32.mrb[0].mxu0
        %v4893 = vadd.f32 0.0, %v4892
        %v4894 = vpop.f32.mrb[0].mxu0
        %v4895 = vadd.f32 0.0, %v4894
        %4896 = vmatprep.mubr.f32.mxu0 %v3998
        %4897 = vmatmul.mubr.f32.gmra.mrb[0].mxu0 %v3997
        %v4898 = vpop.f32.mrb[0].mxu0
        %v4899 = vadd.f32 0.0, %v4898
        %v4900 = vpop.f32.mrb[0].mxu0
        %v4901 = vadd.f32 0.0, %v4900
        %4902 = vmatprep.mubr.f32.mxu0 %v4002
        %4903 = vmatmul.mubr.f32.gmra.mrb[0].mxu0 %v4001
        %v4904 = vpop.f32.mrb[0].mxu0
        %v4905 = vadd.f32 0.0, %v4904
        %v4906 = vpop.f32.mrb[0].mxu0
        %v4907 = vadd.f32 0.0, %v4906
        %4908 = vmatprep.mubr.f32.mxu0 %v4006
        %4909 = vmatmul.mubr.f32.gmra.mrb[0].mxu0 %v4005
        %v4910 = vpop.f32.mrb[0].mxu0
        %v4911 = vadd.f32 0.0, %v4910
        %v4912 = vpop.f32.mrb[0].mxu0
        %v4913 = vadd.f32 0.0, %v4912
        %4914 = vmatprep.mubr.f32.mxu0 %v4010
        %4915 = vmatmul.mubr.f32.gmra.mrb[0].mxu0 %v4009
        %v4916 = vpop.f32.mrb[0].mxu0
        %v4917 = vadd.f32 0.0, %v4916
        %v4918 = vpop.f32.mrb[0].mxu0
        %v4919 = vadd.f32 0.0, %v4918
        %4920 = vmatprep.mubr.f32.mxu0 %v4014
        %4921 = vmatmul.mubr.f32.gmra.mrb[0].mxu0 %v4013
        %v4922 = vpop.f32.mrb[0].mxu0
        %v4923 = vadd.f32 0.0, %v4922
        %v4924 = vpop.f32.mrb[0].mxu0
        %v4925 = vadd.f32 0.0, %v4924
        %4926 = vmatprep.mubr.f32.mxu0 %v4018
        %4927 = vmatmul.mubr.f32.gmra.mrb[0].mxu0 %v4017
        %v4928 = vpop.f32.mrb[0].mxu0
        %v4929 = vadd.f32 0.0, %v4928
        %v4930 = vpop.f32.mrb[0].mxu0
        %v4931 = vadd.f32 0.0, %v4930
        %4932 = vmatprep.mubr.f32.mxu0 %v4022
        %4933 = vmatmul.mubr.f32.gmra.mrb[0].mxu0 %v4021
        %v4934 = vpop.f32.mrb[0].mxu0
        %v4935 = vadd.f32 0.0, %v4934
        %v4936 = vpop.f32.mrb[0].mxu0
        %v4937 = vadd.f32 0.0, %v4936
        %4938 = vmatprep.mubr.f32.mxu0 %v4026
        %4939 = vmatmul.mubr.f32.gmra.mrb[0].mxu0 %v4025
        %v4940 = vpop.f32.mrb[0].mxu0
        %v4941 = vadd.f32 0.0, %v4940
        %v4942 = vpop.f32.mrb[0].mxu0
        %v4943 = vadd.f32 0.0, %v4942
        %4944 = vmatprep.mubr.f32.mxu0 %v4030
        %4945 = vmatmul.mubr.f32.gmra.mrb[0].mxu0 %v4029
        %v4946 = vpop.f32.mrb[0].mxu0
        %v4947 = vadd.f32 0.0, %v4946
        %v4948 = vpop.f32.mrb[0].mxu0
        %v4949 = vadd.f32 0.0, %v4948
        %4950 = vmatprep.mubr.f32.mxu0 %v4034
        %4951 = vmatmul.mubr.f32.gmra.mrb[0].mxu0 %v4033
        %v4952 = vpop.f32.mrb[0].mxu0
        %v4953 = vadd.f32 0.0, %v4952
        %v4954 = vpop.f32.mrb[0].mxu0
        %v4955 = vadd.f32 0.0, %v4954
        %4956 = vmatprep.mubr.f32.mxu0 %v4038
        %4957 = vmatmul.mubr.f32.gmra.mrb[0].mxu0 %v4037
        %v4958 = vpop.f32.mrb[0].mxu0
        %v4959 = vadd.f32 0.0, %v4958
        %v4960 = vpop.f32.mrb[0].mxu0
        %v4961 = vadd.f32 0.0, %v4960
        %4962 = vmatprep.mubr.f32.mxu0 %v4042
        %4963 = vmatmul.mubr.f32.gmra.mrb[0].mxu0 %v4041
        %v4964 = vpop.f32.mrb[0].mxu0
        %v4965 = vadd.f32 0.0, %v4964
        %v4966 = vpop.f32.mrb[0].mxu0
        %v4967 = vadd.f32 0.0, %v4966
        %4968 = vmatprep.mubr.f32.mxu0 %v4046
        %4969 = vmatmul.mubr.f32.gmra.mrb[0].mxu0 %v4045
        %v4970 = vpop.f32.mrb[0].mxu0
        %v4971 = vadd.f32 0.0, %v4970
        %v4972 = vpop.f32.mrb[0].mxu0
        %v4973 = vadd.f32 0.0, %v4972
        %4974 = vdwg.mxu0
        %4975 = vmatprep.subr.mxu0 %v4401
        %4976 = vmatpush1.msra.mxu0 %v4400
        %4977 = vmatprep.subr.mxu0 %v4405
        %4978 = vmatpush1.msra.mxu0 %v4404
        %4979 = vmatprep.subr.mxu0 %v4409
        %4980 = vmatpush1.msra.mxu0 %v4408
        %4981 = vmatprep.subr.mxu0 %v4413
        %4982 = vmatpush1.msra.mxu0 %v4412
        %4983 = vmatprep.subr.mxu0 %v4417
        %4984 = vmatpush1.msra.mxu0 %v4416
        %4985 = vmatprep.subr.mxu0 %v4421
        %4986 = vmatpush1.msra.mxu0 %v4420
        %4987 = vmatprep.subr.mxu0 %v4425
        %4988 = vmatpush1.msra.mxu0 %v4424
        %4989 = vmatprep.subr.mxu0 %v4429
        %4990 = vmatpush1.msra.mxu0 %v4428
        %4991 = vmatprep.subr.mxu0 %v4433
        %4992 = vmatpush1.msra.mxu0 %v4432
        %4993 = vmatprep.subr.mxu0 %v4437
        %4994 = vmatpush1.msra.mxu0 %v4436
        %4995 = vmatprep.subr.mxu0 %v4441
        %4996 = vmatpush1.msra.mxu0 %v4440
        %4997 = vmatprep.subr.mxu0 %v4445
        %4998 = vmatpush1.msra.mxu0 %v4444
        %4999 = vmatprep.subr.mxu0 %v4449
        %5000 = vmatpush1.msra.mxu0 %v4448
        %5001 = vmatprep.subr.mxu0 %v4453
        %5002 = vmatpush1.msra.mxu0 %v4452
        %5003 = vmatprep.subr.mxu0 %v4457
        %5004 = vmatpush1.msra.mxu0 %v4456
        %5005 = vmatprep.subr.mxu0 %v4461
        %5006 = vmatpush1.msra.mxu0 %v4460
        %5007 = vmatprep.subr.mxu0 %v4465
        %5008 = vmatpush1.msra.mxu0 %v4464
        %5009 = vmatprep.subr.mxu0 %v4469
        %5010 = vmatpush1.msra.mxu0 %v4468
        %5011 = vmatprep.subr.mxu0 %v4473
        %5012 = vmatpush1.msra.mxu0 %v4472
        %5013 = vmatprep.subr.mxu0 %v4477
        %5014 = vmatpush1.msra.mxu0 %v4476
        %5015 = vmatprep.subr.mxu0 %v4481
        %5016 = vmatpush1.msra.mxu0 %v4480
        %5017 = vmatprep.subr.mxu0 %v4485
        %5018 = vmatpush1.msra.mxu0 %v4484
        %5019 = vmatprep.subr.mxu0 0.0
        %5020 = vmatpush1.msra.mxu0 0.0
        %5021 = vmatprep.subr.mxu0 0.0
        %5022 = vmatpush1.msra.mxu0 0.0
        %5023 = vmatprep.subr.mxu0 0.0
        %5024 = vmatpush1.msra.mxu0 0.0
        %5025 = vmatprep.subr.mxu0 0.0
        %5026 = vmatpush1.msra.mxu0 0.0
        %5027 = vmatprep.subr.mxu0 0.0
        %5028 = vmatpush1.msra.mxu0 0.0
        %5029 = vmatprep.subr.mxu0 0.0
        %5030 = vmatpush1.msra.mxu0 0.0
        %5031 = vmatprep.subr.mxu0 0.0
        %5032 = vmatpush1.msra.mxu0 0.0
        %5033 = vmatprep.subr.mxu0 0.0
        %5034 = vmatpush1.msra.mxu0 0.0
        %5035 = vmatprep.subr.mxu0 0.0
        %5036 = vmatpush1.msra.mxu0 0.0
        %5037 = vmatprep.subr.mxu0 0.0
        %5038 = vmatpush1.msra.mxu0 0.0
        %5039 = vmatprep.mubr.f32.mxu0 %v4487
        %5040 = vmatmul.mubr.f32.gmra.mrb[0].mxu0 0.0
        %v5041 = vpop.f32.mrb[0].mxu0
        %v5042 = vadd.f32 %v4893, %v5041
        %v5043 = vpop.f32.mrb[0].mxu0
        %v5044 = vadd.f32 %v4895, %v5043
        %5045 = vmatprep.mubr.f32.mxu0 %v4490
        %5046 = vmatmul.mubr.f32.gmra.mrb[0].mxu0 %v3999
        %v5047 = vpop.f32.mrb[0].mxu0
        %v5048 = vadd.f32 %v4899, %v5047
        %v5049 = vpop.f32.mrb[0].mxu0
        %v5050 = vadd.f32 %v4901, %v5049
        %5051 = vmatprep.mubr.f32.mxu0 %v4493
        %5052 = vmatmul.mubr.f32.gmra.mrb[0].mxu0 %v4003
        %v5053 = vpop.f32.mrb[0].mxu0
        %v5054 = vadd.f32 %v4905, %v5053
        %v5055 = vpop.f32.mrb[0].mxu0
        %v5056 = vadd.f32 %v4907, %v5055
        %5057 = vmatprep.mubr.f32.mxu0 %v4496
        %5058 = vmatmul.mubr.f32.gmra.mrb[0].mxu0 %v4007
        %v5059 = vpop.f32.mrb[0].mxu0
        %v5060 = vadd.f32 %v4911, %v5059
        %v5061 = vpop.f32.mrb[0].mxu0
        %v5062 = vadd.f32 %v4913, %v5061
        %5063 = vmatprep.mubr.f32.mxu0 %v4499
        %5064 = vmatmul.mubr.f32.gmra.mrb[0].mxu0 %v4011
        %v5065 = vpop.f32.mrb[0].mxu0
        %v5066 = vadd.f32 %v4917, %v5065
        %v5067 = vpop.f32.mrb[0].mxu0
        %v5068 = vadd.f32 %v4919, %v5067
        %5069 = vmatprep.mubr.f32.mxu0 %v4502
        %5070 = vmatmul.mubr.f32.gmra.mrb[0].mxu0 %v4015
        %v5071 = vpop.f32.mrb[0].mxu0
        %v5072 = vadd.f32 %v4923, %v5071
        %v5073 = vpop.f32.mrb[0].mxu0
        %v5074 = vadd.f32 %v4925, %v5073
        %5075 = vmatprep.mubr.f32.mxu0 %v4505
        %5076 = vmatmul.mubr.f32.gmra.mrb[0].mxu0 %v4019
        %v5077 = vpop.f32.mrb[0].mxu0
        %v5078 = vadd.f32 %v4929, %v5077
        %v5079 = vpop.f32.mrb[0].mxu0
        %v5080 = vadd.f32 %v4931, %v5079
        %5081 = vmatprep.mubr.f32.mxu0 %v4508
        %5082 = vmatmul.mubr.f32.gmra.mrb[0].mxu0 %v4023
        %v5083 = vpop.f32.mrb[0].mxu0
        %v5084 = vadd.f32 %v4935, %v5083
        %v5085 = vpop.f32.mrb[0].mxu0
        %v5086 = vadd.f32 %v4937, %v5085
        %5087 = vmatprep.mubr.f32.mxu0 %v4511
        %5088 = vmatmul.mubr.f32.gmra.mrb[0].mxu0 %v4027
        %v5089 = vpop.f32.mrb[0].mxu0
        %v5090 = vadd.f32 %v4941, %v5089
        %v5091 = vpop.f32.mrb[0].mxu0
        %v5092 = vadd.f32 %v4943, %v5091
        %5093 = vmatprep.mubr.f32.mxu0 %v4514
        %5094 = vmatmul.mubr.f32.gmra.mrb[0].mxu0 %v4031
        %v5095 = vpop.f32.mrb[0].mxu0
        %v5096 = vadd.f32 %v4947, %v5095
        %v5097 = vpop.f32.mrb[0].mxu0
        %v5098 = vadd.f32 %v4949, %v5097
        %5099 = vmatprep.mubr.f32.mxu0 %v4517
        %5100 = vmatmul.mubr.f32.gmra.mrb[0].mxu0 %v4035
        %v5101 = vpop.f32.mrb[0].mxu0
        %v5102 = vadd.f32 %v4953, %v5101
        %v5103 = vpop.f32.mrb[0].mxu0
        %v5104 = vadd.f32 %v4955, %v5103
        %5105 = vmatprep.mubr.f32.mxu0 %v4520
        %5106 = vmatmul.mubr.f32.gmra.mrb[0].mxu0 %v4039
        %v5107 = vpop.f32.mrb[0].mxu0
        %v5108 = vadd.f32 %v4959, %v5107
        %v5109 = vpop.f32.mrb[0].mxu0
        %v5110 = vadd.f32 %v4961, %v5109
        %5111 = vmatprep.mubr.f32.mxu0 %v4523
        %5112 = vmatmul.mubr.f32.gmra.mrb[0].mxu0 %v4043
        %v5113 = vpop.f32.mrb[0].mxu0
        %v5114 = vadd.f32 %v4965, %v5113
        %v5115 = vpop.f32.mrb[0].mxu0
        %v5116 = vadd.f32 %v4967, %v5115
        %5117 = vmatprep.mubr.f32.mxu0 %v4526
        %5118 = vmatmul.mubr.f32.gmra.mrb[0].mxu0 %v4047
        %v5119 = vpop.f32.mrb[0].mxu0
        %v5120 = vadd.f32 %v4971, %v5119
        %v5121 = vpop.f32.mrb[0].mxu0
        %v5122 = vadd.f32 %v4973, %v5121
        %5123 = vdwg.mxu0
        %5124 = vmatprep.subr.mxu0 %v4054
        %5125 = vmatpush1.msra.mxu0 %v4053
        %5126 = vmatprep.subr.mxu0 %v4058
        %5127 = vmatpush1.msra.mxu0 %v4057
        %5128 = vmatprep.subr.mxu0 %v4062
        %5129 = vmatpush1.msra.mxu0 %v4061
        %5130 = vmatprep.subr.mxu0 %v4066
        %5131 = vmatpush1.msra.mxu0 %v4065
        %5132 = vmatprep.subr.mxu0 %v4070
        %5133 = vmatpush1.msra.mxu0 %v4069
        %5134 = vmatprep.subr.mxu0 %v4074
        %5135 = vmatpush1.msra.mxu0 %v4073
        %5136 = vmatprep.subr.mxu0 %v4078
        %5137 = vmatpush1.msra.mxu0 %v4077
        %5138 = vmatprep.subr.mxu0 %v4082
        %5139 = vmatpush1.msra.mxu0 %v4081
        %5140 = vmatprep.subr.mxu0 %v4086
        %5141 = vmatpush1.msra.mxu0 %v4085
        %5142 = vmatprep.subr.mxu0 %v4090
        %5143 = vmatpush1.msra.mxu0 %v4089
        %5144 = vmatprep.subr.mxu0 %v4094
        %5145 = vmatpush1.msra.mxu0 %v4093
        %5146 = vmatprep.subr.mxu0 %v4098
        %5147 = vmatpush1.msra.mxu0 %v4097
        %5148 = vmatprep.subr.mxu0 %v4102
        %5149 = vmatpush1.msra.mxu0 %v4101
        %5150 = vmatprep.subr.mxu0 %v4106
        %5151 = vmatpush1.msra.mxu0 %v4105
        %5152 = vmatprep.subr.mxu0 %v4110
        %5153 = vmatpush1.msra.mxu0 %v4109
        %5154 = vmatprep.subr.mxu0 %v4114
        %5155 = vmatpush1.msra.mxu0 %v4113
        %5156 = vmatprep.subr.mxu0 %v4118
        %5157 = vmatpush1.msra.mxu0 %v4117
        %5158 = vmatprep.subr.mxu0 %v4122
        %5159 = vmatpush1.msra.mxu0 %v4121
        %5160 = vmatprep.subr.mxu0 %v4126
        %5161 = vmatpush1.msra.mxu0 %v4125
        %5162 = vmatprep.subr.mxu0 %v4130
        %5163 = vmatpush1.msra.mxu0 %v4129
        %5164 = vmatprep.subr.mxu0 %v4134
        %5165 = vmatpush1.msra.mxu0 %v4133
        %5166 = vmatprep.subr.mxu0 %v4138
        %5167 = vmatpush1.msra.mxu0 %v4137
        %5168 = vmatprep.subr.mxu0 %v4142
        %5169 = vmatpush1.msra.mxu0 %v4141
        %5170 = vmatprep.subr.mxu0 %v4146
        %5171 = vmatpush1.msra.mxu0 %v4145
        %5172 = vmatprep.subr.mxu0 %v4150
        %5173 = vmatpush1.msra.mxu0 %v4149
        %5174 = vmatprep.subr.mxu0 %v4154
        %5175 = vmatpush1.msra.mxu0 %v4153
        %5176 = vmatprep.subr.mxu0 %v4158
        %5177 = vmatpush1.msra.mxu0 %v4157
        %5178 = vmatprep.subr.mxu0 %v4162
        %5179 = vmatpush1.msra.mxu0 %v4161
        %5180 = vmatprep.subr.mxu0 %v4166
        %5181 = vmatpush1.msra.mxu0 %v4165
        %5182 = vmatprep.subr.mxu0 %v4170
        %5183 = vmatpush1.msra.mxu0 %v4169
        %5184 = vmatprep.subr.mxu0 %v4174
        %5185 = vmatpush1.msra.mxu0 %v4173
        %5186 = vmatprep.subr.mxu0 %v4178
        %5187 = vmatpush1.msra.mxu0 %v4177
        %5188 = vmatprep.mubr.f32.mxu0 0.0
        %5189 = vmatmul.mubr.f32.gmra.mrb[0].mxu0 0.0
        %v5190 = vpop.f32.mrb[0].mxu0
        %v5191 = vadd.f32 %v4744, %v5190
        %v5192 = vpop.f32.mrb[0].mxu0
        %v5193 = vadd.f32 %v4746, %v5192
        %5194 = vmatprep.mubr.f32.mxu0 0.0
        %5195 = vmatmul.mubr.f32.gmra.mrb[0].mxu0 0.0
        %v5196 = vpop.f32.mrb[0].mxu0
        %v5197 = vadd.f32 %v4750, %v5196
        %v5198 = vpop.f32.mrb[0].mxu0
        %v5199 = vadd.f32 %v4752, %v5198
        %5200 = vmatprep.mubr.f32.mxu0 %v3998
        %5201 = vmatmul.mubr.f32.gmra.mrb[0].mxu0 %v3997
        %v5202 = vpop.f32.mrb[0].mxu0
        %v5203 = vadd.f32 %v4756, %v5202
        %v5204 = vpop.f32.mrb[0].mxu0
        %v5205 = vadd.f32 %v4758, %v5204
        %5206 = vmatprep.mubr.f32.mxu0 %v4002
        %5207 = vmatmul.mubr.f32.gmra.mrb[0].mxu0 %v4001
        %v5208 = vpop.f32.mrb[0].mxu0
        %v5209 = vadd.f32 %v4762, %v5208
        %v5210 = vpop.f32.mrb[0].mxu0
        %v5211 = vadd.f32 %v4764, %v5210
        %5212 = vmatprep.mubr.f32.mxu0 %v4006
        %5213 = vmatmul.mubr.f32.gmra.mrb[0].mxu0 %v4005
        %v5214 = vpop.f32.mrb[0].mxu0
        %v5215 = vadd.f32 %v4768, %v5214
        %v5216 = vpop.f32.mrb[0].mxu0
        %v5217 = vadd.f32 %v4770, %v5216
        %5218 = vmatprep.mubr.f32.mxu0 %v4010
        %5219 = vmatmul.mubr.f32.gmra.mrb[0].mxu0 %v4009
        %v5220 = vpop.f32.mrb[0].mxu0
        %v5221 = vadd.f32 %v4774, %v5220
        %v5222 = vpop.f32.mrb[0].mxu0
        %v5223 = vadd.f32 %v4776, %v5222
        %5224 = vmatprep.mubr.f32.mxu0 %v4014
        %5225 = vmatmul.mubr.f32.gmra.mrb[0].mxu0 %v4013
        %v5226 = vpop.f32.mrb[0].mxu0
        %v5227 = vadd.f32 %v4780, %v5226
        %v5228 = vpop.f32.mrb[0].mxu0
        %v5229 = vadd.f32 %v4782, %v5228
        %5230 = vmatprep.mubr.f32.mxu0 %v4018
        %5231 = vmatmul.mubr.f32.gmra.mrb[0].mxu0 %v4017
        %v5232 = vpop.f32.mrb[0].mxu0
        %v5233 = vadd.f32 %v4786, %v5232
        %v5234 = vpop.f32.mrb[0].mxu0
        %v5235 = vadd.f32 %v4788, %v5234
        %5236 = vmatprep.mubr.f32.mxu0 %v4022
        %5237 = vmatmul.mubr.f32.gmra.mrb[0].mxu0 %v4021
        %v5238 = vpop.f32.mrb[0].mxu0
        %v5239 = vadd.f32 %v4792, %v5238
        %v5240 = vpop.f32.mrb[0].mxu0
        %v5241 = vadd.f32 %v4794, %v5240
        %5242 = vmatprep.mubr.f32.mxu0 %v4026
        %5243 = vmatmul.mubr.f32.gmra.mrb[0].mxu0 %v4025
        %v5244 = vpop.f32.mrb[0].mxu0
        %v5245 = vadd.f32 %v4798, %v5244
        %v5246 = vpop.f32.mrb[0].mxu0
        %v5247 = vadd.f32 %v4800, %v5246
        %5248 = vmatprep.mubr.f32.mxu0 %v4030
        %5249 = vmatmul.mubr.f32.gmra.mrb[0].mxu0 %v4029
        %v5250 = vpop.f32.mrb[0].mxu0
        %v5251 = vadd.f32 %v4804, %v5250
        %v5252 = vpop.f32.mrb[0].mxu0
        %v5253 = vadd.f32 %v4806, %v5252
        %5254 = vmatprep.mubr.f32.mxu0 %v4034
        %5255 = vmatmul.mubr.f32.gmra.mrb[0].mxu0 %v4033
        %v5256 = vpop.f32.mrb[0].mxu0
        %v5257 = vadd.f32 %v4810, %v5256
        %v5258 = vpop.f32.mrb[0].mxu0
        %v5259 = vadd.f32 %v4812, %v5258
        %5260 = vmatprep.mubr.f32.mxu0 %v4038
        %5261 = vmatmul.mubr.f32.gmra.mrb[0].mxu0 %v4037
        %v5262 = vpop.f32.mrb[0].mxu0
        %v5263 = vadd.f32 %v4816, %v5262
        %v5264 = vpop.f32.mrb[0].mxu0
        %v5265 = vadd.f32 %v4818, %v5264
        %5266 = vmatprep.mubr.f32.mxu0 %v4042
        %5267 = vmatmul.mubr.f32.gmra.mrb[0].mxu0 %v4041
        %v5268 = vpop.f32.mrb[0].mxu0
        %v5269 = vadd.f32 %v4822, %v5268
        %v5270 = vpop.f32.mrb[0].mxu0
        %v5271 = vadd.f32 %v4824, %v5270
        %5272 = vdwg.mxu0
        %5273 = vmatprep.subr.mxu0 %v4182
        %5274 = vmatpush1.msra.mxu0 %v4181
        %5275 = vmatprep.subr.mxu0 %v4186
        %5276 = vmatpush1.msra.mxu0 %v4185
        %5277 = vmatprep.subr.mxu0 %v4190
        %5278 = vmatpush1.msra.mxu0 %v4189
        %5279 = vmatprep.subr.mxu0 %v4194
        %5280 = vmatpush1.msra.mxu0 %v4193
        %5281 = vmatprep.subr.mxu0 %v4198
        %5282 = vmatpush1.msra.mxu0 %v4197
        %5283 = vmatprep.subr.mxu0 %v4202
        %5284 = vmatpush1.msra.mxu0 %v4201
        %5285 = vmatprep.subr.mxu0 %v4206
        %5286 = vmatpush1.msra.mxu0 %v4205
        %5287 = vmatprep.subr.mxu0 %v4210
        %5288 = vmatpush1.msra.mxu0 %v4209
        %5289 = vmatprep.subr.mxu0 %v4214
        %5290 = vmatpush1.msra.mxu0 %v4213
        %5291 = vmatprep.subr.mxu0 %v4218
        %5292 = vmatpush1.msra.mxu0 %v4217
        %5293 = vmatprep.subr.mxu0 %v4222
        %5294 = vmatpush1.msra.mxu0 %v4221
        %5295 = vmatprep.subr.mxu0 %v4226
        %5296 = vmatpush1.msra.mxu0 %v4225
        %5297 = vmatprep.subr.mxu0 %v4230
        %5298 = vmatpush1.msra.mxu0 %v4229
        %5299 = vmatprep.subr.mxu0 %v4234
        %5300 = vmatpush1.msra.mxu0 %v4233
        %5301 = vmatprep.subr.mxu0 %v4238
        %5302 = vmatpush1.msra.mxu0 %v4237
        %5303 = vmatprep.subr.mxu0 %v4242
        %5304 = vmatpush1.msra.mxu0 %v4241
        %5305 = vmatprep.subr.mxu0 %v4246
        %5306 = vmatpush1.msra.mxu0 %v4245
        %5307 = vmatprep.subr.mxu0 %v4250
        %5308 = vmatpush1.msra.mxu0 %v4249
        %5309 = vmatprep.subr.mxu0 %v4254
        %5310 = vmatpush1.msra.mxu0 %v4253
        %5311 = vmatprep.subr.mxu0 %v4258
        %5312 = vmatpush1.msra.mxu0 %v4257
        %5313 = vmatprep.subr.mxu0 %v4262
        %5314 = vmatpush1.msra.mxu0 %v4261
        %5315 = vmatprep.subr.mxu0 %v4266
        %5316 = vmatpush1.msra.mxu0 %v4265
        %5317 = vmatprep.subr.mxu0 0.0
        %5318 = vmatpush1.msra.mxu0 0.0
        %5319 = vmatprep.subr.mxu0 0.0
        %5320 = vmatpush1.msra.mxu0 0.0
        %5321 = vmatprep.subr.mxu0 0.0
        %5322 = vmatpush1.msra.mxu0 0.0
        %5323 = vmatprep.subr.mxu0 0.0
        %5324 = vmatpush1.msra.mxu0 0.0
        %5325 = vmatprep.subr.mxu0 0.0
        %5326 = vmatpush1.msra.mxu0 0.0
        %5327 = vmatprep.subr.mxu0 0.0
        %5328 = vmatpush1.msra.mxu0 0.0
        %5329 = vmatprep.subr.mxu0 0.0
        %5330 = vmatpush1.msra.mxu0 0.0
        %5331 = vmatprep.subr.mxu0 0.0
        %5332 = vmatpush1.msra.mxu0 0.0
        %5333 = vmatprep.subr.mxu0 0.0
        %5334 = vmatpush1.msra.mxu0 0.0
        %5335 = vmatprep.subr.mxu0 0.0
        %5336 = vmatpush1.msra.mxu0 0.0
        %5337 = vmatprep.mubr.f32.mxu0 %v4487
        %5338 = vmatmul.mubr.f32.gmra.mrb[0].mxu0 0.0
        %v5339 = vpop.f32.mrb[0].mxu0
        %v5340 = vadd.f32 %v5191, %v5339
        %v5341 = vpop.f32.mrb[0].mxu0
        %v5342 = vadd.f32 %v5193, %v5341
        %5343 = vmatprep.mubr.f32.mxu0 %v4487
        %5344 = vmatmul.mubr.f32.gmra.mrb[0].mxu0 0.0
        %v5345 = vpop.f32.mrb[0].mxu0
        %v5346 = vadd.f32 %v5197, %v5345
        %v5347 = vpop.f32.mrb[0].mxu0
        %v5348 = vadd.f32 %v5199, %v5347
        %5349 = vmatprep.mubr.f32.mxu0 %v4490
        %5350 = vmatmul.mubr.f32.gmra.mrb[0].mxu0 %v3999
        %v5351 = vpop.f32.mrb[0].mxu0
        %v5352 = vadd.f32 %v5203, %v5351
        %v5353 = vpop.f32.mrb[0].mxu0
        %v5354 = vadd.f32 %v5205, %v5353
        %5355 = vmatprep.mubr.f32.mxu0 %v4493
        %5356 = vmatmul.mubr.f32.gmra.mrb[0].mxu0 %v4003
        %v5357 = vpop.f32.mrb[0].mxu0
        %v5358 = vadd.f32 %v5209, %v5357
        %v5359 = vpop.f32.mrb[0].mxu0
        %v5360 = vadd.f32 %v5211, %v5359
        %5361 = vmatprep.mubr.f32.mxu0 %v4496
        %5362 = vmatmul.mubr.f32.gmra.mrb[0].mxu0 %v4007
        %v5363 = vpop.f32.mrb[0].mxu0
        %v5364 = vadd.f32 %v5215, %v5363
        %v5365 = vpop.f32.mrb[0].mxu0
        %v5366 = vadd.f32 %v5217, %v5365
        %5367 = vmatprep.mubr.f32.mxu0 %v4499
        %5368 = vmatmul.mubr.f32.gmra.mrb[0].mxu0 %v4011
        %v5369 = vpop.f32.mrb[0].mxu0
        %v5370 = vadd.f32 %v5221, %v5369
        %v5371 = vpop.f32.mrb[0].mxu0
        %v5372 = vadd.f32 %v5223, %v5371
        %5373 = vmatprep.mubr.f32.mxu0 %v4502
        %5374 = vmatmul.mubr.f32.gmra.mrb[0].mxu0 %v4015
        %v5375 = vpop.f32.mrb[0].mxu0
        %v5376 = vadd.f32 %v5227, %v5375
        %v5377 = vpop.f32.mrb[0].mxu0
        %v5378 = vadd.f32 %v5229, %v5377
        %5379 = vmatprep.mubr.f32.mxu0 %v4505
        %5380 = vmatmul.mubr.f32.gmra.mrb[0].mxu0 %v4019
        %v5381 = vpop.f32.mrb[0].mxu0
        %v5382 = vadd.f32 %v5233, %v5381
        %v5383 = vpop.f32.mrb[0].mxu0
        %v5384 = vadd.f32 %v5235, %v5383
        %5385 = vmatprep.mubr.f32.mxu0 %v4508
        %5386 = vmatmul.mubr.f32.gmra.mrb[0].mxu0 %v4023
        %v5387 = vpop.f32.mrb[0].mxu0
        %v5388 = vadd.f32 %v5239, %v5387
        %v5389 = vpop.f32.mrb[0].mxu0
        %v5390 = vadd.f32 %v5241, %v5389
        %5391 = vmatprep.mubr.f32.mxu0 %v4511
        %5392 = vmatmul.mubr.f32.gmra.mrb[0].mxu0 %v4027
        %v5393 = vpop.f32.mrb[0].mxu0
        %v5394 = vadd.f32 %v5245, %v5393
        %v5395 = vpop.f32.mrb[0].mxu0
        %v5396 = vadd.f32 %v5247, %v5395
        %5397 = vmatprep.mubr.f32.mxu0 %v4514
        %5398 = vmatmul.mubr.f32.gmra.mrb[0].mxu0 %v4031
        %v5399 = vpop.f32.mrb[0].mxu0
        %v5400 = vadd.f32 %v5251, %v5399
        %v5401 = vpop.f32.mrb[0].mxu0
        %v5402 = vadd.f32 %v5253, %v5401
        %5403 = vmatprep.mubr.f32.mxu0 %v4517
        %5404 = vmatmul.mubr.f32.gmra.mrb[0].mxu0 %v4035
        %v5405 = vpop.f32.mrb[0].mxu0
        %v5406 = vadd.f32 %v5257, %v5405
        %v5407 = vpop.f32.mrb[0].mxu0
        %v5408 = vadd.f32 %v5259, %v5407
        %5409 = vmatprep.mubr.f32.mxu0 %v4520
        %5410 = vmatmul.mubr.f32.gmra.mrb[0].mxu0 %v4039
        %v5411 = vpop.f32.mrb[0].mxu0
        %v5412 = vadd.f32 %v5263, %v5411
        %v5413 = vpop.f32.mrb[0].mxu0
        %v5414 = vadd.f32 %v5265, %v5413
        %5415 = vmatprep.mubr.f32.mxu0 %v4523
        %5416 = vmatmul.mubr.f32.gmra.mrb[0].mxu0 %v4043
        %v5417 = vpop.f32.mrb[0].mxu0
        %v5418 = vadd.f32 %v5269, %v5417
        %v5419 = vpop.f32.mrb[0].mxu0
        %v5420 = vadd.f32 %v5271, %v5419
        %5421 = vdwg.mxu0
        %5422 = vmatprep.subr.mxu0 %v4056
        %5423 = vmatpush1.msra.mxu0 %v4055
        %5424 = vmatprep.subr.mxu0 %v4060
        %5425 = vmatpush1.msra.mxu0 %v4059
        %5426 = vmatprep.subr.mxu0 %v4064
        %5427 = vmatpush1.msra.mxu0 %v4063
        %5428 = vmatprep.subr.mxu0 %v4068
        %5429 = vmatpush1.msra.mxu0 %v4067
        %5430 = vmatprep.subr.mxu0 %v4072
        %5431 = vmatpush1.msra.mxu0 %v4071
        %5432 = vmatprep.subr.mxu0 %v4076
        %5433 = vmatpush1.msra.mxu0 %v4075
        %5434 = vmatprep.subr.mxu0 %v4080
        %5435 = vmatpush1.msra.mxu0 %v4079
        %5436 = vmatprep.subr.mxu0 %v4084
        %5437 = vmatpush1.msra.mxu0 %v4083
        %5438 = vmatprep.subr.mxu0 %v4088
        %5439 = vmatpush1.msra.mxu0 %v4087
        %5440 = vmatprep.subr.mxu0 %v4092
        %5441 = vmatpush1.msra.mxu0 %v4091
        %5442 = vmatprep.subr.mxu0 %v4096
        %5443 = vmatpush1.msra.mxu0 %v4095
        %5444 = vmatprep.subr.mxu0 %v4100
        %5445 = vmatpush1.msra.mxu0 %v4099
        %5446 = vmatprep.subr.mxu0 %v4104
        %5447 = vmatpush1.msra.mxu0 %v4103
        %5448 = vmatprep.subr.mxu0 %v4108
        %5449 = vmatpush1.msra.mxu0 %v4107
        %5450 = vmatprep.subr.mxu0 %v4112
        %5451 = vmatpush1.msra.mxu0 %v4111
        %5452 = vmatprep.subr.mxu0 %v4116
        %5453 = vmatpush1.msra.mxu0 %v4115
        %5454 = vmatprep.subr.mxu0 %v4120
        %5455 = vmatpush1.msra.mxu0 %v4119
        %5456 = vmatprep.subr.mxu0 %v4124
        %5457 = vmatpush1.msra.mxu0 %v4123
        %5458 = vmatprep.subr.mxu0 %v4128
        %5459 = vmatpush1.msra.mxu0 %v4127
        %5460 = vmatprep.subr.mxu0 %v4132
        %5461 = vmatpush1.msra.mxu0 %v4131
        %5462 = vmatprep.subr.mxu0 %v4136
        %5463 = vmatpush1.msra.mxu0 %v4135
        %5464 = vmatprep.subr.mxu0 %v4140
        %5465 = vmatpush1.msra.mxu0 %v4139
        %5466 = vmatprep.subr.mxu0 %v4144
        %5467 = vmatpush1.msra.mxu0 %v4143
        %5468 = vmatprep.subr.mxu0 %v4148
        %5469 = vmatpush1.msra.mxu0 %v4147
        %5470 = vmatprep.subr.mxu0 %v4152
        %5471 = vmatpush1.msra.mxu0 %v4151
        %5472 = vmatprep.subr.mxu0 %v4156
        %5473 = vmatpush1.msra.mxu0 %v4155
        %5474 = vmatprep.subr.mxu0 %v4160
        %5475 = vmatpush1.msra.mxu0 %v4159
        %5476 = vmatprep.subr.mxu0 %v4164
        %5477 = vmatpush1.msra.mxu0 %v4163
        %5478 = vmatprep.subr.mxu0 %v4168
        %5479 = vmatpush1.msra.mxu0 %v4167
        %5480 = vmatprep.subr.mxu0 %v4172
        %5481 = vmatpush1.msra.mxu0 %v4171
        %5482 = vmatprep.subr.mxu0 %v4176
        %5483 = vmatpush1.msra.mxu0 %v4175
        %5484 = vmatprep.subr.mxu0 %v4180
        %5485 = vmatpush1.msra.mxu0 %v4179
        %5486 = vmatprep.mubr.f32.mxu0 0.0
        %5487 = vmatmul.mubr.f32.gmra.mrb[0].mxu0 0.0
        %v5488 = vpop.f32.mrb[0].mxu0
        %v5489 = vadd.f32 %v5042, %v5488
        %v5490 = vpop.f32.mrb[0].mxu0
        %v5491 = vadd.f32 %v5044, %v5490
        %5492 = vmatprep.mubr.f32.mxu0 0.0
        %5493 = vmatmul.mubr.f32.gmra.mrb[0].mxu0 0.0
        %v5494 = vpop.f32.mrb[0].mxu0
        %v5495 = vadd.f32 %v5048, %v5494
        %v5496 = vpop.f32.mrb[0].mxu0
        %v5497 = vadd.f32 %v5050, %v5496
        %5498 = vmatprep.mubr.f32.mxu0 %v3998
        %5499 = vmatmul.mubr.f32.gmra.mrb[0].mxu0 %v3997
        %v5500 = vpop.f32.mrb[0].mxu0
        %v5501 = vadd.f32 %v5054, %v5500
        %v5502 = vpop.f32.mrb[0].mxu0
        %v5503 = vadd.f32 %v5056, %v5502
        %5504 = vmatprep.mubr.f32.mxu0 %v4002
        %5505 = vmatmul.mubr.f32.gmra.mrb[0].mxu0 %v4001
        %v5506 = vpop.f32.mrb[0].mxu0
        %v5507 = vadd.f32 %v5060, %v5506
        %v5508 = vpop.f32.mrb[0].mxu0
        %v5509 = vadd.f32 %v5062, %v5508
        %5510 = vmatprep.mubr.f32.mxu0 %v4006
        %5511 = vmatmul.mubr.f32.gmra.mrb[0].mxu0 %v4005
        %v5512 = vpop.f32.mrb[0].mxu0
        %v5513 = vadd.f32 %v5066, %v5512
        %v5514 = vpop.f32.mrb[0].mxu0
        %v5515 = vadd.f32 %v5068, %v5514
        %5516 = vmatprep.mubr.f32.mxu0 %v4010
        %5517 = vmatmul.mubr.f32.gmra.mrb[0].mxu0 %v4009
        %v5518 = vpop.f32.mrb[0].mxu0
        %v5519 = vadd.f32 %v5072, %v5518
        %v5520 = vpop.f32.mrb[0].mxu0
        %v5521 = vadd.f32 %v5074, %v5520
        %5522 = vmatprep.mubr.f32.mxu0 %v4014
        %5523 = vmatmul.mubr.f32.gmra.mrb[0].mxu0 %v4013
        %v5524 = vpop.f32.mrb[0].mxu0
        %v5525 = vadd.f32 %v5078, %v5524
        %v5526 = vpop.f32.mrb[0].mxu0
        %v5527 = vadd.f32 %v5080, %v5526
        %5528 = vmatprep.mubr.f32.mxu0 %v4018
        %5529 = vmatmul.mubr.f32.gmra.mrb[0].mxu0 %v4017
        %v5530 = vpop.f32.mrb[0].mxu0
        %v5531 = vadd.f32 %v5084, %v5530
        %v5532 = vpop.f32.mrb[0].mxu0
        %v5533 = vadd.f32 %v5086, %v5532
        %5534 = vmatprep.mubr.f32.mxu0 %v4022
        %5535 = vmatmul.mubr.f32.gmra.mrb[0].mxu0 %v4021
        %v5536 = vpop.f32.mrb[0].mxu0
        %v5537 = vadd.f32 %v5090, %v5536
        %v5538 = vpop.f32.mrb[0].mxu0
        %v5539 = vadd.f32 %v5092, %v5538
        %5540 = vmatprep.mubr.f32.mxu0 %v4026
        %5541 = vmatmul.mubr.f32.gmra.mrb[0].mxu0 %v4025
        %v5542 = vpop.f32.mrb[0].mxu0
        %v5543 = vadd.f32 %v5096, %v5542
        %v5544 = vpop.f32.mrb[0].mxu0
        %v5545 = vadd.f32 %v5098, %v5544
        %5546 = vmatprep.mubr.f32.mxu0 %v4030
        %5547 = vmatmul.mubr.f32.gmra.mrb[0].mxu0 %v4029
        %v5548 = vpop.f32.mrb[0].mxu0
        %v5549 = vadd.f32 %v5102, %v5548
        %v5550 = vpop.f32.mrb[0].mxu0
        %v5551 = vadd.f32 %v5104, %v5550
        %5552 = vmatprep.mubr.f32.mxu0 %v4034
        %5553 = vmatmul.mubr.f32.gmra.mrb[0].mxu0 %v4033
        %v5554 = vpop.f32.mrb[0].mxu0
        %v5555 = vadd.f32 %v5108, %v5554
        %v5556 = vpop.f32.mrb[0].mxu0
        %v5557 = vadd.f32 %v5110, %v5556
        %5558 = vmatprep.mubr.f32.mxu0 %v4038
        %5559 = vmatmul.mubr.f32.gmra.mrb[0].mxu0 %v4037
        %v5560 = vpop.f32.mrb[0].mxu0
        %v5561 = vadd.f32 %v5114, %v5560
        %v5562 = vpop.f32.mrb[0].mxu0
        %v5563 = vadd.f32 %v5116, %v5562
        %5564 = vmatprep.mubr.f32.mxu0 %v4042
        %5565 = vmatmul.mubr.f32.gmra.mrb[0].mxu0 %v4041
        %v5566 = vpop.f32.mrb[0].mxu0
        %v5567 = vadd.f32 %v5120, %v5566
        %v5568 = vpop.f32.mrb[0].mxu0
        %v5569 = vadd.f32 %v5122, %v5568
        %5570 = vdwg.mxu0
        %5571 = vmatprep.subr.mxu0 %v4184
        %5572 = vmatpush1.msra.mxu0 %v4183
        %5573 = vmatprep.subr.mxu0 %v4188
        %5574 = vmatpush1.msra.mxu0 %v4187
        %5575 = vmatprep.subr.mxu0 %v4192
        %5576 = vmatpush1.msra.mxu0 %v4191
        %5577 = vmatprep.subr.mxu0 %v4196
        %5578 = vmatpush1.msra.mxu0 %v4195
        %5579 = vmatprep.subr.mxu0 %v4200
        %5580 = vmatpush1.msra.mxu0 %v4199
        %5581 = vmatprep.subr.mxu0 %v4204
        %5582 = vmatpush1.msra.mxu0 %v4203
        %5583 = vmatprep.subr.mxu0 %v4208
        %5584 = vmatpush1.msra.mxu0 %v4207
        %5585 = vmatprep.subr.mxu0 %v4212
        %5586 = vmatpush1.msra.mxu0 %v4211
        %5587 = vmatprep.subr.mxu0 %v4216
        %5588 = vmatpush1.msra.mxu0 %v4215
        %5589 = vmatprep.subr.mxu0 %v4220
        %5590 = vmatpush1.msra.mxu0 %v4219
        %5591 = vmatprep.subr.mxu0 %v4224
        %5592 = vmatpush1.msra.mxu0 %v4223
        %5593 = vmatprep.subr.mxu0 %v4228
        %5594 = vmatpush1.msra.mxu0 %v4227
        %5595 = vmatprep.subr.mxu0 %v4232
        %5596 = vmatpush1.msra.mxu0 %v4231
        %5597 = vmatprep.subr.mxu0 %v4236
        %5598 = vmatpush1.msra.mxu0 %v4235
        %5599 = vmatprep.subr.mxu0 %v4240
        %5600 = vmatpush1.msra.mxu0 %v4239
        %5601 = vmatprep.subr.mxu0 %v4244
        %5602 = vmatpush1.msra.mxu0 %v4243
        %5603 = vmatprep.subr.mxu0 %v4248
        %5604 = vmatpush1.msra.mxu0 %v4247
        %5605 = vmatprep.subr.mxu0 %v4252
        %5606 = vmatpush1.msra.mxu0 %v4251
        %5607 = vmatprep.subr.mxu0 %v4256
        %5608 = vmatpush1.msra.mxu0 %v4255
        %5609 = vmatprep.subr.mxu0 %v4260
        %5610 = vmatpush1.msra.mxu0 %v4259
        %5611 = vmatprep.subr.mxu0 %v4264
        %5612 = vmatpush1.msra.mxu0 %v4263
        %5613 = vmatprep.subr.mxu0 %v4268
        %5614 = vmatpush1.msra.mxu0 %v4267
        %5615 = vmatprep.subr.mxu0 0.0
        %5616 = vmatpush1.msra.mxu0 0.0
        %5617 = vmatprep.subr.mxu0 0.0
        %5618 = vmatpush1.msra.mxu0 0.0
        %5619 = vmatprep.subr.mxu0 0.0
        %5620 = vmatpush1.msra.mxu0 0.0
        %5621 = vmatprep.subr.mxu0 0.0
        %5622 = vmatpush1.msra.mxu0 0.0
        %5623 = vmatprep.subr.mxu0 0.0
        %5624 = vmatpush1.msra.mxu0 0.0
        %5625 = vmatprep.subr.mxu0 0.0
        %5626 = vmatpush1.msra.mxu0 0.0
        %5627 = vmatprep.subr.mxu0 0.0
        %5628 = vmatpush1.msra.mxu0 0.0
        %5629 = vmatprep.subr.mxu0 0.0
        %5630 = vmatpush1.msra.mxu0 0.0
        %5631 = vmatprep.subr.mxu0 0.0
        %5632 = vmatpush1.msra.mxu0 0.0
        %5633 = vmatprep.subr.mxu0 0.0
        %5634 = vmatpush1.msra.mxu0 0.0
        %5635 = vmatprep.mubr.f32.mxu0 %v4487
        %5636 = vmatmul.mubr.f32.gmra.mrb[0].mxu0 0.0
        %v5637 = vpop.f32.mrb[0].mxu0
        %v5638 = vadd.f32 %v5489, %v5637
        %v5639 = vpop.f32.mrb[0].mxu0
        %v5640 = vadd.f32 %v5491, %v5639
        %5641 = vmatprep.mubr.f32.mxu0 %v4487
        %5642 = vmatmul.mubr.f32.gmra.mrb[0].mxu0 0.0
        %v5643 = vpop.f32.mrb[0].mxu0
        %v5644 = vadd.f32 %v5495, %v5643
        %v5645 = vpop.f32.mrb[0].mxu0
        %v5646 = vadd.f32 %v5497, %v5645
        %5647 = vmatprep.mubr.f32.mxu0 %v4490
        %5648 = vmatmul.mubr.f32.gmra.mrb[0].mxu0 %v3999
        %v5649 = vpop.f32.mrb[0].mxu0
        %v5650 = vadd.f32 %v5501, %v5649
        %v5651 = vpop.f32.mrb[0].mxu0
        %v5652 = vadd.f32 %v5503, %v5651
        %5653 = vmatprep.mubr.f32.mxu0 %v4493
        %5654 = vmatmul.mubr.f32.gmra.mrb[0].mxu0 %v4003
        %v5655 = vpop.f32.mrb[0].mxu0
        %v5656 = vadd.f32 %v5507, %v5655
        %v5657 = vpop.f32.mrb[0].mxu0
        %v5658 = vadd.f32 %v5509, %v5657
        %5659 = vmatprep.mubr.f32.mxu0 %v4496
        %5660 = vmatmul.mubr.f32.gmra.mrb[0].mxu0 %v4007
        %v5661 = vpop.f32.mrb[0].mxu0
        %v5662 = vadd.f32 %v5513, %v5661
        %v5663 = vpop.f32.mrb[0].mxu0
        %v5664 = vadd.f32 %v5515, %v5663
        %5665 = vmatprep.mubr.f32.mxu0 %v4499
        %5666 = vmatmul.mubr.f32.gmra.mrb[0].mxu0 %v4011
        %v5667 = vpop.f32.mrb[0].mxu0
        %v5668 = vadd.f32 %v5519, %v5667
        %v5669 = vpop.f32.mrb[0].mxu0
        %v5670 = vadd.f32 %v5521, %v5669
        %5671 = vmatprep.mubr.f32.mxu0 %v4502
        %5672 = vmatmul.mubr.f32.gmra.mrb[0].mxu0 %v4015
        %v5673 = vpop.f32.mrb[0].mxu0
        %v5674 = vadd.f32 %v5525, %v5673
        %v5675 = vpop.f32.mrb[0].mxu0
        %v5676 = vadd.f32 %v5527, %v5675
        %5677 = vmatprep.mubr.f32.mxu0 %v4505
        %5678 = vmatmul.mubr.f32.gmra.mrb[0].mxu0 %v4019
        %v5679 = vpop.f32.mrb[0].mxu0
        %v5680 = vadd.f32 %v5531, %v5679
        %v5681 = vpop.f32.mrb[0].mxu0
        %v5682 = vadd.f32 %v5533, %v5681
        %5683 = vmatprep.mubr.f32.mxu0 %v4508
        %5684 = vmatmul.mubr.f32.gmra.mrb[0].mxu0 %v4023
        %v5685 = vpop.f32.mrb[0].mxu0
        %v5686 = vadd.f32 %v5537, %v5685
        %v5687 = vpop.f32.mrb[0].mxu0
        %v5688 = vadd.f32 %v5539, %v5687
        %5689 = vmatprep.mubr.f32.mxu0 %v4511
        %5690 = vmatmul.mubr.f32.gmra.mrb[0].mxu0 %v4027
        %v5691 = vpop.f32.mrb[0].mxu0
        %v5692 = vadd.f32 %v5543, %v5691
        %v5693 = vpop.f32.mrb[0].mxu0
        %v5694 = vadd.f32 %v5545, %v5693
        %5695 = vmatprep.mubr.f32.mxu0 %v4514
        %5696 = vmatmul.mubr.f32.gmra.mrb[0].mxu0 %v4031
        %v5697 = vpop.f32.mrb[0].mxu0
        %v5698 = vadd.f32 %v5549, %v5697
        %v5699 = vpop.f32.mrb[0].mxu0
        %v5700 = vadd.f32 %v5551, %v5699
        %5701 = vmatprep.mubr.f32.mxu0 %v4517
        %5702 = vmatmul.mubr.f32.gmra.mrb[0].mxu0 %v4035
        %v5703 = vpop.f32.mrb[0].mxu0
        %v5704 = vadd.f32 %v5555, %v5703
        %v5705 = vpop.f32.mrb[0].mxu0
        %v5706 = vadd.f32 %v5557, %v5705
        %5707 = vmatprep.mubr.f32.mxu0 %v4520
        %5708 = vmatmul.mubr.f32.gmra.mrb[0].mxu0 %v4039
        %v5709 = vpop.f32.mrb[0].mxu0
        %v5710 = vadd.f32 %v5561, %v5709
        %v5711 = vpop.f32.mrb[0].mxu0
        %v5712 = vadd.f32 %v5563, %v5711
        %5713 = vmatprep.mubr.f32.mxu0 %v4523
        %5714 = vmatmul.mubr.f32.gmra.mrb[0].mxu0 %v4043
        %v5715 = vpop.f32.mrb[0].mxu0
        %v5716 = vadd.f32 %v5567, %v5715
        %v5717 = vpop.f32.mrb[0].mxu0
        %v5718 = vadd.f32 %v5569, %v5717
        %5719 = vdwg.mxu0
        %s5720 = scalar_lea.vmem [#allocation8], 3456
        %v5721 = vld [vmem:[%s5720] sm:$0xff]
        %v5722 = vld [vmem:[%s5720 + $0x8] sm:$0xff]
        %v5723 = vld [vmem:[%s5720 + $0x10] sm:$0xff]
        %v5724 = vld [vmem:[%s5720 + $0x18] sm:$0xff]
        %v5725 = vld [vmem:[%s5720 + $0x20] sm:$0xff]
        %v5726 = vld [vmem:[%s5720 + $0x28] sm:$0xff]
        %v5727 = vld [vmem:[%s5720 + $0x30] sm:$0xff]
        %v5728 = vld [vmem:[%s5720 + $0x38] sm:$0xff]
        %v5729 = vld [vmem:[%s5720 + $0x40] sm:$0xff]
        %v5730 = vld [vmem:[%s5720 + $0x48] sm:$0xff]
        %v5731 = vld [vmem:[%s5720 + $0x50] sm:$0xff]
        %v5732 = vld [vmem:[%s5720 + $0x58] sm:$0xff]
        %v5733 = vld [vmem:[%s5720 + $0x60] sm:$0xff]
        %v5734 = vld [vmem:[%s5720 + $0x68] sm:$0xff]
        %v5735 = vld [vmem:[%s5720 + $0x70] sm:$0xff]
        %v5736 = vld [vmem:[%s5720 + $0x78] sm:$0xff]
        %v5737 = vld [vmem:[%s5720 + $0x80] sm:$0xff]
        %v5738 = vld [vmem:[%s5720 + $0x88] sm:$0xff]
        %v5739 = vld [vmem:[%s5720 + $0x90] sm:$0xff]
        %v5740 = vld [vmem:[%s5720 + $0x98] sm:$0xff]
        %v5741 = vld [vmem:[%s5720 + $0xa0] sm:$0xff]
        %v5742 = vld [vmem:[%s5720 + $0xa8] sm:$0xff]
        %v5743 = vld [vmem:[%s5720 + $0xb0] sm:$0xff]
        %v5744 = vld [vmem:[%s5720 + $0xb8] sm:$0xff]
        %v5745 = vld [vmem:[%s5720 + $0xc0] sm:$0xff]
        %v5746 = vld [vmem:[%s5720 + $0xc8] sm:$0xff]
        %v5747 = vld [vmem:[%s5720 + $0xd0] sm:$0xff]
        %v5748 = vld [vmem:[%s5720 + $0xd8] sm:$0xff]
        %v5749 = vld [vmem:[%s5720 + $0xe0] sm:$0xff]
        %v5750 = vld [vmem:[%s5720 + $0xe8] sm:$0xff]
        %v5751 = vld [vmem:[%s5720 + $0xf0] sm:$0xff]
        %v5752 = vld [vmem:[%s5720 + $0xf8] sm:$0xff]
        %v5753 = vld [vmem:[%s5720 + $0x100] sm:$0xff]
        %v5754 = vld [vmem:[%s5720 + $0x108] sm:$0xff]
        %v5755 = vld [vmem:[%s5720 + $0x110] sm:$0xff]
        %v5756 = vld [vmem:[%s5720 + $0x118] sm:$0xff]
        %v5757 = vld [vmem:[%s5720 + $0x120] sm:$0xff]
        %v5758 = vld [vmem:[%s5720 + $0x128] sm:$0xff]
        %v5759 = vld [vmem:[%s5720 + $0x130] sm:$0xff]
        %v5760 = vld [vmem:[%s5720 + $0x138] sm:$0xff]
        %v5761 = vld [vmem:[%s5720 + $0x140] sm:$0xff]
        %v5762 = vld [vmem:[%s5720 + $0x148] sm:$0xff]
        %v5763 = vld [vmem:[%s5720 + $0x150] sm:$0xff]
        %v5764 = vld [vmem:[%s5720 + $0x158] sm:$0xff]
        %v5765 = vld [vmem:[%s5720 + $0x160] sm:$0xff]
        %v5766 = vld [vmem:[%s5720 + $0x168] sm:$0xff]
        %v5767 = vld [vmem:[%s5720 + $0x170] sm:$0xff]
        %v5768 = vld [vmem:[%s5720 + $0x178] sm:$0xff]
        %v5769 = vld [vmem:[%s5720 + $0x180] sm:$0xff]
        %v5770 = vld [vmem:[%s5720 + $0x188] sm:$0xff]
        %v5771 = vld [vmem:[%s5720 + $0x190] sm:$0xff]
        %v5772 = vld [vmem:[%s5720 + $0x198] sm:$0xff]
        %v5773 = vld [vmem:[%s5720 + $0x1a0] sm:$0xff]
        %v5774 = vld [vmem:[%s5720 + $0x1a8] sm:$0xff]
        %v5775 = vld [vmem:[%s5720 + $0x1b0] sm:$0xff]
        %v5776 = vld [vmem:[%s5720 + $0x1b8] sm:$0xff]
        %v5777 = vld [vmem:[%s5720 + $0x1c0] sm:$0xff]
        %v5778 = vld [vmem:[%s5720 + $0x1c8] sm:$0xff]
        %v5779 = vld [vmem:[%s5720 + $0x1d0] sm:$0xff]
        %v5780 = vld [vmem:[%s5720 + $0x1d8] sm:$0xff]
        %v5781 = vld [vmem:[%s5720 + $0x1e0] sm:$0xff]
        %v5782 = vld [vmem:[%s5720 + $0x1e8] sm:$0xff]
        %v5783 = vld [vmem:[%s5720 + $0x1f0] sm:$0xff]
        %v5784 = vld [vmem:[%s5720 + $0x1f8] sm:$0xff]
        %v5785 = vld [vmem:[%s5720 + $0x200] sm:$0xff]
        %v5786 = vld [vmem:[%s5720 + $0x208] sm:$0xff]
        %v5787 = vld [vmem:[%s5720 + $0x210] sm:$0xff]
        %v5788 = vld [vmem:[%s5720 + $0x218] sm:$0xff]
        %v5789 = vld [vmem:[%s5720 + $0x220] sm:$0xff]
        %v5790 = vld [vmem:[%s5720 + $0x228] sm:$0xff]
        %v5791 = vld [vmem:[%s5720 + $0x230] sm:$0xff]
        %v5792 = vld [vmem:[%s5720 + $0x238] sm:$0xff]
        %v5793 = vld [vmem:[%s5720 + $0x240] sm:$0xff]
        %v5794 = vld [vmem:[%s5720 + $0x248] sm:$0xff]
        %v5795 = vld [vmem:[%s5720 + $0x250] sm:$0xff]
        %v5796 = vld [vmem:[%s5720 + $0x258] sm:$0xff]
        %v5797 = vld [vmem:[%s5720 + $0x260] sm:$0xff]
        %v5798 = vld [vmem:[%s5720 + $0x268] sm:$0xff]
        %v5799 = vld [vmem:[%s5720 + $0x270] sm:$0xff]
        %v5800 = vld [vmem:[%s5720 + $0x278] sm:$0xff]
        %v5801 = vld [vmem:[%s5720 + $0x280] sm:$0xff]
        %v5802 = vld [vmem:[%s5720 + $0x288] sm:$0xff]
        %v5803 = vld [vmem:[%s5720 + $0x290] sm:$0xff]
        %v5804 = vld [vmem:[%s5720 + $0x298] sm:$0xff]
        %v5805 = vld [vmem:[%s5720 + $0x2a0] sm:$0xff]
        %v5806 = vld [vmem:[%s5720 + $0x2a8] sm:$0xff]
        %v5807 = vld [vmem:[%s5720 + $0x2b0] sm:$0xff]
        %v5808 = vld [vmem:[%s5720 + $0x2b8] sm:$0xff]
        %v5809 = vld [vmem:[%s5720 + $0x2c0] sm:$0xff]
        %v5810 = vld [vmem:[%s5720 + $0x2c8] sm:$0xff]
        %v5811 = vld [vmem:[%s5720 + $0x2d0] sm:$0xff]
        %v5812 = vld [vmem:[%s5720 + $0x2d8] sm:$0xff]
        %v5813 = vld [vmem:[%s5720 + $0x2e0] sm:$0xff]
        %v5814 = vld [vmem:[%s5720 + $0x2e8] sm:$0xff]
        %v5815 = vld [vmem:[%s5720 + $0x2f0] sm:$0xff]
        %v5816 = vld [vmem:[%s5720 + $0x2f8] sm:$0xff]
        %v5817 = vld [vmem:[%s5720 + $0x300] sm:$0xff]
        %v5818 = vld [vmem:[%s5720 + $0x308] sm:$0xff]
        %v5819 = vld [vmem:[%s5720 + $0x310] sm:$0xff]
        %v5820 = vld [vmem:[%s5720 + $0x318] sm:$0xff]
        %v5821 = vld [vmem:[%s5720 + $0x320] sm:$0xff]
        %v5822 = vld [vmem:[%s5720 + $0x328] sm:$0xff]
        %v5823 = vld [vmem:[%s5720 + $0x330] sm:$0xff]
        %v5824 = vld [vmem:[%s5720 + $0x338] sm:$0xff]
        %v5825 = vld [vmem:[%s5720 + $0x340] sm:$0xff]
        %v5826 = vld [vmem:[%s5720 + $0x348] sm:$0xff]
        %v5827 = vld [vmem:[%s5720 + $0x350] sm:$0xff]
        %v5828 = vld [vmem:[%s5720 + $0x358] sm:$0xff]
        %v5829 = vld [vmem:[%s5720 + $0x360] sm:$0xff]
        %v5830 = vld [vmem:[%s5720 + $0x368] sm:$0xff]
        %v5831 = vld [vmem:[%s5720 + $0x370] sm:$0xff]
        %v5832 = vld [vmem:[%s5720 + $0x378] sm:$0xff]
        %v5833 = vld [vmem:[%s5720 + $0x380] sm:$0xff]
        %v5834 = vld [vmem:[%s5720 + $0x388] sm:$0xff]
        %v5835 = vld [vmem:[%s5720 + $0x390] sm:$0xff]
        %v5836 = vld [vmem:[%s5720 + $0x398] sm:$0xff]
        %v5837 = vld [vmem:[%s5720 + $0x3a0] sm:$0xff]
        %v5838 = vld [vmem:[%s5720 + $0x3a8] sm:$0xff]
        %v5839 = vld [vmem:[%s5720 + $0x3b0] sm:$0xff]
        %v5840 = vld [vmem:[%s5720 + $0x3b8] sm:$0xff]
        %v5841 = vld [vmem:[%s5720 + $0x3c0] sm:$0xff]
        %v5842 = vld [vmem:[%s5720 + $0x3c8] sm:$0xff]
        %v5843 = vld [vmem:[%s5720 + $0x3d0] sm:$0xff]
        %v5844 = vld [vmem:[%s5720 + $0x3d8] sm:$0xff]
        %v5845 = vld [vmem:[%s5720 + $0x3e0] sm:$0xff]
        %v5846 = vld [vmem:[%s5720 + $0x3e8] sm:$0xff]
        %v5847 = vld [vmem:[%s5720 + $0x3f0] sm:$0xff]
        %v5848 = vld [vmem:[%s5720 + $0x3f8] sm:$0xff]
        %v5849 = vld [vmem:[%s5720 + $0x400] sm:$0xff]
        %v5850 = vld [vmem:[%s5720 + $0x408] sm:$0xff]
        %v5851 = vld [vmem:[%s5720 + $0x410] sm:$0xff]
        %v5852 = vld [vmem:[%s5720 + $0x418] sm:$0xff]
        %v5853 = vld [vmem:[%s5720 + $0x420] sm:$0xff]
        %v5854 = vld [vmem:[%s5720 + $0x428] sm:$0xff]
        %v5855 = vld [vmem:[%s5720 + $0x430] sm:$0xff]
        %v5856 = vld [vmem:[%s5720 + $0x438] sm:$0xff]
        %v5857 = vld [vmem:[%s5720 + $0x440] sm:$0xff]
        %v5858 = vld [vmem:[%s5720 + $0x448] sm:$0xff]
        %v5859 = vld [vmem:[%s5720 + $0x450] sm:$0xff]
        %v5860 = vld [vmem:[%s5720 + $0x458] sm:$0xff]
        %v5861 = vld [vmem:[%s5720 + $0x460] sm:$0xff]
        %v5862 = vld [vmem:[%s5720 + $0x468] sm:$0xff]
        %v5863 = vld [vmem:[%s5720 + $0x470] sm:$0xff]
        %v5864 = vld [vmem:[%s5720 + $0x478] sm:$0xff]
        %v5865 = vld [vmem:[%s5720 + $0x480] sm:$0xff]
        %v5866 = vld [vmem:[%s5720 + $0x488] sm:$0xff]
        %v5867 = vld [vmem:[%s5720 + $0x490] sm:$0xff]
        %v5868 = vld [vmem:[%s5720 + $0x498] sm:$0xff]
        %v5869 = vld [vmem:[%s5720 + $0x4a0] sm:$0xff]
        %v5870 = vld [vmem:[%s5720 + $0x4a8] sm:$0xff]
        %v5871 = vld [vmem:[%s5720 + $0x4b0] sm:$0xff]
        %v5872 = vld [vmem:[%s5720 + $0x4b8] sm:$0xff]
        %v5873 = vld [vmem:[%s5720 + $0x4c0] sm:$0xff]
        %v5874 = vld [vmem:[%s5720 + $0x4c8] sm:$0xff]
        %v5875 = vld [vmem:[%s5720 + $0x4d0] sm:$0xff]
        %v5876 = vld [vmem:[%s5720 + $0x4d8] sm:$0xff]
        %v5877 = vld [vmem:[%s5720 + $0x4e0] sm:$0xff]
        %v5878 = vld [vmem:[%s5720 + $0x4e8] sm:$0xff]
        %v5879 = vld [vmem:[%s5720 + $0x4f0] sm:$0xff]
        %v5880 = vld [vmem:[%s5720 + $0x4f8] sm:$0xff]
        %v5881 = vld [vmem:[%s5720 + $0x500] sm:$0xff]
        %v5882 = vld [vmem:[%s5720 + $0x508] sm:$0xff]
        %v5883 = vld [vmem:[%s5720 + $0x510] sm:$0xff]
        %v5884 = vld [vmem:[%s5720 + $0x518] sm:$0xff]
        %v5885 = vld [vmem:[%s5720 + $0x520] sm:$0xff]
        %v5886 = vld [vmem:[%s5720 + $0x528] sm:$0xff]
        %v5887 = vld [vmem:[%s5720 + $0x530] sm:$0xff]
        %v5888 = vld [vmem:[%s5720 + $0x538] sm:$0xff]
        %v5889 = vld [vmem:[%s5720 + $0x540] sm:$0xff]
        %v5890 = vld [vmem:[%s5720 + $0x548] sm:$0xff]
        %v5891 = vld [vmem:[%s5720 + $0x550] sm:$0xff]
        %v5892 = vld [vmem:[%s5720 + $0x558] sm:$0xff]
        %v5893 = vld [vmem:[%s5720 + $0x560] sm:$0xff]
        %v5894 = vld [vmem:[%s5720 + $0x568] sm:$0xff]
        %v5895 = vld [vmem:[%s5720 + $0x570] sm:$0xff]
        %v5896 = vld [vmem:[%s5720 + $0x578] sm:$0xff]
        %v5897 = vld [vmem:[%s5720 + $0x580] sm:$0xff]
        %v5898 = vld [vmem:[%s5720 + $0x588] sm:$0xff]
        %v5899 = vld [vmem:[%s5720 + $0x590] sm:$0xff]
        %v5900 = vld [vmem:[%s5720 + $0x598] sm:$0xff]
        %v5901 = vld [vmem:[%s5720 + $0x5a0] sm:$0xff]
        %v5902 = vld [vmem:[%s5720 + $0x5a8] sm:$0xff]
        %v5903 = vld [vmem:[%s5720 + $0x5b0] sm:$0xff]
        %v5904 = vld [vmem:[%s5720 + $0x5b8] sm:$0xff]
        %v5905 = vld [vmem:[%s5720 + $0x5c0] sm:$0xff]
        %v5906 = vld [vmem:[%s5720 + $0x5c8] sm:$0xff]
        %v5907 = vld [vmem:[%s5720 + $0x5d0] sm:$0xff]
        %v5908 = vld [vmem:[%s5720 + $0x5d8] sm:$0xff]
        %v5909 = vld [vmem:[%s5720 + $0x5e0] sm:$0xff]
        %v5910 = vld [vmem:[%s5720 + $0x5e8] sm:$0xff]
        %v5911 = vld [vmem:[%s5720 + $0x5f0] sm:$0xff]
        %v5912 = vld [vmem:[%s5720 + $0x5f8] sm:$0xff]
        %v5913 = vld [vmem:[%s5720 + $0x600] sm:$0xff]
        %v5914 = vld [vmem:[%s5720 + $0x608] sm:$0xff]
        %v5915 = vld [vmem:[%s5720 + $0x610] sm:$0xff]
        %v5916 = vld [vmem:[%s5720 + $0x618] sm:$0xff]
        %v5917 = vld [vmem:[%s5720 + $0x620] sm:$0xff]
        %v5918 = vld [vmem:[%s5720 + $0x628] sm:$0xff]
        %v5919 = vld [vmem:[%s5720 + $0x630] sm:$0xff]
        %v5920 = vld [vmem:[%s5720 + $0x638] sm:$0xff]
        %v5921 = vld [vmem:[%s5720 + $0x640] sm:$0xff]
        %v5922 = vld [vmem:[%s5720 + $0x648] sm:$0xff]
        %v5923 = vld [vmem:[%s5720 + $0x650] sm:$0xff]
        %v5924 = vld [vmem:[%s5720 + $0x658] sm:$0xff]
        %v5925 = vld [vmem:[%s5720 + $0x660] sm:$0xff]
        %v5926 = vld [vmem:[%s5720 + $0x668] sm:$0xff]
        %v5927 = vld [vmem:[%s5720 + $0x670] sm:$0xff]
        %v5928 = vld [vmem:[%s5720 + $0x678] sm:$0xff]
        %v5929 = vld [vmem:[%s5720 + $0x680] sm:$0xff]
        %v5930 = vld [vmem:[%s5720 + $0x688] sm:$0xff]
        %v5931 = vld [vmem:[%s5720 + $0x690] sm:$0xff]
        %v5932 = vld [vmem:[%s5720 + $0x698] sm:$0xff]
        %v5933 = vld [vmem:[%s5720 + $0x6a0] sm:$0xff]
        %v5934 = vld [vmem:[%s5720 + $0x6a8] sm:$0xff]
        %v5935 = vld [vmem:[%s5720 + $0x6b0] sm:$0xff]
        %v5936 = vld [vmem:[%s5720 + $0x6b8] sm:$0xff]
        %v5938 = vsel %vm4486, %v4052, 0
        %5940 = vmatprep.subr.mxu0 %v5722
        %5941 = vmatpush1.msra.mxu0 %v5721
        %5942 = vmatprep.subr.mxu0 %v5726
        %5943 = vmatpush1.msra.mxu0 %v5725
        %5944 = vmatprep.subr.mxu0 %v5730
        %5945 = vmatpush1.msra.mxu0 %v5729
        %5946 = vmatprep.subr.mxu0 %v5734
        %5947 = vmatpush1.msra.mxu0 %v5733
        %5948 = vmatprep.subr.mxu0 %v5738
        %5949 = vmatpush1.msra.mxu0 %v5737
        %5950 = vmatprep.subr.mxu0 %v5742
        %5951 = vmatpush1.msra.mxu0 %v5741
        %5952 = vmatprep.subr.mxu0 %v5746
        %5953 = vmatpush1.msra.mxu0 %v5745
        %5954 = vmatprep.subr.mxu0 %v5750
        %5955 = vmatpush1.msra.mxu0 %v5749
        %5956 = vmatprep.subr.mxu0 %v5754
        %5957 = vmatpush1.msra.mxu0 %v5753
        %5958 = vmatprep.subr.mxu0 %v5758
        %5959 = vmatpush1.msra.mxu0 %v5757
        %5960 = vmatprep.subr.mxu0 %v5762
        %5961 = vmatpush1.msra.mxu0 %v5761
        %5962 = vmatprep.subr.mxu0 %v5766
        %5963 = vmatpush1.msra.mxu0 %v5765
        %5964 = vmatprep.subr.mxu0 %v5770
        %5965 = vmatpush1.msra.mxu0 %v5769
        %5966 = vmatprep.subr.mxu0 %v5774
        %5967 = vmatpush1.msra.mxu0 %v5773
        %5968 = vmatprep.subr.mxu0 %v5778
        %5969 = vmatpush1.msra.mxu0 %v5777
        %5970 = vmatprep.subr.mxu0 %v5782
        %5971 = vmatpush1.msra.mxu0 %v5781
        %5972 = vmatprep.subr.mxu0 %v5786
        %5973 = vmatpush1.msra.mxu0 %v5785
        %5974 = vmatprep.subr.mxu0 %v5790
        %5975 = vmatpush1.msra.mxu0 %v5789
        %5976 = vmatprep.subr.mxu0 %v5794
        %5977 = vmatpush1.msra.mxu0 %v5793
        %5978 = vmatprep.subr.mxu0 %v5798
        %5979 = vmatpush1.msra.mxu0 %v5797
        %5980 = vmatprep.subr.mxu0 %v5802
        %5981 = vmatpush1.msra.mxu0 %v5801
        %5982 = vmatprep.subr.mxu0 %v5806
        %5983 = vmatpush1.msra.mxu0 %v5805
        %5984 = vmatprep.subr.mxu0 %v5810
        %5985 = vmatpush1.msra.mxu0 %v5809
        %5986 = vmatprep.subr.mxu0 %v5814
        %5987 = vmatpush1.msra.mxu0 %v5813
        %5988 = vmatprep.subr.mxu0 %v5818
        %5989 = vmatpush1.msra.mxu0 %v5817
        %5990 = vmatprep.subr.mxu0 %v5822
        %5991 = vmatpush1.msra.mxu0 %v5821
        %5992 = vmatprep.subr.mxu0 %v5826
        %5993 = vmatpush1.msra.mxu0 %v5825
        %5994 = vmatprep.subr.mxu0 %v5830
        %5995 = vmatpush1.msra.mxu0 %v5829
        %5996 = vmatprep.subr.mxu0 %v5834
        %5997 = vmatpush1.msra.mxu0 %v5833
        %5998 = vmatprep.subr.mxu0 %v5838
        %5999 = vmatpush1.msra.mxu0 %v5837
        %6000 = vmatprep.subr.mxu0 %v5842
        %6001 = vmatpush1.msra.mxu0 %v5841
        %6002 = vmatprep.subr.mxu0 %v5846
        %6003 = vmatpush1.msra.mxu0 %v5845
        %6004 = vmatprep.mubr.f32.mxu0 %v3998
        %6005 = vmatmul.mubr.f32.gmra.mrb[0].mxu0 %v3997
        %v6006 = vpop.f32.mrb[0].mxu0
        %v6007 = vadd.f32 0.0, %v6006
        %v6008 = vpop.f32.mrb[0].mxu0
        %v6009 = vadd.f32 0.0, %v6008
        %6010 = vmatprep.mubr.f32.mxu0 %v4002
        %6011 = vmatmul.mubr.f32.gmra.mrb[0].mxu0 %v4001
        %v6012 = vpop.f32.mrb[0].mxu0
        %v6013 = vadd.f32 0.0, %v6012
        %v6014 = vpop.f32.mrb[0].mxu0
        %v6015 = vadd.f32 0.0, %v6014
        %6016 = vmatprep.mubr.f32.mxu0 %v4006
        %6017 = vmatmul.mubr.f32.gmra.mrb[0].mxu0 %v4005
        %v6018 = vpop.f32.mrb[0].mxu0
        %v6019 = vadd.f32 0.0, %v6018
        %v6020 = vpop.f32.mrb[0].mxu0
        %v6021 = vadd.f32 0.0, %v6020
        %6022 = vmatprep.mubr.f32.mxu0 %v4010
        %6023 = vmatmul.mubr.f32.gmra.mrb[0].mxu0 %v4009
        %v6024 = vpop.f32.mrb[0].mxu0
        %v6025 = vadd.f32 0.0, %v6024
        %v6026 = vpop.f32.mrb[0].mxu0
        %v6027 = vadd.f32 0.0, %v6026
        %6028 = vmatprep.mubr.f32.mxu0 %v4014
        %6029 = vmatmul.mubr.f32.gmra.mrb[0].mxu0 %v4013
        %v6030 = vpop.f32.mrb[0].mxu0
        %v6031 = vadd.f32 0.0, %v6030
        %v6032 = vpop.f32.mrb[0].mxu0
        %v6033 = vadd.f32 0.0, %v6032
        %6034 = vmatprep.mubr.f32.mxu0 %v4018
        %6035 = vmatmul.mubr.f32.gmra.mrb[0].mxu0 %v4017
        %v6036 = vpop.f32.mrb[0].mxu0
        %v6037 = vadd.f32 0.0, %v6036
        %v6038 = vpop.f32.mrb[0].mxu0
        %v6039 = vadd.f32 0.0, %v6038
        %6040 = vmatprep.mubr.f32.mxu0 %v4022
        %6041 = vmatmul.mubr.f32.gmra.mrb[0].mxu0 %v4021
        %v6042 = vpop.f32.mrb[0].mxu0
        %v6043 = vadd.f32 0.0, %v6042
        %v6044 = vpop.f32.mrb[0].mxu0
        %v6045 = vadd.f32 0.0, %v6044
        %6046 = vmatprep.mubr.f32.mxu0 %v4026
        %6047 = vmatmul.mubr.f32.gmra.mrb[0].mxu0 %v4025
        %v6048 = vpop.f32.mrb[0].mxu0
        %v6049 = vadd.f32 0.0, %v6048
        %v6050 = vpop.f32.mrb[0].mxu0
        %v6051 = vadd.f32 0.0, %v6050
        %6052 = vmatprep.mubr.f32.mxu0 %v4030
        %6053 = vmatmul.mubr.f32.gmra.mrb[0].mxu0 %v4029
        %v6054 = vpop.f32.mrb[0].mxu0
        %v6055 = vadd.f32 0.0, %v6054
        %v6056 = vpop.f32.mrb[0].mxu0
        %v6057 = vadd.f32 0.0, %v6056
        %6058 = vmatprep.mubr.f32.mxu0 %v4034
        %6059 = vmatmul.mubr.f32.gmra.mrb[0].mxu0 %v4033
        %v6060 = vpop.f32.mrb[0].mxu0
        %v6061 = vadd.f32 0.0, %v6060
        %v6062 = vpop.f32.mrb[0].mxu0
        %v6063 = vadd.f32 0.0, %v6062
        %6064 = vmatprep.mubr.f32.mxu0 %v4038
        %6065 = vmatmul.mubr.f32.gmra.mrb[0].mxu0 %v4037
        %v6066 = vpop.f32.mrb[0].mxu0
        %v6067 = vadd.f32 0.0, %v6066
        %v6068 = vpop.f32.mrb[0].mxu0
        %v6069 = vadd.f32 0.0, %v6068
        %6070 = vmatprep.mubr.f32.mxu0 %v4042
        %6071 = vmatmul.mubr.f32.gmra.mrb[0].mxu0 %v4041
        %v6072 = vpop.f32.mrb[0].mxu0
        %v6073 = vadd.f32 0.0, %v6072
        %v6074 = vpop.f32.mrb[0].mxu0
        %v6075 = vadd.f32 0.0, %v6074
        %6076 = vmatprep.mubr.f32.mxu0 %v4046
        %6077 = vmatmul.mubr.f32.gmra.mrb[0].mxu0 %v4045
        %v6078 = vpop.f32.mrb[0].mxu0
        %v6079 = vadd.f32 0.0, %v6078
        %v6080 = vpop.f32.mrb[0].mxu0
        %v6081 = vadd.f32 0.0, %v6080
        %6082 = vmatprep.mubr.f32.mxu0 %v4050
        %6083 = vmatmul.mubr.f32.gmra.mrb[0].mxu0 %v4049
        %v6084 = vpop.f32.mrb[0].mxu0
        %v6085 = vadd.f32 0.0, %v6084
        %v6086 = vpop.f32.mrb[0].mxu0
        %v6087 = vadd.f32 0.0, %v6086
        %6088 = vdwg.mxu0
        %6089 = vmatprep.subr.mxu0 %v5850
        %6090 = vmatpush1.msra.mxu0 %v5849
        %6091 = vmatprep.subr.mxu0 %v5854
        %6092 = vmatpush1.msra.mxu0 %v5853
        %6093 = vmatprep.subr.mxu0 %v5858
        %6094 = vmatpush1.msra.mxu0 %v5857
        %6095 = vmatprep.subr.mxu0 %v5862
        %6096 = vmatpush1.msra.mxu0 %v5861
        %6097 = vmatprep.subr.mxu0 %v5866
        %6098 = vmatpush1.msra.mxu0 %v5865
        %6099 = vmatprep.subr.mxu0 %v5870
        %6100 = vmatpush1.msra.mxu0 %v5869
        %6101 = vmatprep.subr.mxu0 %v5874
        %6102 = vmatpush1.msra.mxu0 %v5873
        %6103 = vmatprep.subr.mxu0 %v5878
        %6104 = vmatpush1.msra.mxu0 %v5877
        %6105 = vmatprep.subr.mxu0 %v5882
        %6106 = vmatpush1.msra.mxu0 %v5881
        %6107 = vmatprep.subr.mxu0 %v5886
        %6108 = vmatpush1.msra.mxu0 %v5885
        %6109 = vmatprep.subr.mxu0 %v5890
        %6110 = vmatpush1.msra.mxu0 %v5889
        %6111 = vmatprep.subr.mxu0 %v5894
        %6112 = vmatpush1.msra.mxu0 %v5893
        %6113 = vmatprep.subr.mxu0 %v5898
        %6114 = vmatpush1.msra.mxu0 %v5897
        %6115 = vmatprep.subr.mxu0 %v5902
        %6116 = vmatpush1.msra.mxu0 %v5901
        %6117 = vmatprep.subr.mxu0 %v5906
        %6118 = vmatpush1.msra.mxu0 %v5905
        %6119 = vmatprep.subr.mxu0 %v5910
        %6120 = vmatpush1.msra.mxu0 %v5909
        %6121 = vmatprep.subr.mxu0 %v5914
        %6122 = vmatpush1.msra.mxu0 %v5913
        %6123 = vmatprep.subr.mxu0 %v5918
        %6124 = vmatpush1.msra.mxu0 %v5917
        %6125 = vmatprep.subr.mxu0 %v5922
        %6126 = vmatpush1.msra.mxu0 %v5921
        %6127 = vmatprep.subr.mxu0 %v5926
        %6128 = vmatpush1.msra.mxu0 %v5925
        %6129 = vmatprep.subr.mxu0 %v5930
        %6130 = vmatpush1.msra.mxu0 %v5929
        %6131 = vmatprep.subr.mxu0 %v5934
        %6132 = vmatpush1.msra.mxu0 %v5933
        %6133 = vmatprep.subr.mxu0 0.0
        %6134 = vmatpush1.msra.mxu0 0.0
        %6135 = vmatprep.subr.mxu0 0.0
        %6136 = vmatpush1.msra.mxu0 0.0
        %6137 = vmatprep.subr.mxu0 0.0
        %6138 = vmatpush1.msra.mxu0 0.0
        %6139 = vmatprep.subr.mxu0 0.0
        %6140 = vmatpush1.msra.mxu0 0.0
        %6141 = vmatprep.subr.mxu0 0.0
        %6142 = vmatpush1.msra.mxu0 0.0
        %6143 = vmatprep.subr.mxu0 0.0
        %6144 = vmatpush1.msra.mxu0 0.0
        %6145 = vmatprep.subr.mxu0 0.0
        %6146 = vmatpush1.msra.mxu0 0.0
        %6147 = vmatprep.subr.mxu0 0.0
        %6148 = vmatpush1.msra.mxu0 0.0
        %6149 = vmatprep.subr.mxu0 0.0
        %6150 = vmatpush1.msra.mxu0 0.0
        %6151 = vmatprep.subr.mxu0 0.0
        %6152 = vmatpush1.msra.mxu0 0.0
        %6153 = vmatprep.mubr.f32.mxu0 %v4490
        %6154 = vmatmul.mubr.f32.gmra.mrb[0].mxu0 %v3999
        %v6155 = vpop.f32.mrb[0].mxu0
        %v6156 = vadd.f32 %v6007, %v6155
        %v6157 = vpop.f32.mrb[0].mxu0
        %v6158 = vadd.f32 %v6009, %v6157
        %6159 = vmatprep.mubr.f32.mxu0 %v4493
        %6160 = vmatmul.mubr.f32.gmra.mrb[0].mxu0 %v4003
        %v6161 = vpop.f32.mrb[0].mxu0
        %v6162 = vadd.f32 %v6013, %v6161
        %v6163 = vpop.f32.mrb[0].mxu0
        %v6164 = vadd.f32 %v6015, %v6163
        %6165 = vmatprep.mubr.f32.mxu0 %v4496
        %6166 = vmatmul.mubr.f32.gmra.mrb[0].mxu0 %v4007
        %v6167 = vpop.f32.mrb[0].mxu0
        %v6168 = vadd.f32 %v6019, %v6167
        %v6169 = vpop.f32.mrb[0].mxu0
        %v6170 = vadd.f32 %v6021, %v6169
        %6171 = vmatprep.mubr.f32.mxu0 %v4499
        %6172 = vmatmul.mubr.f32.gmra.mrb[0].mxu0 %v4011
        %v6173 = vpop.f32.mrb[0].mxu0
        %v6174 = vadd.f32 %v6025, %v6173
        %v6175 = vpop.f32.mrb[0].mxu0
        %v6176 = vadd.f32 %v6027, %v6175
        %6177 = vmatprep.mubr.f32.mxu0 %v4502
        %6178 = vmatmul.mubr.f32.gmra.mrb[0].mxu0 %v4015
        %v6179 = vpop.f32.mrb[0].mxu0
        %v6180 = vadd.f32 %v6031, %v6179
        %v6181 = vpop.f32.mrb[0].mxu0
        %v6182 = vadd.f32 %v6033, %v6181
        %6183 = vmatprep.mubr.f32.mxu0 %v4505
        %6184 = vmatmul.mubr.f32.gmra.mrb[0].mxu0 %v4019
        %v6185 = vpop.f32.mrb[0].mxu0
        %v6186 = vadd.f32 %v6037, %v6185
        %v6187 = vpop.f32.mrb[0].mxu0
        %v6188 = vadd.f32 %v6039, %v6187
        %6189 = vmatprep.mubr.f32.mxu0 %v4508
        %6190 = vmatmul.mubr.f32.gmra.mrb[0].mxu0 %v4023
        %v6191 = vpop.f32.mrb[0].mxu0
        %v6192 = vadd.f32 %v6043, %v6191
        %v6193 = vpop.f32.mrb[0].mxu0
        %v6194 = vadd.f32 %v6045, %v6193
        %6195 = vmatprep.mubr.f32.mxu0 %v4511
        %6196 = vmatmul.mubr.f32.gmra.mrb[0].mxu0 %v4027
        %v6197 = vpop.f32.mrb[0].mxu0
        %v6198 = vadd.f32 %v6049, %v6197
        %v6199 = vpop.f32.mrb[0].mxu0
        %v6200 = vadd.f32 %v6051, %v6199
        %6201 = vmatprep.mubr.f32.mxu0 %v4514
        %6202 = vmatmul.mubr.f32.gmra.mrb[0].mxu0 %v4031
        %v6203 = vpop.f32.mrb[0].mxu0
        %v6204 = vadd.f32 %v6055, %v6203
        %v6205 = vpop.f32.mrb[0].mxu0
        %v6206 = vadd.f32 %v6057, %v6205
        %6207 = vmatprep.mubr.f32.mxu0 %v4517
        %6208 = vmatmul.mubr.f32.gmra.mrb[0].mxu0 %v4035
        %v6209 = vpop.f32.mrb[0].mxu0
        %v6210 = vadd.f32 %v6061, %v6209
        %v6211 = vpop.f32.mrb[0].mxu0
        %v6212 = vadd.f32 %v6063, %v6211
        %6213 = vmatprep.mubr.f32.mxu0 %v4520
        %6214 = vmatmul.mubr.f32.gmra.mrb[0].mxu0 %v4039
        %v6215 = vpop.f32.mrb[0].mxu0
        %v6216 = vadd.f32 %v6067, %v6215
        %v6217 = vpop.f32.mrb[0].mxu0
        %v6218 = vadd.f32 %v6069, %v6217
        %6219 = vmatprep.mubr.f32.mxu0 %v4523
        %6220 = vmatmul.mubr.f32.gmra.mrb[0].mxu0 %v4043
        %v6221 = vpop.f32.mrb[0].mxu0
        %v6222 = vadd.f32 %v6073, %v6221
        %v6223 = vpop.f32.mrb[0].mxu0
        %v6224 = vadd.f32 %v6075, %v6223
        %6225 = vmatprep.mubr.f32.mxu0 %v4526
        %6226 = vmatmul.mubr.f32.gmra.mrb[0].mxu0 %v4047
        %v6227 = vpop.f32.mrb[0].mxu0
        %v6228 = vadd.f32 %v6079, %v6227
        %v6229 = vpop.f32.mrb[0].mxu0
        %v6230 = vadd.f32 %v6081, %v6229
        %6231 = vmatprep.mubr.f32.mxu0 %v5938
        %6232 = vmatmul.mubr.f32.gmra.mrb[0].mxu0 %v4051
        %v6233 = vpop.f32.mrb[0].mxu0
        %v6234 = vadd.f32 %v6085, %v6233
        %v6235 = vpop.f32.mrb[0].mxu0
        %v6236 = vadd.f32 %v6087, %v6235
        %6237 = vdwg.mxu0
        %6238 = vmatprep.subr.mxu0 %v5724
        %6239 = vmatpush1.msra.mxu0 %v5723
        %6240 = vmatprep.subr.mxu0 %v5728
        %6241 = vmatpush1.msra.mxu0 %v5727
        %6242 = vmatprep.subr.mxu0 %v5732
        %6243 = vmatpush1.msra.mxu0 %v5731
        %6244 = vmatprep.subr.mxu0 %v5736
        %6245 = vmatpush1.msra.mxu0 %v5735
        %6246 = vmatprep.subr.mxu0 %v5740
        %6247 = vmatpush1.msra.mxu0 %v5739
        %6248 = vmatprep.subr.mxu0 %v5744
        %6249 = vmatpush1.msra.mxu0 %v5743
        %6250 = vmatprep.subr.mxu0 %v5748
        %6251 = vmatpush1.msra.mxu0 %v5747
        %6252 = vmatprep.subr.mxu0 %v5752
        %6253 = vmatpush1.msra.mxu0 %v5751
        %6254 = vmatprep.subr.mxu0 %v5756
        %6255 = vmatpush1.msra.mxu0 %v5755
        %6256 = vmatprep.subr.mxu0 %v5760
        %6257 = vmatpush1.msra.mxu0 %v5759
        %6258 = vmatprep.subr.mxu0 %v5764
        %6259 = vmatpush1.msra.mxu0 %v5763
        %6260 = vmatprep.subr.mxu0 %v5768
        %6261 = vmatpush1.msra.mxu0 %v5767
        %6262 = vmatprep.subr.mxu0 %v5772
        %6263 = vmatpush1.msra.mxu0 %v5771
        %6264 = vmatprep.subr.mxu0 %v5776
        %6265 = vmatpush1.msra.mxu0 %v5775
        %6266 = vmatprep.subr.mxu0 %v5780
        %6267 = vmatpush1.msra.mxu0 %v5779
        %6268 = vmatprep.subr.mxu0 %v5784
        %6269 = vmatpush1.msra.mxu0 %v5783
        %6270 = vmatprep.subr.mxu0 %v5788
        %6271 = vmatpush1.msra.mxu0 %v5787
        %6272 = vmatprep.subr.mxu0 %v5792
        %6273 = vmatpush1.msra.mxu0 %v5791
        %6274 = vmatprep.subr.mxu0 %v5796
        %6275 = vmatpush1.msra.mxu0 %v5795
        %6276 = vmatprep.subr.mxu0 %v5800
        %6277 = vmatpush1.msra.mxu0 %v5799
        %6278 = vmatprep.subr.mxu0 %v5804
        %6279 = vmatpush1.msra.mxu0 %v5803
        %6280 = vmatprep.subr.mxu0 %v5808
        %6281 = vmatpush1.msra.mxu0 %v5807
        %6282 = vmatprep.subr.mxu0 %v5812
        %6283 = vmatpush1.msra.mxu0 %v5811
        %6284 = vmatprep.subr.mxu0 %v5816
        %6285 = vmatpush1.msra.mxu0 %v5815
        %6286 = vmatprep.subr.mxu0 %v5820
        %6287 = vmatpush1.msra.mxu0 %v5819
        %6288 = vmatprep.subr.mxu0 %v5824
        %6289 = vmatpush1.msra.mxu0 %v5823
        %6290 = vmatprep.subr.mxu0 %v5828
        %6291 = vmatpush1.msra.mxu0 %v5827
        %6292 = vmatprep.subr.mxu0 %v5832
        %6293 = vmatpush1.msra.mxu0 %v5831
        %6294 = vmatprep.subr.mxu0 %v5836
        %6295 = vmatpush1.msra.mxu0 %v5835
        %6296 = vmatprep.subr.mxu0 %v5840
        %6297 = vmatpush1.msra.mxu0 %v5839
        %6298 = vmatprep.subr.mxu0 %v5844
        %6299 = vmatpush1.msra.mxu0 %v5843
        %6300 = vmatprep.subr.mxu0 %v5848
        %6301 = vmatpush1.msra.mxu0 %v5847
        %6302 = vmatprep.mubr.f32.mxu0 %v3998
        %6303 = vmatmul.mubr.f32.gmra.mrb[0].mxu0 %v3997
        %v6304 = vpop.f32.mrb[0].mxu0
        %v6305 = vadd.f32 0.0, %v6304
        %v6306 = vpop.f32.mrb[0].mxu0
        %v6307 = vadd.f32 0.0, %v6306
        %6308 = vmatprep.mubr.f32.mxu0 %v4002
        %6309 = vmatmul.mubr.f32.gmra.mrb[0].mxu0 %v4001
        %v6310 = vpop.f32.mrb[0].mxu0
        %v6311 = vadd.f32 0.0, %v6310
        %v6312 = vpop.f32.mrb[0].mxu0
        %v6313 = vadd.f32 0.0, %v6312
        %6314 = vmatprep.mubr.f32.mxu0 %v4006
        %6315 = vmatmul.mubr.f32.gmra.mrb[0].mxu0 %v4005
        %v6316 = vpop.f32.mrb[0].mxu0
        %v6317 = vadd.f32 0.0, %v6316
        %v6318 = vpop.f32.mrb[0].mxu0
        %v6319 = vadd.f32 0.0, %v6318
        %6320 = vmatprep.mubr.f32.mxu0 %v4010
        %6321 = vmatmul.mubr.f32.gmra.mrb[0].mxu0 %v4009
        %v6322 = vpop.f32.mrb[0].mxu0
        %v6323 = vadd.f32 0.0, %v6322
        %v6324 = vpop.f32.mrb[0].mxu0
        %v6325 = vadd.f32 0.0, %v6324
        %6326 = vmatprep.mubr.f32.mxu0 %v4014
        %6327 = vmatmul.mubr.f32.gmra.mrb[0].mxu0 %v4013
        %v6328 = vpop.f32.mrb[0].mxu0
        %v6329 = vadd.f32 0.0, %v6328
        %v6330 = vpop.f32.mrb[0].mxu0
        %v6331 = vadd.f32 0.0, %v6330
        %6332 = vmatprep.mubr.f32.mxu0 %v4018
        %6333 = vmatmul.mubr.f32.gmra.mrb[0].mxu0 %v4017
        %v6334 = vpop.f32.mrb[0].mxu0
        %v6335 = vadd.f32 0.0, %v6334
        %v6336 = vpop.f32.mrb[0].mxu0
        %v6337 = vadd.f32 0.0, %v6336
        %6338 = vmatprep.mubr.f32.mxu0 %v4022
        %6339 = vmatmul.mubr.f32.gmra.mrb[0].mxu0 %v4021
        %v6340 = vpop.f32.mrb[0].mxu0
        %v6341 = vadd.f32 0.0, %v6340
        %v6342 = vpop.f32.mrb[0].mxu0
        %v6343 = vadd.f32 0.0, %v6342
        %6344 = vmatprep.mubr.f32.mxu0 %v4026
        %6345 = vmatmul.mubr.f32.gmra.mrb[0].mxu0 %v4025
        %v6346 = vpop.f32.mrb[0].mxu0
        %v6347 = vadd.f32 0.0, %v6346
        %v6348 = vpop.f32.mrb[0].mxu0
        %v6349 = vadd.f32 0.0, %v6348
        %6350 = vmatprep.mubr.f32.mxu0 %v4030
        %6351 = vmatmul.mubr.f32.gmra.mrb[0].mxu0 %v4029
        %v6352 = vpop.f32.mrb[0].mxu0
        %v6353 = vadd.f32 0.0, %v6352
        %v6354 = vpop.f32.mrb[0].mxu0
        %v6355 = vadd.f32 0.0, %v6354
        %6356 = vmatprep.mubr.f32.mxu0 %v4034
        %6357 = vmatmul.mubr.f32.gmra.mrb[0].mxu0 %v4033
        %v6358 = vpop.f32.mrb[0].mxu0
        %v6359 = vadd.f32 0.0, %v6358
        %v6360 = vpop.f32.mrb[0].mxu0
        %v6361 = vadd.f32 0.0, %v6360
        %6362 = vmatprep.mubr.f32.mxu0 %v4038
        %6363 = vmatmul.mubr.f32.gmra.mrb[0].mxu0 %v4037
        %v6364 = vpop.f32.mrb[0].mxu0
        %v6365 = vadd.f32 0.0, %v6364
        %v6366 = vpop.f32.mrb[0].mxu0
        %v6367 = vadd.f32 0.0, %v6366
        %6368 = vmatprep.mubr.f32.mxu0 %v4042
        %6369 = vmatmul.mubr.f32.gmra.mrb[0].mxu0 %v4041
        %v6370 = vpop.f32.mrb[0].mxu0
        %v6371 = vadd.f32 0.0, %v6370
        %v6372 = vpop.f32.mrb[0].mxu0
        %v6373 = vadd.f32 0.0, %v6372
        %6374 = vmatprep.mubr.f32.mxu0 %v4046
        %6375 = vmatmul.mubr.f32.gmra.mrb[0].mxu0 %v4045
        %v6376 = vpop.f32.mrb[0].mxu0
        %v6377 = vadd.f32 0.0, %v6376
        %v6378 = vpop.f32.mrb[0].mxu0
        %v6379 = vadd.f32 0.0, %v6378
        %6380 = vmatprep.mubr.f32.mxu0 %v4050
        %6381 = vmatmul.mubr.f32.gmra.mrb[0].mxu0 %v4049
        %v6382 = vpop.f32.mrb[0].mxu0
        %v6383 = vadd.f32 0.0, %v6382
        %v6384 = vpop.f32.mrb[0].mxu0
        %v6385 = vadd.f32 0.0, %v6384
        %6386 = vdwg.mxu0
        %6387 = vmatprep.subr.mxu0 %v5852
        %6388 = vmatpush1.msra.mxu0 %v5851
        %6389 = vmatprep.subr.mxu0 %v5856
        %6390 = vmatpush1.msra.mxu0 %v5855
        %6391 = vmatprep.subr.mxu0 %v5860
        %6392 = vmatpush1.msra.mxu0 %v5859
        %6393 = vmatprep.subr.mxu0 %v5864
        %6394 = vmatpush1.msra.mxu0 %v5863
        %6395 = vmatprep.subr.mxu0 %v5868
        %6396 = vmatpush1.msra.mxu0 %v5867
        %6397 = vmatprep.subr.mxu0 %v5872
        %6398 = vmatpush1.msra.mxu0 %v5871
        %6399 = vmatprep.subr.mxu0 %v5876
        %6400 = vmatpush1.msra.mxu0 %v5875
        %6401 = vmatprep.subr.mxu0 %v5880
        %6402 = vmatpush1.msra.mxu0 %v5879
        %6403 = vmatprep.subr.mxu0 %v5884
        %6404 = vmatpush1.msra.mxu0 %v5883
        %6405 = vmatprep.subr.mxu0 %v5888
        %6406 = vmatpush1.msra.mxu0 %v5887
        %6407 = vmatprep.subr.mxu0 %v5892
        %6408 = vmatpush1.msra.mxu0 %v5891
        %6409 = vmatprep.subr.mxu0 %v5896
        %6410 = vmatpush1.msra.mxu0 %v5895
        %6411 = vmatprep.subr.mxu0 %v5900
        %6412 = vmatpush1.msra.mxu0 %v5899
        %6413 = vmatprep.subr.mxu0 %v5904
        %6414 = vmatpush1.msra.mxu0 %v5903
        %6415 = vmatprep.subr.mxu0 %v5908
        %6416 = vmatpush1.msra.mxu0 %v5907
        %6417 = vmatprep.subr.mxu0 %v5912
        %6418 = vmatpush1.msra.mxu0 %v5911
        %6419 = vmatprep.subr.mxu0 %v5916
        %6420 = vmatpush1.msra.mxu0 %v5915
        %6421 = vmatprep.subr.mxu0 %v5920
        %6422 = vmatpush1.msra.mxu0 %v5919
        %6423 = vmatprep.subr.mxu0 %v5924
        %6424 = vmatpush1.msra.mxu0 %v5923
        %6425 = vmatprep.subr.mxu0 %v5928
        %6426 = vmatpush1.msra.mxu0 %v5927
        %6427 = vmatprep.subr.mxu0 %v5932
        %6428 = vmatpush1.msra.mxu0 %v5931
        %6429 = vmatprep.subr.mxu0 %v5936
        %6430 = vmatpush1.msra.mxu0 %v5935
        %6431 = vmatprep.subr.mxu0 0.0
        %6432 = vmatpush1.msra.mxu0 0.0
        %6433 = vmatprep.subr.mxu0 0.0
        %6434 = vmatpush1.msra.mxu0 0.0
        %6435 = vmatprep.subr.mxu0 0.0
        %6436 = vmatpush1.msra.mxu0 0.0
        %6437 = vmatprep.subr.mxu0 0.0
        %6438 = vmatpush1.msra.mxu0 0.0
        %6439 = vmatprep.subr.mxu0 0.0
        %6440 = vmatpush1.msra.mxu0 0.0
        %6441 = vmatprep.subr.mxu0 0.0
        %6442 = vmatpush1.msra.mxu0 0.0
        %6443 = vmatprep.subr.mxu0 0.0
        %6444 = vmatpush1.msra.mxu0 0.0
        %6445 = vmatprep.subr.mxu0 0.0
        %6446 = vmatpush1.msra.mxu0 0.0
        %6447 = vmatprep.subr.mxu0 0.0
        %6448 = vmatpush1.msra.mxu0 0.0
        %6449 = vmatprep.subr.mxu0 0.0
        %6450 = vmatpush1.msra.mxu0 0.0
        %6451 = vmatprep.mubr.f32.mxu0 %v4490
        %6452 = vmatmul.mubr.f32.gmra.mrb[0].mxu0 %v3999
        %v6453 = vpop.f32.mrb[0].mxu0
        %v6454 = vadd.f32 %v6305, %v6453
        %v6455 = vpop.f32.mrb[0].mxu0
        %v6456 = vadd.f32 %v6307, %v6455
        %6457 = vmatprep.mubr.f32.mxu0 %v4493
        %6458 = vmatmul.mubr.f32.gmra.mrb[0].mxu0 %v4003
        %v6459 = vpop.f32.mrb[0].mxu0
        %v6460 = vadd.f32 %v6311, %v6459
        %v6461 = vpop.f32.mrb[0].mxu0
        %v6462 = vadd.f32 %v6313, %v6461
        %6463 = vmatprep.mubr.f32.mxu0 %v4496
        %6464 = vmatmul.mubr.f32.gmra.mrb[0].mxu0 %v4007
        %v6465 = vpop.f32.mrb[0].mxu0
        %v6466 = vadd.f32 %v6317, %v6465
        %v6467 = vpop.f32.mrb[0].mxu0
        %v6468 = vadd.f32 %v6319, %v6467
        %6469 = vmatprep.mubr.f32.mxu0 %v4499
        %6470 = vmatmul.mubr.f32.gmra.mrb[0].mxu0 %v4011
        %v6471 = vpop.f32.mrb[0].mxu0
        %v6472 = vadd.f32 %v6323, %v6471
        %v6473 = vpop.f32.mrb[0].mxu0
        %v6474 = vadd.f32 %v6325, %v6473
        %6475 = vmatprep.mubr.f32.mxu0 %v4502
        %6476 = vmatmul.mubr.f32.gmra.mrb[0].mxu0 %v4015
        %v6477 = vpop.f32.mrb[0].mxu0
        %v6478 = vadd.f32 %v6329, %v6477
        %v6479 = vpop.f32.mrb[0].mxu0
        %v6480 = vadd.f32 %v6331, %v6479
        %6481 = vmatprep.mubr.f32.mxu0 %v4505
        %6482 = vmatmul.mubr.f32.gmra.mrb[0].mxu0 %v4019
        %v6483 = vpop.f32.mrb[0].mxu0
        %v6484 = vadd.f32 %v6335, %v6483
        %v6485 = vpop.f32.mrb[0].mxu0
        %v6486 = vadd.f32 %v6337, %v6485
        %6487 = vmatprep.mubr.f32.mxu0 %v4508
        %6488 = vmatmul.mubr.f32.gmra.mrb[0].mxu0 %v4023
        %v6489 = vpop.f32.mrb[0].mxu0
        %v6490 = vadd.f32 %v6341, %v6489
        %v6491 = vpop.f32.mrb[0].mxu0
        %v6492 = vadd.f32 %v6343, %v6491
        %6493 = vmatprep.mubr.f32.mxu0 %v4511
        %6494 = vmatmul.mubr.f32.gmra.mrb[0].mxu0 %v4027
        %v6495 = vpop.f32.mrb[0].mxu0
        %v6496 = vadd.f32 %v6347, %v6495
        %v6497 = vpop.f32.mrb[0].mxu0
        %v6498 = vadd.f32 %v6349, %v6497
        %6499 = vmatprep.mubr.f32.mxu0 %v4514
        %6500 = vmatmul.mubr.f32.gmra.mrb[0].mxu0 %v4031
        %v6501 = vpop.f32.mrb[0].mxu0
        %v6502 = vadd.f32 %v6353, %v6501
        %v6503 = vpop.f32.mrb[0].mxu0
        %v6504 = vadd.f32 %v6355, %v6503
        %6505 = vmatprep.mubr.f32.mxu0 %v4517
        %6506 = vmatmul.mubr.f32.gmra.mrb[0].mxu0 %v4035
        %v6507 = vpop.f32.mrb[0].mxu0
        %v6508 = vadd.f32 %v6359, %v6507
        %v6509 = vpop.f32.mrb[0].mxu0
        %v6510 = vadd.f32 %v6361, %v6509
        %6511 = vmatprep.mubr.f32.mxu0 %v4520
        %6512 = vmatmul.mubr.f32.gmra.mrb[0].mxu0 %v4039
        %v6513 = vpop.f32.mrb[0].mxu0
        %v6514 = vadd.f32 %v6365, %v6513
        %v6515 = vpop.f32.mrb[0].mxu0
        %v6516 = vadd.f32 %v6367, %v6515
        %6517 = vmatprep.mubr.f32.mxu0 %v4523
        %6518 = vmatmul.mubr.f32.gmra.mrb[0].mxu0 %v4043
        %v6519 = vpop.f32.mrb[0].mxu0
        %v6520 = vadd.f32 %v6371, %v6519
        %v6521 = vpop.f32.mrb[0].mxu0
        %v6522 = vadd.f32 %v6373, %v6521
        %6523 = vmatprep.mubr.f32.mxu0 %v4526
        %6524 = vmatmul.mubr.f32.gmra.mrb[0].mxu0 %v4047
        %v6525 = vpop.f32.mrb[0].mxu0
        %v6526 = vadd.f32 %v6377, %v6525
        %v6527 = vpop.f32.mrb[0].mxu0
        %v6528 = vadd.f32 %v6379, %v6527
        %6529 = vmatprep.mubr.f32.mxu0 %v5938
        %6530 = vmatmul.mubr.f32.gmra.mrb[0].mxu0 %v4051
        %v6531 = vpop.f32.mrb[0].mxu0
        %v6532 = vadd.f32 %v6383, %v6531
        %v6533 = vpop.f32.mrb[0].mxu0
        %v6534 = vadd.f32 %v6385, %v6533
        %6535 = vdwg.mxu0
        %v6536 = vadd.f32 %v5340, %v6156
        %v6537 = vadd.f32 %v5342, %v6158
        %v6538 = vadd.f32 %v5638, %v6454
        %v6539 = vadd.f32 %v5640, %v6456
        %v6540 = vadd.f32 %v5346, %v6162
        %v6541 = vadd.f32 %v5348, %v6164
        %v6542 = vadd.f32 %v5644, %v6460
        %v6543 = vadd.f32 %v5646, %v6462
        %v6544 = vadd.f32 %v5352, %v6168
        %v6545 = vadd.f32 %v5354, %v6170
        %v6546 = vadd.f32 %v5650, %v6466
        %v6547 = vadd.f32 %v5652, %v6468
        %v6548 = vadd.f32 %v5358, %v6174
        %v6549 = vadd.f32 %v5360, %v6176
        %v6550 = vadd.f32 %v5656, %v6472
        %v6551 = vadd.f32 %v5658, %v6474
        %v6552 = vadd.f32 %v5364, %v6180
        %v6553 = vadd.f32 %v5366, %v6182
        %v6554 = vadd.f32 %v5662, %v6478
        %v6555 = vadd.f32 %v5664, %v6480
        %v6556 = vadd.f32 %v5370, %v6186
        %v6557 = vadd.f32 %v5372, %v6188
        %v6558 = vadd.f32 %v5668, %v6484
        %v6559 = vadd.f32 %v5670, %v6486
        %v6560 = vadd.f32 %v5376, %v6192
        %v6561 = vadd.f32 %v5378, %v6194
        %v6562 = vadd.f32 %v5674, %v6490
        %v6563 = vadd.f32 %v5676, %v6492
        %v6564 = vadd.f32 %v5382, %v6198
        %v6565 = vadd.f32 %v5384, %v6200
        %v6566 = vadd.f32 %v5680, %v6496
        %v6567 = vadd.f32 %v5682, %v6498
        %v6568 = vadd.f32 %v5388, %v6204
        %v6569 = vadd.f32 %v5390, %v6206
        %v6570 = vadd.f32 %v5686, %v6502
        %v6571 = vadd.f32 %v5688, %v6504
        %v6572 = vadd.f32 %v5394, %v6210
        %v6573 = vadd.f32 %v5396, %v6212
        %v6574 = vadd.f32 %v5692, %v6508
        %v6575 = vadd.f32 %v5694, %v6510
        %v6576 = vadd.f32 %v5400, %v6216
        %v6577 = vadd.f32 %v5402, %v6218
        %v6578 = vadd.f32 %v5698, %v6514
        %v6579 = vadd.f32 %v5700, %v6516
        %v6580 = vadd.f32 %v5406, %v6222
        %v6581 = vadd.f32 %v5408, %v6224
        %v6582 = vadd.f32 %v5704, %v6520
        %v6583 = vadd.f32 %v5706, %v6522
        %v6584 = vadd.f32 %v5412, %v6228
        %v6585 = vadd.f32 %v5414, %v6230
        %v6586 = vadd.f32 %v5710, %v6526
        %v6587 = vadd.f32 %v5712, %v6528
        %v6588 = vadd.f32 %v5418, %v6234
        %v6589 = vadd.f32 %v5420, %v6236
        %v6590 = vadd.f32 %v5716, %v6532
        %v6591 = vadd.f32 %v5718, %v6534
        %s6592 = scalar_lea.vmem [#allocation8], 5184
        %v6593 = vld [vmem:[%s6592] sm:$0xff]
        %v6594 = vld [vmem:[%s6592 + $0x8] sm:$0xff]
        %v6595 = vld [vmem:[%s6592 + $0x10] sm:$0xff]
        %v6596 = vld [vmem:[%s6592 + $0x18] sm:$0xff]
        %v6597 = vld [vmem:[%s6592 + $0x20] sm:$0xff]
        %v6598 = vld [vmem:[%s6592 + $0x28] sm:$0xff]
        %v6599 = vld [vmem:[%s6592 + $0x30] sm:$0xff]
        %v6600 = vld [vmem:[%s6592 + $0x38] sm:$0xff]
        %v6601 = vld [vmem:[%s6592 + $0x40] sm:$0xff]
        %v6602 = vld [vmem:[%s6592 + $0x48] sm:$0xff]
        %v6603 = vld [vmem:[%s6592 + $0x50] sm:$0xff]
        %v6604 = vld [vmem:[%s6592 + $0x58] sm:$0xff]
        %v6605 = vld [vmem:[%s6592 + $0x60] sm:$0xff]
        %v6606 = vld [vmem:[%s6592 + $0x68] sm:$0xff]
        %v6607 = vld [vmem:[%s6592 + $0x70] sm:$0xff]
        %v6608 = vld [vmem:[%s6592 + $0x78] sm:$0xff]
        %v6609 = vld [vmem:[%s6592 + $0x80] sm:$0xff]
        %v6610 = vld [vmem:[%s6592 + $0x88] sm:$0xff]
        %v6611 = vld [vmem:[%s6592 + $0x90] sm:$0xff]
        %v6612 = vld [vmem:[%s6592 + $0x98] sm:$0xff]
        %v6613 = vld [vmem:[%s6592 + $0xa0] sm:$0xff]
        %v6614 = vld [vmem:[%s6592 + $0xa8] sm:$0xff]
        %v6615 = vld [vmem:[%s6592 + $0xb0] sm:$0xff]
        %v6616 = vld [vmem:[%s6592 + $0xb8] sm:$0xff]
        %v6617 = vld [vmem:[%s6592 + $0xc0] sm:$0xff]
        %v6618 = vld [vmem:[%s6592 + $0xc8] sm:$0xff]
        %v6619 = vld [vmem:[%s6592 + $0xd0] sm:$0xff]
        %v6620 = vld [vmem:[%s6592 + $0xd8] sm:$0xff]
        %v6621 = vld [vmem:[%s6592 + $0xe0] sm:$0xff]
        %v6622 = vld [vmem:[%s6592 + $0xe8] sm:$0xff]
        %v6623 = vld [vmem:[%s6592 + $0xf0] sm:$0xff]
        %v6624 = vld [vmem:[%s6592 + $0xf8] sm:$0xff]
        %v6625 = vld [vmem:[%s6592 + $0x100] sm:$0xff]
        %v6626 = vld [vmem:[%s6592 + $0x108] sm:$0xff]
        %v6627 = vld [vmem:[%s6592 + $0x110] sm:$0xff]
        %v6628 = vld [vmem:[%s6592 + $0x118] sm:$0xff]
        %v6629 = vld [vmem:[%s6592 + $0x120] sm:$0xff]
        %v6630 = vld [vmem:[%s6592 + $0x128] sm:$0xff]
        %v6631 = vld [vmem:[%s6592 + $0x130] sm:$0xff]
        %v6632 = vld [vmem:[%s6592 + $0x138] sm:$0xff]
        %v6633 = vld [vmem:[%s6592 + $0x140] sm:$0xff]
        %v6634 = vld [vmem:[%s6592 + $0x148] sm:$0xff]
        %v6635 = vld [vmem:[%s6592 + $0x150] sm:$0xff]
        %v6636 = vld [vmem:[%s6592 + $0x158] sm:$0xff]
        %v6637 = vld [vmem:[%s6592 + $0x160] sm:$0xff]
        %v6638 = vld [vmem:[%s6592 + $0x168] sm:$0xff]
        %v6639 = vld [vmem:[%s6592 + $0x170] sm:$0xff]
        %v6640 = vld [vmem:[%s6592 + $0x178] sm:$0xff]
        %v6641 = vld [vmem:[%s6592 + $0x180] sm:$0xff]
        %v6642 = vld [vmem:[%s6592 + $0x188] sm:$0xff]
        %v6643 = vld [vmem:[%s6592 + $0x190] sm:$0xff]
        %v6644 = vld [vmem:[%s6592 + $0x198] sm:$0xff]
        %v6645 = vld [vmem:[%s6592 + $0x1a0] sm:$0xff]
        %v6646 = vld [vmem:[%s6592 + $0x1a8] sm:$0xff]
        %v6647 = vld [vmem:[%s6592 + $0x1b0] sm:$0xff]
        %v6648 = vld [vmem:[%s6592 + $0x1b8] sm:$0xff]
        %v6649 = vld [vmem:[%s6592 + $0x1c0] sm:$0xff]
        %v6650 = vld [vmem:[%s6592 + $0x1c8] sm:$0xff]
        %v6651 = vld [vmem:[%s6592 + $0x1d0] sm:$0xff]
        %v6652 = vld [vmem:[%s6592 + $0x1d8] sm:$0xff]
        %v6653 = vld [vmem:[%s6592 + $0x1e0] sm:$0xff]
        %v6654 = vld [vmem:[%s6592 + $0x1e8] sm:$0xff]
        %v6655 = vld [vmem:[%s6592 + $0x1f0] sm:$0xff]
        %v6656 = vld [vmem:[%s6592 + $0x1f8] sm:$0xff]
        %v6657 = vld [vmem:[%s6592 + $0x200] sm:$0xff]
        %v6658 = vld [vmem:[%s6592 + $0x208] sm:$0xff]
        %v6659 = vld [vmem:[%s6592 + $0x210] sm:$0xff]
        %v6660 = vld [vmem:[%s6592 + $0x218] sm:$0xff]
        %v6661 = vld [vmem:[%s6592 + $0x220] sm:$0xff]
        %v6662 = vld [vmem:[%s6592 + $0x228] sm:$0xff]
        %v6663 = vld [vmem:[%s6592 + $0x230] sm:$0xff]
        %v6664 = vld [vmem:[%s6592 + $0x238] sm:$0xff]
        %v6665 = vld [vmem:[%s6592 + $0x240] sm:$0xff]
        %v6666 = vld [vmem:[%s6592 + $0x248] sm:$0xff]
        %v6667 = vld [vmem:[%s6592 + $0x250] sm:$0xff]
        %v6668 = vld [vmem:[%s6592 + $0x258] sm:$0xff]
        %v6669 = vld [vmem:[%s6592 + $0x260] sm:$0xff]
        %v6670 = vld [vmem:[%s6592 + $0x268] sm:$0xff]
        %v6671 = vld [vmem:[%s6592 + $0x270] sm:$0xff]
        %v6672 = vld [vmem:[%s6592 + $0x278] sm:$0xff]
        %v6673 = vld [vmem:[%s6592 + $0x280] sm:$0xff]
        %v6674 = vld [vmem:[%s6592 + $0x288] sm:$0xff]
        %v6675 = vld [vmem:[%s6592 + $0x290] sm:$0xff]
        %v6676 = vld [vmem:[%s6592 + $0x298] sm:$0xff]
        %v6677 = vld [vmem:[%s6592 + $0x2a0] sm:$0xff]
        %v6678 = vld [vmem:[%s6592 + $0x2a8] sm:$0xff]
        %v6679 = vld [vmem:[%s6592 + $0x2b0] sm:$0xff]
        %v6680 = vld [vmem:[%s6592 + $0x2b8] sm:$0xff]
        %v6681 = vld [vmem:[%s6592 + $0x2c0] sm:$0xff]
        %v6682 = vld [vmem:[%s6592 + $0x2c8] sm:$0xff]
        %v6683 = vld [vmem:[%s6592 + $0x2d0] sm:$0xff]
        %v6684 = vld [vmem:[%s6592 + $0x2d8] sm:$0xff]
        %v6685 = vld [vmem:[%s6592 + $0x2e0] sm:$0xff]
        %v6686 = vld [vmem:[%s6592 + $0x2e8] sm:$0xff]
        %v6687 = vld [vmem:[%s6592 + $0x2f0] sm:$0xff]
        %v6688 = vld [vmem:[%s6592 + $0x2f8] sm:$0xff]
        %v6689 = vld [vmem:[%s6592 + $0x300] sm:$0xff]
        %v6690 = vld [vmem:[%s6592 + $0x308] sm:$0xff]
        %v6691 = vld [vmem:[%s6592 + $0x310] sm:$0xff]
        %v6692 = vld [vmem:[%s6592 + $0x318] sm:$0xff]
        %v6693 = vld [vmem:[%s6592 + $0x320] sm:$0xff]
        %v6694 = vld [vmem:[%s6592 + $0x328] sm:$0xff]
        %v6695 = vld [vmem:[%s6592 + $0x330] sm:$0xff]
        %v6696 = vld [vmem:[%s6592 + $0x338] sm:$0xff]
        %v6697 = vld [vmem:[%s6592 + $0x340] sm:$0xff]
        %v6698 = vld [vmem:[%s6592 + $0x348] sm:$0xff]
        %v6699 = vld [vmem:[%s6592 + $0x350] sm:$0xff]
        %v6700 = vld [vmem:[%s6592 + $0x358] sm:$0xff]
        %v6701 = vld [vmem:[%s6592 + $0x360] sm:$0xff]
        %v6702 = vld [vmem:[%s6592 + $0x368] sm:$0xff]
        %v6703 = vld [vmem:[%s6592 + $0x370] sm:$0xff]
        %v6704 = vld [vmem:[%s6592 + $0x378] sm:$0xff]
        %v6705 = vld [vmem:[%s6592 + $0x380] sm:$0xff]
        %v6706 = vld [vmem:[%s6592 + $0x388] sm:$0xff]
        %v6707 = vld [vmem:[%s6592 + $0x390] sm:$0xff]
        %v6708 = vld [vmem:[%s6592 + $0x398] sm:$0xff]
        %v6709 = vld [vmem:[%s6592 + $0x3a0] sm:$0xff]
        %v6710 = vld [vmem:[%s6592 + $0x3a8] sm:$0xff]
        %v6711 = vld [vmem:[%s6592 + $0x3b0] sm:$0xff]
        %v6712 = vld [vmem:[%s6592 + $0x3b8] sm:$0xff]
        %v6713 = vld [vmem:[%s6592 + $0x3c0] sm:$0xff]
        %v6714 = vld [vmem:[%s6592 + $0x3c8] sm:$0xff]
        %v6715 = vld [vmem:[%s6592 + $0x3d0] sm:$0xff]
        %v6716 = vld [vmem:[%s6592 + $0x3d8] sm:$0xff]
        %v6717 = vld [vmem:[%s6592 + $0x3e0] sm:$0xff]
        %v6718 = vld [vmem:[%s6592 + $0x3e8] sm:$0xff]
        %v6719 = vld [vmem:[%s6592 + $0x3f0] sm:$0xff]
        %v6720 = vld [vmem:[%s6592 + $0x3f8] sm:$0xff]
        %v6721 = vld [vmem:[%s6592 + $0x400] sm:$0xff]
        %v6722 = vld [vmem:[%s6592 + $0x408] sm:$0xff]
        %v6723 = vld [vmem:[%s6592 + $0x410] sm:$0xff]
        %v6724 = vld [vmem:[%s6592 + $0x418] sm:$0xff]
        %v6725 = vld [vmem:[%s6592 + $0x420] sm:$0xff]
        %v6726 = vld [vmem:[%s6592 + $0x428] sm:$0xff]
        %v6727 = vld [vmem:[%s6592 + $0x430] sm:$0xff]
        %v6728 = vld [vmem:[%s6592 + $0x438] sm:$0xff]
        %v6729 = vld [vmem:[%s6592 + $0x440] sm:$0xff]
        %v6730 = vld [vmem:[%s6592 + $0x448] sm:$0xff]
        %v6731 = vld [vmem:[%s6592 + $0x450] sm:$0xff]
        %v6732 = vld [vmem:[%s6592 + $0x458] sm:$0xff]
        %v6733 = vld [vmem:[%s6592 + $0x460] sm:$0xff]
        %v6734 = vld [vmem:[%s6592 + $0x468] sm:$0xff]
        %v6735 = vld [vmem:[%s6592 + $0x470] sm:$0xff]
        %v6736 = vld [vmem:[%s6592 + $0x478] sm:$0xff]
        %v6737 = vld [vmem:[%s6592 + $0x480] sm:$0xff]
        %v6738 = vld [vmem:[%s6592 + $0x488] sm:$0xff]
        %v6739 = vld [vmem:[%s6592 + $0x490] sm:$0xff]
        %v6740 = vld [vmem:[%s6592 + $0x498] sm:$0xff]
        %v6741 = vld [vmem:[%s6592 + $0x4a0] sm:$0xff]
        %v6742 = vld [vmem:[%s6592 + $0x4a8] sm:$0xff]
        %v6743 = vld [vmem:[%s6592 + $0x4b0] sm:$0xff]
        %v6744 = vld [vmem:[%s6592 + $0x4b8] sm:$0xff]
        %v6745 = vld [vmem:[%s6592 + $0x4c0] sm:$0xff]
        %v6746 = vld [vmem:[%s6592 + $0x4c8] sm:$0xff]
        %v6747 = vld [vmem:[%s6592 + $0x4d0] sm:$0xff]
        %v6748 = vld [vmem:[%s6592 + $0x4d8] sm:$0xff]
        %v6749 = vld [vmem:[%s6592 + $0x4e0] sm:$0xff]
        %v6750 = vld [vmem:[%s6592 + $0x4e8] sm:$0xff]
        %v6751 = vld [vmem:[%s6592 + $0x4f0] sm:$0xff]
        %v6752 = vld [vmem:[%s6592 + $0x4f8] sm:$0xff]
        %v6753 = vld [vmem:[%s6592 + $0x500] sm:$0xff]
        %v6754 = vld [vmem:[%s6592 + $0x508] sm:$0xff]
        %v6755 = vld [vmem:[%s6592 + $0x510] sm:$0xff]
        %v6756 = vld [vmem:[%s6592 + $0x518] sm:$0xff]
        %v6757 = vld [vmem:[%s6592 + $0x520] sm:$0xff]
        %v6758 = vld [vmem:[%s6592 + $0x528] sm:$0xff]
        %v6759 = vld [vmem:[%s6592 + $0x530] sm:$0xff]
        %v6760 = vld [vmem:[%s6592 + $0x538] sm:$0xff]
        %v6761 = vld [vmem:[%s6592 + $0x540] sm:$0xff]
        %v6762 = vld [vmem:[%s6592 + $0x548] sm:$0xff]
        %v6763 = vld [vmem:[%s6592 + $0x550] sm:$0xff]
        %v6764 = vld [vmem:[%s6592 + $0x558] sm:$0xff]
        %v6765 = vld [vmem:[%s6592 + $0x560] sm:$0xff]
        %v6766 = vld [vmem:[%s6592 + $0x568] sm:$0xff]
        %v6767 = vld [vmem:[%s6592 + $0x570] sm:$0xff]
        %v6768 = vld [vmem:[%s6592 + $0x578] sm:$0xff]
        %v6769 = vld [vmem:[%s6592 + $0x580] sm:$0xff]
        %v6770 = vld [vmem:[%s6592 + $0x588] sm:$0xff]
        %v6771 = vld [vmem:[%s6592 + $0x590] sm:$0xff]
        %v6772 = vld [vmem:[%s6592 + $0x598] sm:$0xff]
        %v6773 = vld [vmem:[%s6592 + $0x5a0] sm:$0xff]
        %v6774 = vld [vmem:[%s6592 + $0x5a8] sm:$0xff]
        %v6775 = vld [vmem:[%s6592 + $0x5b0] sm:$0xff]
        %v6776 = vld [vmem:[%s6592 + $0x5b8] sm:$0xff]
        %v6777 = vld [vmem:[%s6592 + $0x5c0] sm:$0xff]
        %v6778 = vld [vmem:[%s6592 + $0x5c8] sm:$0xff]
        %v6779 = vld [vmem:[%s6592 + $0x5d0] sm:$0xff]
        %v6780 = vld [vmem:[%s6592 + $0x5d8] sm:$0xff]
        %v6781 = vld [vmem:[%s6592 + $0x5e0] sm:$0xff]
        %v6782 = vld [vmem:[%s6592 + $0x5e8] sm:$0xff]
        %v6783 = vld [vmem:[%s6592 + $0x5f0] sm:$0xff]
        %v6784 = vld [vmem:[%s6592 + $0x5f8] sm:$0xff]
        %v6785 = vld [vmem:[%s6592 + $0x600] sm:$0xff]
        %v6786 = vld [vmem:[%s6592 + $0x608] sm:$0xff]
        %v6787 = vld [vmem:[%s6592 + $0x610] sm:$0xff]
        %v6788 = vld [vmem:[%s6592 + $0x618] sm:$0xff]
        %v6789 = vld [vmem:[%s6592 + $0x620] sm:$0xff]
        %v6790 = vld [vmem:[%s6592 + $0x628] sm:$0xff]
        %v6791 = vld [vmem:[%s6592 + $0x630] sm:$0xff]
        %v6792 = vld [vmem:[%s6592 + $0x638] sm:$0xff]
        %v6793 = vld [vmem:[%s6592 + $0x640] sm:$0xff]
        %v6794 = vld [vmem:[%s6592 + $0x648] sm:$0xff]
        %v6795 = vld [vmem:[%s6592 + $0x650] sm:$0xff]
        %v6796 = vld [vmem:[%s6592 + $0x658] sm:$0xff]
        %v6797 = vld [vmem:[%s6592 + $0x660] sm:$0xff]
        %v6798 = vld [vmem:[%s6592 + $0x668] sm:$0xff]
        %v6799 = vld [vmem:[%s6592 + $0x670] sm:$0xff]
        %v6800 = vld [vmem:[%s6592 + $0x678] sm:$0xff]
        %v6801 = vld [vmem:[%s6592 + $0x680] sm:$0xff]
        %v6802 = vld [vmem:[%s6592 + $0x688] sm:$0xff]
        %v6803 = vld [vmem:[%s6592 + $0x690] sm:$0xff]
        %v6804 = vld [vmem:[%s6592 + $0x698] sm:$0xff]
        %v6805 = vld [vmem:[%s6592 + $0x6a0] sm:$0xff]
        %v6806 = vld [vmem:[%s6592 + $0x6a8] sm:$0xff]
        %v6807 = vld [vmem:[%s6592 + $0x6b0] sm:$0xff]
        %v6808 = vld [vmem:[%s6592 + $0x6b8] sm:$0xff]
        %6809 = vmatprep.subr.mxu0 %v6594
        %6810 = vmatpush1.msra.mxu0 %v6593
        %6811 = vmatprep.subr.mxu0 %v6598
        %6812 = vmatpush1.msra.mxu0 %v6597
        %6813 = vmatprep.subr.mxu0 %v6602
        %6814 = vmatpush1.msra.mxu0 %v6601
        %6815 = vmatprep.subr.mxu0 %v6606
        %6816 = vmatpush1.msra.mxu0 %v6605
        %6817 = vmatprep.subr.mxu0 %v6610
        %6818 = vmatpush1.msra.mxu0 %v6609
        %6819 = vmatprep.subr.mxu0 %v6614
        %6820 = vmatpush1.msra.mxu0 %v6613
        %6821 = vmatprep.subr.mxu0 %v6618
        %6822 = vmatpush1.msra.mxu0 %v6617
        %6823 = vmatprep.subr.mxu0 %v6622
        %6824 = vmatpush1.msra.mxu0 %v6621
        %6825 = vmatprep.subr.mxu0 %v6626
        %6826 = vmatpush1.msra.mxu0 %v6625
        %6827 = vmatprep.subr.mxu0 %v6630
        %6828 = vmatpush1.msra.mxu0 %v6629
        %6829 = vmatprep.subr.mxu0 %v6634
        %6830 = vmatpush1.msra.mxu0 %v6633
        %6831 = vmatprep.subr.mxu0 %v6638
        %6832 = vmatpush1.msra.mxu0 %v6637
        %6833 = vmatprep.subr.mxu0 %v6642
        %6834 = vmatpush1.msra.mxu0 %v6641
        %6835 = vmatprep.subr.mxu0 %v6646
        %6836 = vmatpush1.msra.mxu0 %v6645
        %6837 = vmatprep.subr.mxu0 %v6650
        %6838 = vmatpush1.msra.mxu0 %v6649
        %6839 = vmatprep.subr.mxu0 %v6654
        %6840 = vmatpush1.msra.mxu0 %v6653
        %6841 = vmatprep.subr.mxu0 %v6658
        %6842 = vmatpush1.msra.mxu0 %v6657
        %6843 = vmatprep.subr.mxu0 %v6662
        %6844 = vmatpush1.msra.mxu0 %v6661
        %6845 = vmatprep.subr.mxu0 %v6666
        %6846 = vmatpush1.msra.mxu0 %v6665
        %6847 = vmatprep.subr.mxu0 %v6670
        %6848 = vmatpush1.msra.mxu0 %v6669
        %6849 = vmatprep.subr.mxu0 %v6674
        %6850 = vmatpush1.msra.mxu0 %v6673
        %6851 = vmatprep.subr.mxu0 %v6678
        %6852 = vmatpush1.msra.mxu0 %v6677
        %6853 = vmatprep.subr.mxu0 %v6682
        %6854 = vmatpush1.msra.mxu0 %v6681
        %6855 = vmatprep.subr.mxu0 %v6686
        %6856 = vmatpush1.msra.mxu0 %v6685
        %6857 = vmatprep.subr.mxu0 %v6690
        %6858 = vmatpush1.msra.mxu0 %v6689
        %6859 = vmatprep.subr.mxu0 %v6694
        %6860 = vmatpush1.msra.mxu0 %v6693
        %6861 = vmatprep.subr.mxu0 %v6698
        %6862 = vmatpush1.msra.mxu0 %v6697
        %6863 = vmatprep.subr.mxu0 %v6702
        %6864 = vmatpush1.msra.mxu0 %v6701
        %6865 = vmatprep.subr.mxu0 %v6706
        %6866 = vmatpush1.msra.mxu0 %v6705
        %6867 = vmatprep.subr.mxu0 %v6710
        %6868 = vmatpush1.msra.mxu0 %v6709
        %6869 = vmatprep.subr.mxu0 %v6714
        %6870 = vmatpush1.msra.mxu0 %v6713
        %6871 = vmatprep.subr.mxu0 %v6718
        %6872 = vmatpush1.msra.mxu0 %v6717
        %6873 = vmatprep.mubr.f32.mxu0 %v4002
        %6874 = vmatmul.mubr.f32.gmra.mrb[0].mxu0 %v4001
        %v6875 = vpop.f32.mrb[0].mxu0
        %v6876 = vadd.f32 0.0, %v6875
        %v6877 = vpop.f32.mrb[0].mxu0
        %v6878 = vadd.f32 0.0, %v6877
        %6879 = vmatprep.mubr.f32.mxu0 %v4006
        %6880 = vmatmul.mubr.f32.gmra.mrb[0].mxu0 %v4005
        %v6881 = vpop.f32.mrb[0].mxu0
        %v6882 = vadd.f32 0.0, %v6881
        %v6883 = vpop.f32.mrb[0].mxu0
        %v6884 = vadd.f32 0.0, %v6883
        %6885 = vmatprep.mubr.f32.mxu0 %v4010
        %6886 = vmatmul.mubr.f32.gmra.mrb[0].mxu0 %v4009
        %v6887 = vpop.f32.mrb[0].mxu0
        %v6888 = vadd.f32 0.0, %v6887
        %v6889 = vpop.f32.mrb[0].mxu0
        %v6890 = vadd.f32 0.0, %v6889
        %6891 = vmatprep.mubr.f32.mxu0 %v4014
        %6892 = vmatmul.mubr.f32.gmra.mrb[0].mxu0 %v4013
        %v6893 = vpop.f32.mrb[0].mxu0
        %v6894 = vadd.f32 0.0, %v6893
        %v6895 = vpop.f32.mrb[0].mxu0
        %v6896 = vadd.f32 0.0, %v6895
        %6897 = vmatprep.mubr.f32.mxu0 %v4018
        %6898 = vmatmul.mubr.f32.gmra.mrb[0].mxu0 %v4017
        %v6899 = vpop.f32.mrb[0].mxu0
        %v6900 = vadd.f32 0.0, %v6899
        %v6901 = vpop.f32.mrb[0].mxu0
        %v6902 = vadd.f32 0.0, %v6901
        %6903 = vmatprep.mubr.f32.mxu0 %v4022
        %6904 = vmatmul.mubr.f32.gmra.mrb[0].mxu0 %v4021
        %v6905 = vpop.f32.mrb[0].mxu0
        %v6906 = vadd.f32 0.0, %v6905
        %v6907 = vpop.f32.mrb[0].mxu0
        %v6908 = vadd.f32 0.0, %v6907
        %6909 = vmatprep.mubr.f32.mxu0 %v4026
        %6910 = vmatmul.mubr.f32.gmra.mrb[0].mxu0 %v4025
        %v6911 = vpop.f32.mrb[0].mxu0
        %v6912 = vadd.f32 0.0, %v6911
        %v6913 = vpop.f32.mrb[0].mxu0
        %v6914 = vadd.f32 0.0, %v6913
        %6915 = vmatprep.mubr.f32.mxu0 %v4030
        %6916 = vmatmul.mubr.f32.gmra.mrb[0].mxu0 %v4029
        %v6917 = vpop.f32.mrb[0].mxu0
        %v6918 = vadd.f32 0.0, %v6917
        %v6919 = vpop.f32.mrb[0].mxu0
        %v6920 = vadd.f32 0.0, %v6919
        %6921 = vmatprep.mubr.f32.mxu0 %v4034
        %6922 = vmatmul.mubr.f32.gmra.mrb[0].mxu0 %v4033
        %v6923 = vpop.f32.mrb[0].mxu0
        %v6924 = vadd.f32 0.0, %v6923
        %v6925 = vpop.f32.mrb[0].mxu0
        %v6926 = vadd.f32 0.0, %v6925
        %6927 = vmatprep.mubr.f32.mxu0 %v4038
        %6928 = vmatmul.mubr.f32.gmra.mrb[0].mxu0 %v4037
        %v6929 = vpop.f32.mrb[0].mxu0
        %v6930 = vadd.f32 0.0, %v6929
        %v6931 = vpop.f32.mrb[0].mxu0
        %v6932 = vadd.f32 0.0, %v6931
        %6933 = vmatprep.mubr.f32.mxu0 %v4042
        %6934 = vmatmul.mubr.f32.gmra.mrb[0].mxu0 %v4041
        %v6935 = vpop.f32.mrb[0].mxu0
        %v6936 = vadd.f32 0.0, %v6935
        %v6937 = vpop.f32.mrb[0].mxu0
        %v6938 = vadd.f32 0.0, %v6937
        %6939 = vmatprep.mubr.f32.mxu0 %v4046
        %6940 = vmatmul.mubr.f32.gmra.mrb[0].mxu0 %v4045
        %v6941 = vpop.f32.mrb[0].mxu0
        %v6942 = vadd.f32 0.0, %v6941
        %v6943 = vpop.f32.mrb[0].mxu0
        %v6944 = vadd.f32 0.0, %v6943
        %6945 = vmatprep.mubr.f32.mxu0 %v4050
        %6946 = vmatmul.mubr.f32.gmra.mrb[0].mxu0 %v4049
        %v6947 = vpop.f32.mrb[0].mxu0
        %v6948 = vadd.f32 0.0, %v6947
        %v6949 = vpop.f32.mrb[0].mxu0
        %v6950 = vadd.f32 0.0, %v6949
        %6951 = vmatprep.mubr.f32.mxu0 0.0
        %6952 = vmatmul.mubr.f32.gmra.mrb[0].mxu0 0.0
        %v6953 = vpop.f32.mrb[0].mxu0
        %v6954 = vadd.f32 0.0, %v6953
        %v6955 = vpop.f32.mrb[0].mxu0
        %v6956 = vadd.f32 0.0, %v6955
        %6957 = vdwg.mxu0
        %6958 = vmatprep.subr.mxu0 %v6722
        %6959 = vmatpush1.msra.mxu0 %v6721
        %6960 = vmatprep.subr.mxu0 %v6726
        %6961 = vmatpush1.msra.mxu0 %v6725
        %6962 = vmatprep.subr.mxu0 %v6730
        %6963 = vmatpush1.msra.mxu0 %v6729
        %6964 = vmatprep.subr.mxu0 %v6734
        %6965 = vmatpush1.msra.mxu0 %v6733
        %6966 = vmatprep.subr.mxu0 %v6738
        %6967 = vmatpush1.msra.mxu0 %v6737
        %6968 = vmatprep.subr.mxu0 %v6742
        %6969 = vmatpush1.msra.mxu0 %v6741
        %6970 = vmatprep.subr.mxu0 %v6746
        %6971 = vmatpush1.msra.mxu0 %v6745
        %6972 = vmatprep.subr.mxu0 %v6750
        %6973 = vmatpush1.msra.mxu0 %v6749
        %6974 = vmatprep.subr.mxu0 %v6754
        %6975 = vmatpush1.msra.mxu0 %v6753
        %6976 = vmatprep.subr.mxu0 %v6758
        %6977 = vmatpush1.msra.mxu0 %v6757
        %6978 = vmatprep.subr.mxu0 %v6762
        %6979 = vmatpush1.msra.mxu0 %v6761
        %6980 = vmatprep.subr.mxu0 %v6766
        %6981 = vmatpush1.msra.mxu0 %v6765
        %6982 = vmatprep.subr.mxu0 %v6770
        %6983 = vmatpush1.msra.mxu0 %v6769
        %6984 = vmatprep.subr.mxu0 %v6774
        %6985 = vmatpush1.msra.mxu0 %v6773
        %6986 = vmatprep.subr.mxu0 %v6778
        %6987 = vmatpush1.msra.mxu0 %v6777
        %6988 = vmatprep.subr.mxu0 %v6782
        %6989 = vmatpush1.msra.mxu0 %v6781
        %6990 = vmatprep.subr.mxu0 %v6786
        %6991 = vmatpush1.msra.mxu0 %v6785
        %6992 = vmatprep.subr.mxu0 %v6790
        %6993 = vmatpush1.msra.mxu0 %v6789
        %6994 = vmatprep.subr.mxu0 %v6794
        %6995 = vmatpush1.msra.mxu0 %v6793
        %6996 = vmatprep.subr.mxu0 %v6798
        %6997 = vmatpush1.msra.mxu0 %v6797
        %6998 = vmatprep.subr.mxu0 %v6802
        %6999 = vmatpush1.msra.mxu0 %v6801
        %7000 = vmatprep.subr.mxu0 %v6806
        %7001 = vmatpush1.msra.mxu0 %v6805
        %7002 = vmatprep.subr.mxu0 0.0
        %7003 = vmatpush1.msra.mxu0 0.0
        %7004 = vmatprep.subr.mxu0 0.0
        %7005 = vmatpush1.msra.mxu0 0.0
        %7006 = vmatprep.subr.mxu0 0.0
        %7007 = vmatpush1.msra.mxu0 0.0
        %7008 = vmatprep.subr.mxu0 0.0
        %7009 = vmatpush1.msra.mxu0 0.0
        %7010 = vmatprep.subr.mxu0 0.0
        %7011 = vmatpush1.msra.mxu0 0.0
        %7012 = vmatprep.subr.mxu0 0.0
        %7013 = vmatpush1.msra.mxu0 0.0
        %7014 = vmatprep.subr.mxu0 0.0
        %7015 = vmatpush1.msra.mxu0 0.0
        %7016 = vmatprep.subr.mxu0 0.0
        %7017 = vmatpush1.msra.mxu0 0.0
        %7018 = vmatprep.subr.mxu0 0.0
        %7019 = vmatpush1.msra.mxu0 0.0
        %7020 = vmatprep.subr.mxu0 0.0
        %7021 = vmatpush1.msra.mxu0 0.0
        %7022 = vmatprep.mubr.f32.mxu0 %v4493
        %7023 = vmatmul.mubr.f32.gmra.mrb[0].mxu0 %v4003
        %v7024 = vpop.f32.mrb[0].mxu0
        %v7025 = vadd.f32 %v6876, %v7024
        %v7026 = vpop.f32.mrb[0].mxu0
        %v7027 = vadd.f32 %v6878, %v7026
        %7028 = vmatprep.mubr.f32.mxu0 %v4496
        %7029 = vmatmul.mubr.f32.gmra.mrb[0].mxu0 %v4007
        %v7030 = vpop.f32.mrb[0].mxu0
        %v7031 = vadd.f32 %v6882, %v7030
        %v7032 = vpop.f32.mrb[0].mxu0
        %v7033 = vadd.f32 %v6884, %v7032
        %7034 = vmatprep.mubr.f32.mxu0 %v4499
        %7035 = vmatmul.mubr.f32.gmra.mrb[0].mxu0 %v4011
        %v7036 = vpop.f32.mrb[0].mxu0
        %v7037 = vadd.f32 %v6888, %v7036
        %v7038 = vpop.f32.mrb[0].mxu0
        %v7039 = vadd.f32 %v6890, %v7038
        %7040 = vmatprep.mubr.f32.mxu0 %v4502
        %7041 = vmatmul.mubr.f32.gmra.mrb[0].mxu0 %v4015
        %v7042 = vpop.f32.mrb[0].mxu0
        %v7043 = vadd.f32 %v6894, %v7042
        %v7044 = vpop.f32.mrb[0].mxu0
        %v7045 = vadd.f32 %v6896, %v7044
        %7046 = vmatprep.mubr.f32.mxu0 %v4505
        %7047 = vmatmul.mubr.f32.gmra.mrb[0].mxu0 %v4019
        %v7048 = vpop.f32.mrb[0].mxu0
        %v7049 = vadd.f32 %v6900, %v7048
        %v7050 = vpop.f32.mrb[0].mxu0
        %v7051 = vadd.f32 %v6902, %v7050
        %7052 = vmatprep.mubr.f32.mxu0 %v4508
        %7053 = vmatmul.mubr.f32.gmra.mrb[0].mxu0 %v4023
        %v7054 = vpop.f32.mrb[0].mxu0
        %v7055 = vadd.f32 %v6906, %v7054
        %v7056 = vpop.f32.mrb[0].mxu0
        %v7057 = vadd.f32 %v6908, %v7056
        %7058 = vmatprep.mubr.f32.mxu0 %v4511
        %7059 = vmatmul.mubr.f32.gmra.mrb[0].mxu0 %v4027
        %v7060 = vpop.f32.mrb[0].mxu0
        %v7061 = vadd.f32 %v6912, %v7060
        %v7062 = vpop.f32.mrb[0].mxu0
        %v7063 = vadd.f32 %v6914, %v7062
        %7064 = vmatprep.mubr.f32.mxu0 %v4514
        %7065 = vmatmul.mubr.f32.gmra.mrb[0].mxu0 %v4031
        %v7066 = vpop.f32.mrb[0].mxu0
        %v7067 = vadd.f32 %v6918, %v7066
        %v7068 = vpop.f32.mrb[0].mxu0
        %v7069 = vadd.f32 %v6920, %v7068
        %7070 = vmatprep.mubr.f32.mxu0 %v4517
        %7071 = vmatmul.mubr.f32.gmra.mrb[0].mxu0 %v4035
        %v7072 = vpop.f32.mrb[0].mxu0
        %v7073 = vadd.f32 %v6924, %v7072
        %v7074 = vpop.f32.mrb[0].mxu0
        %v7075 = vadd.f32 %v6926, %v7074
        %7076 = vmatprep.mubr.f32.mxu0 %v4520
        %7077 = vmatmul.mubr.f32.gmra.mrb[0].mxu0 %v4039
        %v7078 = vpop.f32.mrb[0].mxu0
        %v7079 = vadd.f32 %v6930, %v7078
        %v7080 = vpop.f32.mrb[0].mxu0
        %v7081 = vadd.f32 %v6932, %v7080
        %7082 = vmatprep.mubr.f32.mxu0 %v4523
        %7083 = vmatmul.mubr.f32.gmra.mrb[0].mxu0 %v4043
        %v7084 = vpop.f32.mrb[0].mxu0
        %v7085 = vadd.f32 %v6936, %v7084
        %v7086 = vpop.f32.mrb[0].mxu0
        %v7087 = vadd.f32 %v6938, %v7086
        %7088 = vmatprep.mubr.f32.mxu0 %v4526
        %7089 = vmatmul.mubr.f32.gmra.mrb[0].mxu0 %v4047
        %v7090 = vpop.f32.mrb[0].mxu0
        %v7091 = vadd.f32 %v6942, %v7090
        %v7092 = vpop.f32.mrb[0].mxu0
        %v7093 = vadd.f32 %v6944, %v7092
        %7094 = vmatprep.mubr.f32.mxu0 %v5938
        %7095 = vmatmul.mubr.f32.gmra.mrb[0].mxu0 %v4051
        %v7096 = vpop.f32.mrb[0].mxu0
        %v7097 = vadd.f32 %v6948, %v7096
        %v7098 = vpop.f32.mrb[0].mxu0
        %v7099 = vadd.f32 %v6950, %v7098
        %7100 = vmatprep.mubr.f32.mxu0 %v4487
        %7101 = vmatmul.mubr.f32.gmra.mrb[0].mxu0 0.0
        %v7102 = vpop.f32.mrb[0].mxu0
        %v7103 = vadd.f32 %v6954, %v7102
        %v7104 = vpop.f32.mrb[0].mxu0
        %v7105 = vadd.f32 %v6956, %v7104
        %7106 = vdwg.mxu0
        %7107 = vmatprep.subr.mxu0 %v6596
        %7108 = vmatpush1.msra.mxu0 %v6595
        %7109 = vmatprep.subr.mxu0 %v6600
        %7110 = vmatpush1.msra.mxu0 %v6599
        %7111 = vmatprep.subr.mxu0 %v6604
        %7112 = vmatpush1.msra.mxu0 %v6603
        %7113 = vmatprep.subr.mxu0 %v6608
        %7114 = vmatpush1.msra.mxu0 %v6607
        %7115 = vmatprep.subr.mxu0 %v6612
        %7116 = vmatpush1.msra.mxu0 %v6611
        %7117 = vmatprep.subr.mxu0 %v6616
        %7118 = vmatpush1.msra.mxu0 %v6615
        %7119 = vmatprep.subr.mxu0 %v6620
        %7120 = vmatpush1.msra.mxu0 %v6619
        %7121 = vmatprep.subr.mxu0 %v6624
        %7122 = vmatpush1.msra.mxu0 %v6623
        %7123 = vmatprep.subr.mxu0 %v6628
        %7124 = vmatpush1.msra.mxu0 %v6627
        %7125 = vmatprep.subr.mxu0 %v6632
        %7126 = vmatpush1.msra.mxu0 %v6631
        %7127 = vmatprep.subr.mxu0 %v6636
        %7128 = vmatpush1.msra.mxu0 %v6635
        %7129 = vmatprep.subr.mxu0 %v6640
        %7130 = vmatpush1.msra.mxu0 %v6639
        %7131 = vmatprep.subr.mxu0 %v6644
        %7132 = vmatpush1.msra.mxu0 %v6643
        %7133 = vmatprep.subr.mxu0 %v6648
        %7134 = vmatpush1.msra.mxu0 %v6647
        %7135 = vmatprep.subr.mxu0 %v6652
        %7136 = vmatpush1.msra.mxu0 %v6651
        %7137 = vmatprep.subr.mxu0 %v6656
        %7138 = vmatpush1.msra.mxu0 %v6655
        %7139 = vmatprep.subr.mxu0 %v6660
        %7140 = vmatpush1.msra.mxu0 %v6659
        %7141 = vmatprep.subr.mxu0 %v6664
        %7142 = vmatpush1.msra.mxu0 %v6663
        %7143 = vmatprep.subr.mxu0 %v6668
        %7144 = vmatpush1.msra.mxu0 %v6667
        %7145 = vmatprep.subr.mxu0 %v6672
        %7146 = vmatpush1.msra.mxu0 %v6671
        %7147 = vmatprep.subr.mxu0 %v6676
        %7148 = vmatpush1.msra.mxu0 %v6675
        %7149 = vmatprep.subr.mxu0 %v6680
        %7150 = vmatpush1.msra.mxu0 %v6679
        %7151 = vmatprep.subr.mxu0 %v6684
        %7152 = vmatpush1.msra.mxu0 %v6683
        %7153 = vmatprep.subr.mxu0 %v6688
        %7154 = vmatpush1.msra.mxu0 %v6687
        %7155 = vmatprep.subr.mxu0 %v6692
        %7156 = vmatpush1.msra.mxu0 %v6691
        %7157 = vmatprep.subr.mxu0 %v6696
        %7158 = vmatpush1.msra.mxu0 %v6695
        %7159 = vmatprep.subr.mxu0 %v6700
        %7160 = vmatpush1.msra.mxu0 %v6699
        %7161 = vmatprep.subr.mxu0 %v6704
        %7162 = vmatpush1.msra.mxu0 %v6703
        %7163 = vmatprep.subr.mxu0 %v6708
        %7164 = vmatpush1.msra.mxu0 %v6707
        %7165 = vmatprep.subr.mxu0 %v6712
        %7166 = vmatpush1.msra.mxu0 %v6711
        %7167 = vmatprep.subr.mxu0 %v6716
        %7168 = vmatpush1.msra.mxu0 %v6715
        %7169 = vmatprep.subr.mxu0 %v6720
        %7170 = vmatpush1.msra.mxu0 %v6719
        %7171 = vmatprep.mubr.f32.mxu0 %v4002
        %7172 = vmatmul.mubr.f32.gmra.mrb[0].mxu0 %v4001
        %v7173 = vpop.f32.mrb[0].mxu0
        %v7174 = vadd.f32 0.0, %v7173
        %v7175 = vpop.f32.mrb[0].mxu0
        %v7176 = vadd.f32 0.0, %v7175
        %7177 = vmatprep.mubr.f32.mxu0 %v4006
        %7178 = vmatmul.mubr.f32.gmra.mrb[0].mxu0 %v4005
        %v7179 = vpop.f32.mrb[0].mxu0
        %v7180 = vadd.f32 0.0, %v7179
        %v7181 = vpop.f32.mrb[0].mxu0
        %v7182 = vadd.f32 0.0, %v7181
        %7183 = vmatprep.mubr.f32.mxu0 %v4010
        %7184 = vmatmul.mubr.f32.gmra.mrb[0].mxu0 %v4009
        %v7185 = vpop.f32.mrb[0].mxu0
        %v7186 = vadd.f32 0.0, %v7185
        %v7187 = vpop.f32.mrb[0].mxu0
        %v7188 = vadd.f32 0.0, %v7187
        %7189 = vmatprep.mubr.f32.mxu0 %v4014
        %7190 = vmatmul.mubr.f32.gmra.mrb[0].mxu0 %v4013
        %v7191 = vpop.f32.mrb[0].mxu0
        %v7192 = vadd.f32 0.0, %v7191
        %v7193 = vpop.f32.mrb[0].mxu0
        %v7194 = vadd.f32 0.0, %v7193
        %7195 = vmatprep.mubr.f32.mxu0 %v4018
        %7196 = vmatmul.mubr.f32.gmra.mrb[0].mxu0 %v4017
        %v7197 = vpop.f32.mrb[0].mxu0
        %v7198 = vadd.f32 0.0, %v7197
        %v7199 = vpop.f32.mrb[0].mxu0
        %v7200 = vadd.f32 0.0, %v7199
        %7201 = vmatprep.mubr.f32.mxu0 %v4022
        %7202 = vmatmul.mubr.f32.gmra.mrb[0].mxu0 %v4021
        %v7203 = vpop.f32.mrb[0].mxu0
        %v7204 = vadd.f32 0.0, %v7203
        %v7205 = vpop.f32.mrb[0].mxu0
        %v7206 = vadd.f32 0.0, %v7205
        %7207 = vmatprep.mubr.f32.mxu0 %v4026
        %7208 = vmatmul.mubr.f32.gmra.mrb[0].mxu0 %v4025
        %v7209 = vpop.f32.mrb[0].mxu0
        %v7210 = vadd.f32 0.0, %v7209
        %v7211 = vpop.f32.mrb[0].mxu0
        %v7212 = vadd.f32 0.0, %v7211
        %7213 = vmatprep.mubr.f32.mxu0 %v4030
        %7214 = vmatmul.mubr.f32.gmra.mrb[0].mxu0 %v4029
        %v7215 = vpop.f32.mrb[0].mxu0
        %v7216 = vadd.f32 0.0, %v7215
        %v7217 = vpop.f32.mrb[0].mxu0
        %v7218 = vadd.f32 0.0, %v7217
        %7219 = vmatprep.mubr.f32.mxu0 %v4034
        %7220 = vmatmul.mubr.f32.gmra.mrb[0].mxu0 %v4033
        %v7221 = vpop.f32.mrb[0].mxu0
        %v7222 = vadd.f32 0.0, %v7221
        %v7223 = vpop.f32.mrb[0].mxu0
        %v7224 = vadd.f32 0.0, %v7223
        %7225 = vmatprep.mubr.f32.mxu0 %v4038
        %7226 = vmatmul.mubr.f32.gmra.mrb[0].mxu0 %v4037
        %v7227 = vpop.f32.mrb[0].mxu0
        %v7228 = vadd.f32 0.0, %v7227
        %v7229 = vpop.f32.mrb[0].mxu0
        %v7230 = vadd.f32 0.0, %v7229
        %7231 = vmatprep.mubr.f32.mxu0 %v4042
        %7232 = vmatmul.mubr.f32.gmra.mrb[0].mxu0 %v4041
        %v7233 = vpop.f32.mrb[0].mxu0
        %v7234 = vadd.f32 0.0, %v7233
        %v7235 = vpop.f32.mrb[0].mxu0
        %v7236 = vadd.f32 0.0, %v7235
        %7237 = vmatprep.mubr.f32.mxu0 %v4046
        %7238 = vmatmul.mubr.f32.gmra.mrb[0].mxu0 %v4045
        %v7239 = vpop.f32.mrb[0].mxu0
        %v7240 = vadd.f32 0.0, %v7239
        %v7241 = vpop.f32.mrb[0].mxu0
        %v7242 = vadd.f32 0.0, %v7241
        %7243 = vmatprep.mubr.f32.mxu0 %v4050
        %7244 = vmatmul.mubr.f32.gmra.mrb[0].mxu0 %v4049
        %v7245 = vpop.f32.mrb[0].mxu0
        %v7246 = vadd.f32 0.0, %v7245
        %v7247 = vpop.f32.mrb[0].mxu0
        %v7248 = vadd.f32 0.0, %v7247
        %7249 = vmatprep.mubr.f32.mxu0 0.0
        %7250 = vmatmul.mubr.f32.gmra.mrb[0].mxu0 0.0
        %v7251 = vpop.f32.mrb[0].mxu0
        %v7252 = vadd.f32 0.0, %v7251
        %v7253 = vpop.f32.mrb[0].mxu0
        %v7254 = vadd.f32 0.0, %v7253
        %7255 = vdwg.mxu0
        %7256 = vmatprep.subr.mxu0 %v6724
        %7257 = vmatpush1.msra.mxu0 %v6723
        %7258 = vmatprep.subr.mxu0 %v6728
        %7259 = vmatpush1.msra.mxu0 %v6727
        %7260 = vmatprep.subr.mxu0 %v6732
        %7261 = vmatpush1.msra.mxu0 %v6731
        %7262 = vmatprep.subr.mxu0 %v6736
        %7263 = vmatpush1.msra.mxu0 %v6735
        %7264 = vmatprep.subr.mxu0 %v6740
        %7265 = vmatpush1.msra.mxu0 %v6739
        %7266 = vmatprep.subr.mxu0 %v6744
        %7267 = vmatpush1.msra.mxu0 %v6743
        %7268 = vmatprep.subr.mxu0 %v6748
        %7269 = vmatpush1.msra.mxu0 %v6747
        %7270 = vmatprep.subr.mxu0 %v6752
        %7271 = vmatpush1.msra.mxu0 %v6751
        %7272 = vmatprep.subr.mxu0 %v6756
        %7273 = vmatpush1.msra.mxu0 %v6755
        %7274 = vmatprep.subr.mxu0 %v6760
        %7275 = vmatpush1.msra.mxu0 %v6759
        %7276 = vmatprep.subr.mxu0 %v6764
        %7277 = vmatpush1.msra.mxu0 %v6763
        %7278 = vmatprep.subr.mxu0 %v6768
        %7279 = vmatpush1.msra.mxu0 %v6767
        %7280 = vmatprep.subr.mxu0 %v6772
        %7281 = vmatpush1.msra.mxu0 %v6771
        %7282 = vmatprep.subr.mxu0 %v6776
        %7283 = vmatpush1.msra.mxu0 %v6775
        %7284 = vmatprep.subr.mxu0 %v6780
        %7285 = vmatpush1.msra.mxu0 %v6779
        %7286 = vmatprep.subr.mxu0 %v6784
        %7287 = vmatpush1.msra.mxu0 %v6783
        %7288 = vmatprep.subr.mxu0 %v6788
        %7289 = vmatpush1.msra.mxu0 %v6787
        %7290 = vmatprep.subr.mxu0 %v6792
        %7291 = vmatpush1.msra.mxu0 %v6791
        %7292 = vmatprep.subr.mxu0 %v6796
        %7293 = vmatpush1.msra.mxu0 %v6795
        %7294 = vmatprep.subr.mxu0 %v6800
        %7295 = vmatpush1.msra.mxu0 %v6799
        %7296 = vmatprep.subr.mxu0 %v6804
        %7297 = vmatpush1.msra.mxu0 %v6803
        %7298 = vmatprep.subr.mxu0 %v6808
        %7299 = vmatpush1.msra.mxu0 %v6807
        %7300 = vmatprep.subr.mxu0 0.0
        %7301 = vmatpush1.msra.mxu0 0.0
        %7302 = vmatprep.subr.mxu0 0.0
        %7303 = vmatpush1.msra.mxu0 0.0
        %7304 = vmatprep.subr.mxu0 0.0
        %7305 = vmatpush1.msra.mxu0 0.0
        %7306 = vmatprep.subr.mxu0 0.0
        %7307 = vmatpush1.msra.mxu0 0.0
        %7308 = vmatprep.subr.mxu0 0.0
        %7309 = vmatpush1.msra.mxu0 0.0
        %7310 = vmatprep.subr.mxu0 0.0
        %7311 = vmatpush1.msra.mxu0 0.0
        %7312 = vmatprep.subr.mxu0 0.0
        %7313 = vmatpush1.msra.mxu0 0.0
        %7314 = vmatprep.subr.mxu0 0.0
        %7315 = vmatpush1.msra.mxu0 0.0
        %7316 = vmatprep.subr.mxu0 0.0
        %7317 = vmatpush1.msra.mxu0 0.0
        %7318 = vmatprep.subr.mxu0 0.0
        %7319 = vmatpush1.msra.mxu0 0.0
        %7320 = vmatprep.mubr.f32.mxu0 %v4493
        %7321 = vmatmul.mubr.f32.gmra.mrb[0].mxu0 %v4003
        %v7322 = vpop.f32.mrb[0].mxu0
        %v7323 = vadd.f32 %v7174, %v7322
        %v7324 = vpop.f32.mrb[0].mxu0
        %v7325 = vadd.f32 %v7176, %v7324
        %7326 = vmatprep.mubr.f32.mxu0 %v4496
        %7327 = vmatmul.mubr.f32.gmra.mrb[0].mxu0 %v4007
        %v7328 = vpop.f32.mrb[0].mxu0
        %v7329 = vadd.f32 %v7180, %v7328
        %v7330 = vpop.f32.mrb[0].mxu0
        %v7331 = vadd.f32 %v7182, %v7330
        %7332 = vmatprep.mubr.f32.mxu0 %v4499
        %7333 = vmatmul.mubr.f32.gmra.mrb[0].mxu0 %v4011
        %v7334 = vpop.f32.mrb[0].mxu0
        %v7335 = vadd.f32 %v7186, %v7334
        %v7336 = vpop.f32.mrb[0].mxu0
        %v7337 = vadd.f32 %v7188, %v7336
        %7338 = vmatprep.mubr.f32.mxu0 %v4502
        %7339 = vmatmul.mubr.f32.gmra.mrb[0].mxu0 %v4015
        %v7340 = vpop.f32.mrb[0].mxu0
        %v7341 = vadd.f32 %v7192, %v7340
        %v7342 = vpop.f32.mrb[0].mxu0
        %v7343 = vadd.f32 %v7194, %v7342
        %7344 = vmatprep.mubr.f32.mxu0 %v4505
        %7345 = vmatmul.mubr.f32.gmra.mrb[0].mxu0 %v4019
        %v7346 = vpop.f32.mrb[0].mxu0
        %v7347 = vadd.f32 %v7198, %v7346
        %v7348 = vpop.f32.mrb[0].mxu0
        %v7349 = vadd.f32 %v7200, %v7348
        %7350 = vmatprep.mubr.f32.mxu0 %v4508
        %7351 = vmatmul.mubr.f32.gmra.mrb[0].mxu0 %v4023
        %v7352 = vpop.f32.mrb[0].mxu0
        %v7353 = vadd.f32 %v7204, %v7352
        %v7354 = vpop.f32.mrb[0].mxu0
        %v7355 = vadd.f32 %v7206, %v7354
        %7356 = vmatprep.mubr.f32.mxu0 %v4511
        %7357 = vmatmul.mubr.f32.gmra.mrb[0].mxu0 %v4027
        %v7358 = vpop.f32.mrb[0].mxu0
        %v7359 = vadd.f32 %v7210, %v7358
        %v7360 = vpop.f32.mrb[0].mxu0
        %v7361 = vadd.f32 %v7212, %v7360
        %7362 = vmatprep.mubr.f32.mxu0 %v4514
        %7363 = vmatmul.mubr.f32.gmra.mrb[0].mxu0 %v4031
        %v7364 = vpop.f32.mrb[0].mxu0
        %v7365 = vadd.f32 %v7216, %v7364
        %v7366 = vpop.f32.mrb[0].mxu0
        %v7367 = vadd.f32 %v7218, %v7366
        %7368 = vmatprep.mubr.f32.mxu0 %v4517
        %7369 = vmatmul.mubr.f32.gmra.mrb[0].mxu0 %v4035
        %v7370 = vpop.f32.mrb[0].mxu0
        %v7371 = vadd.f32 %v7222, %v7370
        %v7372 = vpop.f32.mrb[0].mxu0
        %v7373 = vadd.f32 %v7224, %v7372
        %7374 = vmatprep.mubr.f32.mxu0 %v4520
        %7375 = vmatmul.mubr.f32.gmra.mrb[0].mxu0 %v4039
        %v7376 = vpop.f32.mrb[0].mxu0
        %v7377 = vadd.f32 %v7228, %v7376
        %v7378 = vpop.f32.mrb[0].mxu0
        %v7379 = vadd.f32 %v7230, %v7378
        %7380 = vmatprep.mubr.f32.mxu0 %v4523
        %7381 = vmatmul.mubr.f32.gmra.mrb[0].mxu0 %v4043
        %v7382 = vpop.f32.mrb[0].mxu0
        %v7383 = vadd.f32 %v7234, %v7382
        %v7384 = vpop.f32.mrb[0].mxu0
        %v7385 = vadd.f32 %v7236, %v7384
        %7386 = vmatprep.mubr.f32.mxu0 %v4526
        %7387 = vmatmul.mubr.f32.gmra.mrb[0].mxu0 %v4047
        %v7388 = vpop.f32.mrb[0].mxu0
        %v7389 = vadd.f32 %v7240, %v7388
        %v7390 = vpop.f32.mrb[0].mxu0
        %v7391 = vadd.f32 %v7242, %v7390
        %7392 = vmatprep.mubr.f32.mxu0 %v5938
        %7393 = vmatmul.mubr.f32.gmra.mrb[0].mxu0 %v4051
        %v7394 = vpop.f32.mrb[0].mxu0
        %v7395 = vadd.f32 %v7246, %v7394
        %v7396 = vpop.f32.mrb[0].mxu0
        %v7397 = vadd.f32 %v7248, %v7396
        %7398 = vmatprep.mubr.f32.mxu0 %v4487
        %7399 = vmatmul.mubr.f32.gmra.mrb[0].mxu0 0.0
        %v7400 = vpop.f32.mrb[0].mxu0
        %v7401 = vadd.f32 %v7252, %v7400
        %v7402 = vpop.f32.mrb[0].mxu0
        %v7403 = vadd.f32 %v7254, %v7402
        %7404 = vdwg.mxu0
        %v7405 = vadd.f32 %v6536, %v7025
        %v7406 = vadd.f32 %v6537, %v7027
        %v7407 = vadd.f32 %v6538, %v7323
        %v7408 = vadd.f32 %v6539, %v7325
        %v7409 = vadd.f32 %v6540, %v7031
        %v7410 = vadd.f32 %v6541, %v7033
        %v7411 = vadd.f32 %v6542, %v7329
        %v7412 = vadd.f32 %v6543, %v7331
        %v7413 = vadd.f32 %v6544, %v7037
        %v7414 = vadd.f32 %v6545, %v7039
        %v7415 = vadd.f32 %v6546, %v7335
        %v7416 = vadd.f32 %v6547, %v7337
        %v7417 = vadd.f32 %v6548, %v7043
        %v7418 = vadd.f32 %v6549, %v7045
        %v7419 = vadd.f32 %v6550, %v7341
        %v7420 = vadd.f32 %v6551, %v7343
        %v7421 = vadd.f32 %v6552, %v7049
        %v7422 = vadd.f32 %v6553, %v7051
        %v7423 = vadd.f32 %v6554, %v7347
        %v7424 = vadd.f32 %v6555, %v7349
        %v7425 = vadd.f32 %v6556, %v7055
        %v7426 = vadd.f32 %v6557, %v7057
        %v7427 = vadd.f32 %v6558, %v7353
        %v7428 = vadd.f32 %v6559, %v7355
        %v7429 = vadd.f32 %v6560, %v7061
        %v7430 = vadd.f32 %v6561, %v7063
        %v7431 = vadd.f32 %v6562, %v7359
        %v7432 = vadd.f32 %v6563, %v7361
        %v7433 = vadd.f32 %v6564, %v7067
        %v7434 = vadd.f32 %v6565, %v7069
        %v7435 = vadd.f32 %v6566, %v7365
        %v7436 = vadd.f32 %v6567, %v7367
        %v7437 = vadd.f32 %v6568, %v7073
        %v7438 = vadd.f32 %v6569, %v7075
        %v7439 = vadd.f32 %v6570, %v7371
        %v7440 = vadd.f32 %v6571, %v7373
        %v7441 = vadd.f32 %v6572, %v7079
        %v7442 = vadd.f32 %v6573, %v7081
        %v7443 = vadd.f32 %v6574, %v7377
        %v7444 = vadd.f32 %v6575, %v7379
        %v7445 = vadd.f32 %v6576, %v7085
        %v7446 = vadd.f32 %v6577, %v7087
        %v7447 = vadd.f32 %v6578, %v7383
        %v7448 = vadd.f32 %v6579, %v7385
        %v7449 = vadd.f32 %v6580, %v7091
        %v7450 = vadd.f32 %v6581, %v7093
        %v7451 = vadd.f32 %v6582, %v7389
        %v7452 = vadd.f32 %v6583, %v7391
        %v7453 = vadd.f32 %v6584, %v7097
        %v7454 = vadd.f32 %v6585, %v7099
        %v7455 = vadd.f32 %v6586, %v7395
        %v7456 = vadd.f32 %v6587, %v7397
        %v7457 = vadd.f32 %v6588, %v7103
        %v7458 = vadd.f32 %v6589, %v7105
        %v7459 = vadd.f32 %v6590, %v7401
        %v7460 = vadd.f32 %v6591, %v7403
        %s7461 = scalar_lea.vmem [#allocation8], 6912
        %v7462 = vld [vmem:[%s7461] sm:$0xff]
        %v7463 = vld [vmem:[%s7461 + $0x8] sm:$0xff]
        %v7464 = vld [vmem:[%s7461 + $0x10] sm:$0xff]
        %v7465 = vld [vmem:[%s7461 + $0x18] sm:$0xff]
        %v7466 = vld [vmem:[%s7461 + $0x20] sm:$0xff]
        %v7467 = vld [vmem:[%s7461 + $0x28] sm:$0xff]
        %v7468 = vld [vmem:[%s7461 + $0x30] sm:$0xff]
        %v7469 = vld [vmem:[%s7461 + $0x38] sm:$0xff]
        %v7470 = vld [vmem:[%s7461 + $0x40] sm:$0xff]
        %v7471 = vld [vmem:[%s7461 + $0x48] sm:$0xff]
        %v7472 = vld [vmem:[%s7461 + $0x50] sm:$0xff]
        %v7473 = vld [vmem:[%s7461 + $0x58] sm:$0xff]
        %v7474 = vld [vmem:[%s7461 + $0x60] sm:$0xff]
        %v7475 = vld [vmem:[%s7461 + $0x68] sm:$0xff]
        %v7476 = vld [vmem:[%s7461 + $0x70] sm:$0xff]
        %v7477 = vld [vmem:[%s7461 + $0x78] sm:$0xff]
        %v7478 = vld [vmem:[%s7461 + $0x80] sm:$0xff]
        %v7479 = vld [vmem:[%s7461 + $0x88] sm:$0xff]
        %v7480 = vld [vmem:[%s7461 + $0x90] sm:$0xff]
        %v7481 = vld [vmem:[%s7461 + $0x98] sm:$0xff]
        %v7482 = vld [vmem:[%s7461 + $0xa0] sm:$0xff]
        %v7483 = vld [vmem:[%s7461 + $0xa8] sm:$0xff]
        %v7484 = vld [vmem:[%s7461 + $0xb0] sm:$0xff]
        %v7485 = vld [vmem:[%s7461 + $0xb8] sm:$0xff]
        %v7486 = vld [vmem:[%s7461 + $0xc0] sm:$0xff]
        %v7487 = vld [vmem:[%s7461 + $0xc8] sm:$0xff]
        %v7488 = vld [vmem:[%s7461 + $0xd0] sm:$0xff]
        %v7489 = vld [vmem:[%s7461 + $0xd8] sm:$0xff]
        %v7490 = vld [vmem:[%s7461 + $0xe0] sm:$0xff]
        %v7491 = vld [vmem:[%s7461 + $0xe8] sm:$0xff]
        %v7492 = vld [vmem:[%s7461 + $0xf0] sm:$0xff]
        %v7493 = vld [vmem:[%s7461 + $0xf8] sm:$0xff]
        %v7494 = vld [vmem:[%s7461 + $0x100] sm:$0xff]
        %v7495 = vld [vmem:[%s7461 + $0x108] sm:$0xff]
        %v7496 = vld [vmem:[%s7461 + $0x110] sm:$0xff]
        %v7497 = vld [vmem:[%s7461 + $0x118] sm:$0xff]
        %v7498 = vld [vmem:[%s7461 + $0x120] sm:$0xff]
        %v7499 = vld [vmem:[%s7461 + $0x128] sm:$0xff]
        %v7500 = vld [vmem:[%s7461 + $0x130] sm:$0xff]
        %v7501 = vld [vmem:[%s7461 + $0x138] sm:$0xff]
        %v7502 = vld [vmem:[%s7461 + $0x140] sm:$0xff]
        %v7503 = vld [vmem:[%s7461 + $0x148] sm:$0xff]
        %v7504 = vld [vmem:[%s7461 + $0x150] sm:$0xff]
        %v7505 = vld [vmem:[%s7461 + $0x158] sm:$0xff]
        %v7506 = vld [vmem:[%s7461 + $0x160] sm:$0xff]
        %v7507 = vld [vmem:[%s7461 + $0x168] sm:$0xff]
        %v7508 = vld [vmem:[%s7461 + $0x170] sm:$0xff]
        %v7509 = vld [vmem:[%s7461 + $0x178] sm:$0xff]
        %v7510 = vld [vmem:[%s7461 + $0x180] sm:$0xff]
        %v7511 = vld [vmem:[%s7461 + $0x188] sm:$0xff]
        %v7512 = vld [vmem:[%s7461 + $0x190] sm:$0xff]
        %v7513 = vld [vmem:[%s7461 + $0x198] sm:$0xff]
        %v7514 = vld [vmem:[%s7461 + $0x1a0] sm:$0xff]
        %v7515 = vld [vmem:[%s7461 + $0x1a8] sm:$0xff]
        %v7516 = vld [vmem:[%s7461 + $0x1b0] sm:$0xff]
        %v7517 = vld [vmem:[%s7461 + $0x1b8] sm:$0xff]
        %v7518 = vld [vmem:[%s7461 + $0x1c0] sm:$0xff]
        %v7519 = vld [vmem:[%s7461 + $0x1c8] sm:$0xff]
        %v7520 = vld [vmem:[%s7461 + $0x1d0] sm:$0xff]
        %v7521 = vld [vmem:[%s7461 + $0x1d8] sm:$0xff]
        %v7522 = vld [vmem:[%s7461 + $0x1e0] sm:$0xff]
        %v7523 = vld [vmem:[%s7461 + $0x1e8] sm:$0xff]
        %v7524 = vld [vmem:[%s7461 + $0x1f0] sm:$0xff]
        %v7525 = vld [vmem:[%s7461 + $0x1f8] sm:$0xff]
        %v7526 = vld [vmem:[%s7461 + $0x200] sm:$0xff]
        %v7527 = vld [vmem:[%s7461 + $0x208] sm:$0xff]
        %v7528 = vld [vmem:[%s7461 + $0x210] sm:$0xff]
        %v7529 = vld [vmem:[%s7461 + $0x218] sm:$0xff]
        %v7530 = vld [vmem:[%s7461 + $0x220] sm:$0xff]
        %v7531 = vld [vmem:[%s7461 + $0x228] sm:$0xff]
        %v7532 = vld [vmem:[%s7461 + $0x230] sm:$0xff]
        %v7533 = vld [vmem:[%s7461 + $0x238] sm:$0xff]
        %v7534 = vld [vmem:[%s7461 + $0x240] sm:$0xff]
        %v7535 = vld [vmem:[%s7461 + $0x248] sm:$0xff]
        %v7536 = vld [vmem:[%s7461 + $0x250] sm:$0xff]
        %v7537 = vld [vmem:[%s7461 + $0x258] sm:$0xff]
        %v7538 = vld [vmem:[%s7461 + $0x260] sm:$0xff]
        %v7539 = vld [vmem:[%s7461 + $0x268] sm:$0xff]
        %v7540 = vld [vmem:[%s7461 + $0x270] sm:$0xff]
        %v7541 = vld [vmem:[%s7461 + $0x278] sm:$0xff]
        %v7542 = vld [vmem:[%s7461 + $0x280] sm:$0xff]
        %v7543 = vld [vmem:[%s7461 + $0x288] sm:$0xff]
        %v7544 = vld [vmem:[%s7461 + $0x290] sm:$0xff]
        %v7545 = vld [vmem:[%s7461 + $0x298] sm:$0xff]
        %v7546 = vld [vmem:[%s7461 + $0x2a0] sm:$0xff]
        %v7547 = vld [vmem:[%s7461 + $0x2a8] sm:$0xff]
        %v7548 = vld [vmem:[%s7461 + $0x2b0] sm:$0xff]
        %v7549 = vld [vmem:[%s7461 + $0x2b8] sm:$0xff]
        %v7550 = vld [vmem:[%s7461 + $0x2c0] sm:$0xff]
        %v7551 = vld [vmem:[%s7461 + $0x2c8] sm:$0xff]
        %v7552 = vld [vmem:[%s7461 + $0x2d0] sm:$0xff]
        %v7553 = vld [vmem:[%s7461 + $0x2d8] sm:$0xff]
        %v7554 = vld [vmem:[%s7461 + $0x2e0] sm:$0xff]
        %v7555 = vld [vmem:[%s7461 + $0x2e8] sm:$0xff]
        %v7556 = vld [vmem:[%s7461 + $0x2f0] sm:$0xff]
        %v7557 = vld [vmem:[%s7461 + $0x2f8] sm:$0xff]
        %v7558 = vld [vmem:[%s7461 + $0x300] sm:$0xff]
        %v7559 = vld [vmem:[%s7461 + $0x308] sm:$0xff]
        %v7560 = vld [vmem:[%s7461 + $0x310] sm:$0xff]
        %v7561 = vld [vmem:[%s7461 + $0x318] sm:$0xff]
        %v7562 = vld [vmem:[%s7461 + $0x320] sm:$0xff]
        %v7563 = vld [vmem:[%s7461 + $0x328] sm:$0xff]
        %v7564 = vld [vmem:[%s7461 + $0x330] sm:$0xff]
        %v7565 = vld [vmem:[%s7461 + $0x338] sm:$0xff]
        %v7566 = vld [vmem:[%s7461 + $0x340] sm:$0xff]
        %v7567 = vld [vmem:[%s7461 + $0x348] sm:$0xff]
        %v7568 = vld [vmem:[%s7461 + $0x350] sm:$0xff]
        %v7569 = vld [vmem:[%s7461 + $0x358] sm:$0xff]
        %v7570 = vld [vmem:[%s7461 + $0x360] sm:$0xff]
        %v7571 = vld [vmem:[%s7461 + $0x368] sm:$0xff]
        %v7572 = vld [vmem:[%s7461 + $0x370] sm:$0xff]
        %v7573 = vld [vmem:[%s7461 + $0x378] sm:$0xff]
        %v7574 = vld [vmem:[%s7461 + $0x380] sm:$0xff]
        %v7575 = vld [vmem:[%s7461 + $0x388] sm:$0xff]
        %v7576 = vld [vmem:[%s7461 + $0x390] sm:$0xff]
        %v7577 = vld [vmem:[%s7461 + $0x398] sm:$0xff]
        %v7578 = vld [vmem:[%s7461 + $0x3a0] sm:$0xff]
        %v7579 = vld [vmem:[%s7461 + $0x3a8] sm:$0xff]
        %v7580 = vld [vmem:[%s7461 + $0x3b0] sm:$0xff]
        %v7581 = vld [vmem:[%s7461 + $0x3b8] sm:$0xff]
        %v7582 = vld [vmem:[%s7461 + $0x3c0] sm:$0xff]
        %v7583 = vld [vmem:[%s7461 + $0x3c8] sm:$0xff]
        %v7584 = vld [vmem:[%s7461 + $0x3d0] sm:$0xff]
        %v7585 = vld [vmem:[%s7461 + $0x3d8] sm:$0xff]
        %v7586 = vld [vmem:[%s7461 + $0x3e0] sm:$0xff]
        %v7587 = vld [vmem:[%s7461 + $0x3e8] sm:$0xff]
        %v7588 = vld [vmem:[%s7461 + $0x3f0] sm:$0xff]
        %v7589 = vld [vmem:[%s7461 + $0x3f8] sm:$0xff]
        %v7590 = vld [vmem:[%s7461 + $0x400] sm:$0xff]
        %v7591 = vld [vmem:[%s7461 + $0x408] sm:$0xff]
        %v7592 = vld [vmem:[%s7461 + $0x410] sm:$0xff]
        %v7593 = vld [vmem:[%s7461 + $0x418] sm:$0xff]
        %v7594 = vld [vmem:[%s7461 + $0x420] sm:$0xff]
        %v7595 = vld [vmem:[%s7461 + $0x428] sm:$0xff]
        %v7596 = vld [vmem:[%s7461 + $0x430] sm:$0xff]
        %v7597 = vld [vmem:[%s7461 + $0x438] sm:$0xff]
        %v7598 = vld [vmem:[%s7461 + $0x440] sm:$0xff]
        %v7599 = vld [vmem:[%s7461 + $0x448] sm:$0xff]
        %v7600 = vld [vmem:[%s7461 + $0x450] sm:$0xff]
        %v7601 = vld [vmem:[%s7461 + $0x458] sm:$0xff]
        %v7602 = vld [vmem:[%s7461 + $0x460] sm:$0xff]
        %v7603 = vld [vmem:[%s7461 + $0x468] sm:$0xff]
        %v7604 = vld [vmem:[%s7461 + $0x470] sm:$0xff]
        %v7605 = vld [vmem:[%s7461 + $0x478] sm:$0xff]
        %v7606 = vld [vmem:[%s7461 + $0x480] sm:$0xff]
        %v7607 = vld [vmem:[%s7461 + $0x488] sm:$0xff]
        %v7608 = vld [vmem:[%s7461 + $0x490] sm:$0xff]
        %v7609 = vld [vmem:[%s7461 + $0x498] sm:$0xff]
        %v7610 = vld [vmem:[%s7461 + $0x4a0] sm:$0xff]
        %v7611 = vld [vmem:[%s7461 + $0x4a8] sm:$0xff]
        %v7612 = vld [vmem:[%s7461 + $0x4b0] sm:$0xff]
        %v7613 = vld [vmem:[%s7461 + $0x4b8] sm:$0xff]
        %v7614 = vld [vmem:[%s7461 + $0x4c0] sm:$0xff]
        %v7615 = vld [vmem:[%s7461 + $0x4c8] sm:$0xff]
        %v7616 = vld [vmem:[%s7461 + $0x4d0] sm:$0xff]
        %v7617 = vld [vmem:[%s7461 + $0x4d8] sm:$0xff]
        %v7618 = vld [vmem:[%s7461 + $0x4e0] sm:$0xff]
        %v7619 = vld [vmem:[%s7461 + $0x4e8] sm:$0xff]
        %v7620 = vld [vmem:[%s7461 + $0x4f0] sm:$0xff]
        %v7621 = vld [vmem:[%s7461 + $0x4f8] sm:$0xff]
        %v7622 = vld [vmem:[%s7461 + $0x500] sm:$0xff]
        %v7623 = vld [vmem:[%s7461 + $0x508] sm:$0xff]
        %v7624 = vld [vmem:[%s7461 + $0x510] sm:$0xff]
        %v7625 = vld [vmem:[%s7461 + $0x518] sm:$0xff]
        %v7626 = vld [vmem:[%s7461 + $0x520] sm:$0xff]
        %v7627 = vld [vmem:[%s7461 + $0x528] sm:$0xff]
        %v7628 = vld [vmem:[%s7461 + $0x530] sm:$0xff]
        %v7629 = vld [vmem:[%s7461 + $0x538] sm:$0xff]
        %v7630 = vld [vmem:[%s7461 + $0x540] sm:$0xff]
        %v7631 = vld [vmem:[%s7461 + $0x548] sm:$0xff]
        %v7632 = vld [vmem:[%s7461 + $0x550] sm:$0xff]
        %v7633 = vld [vmem:[%s7461 + $0x558] sm:$0xff]
        %v7634 = vld [vmem:[%s7461 + $0x560] sm:$0xff]
        %v7635 = vld [vmem:[%s7461 + $0x568] sm:$0xff]
        %v7636 = vld [vmem:[%s7461 + $0x570] sm:$0xff]
        %v7637 = vld [vmem:[%s7461 + $0x578] sm:$0xff]
        %v7638 = vld [vmem:[%s7461 + $0x580] sm:$0xff]
        %v7639 = vld [vmem:[%s7461 + $0x588] sm:$0xff]
        %v7640 = vld [vmem:[%s7461 + $0x590] sm:$0xff]
        %v7641 = vld [vmem:[%s7461 + $0x598] sm:$0xff]
        %v7642 = vld [vmem:[%s7461 + $0x5a0] sm:$0xff]
        %v7643 = vld [vmem:[%s7461 + $0x5a8] sm:$0xff]
        %v7644 = vld [vmem:[%s7461 + $0x5b0] sm:$0xff]
        %v7645 = vld [vmem:[%s7461 + $0x5b8] sm:$0xff]
        %v7646 = vld [vmem:[%s7461 + $0x5c0] sm:$0xff]
        %v7647 = vld [vmem:[%s7461 + $0x5c8] sm:$0xff]
        %v7648 = vld [vmem:[%s7461 + $0x5d0] sm:$0xff]
        %v7649 = vld [vmem:[%s7461 + $0x5d8] sm:$0xff]
        %v7650 = vld [vmem:[%s7461 + $0x5e0] sm:$0xff]
        %v7651 = vld [vmem:[%s7461 + $0x5e8] sm:$0xff]
        %v7652 = vld [vmem:[%s7461 + $0x5f0] sm:$0xff]
        %v7653 = vld [vmem:[%s7461 + $0x5f8] sm:$0xff]
        %v7654 = vld [vmem:[%s7461 + $0x600] sm:$0xff]
        %v7655 = vld [vmem:[%s7461 + $0x608] sm:$0xff]
        %v7656 = vld [vmem:[%s7461 + $0x610] sm:$0xff]
        %v7657 = vld [vmem:[%s7461 + $0x618] sm:$0xff]
        %v7658 = vld [vmem:[%s7461 + $0x620] sm:$0xff]
        %v7659 = vld [vmem:[%s7461 + $0x628] sm:$0xff]
        %v7660 = vld [vmem:[%s7461 + $0x630] sm:$0xff]
        %v7661 = vld [vmem:[%s7461 + $0x638] sm:$0xff]
        %v7662 = vld [vmem:[%s7461 + $0x640] sm:$0xff]
        %v7663 = vld [vmem:[%s7461 + $0x648] sm:$0xff]
        %v7664 = vld [vmem:[%s7461 + $0x650] sm:$0xff]
        %v7665 = vld [vmem:[%s7461 + $0x658] sm:$0xff]
        %v7666 = vld [vmem:[%s7461 + $0x660] sm:$0xff]
        %v7667 = vld [vmem:[%s7461 + $0x668] sm:$0xff]
        %v7668 = vld [vmem:[%s7461 + $0x670] sm:$0xff]
        %v7669 = vld [vmem:[%s7461 + $0x678] sm:$0xff]
        %v7670 = vld [vmem:[%s7461 + $0x680] sm:$0xff]
        %v7671 = vld [vmem:[%s7461 + $0x688] sm:$0xff]
        %v7672 = vld [vmem:[%s7461 + $0x690] sm:$0xff]
        %v7673 = vld [vmem:[%s7461 + $0x698] sm:$0xff]
        %v7674 = vld [vmem:[%s7461 + $0x6a0] sm:$0xff]
        %v7675 = vld [vmem:[%s7461 + $0x6a8] sm:$0xff]
        %v7676 = vld [vmem:[%s7461 + $0x6b0] sm:$0xff]
        %v7677 = vld [vmem:[%s7461 + $0x6b8] sm:$0xff]
        %7678 = vmatprep.subr.mxu0 %v7463
        %7679 = vmatpush1.msra.mxu0 %v7462
        %7680 = vmatprep.subr.mxu0 %v7467
        %7681 = vmatpush1.msra.mxu0 %v7466
        %7682 = vmatprep.subr.mxu0 %v7471
        %7683 = vmatpush1.msra.mxu0 %v7470
        %7684 = vmatprep.subr.mxu0 %v7475
        %7685 = vmatpush1.msra.mxu0 %v7474
        %7686 = vmatprep.subr.mxu0 %v7479
        %7687 = vmatpush1.msra.mxu0 %v7478
        %7688 = vmatprep.subr.mxu0 %v7483
        %7689 = vmatpush1.msra.mxu0 %v7482
        %7690 = vmatprep.subr.mxu0 %v7487
        %7691 = vmatpush1.msra.mxu0 %v7486
        %7692 = vmatprep.subr.mxu0 %v7491
        %7693 = vmatpush1.msra.mxu0 %v7490
        %7694 = vmatprep.subr.mxu0 %v7495
        %7695 = vmatpush1.msra.mxu0 %v7494
        %7696 = vmatprep.subr.mxu0 %v7499
        %7697 = vmatpush1.msra.mxu0 %v7498
        %7698 = vmatprep.subr.mxu0 %v7503
        %7699 = vmatpush1.msra.mxu0 %v7502
        %7700 = vmatprep.subr.mxu0 %v7507
        %7701 = vmatpush1.msra.mxu0 %v7506
        %7702 = vmatprep.subr.mxu0 %v7511
        %7703 = vmatpush1.msra.mxu0 %v7510
        %7704 = vmatprep.subr.mxu0 %v7515
        %7705 = vmatpush1.msra.mxu0 %v7514
        %7706 = vmatprep.subr.mxu0 %v7519
        %7707 = vmatpush1.msra.mxu0 %v7518
        %7708 = vmatprep.subr.mxu0 %v7523
        %7709 = vmatpush1.msra.mxu0 %v7522
        %7710 = vmatprep.subr.mxu0 %v7527
        %7711 = vmatpush1.msra.mxu0 %v7526
        %7712 = vmatprep.subr.mxu0 %v7531
        %7713 = vmatpush1.msra.mxu0 %v7530
        %7714 = vmatprep.subr.mxu0 %v7535
        %7715 = vmatpush1.msra.mxu0 %v7534
        %7716 = vmatprep.subr.mxu0 %v7539
        %7717 = vmatpush1.msra.mxu0 %v7538
        %7718 = vmatprep.subr.mxu0 %v7543
        %7719 = vmatpush1.msra.mxu0 %v7542
        %7720 = vmatprep.subr.mxu0 %v7547
        %7721 = vmatpush1.msra.mxu0 %v7546
        %7722 = vmatprep.subr.mxu0 %v7551
        %7723 = vmatpush1.msra.mxu0 %v7550
        %7724 = vmatprep.subr.mxu0 %v7555
        %7725 = vmatpush1.msra.mxu0 %v7554
        %7726 = vmatprep.subr.mxu0 %v7559
        %7727 = vmatpush1.msra.mxu0 %v7558
        %7728 = vmatprep.subr.mxu0 %v7563
        %7729 = vmatpush1.msra.mxu0 %v7562
        %7730 = vmatprep.subr.mxu0 %v7567
        %7731 = vmatpush1.msra.mxu0 %v7566
        %7732 = vmatprep.subr.mxu0 %v7571
        %7733 = vmatpush1.msra.mxu0 %v7570
        %7734 = vmatprep.subr.mxu0 %v7575
        %7735 = vmatpush1.msra.mxu0 %v7574
        %7736 = vmatprep.subr.mxu0 %v7579
        %7737 = vmatpush1.msra.mxu0 %v7578
        %7738 = vmatprep.subr.mxu0 %v7583
        %7739 = vmatpush1.msra.mxu0 %v7582
        %7740 = vmatprep.subr.mxu0 %v7587
        %7741 = vmatpush1.msra.mxu0 %v7586
        %7742 = vmatprep.mubr.f32.mxu0 %v4006
        %7743 = vmatmul.mubr.f32.gmra.mrb[0].mxu0 %v4005
        %v7744 = vpop.f32.mrb[0].mxu0
        %v7745 = vadd.f32 0.0, %v7744
        %v7746 = vpop.f32.mrb[0].mxu0
        %v7747 = vadd.f32 0.0, %v7746
        %7748 = vmatprep.mubr.f32.mxu0 %v4010
        %7749 = vmatmul.mubr.f32.gmra.mrb[0].mxu0 %v4009
        %v7750 = vpop.f32.mrb[0].mxu0
        %v7751 = vadd.f32 0.0, %v7750
        %v7752 = vpop.f32.mrb[0].mxu0
        %v7753 = vadd.f32 0.0, %v7752
        %7754 = vmatprep.mubr.f32.mxu0 %v4014
        %7755 = vmatmul.mubr.f32.gmra.mrb[0].mxu0 %v4013
        %v7756 = vpop.f32.mrb[0].mxu0
        %v7757 = vadd.f32 0.0, %v7756
        %v7758 = vpop.f32.mrb[0].mxu0
        %v7759 = vadd.f32 0.0, %v7758
        %7760 = vmatprep.mubr.f32.mxu0 %v4018
        %7761 = vmatmul.mubr.f32.gmra.mrb[0].mxu0 %v4017
        %v7762 = vpop.f32.mrb[0].mxu0
        %v7763 = vadd.f32 0.0, %v7762
        %v7764 = vpop.f32.mrb[0].mxu0
        %v7765 = vadd.f32 0.0, %v7764
        %7766 = vmatprep.mubr.f32.mxu0 %v4022
        %7767 = vmatmul.mubr.f32.gmra.mrb[0].mxu0 %v4021
        %v7768 = vpop.f32.mrb[0].mxu0
        %v7769 = vadd.f32 0.0, %v7768
        %v7770 = vpop.f32.mrb[0].mxu0
        %v7771 = vadd.f32 0.0, %v7770
        %7772 = vmatprep.mubr.f32.mxu0 %v4026
        %7773 = vmatmul.mubr.f32.gmra.mrb[0].mxu0 %v4025
        %v7774 = vpop.f32.mrb[0].mxu0
        %v7775 = vadd.f32 0.0, %v7774
        %v7776 = vpop.f32.mrb[0].mxu0
        %v7777 = vadd.f32 0.0, %v7776
        %7778 = vmatprep.mubr.f32.mxu0 %v4030
        %7779 = vmatmul.mubr.f32.gmra.mrb[0].mxu0 %v4029
        %v7780 = vpop.f32.mrb[0].mxu0
        %v7781 = vadd.f32 0.0, %v7780
        %v7782 = vpop.f32.mrb[0].mxu0
        %v7783 = vadd.f32 0.0, %v7782
        %7784 = vmatprep.mubr.f32.mxu0 %v4034
        %7785 = vmatmul.mubr.f32.gmra.mrb[0].mxu0 %v4033
        %v7786 = vpop.f32.mrb[0].mxu0
        %v7787 = vadd.f32 0.0, %v7786
        %v7788 = vpop.f32.mrb[0].mxu0
        %v7789 = vadd.f32 0.0, %v7788
        %7790 = vmatprep.mubr.f32.mxu0 %v4038
        %7791 = vmatmul.mubr.f32.gmra.mrb[0].mxu0 %v4037
        %v7792 = vpop.f32.mrb[0].mxu0
        %v7793 = vadd.f32 0.0, %v7792
        %v7794 = vpop.f32.mrb[0].mxu0
        %v7795 = vadd.f32 0.0, %v7794
        %7796 = vmatprep.mubr.f32.mxu0 %v4042
        %7797 = vmatmul.mubr.f32.gmra.mrb[0].mxu0 %v4041
        %v7798 = vpop.f32.mrb[0].mxu0
        %v7799 = vadd.f32 0.0, %v7798
        %v7800 = vpop.f32.mrb[0].mxu0
        %v7801 = vadd.f32 0.0, %v7800
        %7802 = vmatprep.mubr.f32.mxu0 %v4046
        %7803 = vmatmul.mubr.f32.gmra.mrb[0].mxu0 %v4045
        %v7804 = vpop.f32.mrb[0].mxu0
        %v7805 = vadd.f32 0.0, %v7804
        %v7806 = vpop.f32.mrb[0].mxu0
        %v7807 = vadd.f32 0.0, %v7806
        %7808 = vmatprep.mubr.f32.mxu0 %v4050
        %7809 = vmatmul.mubr.f32.gmra.mrb[0].mxu0 %v4049
        %v7810 = vpop.f32.mrb[0].mxu0
        %v7811 = vadd.f32 0.0, %v7810
        %v7812 = vpop.f32.mrb[0].mxu0
        %v7813 = vadd.f32 0.0, %v7812
        %7814 = vmatprep.mubr.f32.mxu0 0.0
        %7815 = vmatmul.mubr.f32.gmra.mrb[0].mxu0 0.0
        %v7816 = vpop.f32.mrb[0].mxu0
        %v7817 = vadd.f32 0.0, %v7816
        %v7818 = vpop.f32.mrb[0].mxu0
        %v7819 = vadd.f32 0.0, %v7818
        %7820 = vmatprep.mubr.f32.mxu0 0.0
        %7821 = vmatmul.mubr.f32.gmra.mrb[0].mxu0 0.0
        %v7822 = vpop.f32.mrb[0].mxu0
        %v7823 = vadd.f32 0.0, %v7822
        %v7824 = vpop.f32.mrb[0].mxu0
        %v7825 = vadd.f32 0.0, %v7824
        %7826 = vdwg.mxu0
        %7827 = vmatprep.subr.mxu0 %v7591
        %7828 = vmatpush1.msra.mxu0 %v7590
        %7829 = vmatprep.subr.mxu0 %v7595
        %7830 = vmatpush1.msra.mxu0 %v7594
        %7831 = vmatprep.subr.mxu0 %v7599
        %7832 = vmatpush1.msra.mxu0 %v7598
        %7833 = vmatprep.subr.mxu0 %v7603
        %7834 = vmatpush1.msra.mxu0 %v7602
        %7835 = vmatprep.subr.mxu0 %v7607
        %7836 = vmatpush1.msra.mxu0 %v7606
        %7837 = vmatprep.subr.mxu0 %v7611
        %7838 = vmatpush1.msra.mxu0 %v7610
        %7839 = vmatprep.subr.mxu0 %v7615
        %7840 = vmatpush1.msra.mxu0 %v7614
        %7841 = vmatprep.subr.mxu0 %v7619
        %7842 = vmatpush1.msra.mxu0 %v7618
        %7843 = vmatprep.subr.mxu0 %v7623
        %7844 = vmatpush1.msra.mxu0 %v7622
        %7845 = vmatprep.subr.mxu0 %v7627
        %7846 = vmatpush1.msra.mxu0 %v7626
        %7847 = vmatprep.subr.mxu0 %v7631
        %7848 = vmatpush1.msra.mxu0 %v7630
        %7849 = vmatprep.subr.mxu0 %v7635
        %7850 = vmatpush1.msra.mxu0 %v7634
        %7851 = vmatprep.subr.mxu0 %v7639
        %7852 = vmatpush1.msra.mxu0 %v7638
        %7853 = vmatprep.subr.mxu0 %v7643
        %7854 = vmatpush1.msra.mxu0 %v7642
        %7855 = vmatprep.subr.mxu0 %v7647
        %7856 = vmatpush1.msra.mxu0 %v7646
        %7857 = vmatprep.subr.mxu0 %v7651
        %7858 = vmatpush1.msra.mxu0 %v7650
        %7859 = vmatprep.subr.mxu0 %v7655
        %7860 = vmatpush1.msra.mxu0 %v7654
        %7861 = vmatprep.subr.mxu0 %v7659
        %7862 = vmatpush1.msra.mxu0 %v7658
        %7863 = vmatprep.subr.mxu0 %v7663
        %7864 = vmatpush1.msra.mxu0 %v7662
        %7865 = vmatprep.subr.mxu0 %v7667
        %7866 = vmatpush1.msra.mxu0 %v7666
        %7867 = vmatprep.subr.mxu0 %v7671
        %7868 = vmatpush1.msra.mxu0 %v7670
        %7869 = vmatprep.subr.mxu0 %v7675
        %7870 = vmatpush1.msra.mxu0 %v7674
        %7871 = vmatprep.subr.mxu0 0.0
        %7872 = vmatpush1.msra.mxu0 0.0
        %7873 = vmatprep.subr.mxu0 0.0
        %7874 = vmatpush1.msra.mxu0 0.0
        %7875 = vmatprep.subr.mxu0 0.0
        %7876 = vmatpush1.msra.mxu0 0.0
        %7877 = vmatprep.subr.mxu0 0.0
        %7878 = vmatpush1.msra.mxu0 0.0
        %7879 = vmatprep.subr.mxu0 0.0
        %7880 = vmatpush1.msra.mxu0 0.0
        %7881 = vmatprep.subr.mxu0 0.0
        %7882 = vmatpush1.msra.mxu0 0.0
        %7883 = vmatprep.subr.mxu0 0.0
        %7884 = vmatpush1.msra.mxu0 0.0
        %7885 = vmatprep.subr.mxu0 0.0
        %7886 = vmatpush1.msra.mxu0 0.0
        %7887 = vmatprep.subr.mxu0 0.0
        %7888 = vmatpush1.msra.mxu0 0.0
        %7889 = vmatprep.subr.mxu0 0.0
        %7890 = vmatpush1.msra.mxu0 0.0
        %7891 = vmatprep.mubr.f32.mxu0 %v4496
        %7892 = vmatmul.mubr.f32.gmra.mrb[0].mxu0 %v4007
        %v7893 = vpop.f32.mrb[0].mxu0
        %v7894 = vadd.f32 %v7745, %v7893
        %v7895 = vpop.f32.mrb[0].mxu0
        %v7896 = vadd.f32 %v7747, %v7895
        %7897 = vmatprep.mubr.f32.mxu0 %v4499
        %7898 = vmatmul.mubr.f32.gmra.mrb[0].mxu0 %v4011
        %v7899 = vpop.f32.mrb[0].mxu0
        %v7900 = vadd.f32 %v7751, %v7899
        %v7901 = vpop.f32.mrb[0].mxu0
        %v7902 = vadd.f32 %v7753, %v7901
        %7903 = vmatprep.mubr.f32.mxu0 %v4502
        %7904 = vmatmul.mubr.f32.gmra.mrb[0].mxu0 %v4015
        %v7905 = vpop.f32.mrb[0].mxu0
        %v7906 = vadd.f32 %v7757, %v7905
        %v7907 = vpop.f32.mrb[0].mxu0
        %v7908 = vadd.f32 %v7759, %v7907
        %7909 = vmatprep.mubr.f32.mxu0 %v4505
        %7910 = vmatmul.mubr.f32.gmra.mrb[0].mxu0 %v4019
        %v7911 = vpop.f32.mrb[0].mxu0
        %v7912 = vadd.f32 %v7763, %v7911
        %v7913 = vpop.f32.mrb[0].mxu0
        %v7914 = vadd.f32 %v7765, %v7913
        %7915 = vmatprep.mubr.f32.mxu0 %v4508
        %7916 = vmatmul.mubr.f32.gmra.mrb[0].mxu0 %v4023
        %v7917 = vpop.f32.mrb[0].mxu0
        %v7918 = vadd.f32 %v7769, %v7917
        %v7919 = vpop.f32.mrb[0].mxu0
        %v7920 = vadd.f32 %v7771, %v7919
        %7921 = vmatprep.mubr.f32.mxu0 %v4511
        %7922 = vmatmul.mubr.f32.gmra.mrb[0].mxu0 %v4027
        %v7923 = vpop.f32.mrb[0].mxu0
        %v7924 = vadd.f32 %v7775, %v7923
        %v7925 = vpop.f32.mrb[0].mxu0
        %v7926 = vadd.f32 %v7777, %v7925
        %7927 = vmatprep.mubr.f32.mxu0 %v4514
        %7928 = vmatmul.mubr.f32.gmra.mrb[0].mxu0 %v4031
        %v7929 = vpop.f32.mrb[0].mxu0
        %v7930 = vadd.f32 %v7781, %v7929
        %v7931 = vpop.f32.mrb[0].mxu0
        %v7932 = vadd.f32 %v7783, %v7931
        %7933 = vmatprep.mubr.f32.mxu0 %v4517
        %7934 = vmatmul.mubr.f32.gmra.mrb[0].mxu0 %v4035
        %v7935 = vpop.f32.mrb[0].mxu0
        %v7936 = vadd.f32 %v7787, %v7935
        %v7937 = vpop.f32.mrb[0].mxu0
        %v7938 = vadd.f32 %v7789, %v7937
        %7939 = vmatprep.mubr.f32.mxu0 %v4520
        %7940 = vmatmul.mubr.f32.gmra.mrb[0].mxu0 %v4039
        %v7941 = vpop.f32.mrb[0].mxu0
        %v7942 = vadd.f32 %v7793, %v7941
        %v7943 = vpop.f32.mrb[0].mxu0
        %v7944 = vadd.f32 %v7795, %v7943
        %7945 = vmatprep.mubr.f32.mxu0 %v4523
        %7946 = vmatmul.mubr.f32.gmra.mrb[0].mxu0 %v4043
        %v7947 = vpop.f32.mrb[0].mxu0
        %v7948 = vadd.f32 %v7799, %v7947
        %v7949 = vpop.f32.mrb[0].mxu0
        %v7950 = vadd.f32 %v7801, %v7949
        %7951 = vmatprep.mubr.f32.mxu0 %v4526
        %7952 = vmatmul.mubr.f32.gmra.mrb[0].mxu0 %v4047
        %v7953 = vpop.f32.mrb[0].mxu0
        %v7954 = vadd.f32 %v7805, %v7953
        %v7955 = vpop.f32.mrb[0].mxu0
        %v7956 = vadd.f32 %v7807, %v7955
        %7957 = vmatprep.mubr.f32.mxu0 %v5938
        %7958 = vmatmul.mubr.f32.gmra.mrb[0].mxu0 %v4051
        %v7959 = vpop.f32.mrb[0].mxu0
        %v7960 = vadd.f32 %v7811, %v7959
        %v7961 = vpop.f32.mrb[0].mxu0
        %v7962 = vadd.f32 %v7813, %v7961
        %7963 = vmatprep.mubr.f32.mxu0 %v4487
        %7964 = vmatmul.mubr.f32.gmra.mrb[0].mxu0 0.0
        %v7965 = vpop.f32.mrb[0].mxu0
        %v7966 = vadd.f32 %v7817, %v7965
        %v7967 = vpop.f32.mrb[0].mxu0
        %v7968 = vadd.f32 %v7819, %v7967
        %7969 = vmatprep.mubr.f32.mxu0 %v4487
        %7970 = vmatmul.mubr.f32.gmra.mrb[0].mxu0 0.0
        %v7971 = vpop.f32.mrb[0].mxu0
        %v7972 = vadd.f32 %v7823, %v7971
        %v7973 = vpop.f32.mrb[0].mxu0
        %v7974 = vadd.f32 %v7825, %v7973
        %7975 = vdwg.mxu0
        %7976 = vmatprep.subr.mxu0 %v7465
        %7977 = vmatpush1.msra.mxu0 %v7464
        %7978 = vmatprep.subr.mxu0 %v7469
        %7979 = vmatpush1.msra.mxu0 %v7468
        %7980 = vmatprep.subr.mxu0 %v7473
        %7981 = vmatpush1.msra.mxu0 %v7472
        %7982 = vmatprep.subr.mxu0 %v7477
        %7983 = vmatpush1.msra.mxu0 %v7476
        %7984 = vmatprep.subr.mxu0 %v7481
        %7985 = vmatpush1.msra.mxu0 %v7480
        %7986 = vmatprep.subr.mxu0 %v7485
        %7987 = vmatpush1.msra.mxu0 %v7484
        %7988 = vmatprep.subr.mxu0 %v7489
        %7989 = vmatpush1.msra.mxu0 %v7488
        %7990 = vmatprep.subr.mxu0 %v7493
        %7991 = vmatpush1.msra.mxu0 %v7492
        %7992 = vmatprep.subr.mxu0 %v7497
        %7993 = vmatpush1.msra.mxu0 %v7496
        %7994 = vmatprep.subr.mxu0 %v7501
        %7995 = vmatpush1.msra.mxu0 %v7500
        %7996 = vmatprep.subr.mxu0 %v7505
        %7997 = vmatpush1.msra.mxu0 %v7504
        %7998 = vmatprep.subr.mxu0 %v7509
        %7999 = vmatpush1.msra.mxu0 %v7508
        %8000 = vmatprep.subr.mxu0 %v7513
        %8001 = vmatpush1.msra.mxu0 %v7512
        %8002 = vmatprep.subr.mxu0 %v7517
        %8003 = vmatpush1.msra.mxu0 %v7516
        %8004 = vmatprep.subr.mxu0 %v7521
        %8005 = vmatpush1.msra.mxu0 %v7520
        %8006 = vmatprep.subr.mxu0 %v7525
        %8007 = vmatpush1.msra.mxu0 %v7524
        %8008 = vmatprep.subr.mxu0 %v7529
        %8009 = vmatpush1.msra.mxu0 %v7528
        %8010 = vmatprep.subr.mxu0 %v7533
        %8011 = vmatpush1.msra.mxu0 %v7532
        %8012 = vmatprep.subr.mxu0 %v7537
        %8013 = vmatpush1.msra.mxu0 %v7536
        %8014 = vmatprep.subr.mxu0 %v7541
        %8015 = vmatpush1.msra.mxu0 %v7540
        %8016 = vmatprep.subr.mxu0 %v7545
        %8017 = vmatpush1.msra.mxu0 %v7544
        %8018 = vmatprep.subr.mxu0 %v7549
        %8019 = vmatpush1.msra.mxu0 %v7548
        %8020 = vmatprep.subr.mxu0 %v7553
        %8021 = vmatpush1.msra.mxu0 %v7552
        %8022 = vmatprep.subr.mxu0 %v7557
        %8023 = vmatpush1.msra.mxu0 %v7556
        %8024 = vmatprep.subr.mxu0 %v7561
        %8025 = vmatpush1.msra.mxu0 %v7560
        %8026 = vmatprep.subr.mxu0 %v7565
        %8027 = vmatpush1.msra.mxu0 %v7564
        %8028 = vmatprep.subr.mxu0 %v7569
        %8029 = vmatpush1.msra.mxu0 %v7568
        %8030 = vmatprep.subr.mxu0 %v7573
        %8031 = vmatpush1.msra.mxu0 %v7572
        %8032 = vmatprep.subr.mxu0 %v7577
        %8033 = vmatpush1.msra.mxu0 %v7576
        %8034 = vmatprep.subr.mxu0 %v7581
        %8035 = vmatpush1.msra.mxu0 %v7580
        %8036 = vmatprep.subr.mxu0 %v7585
        %8037 = vmatpush1.msra.mxu0 %v7584
        %8038 = vmatprep.subr.mxu0 %v7589
        %8039 = vmatpush1.msra.mxu0 %v7588
        %8040 = vmatprep.mubr.f32.mxu0 %v4006
        %8041 = vmatmul.mubr.f32.gmra.mrb[0].mxu0 %v4005
        %v8042 = vpop.f32.mrb[0].mxu0
        %v8043 = vadd.f32 0.0, %v8042
        %v8044 = vpop.f32.mrb[0].mxu0
        %v8045 = vadd.f32 0.0, %v8044
        %8046 = vmatprep.mubr.f32.mxu0 %v4010
        %8047 = vmatmul.mubr.f32.gmra.mrb[0].mxu0 %v4009
        %v8048 = vpop.f32.mrb[0].mxu0
        %v8049 = vadd.f32 0.0, %v8048
        %v8050 = vpop.f32.mrb[0].mxu0
        %v8051 = vadd.f32 0.0, %v8050
        %8052 = vmatprep.mubr.f32.mxu0 %v4014
        %8053 = vmatmul.mubr.f32.gmra.mrb[0].mxu0 %v4013
        %v8054 = vpop.f32.mrb[0].mxu0
        %v8055 = vadd.f32 0.0, %v8054
        %v8056 = vpop.f32.mrb[0].mxu0
        %v8057 = vadd.f32 0.0, %v8056
        %8058 = vmatprep.mubr.f32.mxu0 %v4018
        %8059 = vmatmul.mubr.f32.gmra.mrb[0].mxu0 %v4017
        %v8060 = vpop.f32.mrb[0].mxu0
        %v8061 = vadd.f32 0.0, %v8060
        %v8062 = vpop.f32.mrb[0].mxu0
        %v8063 = vadd.f32 0.0, %v8062
        %8064 = vmatprep.mubr.f32.mxu0 %v4022
        %8065 = vmatmul.mubr.f32.gmra.mrb[0].mxu0 %v4021
        %v8066 = vpop.f32.mrb[0].mxu0
        %v8067 = vadd.f32 0.0, %v8066
        %v8068 = vpop.f32.mrb[0].mxu0
        %v8069 = vadd.f32 0.0, %v8068
        %8070 = vmatprep.mubr.f32.mxu0 %v4026
        %8071 = vmatmul.mubr.f32.gmra.mrb[0].mxu0 %v4025
        %v8072 = vpop.f32.mrb[0].mxu0
        %v8073 = vadd.f32 0.0, %v8072
        %v8074 = vpop.f32.mrb[0].mxu0
        %v8075 = vadd.f32 0.0, %v8074
        %8076 = vmatprep.mubr.f32.mxu0 %v4030
        %8077 = vmatmul.mubr.f32.gmra.mrb[0].mxu0 %v4029
        %v8078 = vpop.f32.mrb[0].mxu0
        %v8079 = vadd.f32 0.0, %v8078
        %v8080 = vpop.f32.mrb[0].mxu0
        %v8081 = vadd.f32 0.0, %v8080
        %8082 = vmatprep.mubr.f32.mxu0 %v4034
        %8083 = vmatmul.mubr.f32.gmra.mrb[0].mxu0 %v4033
        %v8084 = vpop.f32.mrb[0].mxu0
        %v8085 = vadd.f32 0.0, %v8084
        %v8086 = vpop.f32.mrb[0].mxu0
        %v8087 = vadd.f32 0.0, %v8086
        %8088 = vmatprep.mubr.f32.mxu0 %v4038
        %8089 = vmatmul.mubr.f32.gmra.mrb[0].mxu0 %v4037
        %v8090 = vpop.f32.mrb[0].mxu0
        %v8091 = vadd.f32 0.0, %v8090
        %v8092 = vpop.f32.mrb[0].mxu0
        %v8093 = vadd.f32 0.0, %v8092
        %8094 = vmatprep.mubr.f32.mxu0 %v4042
        %8095 = vmatmul.mubr.f32.gmra.mrb[0].mxu0 %v4041
        %v8096 = vpop.f32.mrb[0].mxu0
        %v8097 = vadd.f32 0.0, %v8096
        %v8098 = vpop.f32.mrb[0].mxu0
        %v8099 = vadd.f32 0.0, %v8098
        %8100 = vmatprep.mubr.f32.mxu0 %v4046
        %8101 = vmatmul.mubr.f32.gmra.mrb[0].mxu0 %v4045
        %v8102 = vpop.f32.mrb[0].mxu0
        %v8103 = vadd.f32 0.0, %v8102
        %v8104 = vpop.f32.mrb[0].mxu0
        %v8105 = vadd.f32 0.0, %v8104
        %8106 = vmatprep.mubr.f32.mxu0 %v4050
        %8107 = vmatmul.mubr.f32.gmra.mrb[0].mxu0 %v4049
        %v8108 = vpop.f32.mrb[0].mxu0
        %v8109 = vadd.f32 0.0, %v8108
        %v8110 = vpop.f32.mrb[0].mxu0
        %v8111 = vadd.f32 0.0, %v8110
        %8112 = vmatprep.mubr.f32.mxu0 0.0
        %8113 = vmatmul.mubr.f32.gmra.mrb[0].mxu0 0.0
        %v8114 = vpop.f32.mrb[0].mxu0
        %v8115 = vadd.f32 0.0, %v8114
        %v8116 = vpop.f32.mrb[0].mxu0
        %v8117 = vadd.f32 0.0, %v8116
        %8118 = vmatprep.mubr.f32.mxu0 0.0
        %8119 = vmatmul.mubr.f32.gmra.mrb[0].mxu0 0.0
        %v8120 = vpop.f32.mrb[0].mxu0
        %v8121 = vadd.f32 0.0, %v8120
        %v8122 = vpop.f32.mrb[0].mxu0
        %v8123 = vadd.f32 0.0, %v8122
        %8124 = vdwg.mxu0
        %8125 = vmatprep.subr.mxu0 %v7593
        %8126 = vmatpush1.msra.mxu0 %v7592
        %8127 = vmatprep.subr.mxu0 %v7597
        %8128 = vmatpush1.msra.mxu0 %v7596
        %8129 = vmatprep.subr.mxu0 %v7601
        %8130 = vmatpush1.msra.mxu0 %v7600
        %8131 = vmatprep.subr.mxu0 %v7605
        %8132 = vmatpush1.msra.mxu0 %v7604
        %8133 = vmatprep.subr.mxu0 %v7609
        %8134 = vmatpush1.msra.mxu0 %v7608
        %8135 = vmatprep.subr.mxu0 %v7613
        %8136 = vmatpush1.msra.mxu0 %v7612
        %8137 = vmatprep.subr.mxu0 %v7617
        %8138 = vmatpush1.msra.mxu0 %v7616
        %8139 = vmatprep.subr.mxu0 %v7621
        %8140 = vmatpush1.msra.mxu0 %v7620
        %8141 = vmatprep.subr.mxu0 %v7625
        %8142 = vmatpush1.msra.mxu0 %v7624
        %8143 = vmatprep.subr.mxu0 %v7629
        %8144 = vmatpush1.msra.mxu0 %v7628
        %8145 = vmatprep.subr.mxu0 %v7633
        %8146 = vmatpush1.msra.mxu0 %v7632
        %8147 = vmatprep.subr.mxu0 %v7637
        %8148 = vmatpush1.msra.mxu0 %v7636
        %8149 = vmatprep.subr.mxu0 %v7641
        %8150 = vmatpush1.msra.mxu0 %v7640
        %8151 = vmatprep.subr.mxu0 %v7645
        %8152 = vmatpush1.msra.mxu0 %v7644
        %8153 = vmatprep.subr.mxu0 %v7649
        %8154 = vmatpush1.msra.mxu0 %v7648
        %8155 = vmatprep.subr.mxu0 %v7653
        %8156 = vmatpush1.msra.mxu0 %v7652
        %8157 = vmatprep.subr.mxu0 %v7657
        %8158 = vmatpush1.msra.mxu0 %v7656
        %8159 = vmatprep.subr.mxu0 %v7661
        %8160 = vmatpush1.msra.mxu0 %v7660
        %8161 = vmatprep.subr.mxu0 %v7665
        %8162 = vmatpush1.msra.mxu0 %v7664
        %8163 = vmatprep.subr.mxu0 %v7669
        %8164 = vmatpush1.msra.mxu0 %v7668
        %8165 = vmatprep.subr.mxu0 %v7673
        %8166 = vmatpush1.msra.mxu0 %v7672
        %8167 = vmatprep.subr.mxu0 %v7677
        %8168 = vmatpush1.msra.mxu0 %v7676
        %8169 = vmatprep.subr.mxu0 0.0
        %8170 = vmatpush1.msra.mxu0 0.0
        %8171 = vmatprep.subr.mxu0 0.0
        %8172 = vmatpush1.msra.mxu0 0.0
        %8173 = vmatprep.subr.mxu0 0.0
        %8174 = vmatpush1.msra.mxu0 0.0
        %8175 = vmatprep.subr.mxu0 0.0
        %8176 = vmatpush1.msra.mxu0 0.0
        %8177 = vmatprep.subr.mxu0 0.0
        %8178 = vmatpush1.msra.mxu0 0.0
        %8179 = vmatprep.subr.mxu0 0.0
        %8180 = vmatpush1.msra.mxu0 0.0
        %8181 = vmatprep.subr.mxu0 0.0
        %8182 = vmatpush1.msra.mxu0 0.0
        %8183 = vmatprep.subr.mxu0 0.0
        %8184 = vmatpush1.msra.mxu0 0.0
        %8185 = vmatprep.subr.mxu0 0.0
        %8186 = vmatpush1.msra.mxu0 0.0
        %8187 = vmatprep.subr.mxu0 0.0
        %8188 = vmatpush1.msra.mxu0 0.0
        %8189 = vmatprep.mubr.f32.mxu0 %v4496
        %8190 = vmatmul.mubr.f32.gmra.mrb[0].mxu0 %v4007
        %v8191 = vpop.f32.mrb[0].mxu0
        %v8192 = vadd.f32 %v8043, %v8191
        %v8193 = vpop.f32.mrb[0].mxu0
        %v8194 = vadd.f32 %v8045, %v8193
        %8195 = vmatprep.mubr.f32.mxu0 %v4499
        %8196 = vmatmul.mubr.f32.gmra.mrb[0].mxu0 %v4011
        %v8197 = vpop.f32.mrb[0].mxu0
        %v8198 = vadd.f32 %v8049, %v8197
        %v8199 = vpop.f32.mrb[0].mxu0
        %v8200 = vadd.f32 %v8051, %v8199
        %8201 = vmatprep.mubr.f32.mxu0 %v4502
        %8202 = vmatmul.mubr.f32.gmra.mrb[0].mxu0 %v4015
        %v8203 = vpop.f32.mrb[0].mxu0
        %v8204 = vadd.f32 %v8055, %v8203
        %v8205 = vpop.f32.mrb[0].mxu0
        %v8206 = vadd.f32 %v8057, %v8205
        %8207 = vmatprep.mubr.f32.mxu0 %v4505
        %8208 = vmatmul.mubr.f32.gmra.mrb[0].mxu0 %v4019
        %v8209 = vpop.f32.mrb[0].mxu0
        %v8210 = vadd.f32 %v8061, %v8209
        %v8211 = vpop.f32.mrb[0].mxu0
        %v8212 = vadd.f32 %v8063, %v8211
        %8213 = vmatprep.mubr.f32.mxu0 %v4508
        %8214 = vmatmul.mubr.f32.gmra.mrb[0].mxu0 %v4023
        %v8215 = vpop.f32.mrb[0].mxu0
        %v8216 = vadd.f32 %v8067, %v8215
        %v8217 = vpop.f32.mrb[0].mxu0
        %v8218 = vadd.f32 %v8069, %v8217
        %8219 = vmatprep.mubr.f32.mxu0 %v4511
        %8220 = vmatmul.mubr.f32.gmra.mrb[0].mxu0 %v4027
        %v8221 = vpop.f32.mrb[0].mxu0
        %v8222 = vadd.f32 %v8073, %v8221
        %v8223 = vpop.f32.mrb[0].mxu0
        %v8224 = vadd.f32 %v8075, %v8223
        %8225 = vmatprep.mubr.f32.mxu0 %v4514
        %8226 = vmatmul.mubr.f32.gmra.mrb[0].mxu0 %v4031
        %v8227 = vpop.f32.mrb[0].mxu0
        %v8228 = vadd.f32 %v8079, %v8227
        %v8229 = vpop.f32.mrb[0].mxu0
        %v8230 = vadd.f32 %v8081, %v8229
        %8231 = vmatprep.mubr.f32.mxu0 %v4517
        %8232 = vmatmul.mubr.f32.gmra.mrb[0].mxu0 %v4035
        %v8233 = vpop.f32.mrb[0].mxu0
        %v8234 = vadd.f32 %v8085, %v8233
        %v8235 = vpop.f32.mrb[0].mxu0
        %v8236 = vadd.f32 %v8087, %v8235
        %8237 = vmatprep.mubr.f32.mxu0 %v4520
        %8238 = vmatmul.mubr.f32.gmra.mrb[0].mxu0 %v4039
        %v8239 = vpop.f32.mrb[0].mxu0
        %v8240 = vadd.f32 %v8091, %v8239
        %v8241 = vpop.f32.mrb[0].mxu0
        %v8242 = vadd.f32 %v8093, %v8241
        %8243 = vmatprep.mubr.f32.mxu0 %v4523
        %8244 = vmatmul.mubr.f32.gmra.mrb[0].mxu0 %v4043
        %v8245 = vpop.f32.mrb[0].mxu0
        %v8246 = vadd.f32 %v8097, %v8245
        %v8247 = vpop.f32.mrb[0].mxu0
        %v8248 = vadd.f32 %v8099, %v8247
        %8249 = vmatprep.mubr.f32.mxu0 %v4526
        %8250 = vmatmul.mubr.f32.gmra.mrb[0].mxu0 %v4047
        %v8251 = vpop.f32.mrb[0].mxu0
        %v8252 = vadd.f32 %v8103, %v8251
        %v8253 = vpop.f32.mrb[0].mxu0
        %v8254 = vadd.f32 %v8105, %v8253
        %8255 = vmatprep.mubr.f32.mxu0 %v5938
        %8256 = vmatmul.mubr.f32.gmra.mrb[0].mxu0 %v4051
        %v8257 = vpop.f32.mrb[0].mxu0
        %v8258 = vadd.f32 %v8109, %v8257
        %v8259 = vpop.f32.mrb[0].mxu0
        %v8260 = vadd.f32 %v8111, %v8259
        %8261 = vmatprep.mubr.f32.mxu0 %v4487
        %8262 = vmatmul.mubr.f32.gmra.mrb[0].mxu0 0.0
        %v8263 = vpop.f32.mrb[0].mxu0
        %v8264 = vadd.f32 %v8115, %v8263
        %v8265 = vpop.f32.mrb[0].mxu0
        %v8266 = vadd.f32 %v8117, %v8265
        %8267 = vmatprep.mubr.f32.mxu0 %v4487
        %8268 = vmatmul.mubr.f32.gmra.mrb[0].mxu0 0.0
        %v8269 = vpop.f32.mrb[0].mxu0
        %v8270 = vadd.f32 %v8121, %v8269
        %v8271 = vpop.f32.mrb[0].mxu0
        %v8272 = vadd.f32 %v8123, %v8271
        %8273 = vdwg.mxu0
        %v8274 = vadd.f32 %v7405, %v7894
        %v8275 = vadd.f32 %v7406, %v7896
        %v8276 = vadd.f32 %v7407, %v8192
        %v8277 = vadd.f32 %v7408, %v8194
        %v8278 = vadd.f32 %v7409, %v7900
        %v8279 = vadd.f32 %v7410, %v7902
        %v8280 = vadd.f32 %v7411, %v8198
        %v8281 = vadd.f32 %v7412, %v8200
        %v8282 = vadd.f32 %v7413, %v7906
        %v8283 = vadd.f32 %v7414, %v7908
        %v8284 = vadd.f32 %v7415, %v8204
        %v8285 = vadd.f32 %v7416, %v8206
        %v8286 = vadd.f32 %v7417, %v7912
        %v8287 = vadd.f32 %v7418, %v7914
        %v8288 = vadd.f32 %v7419, %v8210
        %v8289 = vadd.f32 %v7420, %v8212
        %v8290 = vadd.f32 %v7421, %v7918
        %v8291 = vadd.f32 %v7422, %v7920
        %v8292 = vadd.f32 %v7423, %v8216
        %v8293 = vadd.f32 %v7424, %v8218
        %v8294 = vadd.f32 %v7425, %v7924
        %v8295 = vadd.f32 %v7426, %v7926
        %v8296 = vadd.f32 %v7427, %v8222
        %v8297 = vadd.f32 %v7428, %v8224
        %v8298 = vadd.f32 %v7429, %v7930
        %v8299 = vadd.f32 %v7430, %v7932
        %v8300 = vadd.f32 %v7431, %v8228
        %v8301 = vadd.f32 %v7432, %v8230
        %v8302 = vadd.f32 %v7433, %v7936
        %v8303 = vadd.f32 %v7434, %v7938
        %v8304 = vadd.f32 %v7435, %v8234
        %v8305 = vadd.f32 %v7436, %v8236
        %v8306 = vadd.f32 %v7437, %v7942
        %v8307 = vadd.f32 %v7438, %v7944
        %v8308 = vadd.f32 %v7439, %v8240
        %v8309 = vadd.f32 %v7440, %v8242
        %v8310 = vadd.f32 %v7441, %v7948
        %v8311 = vadd.f32 %v7442, %v7950
        %v8312 = vadd.f32 %v7443, %v8246
        %v8313 = vadd.f32 %v7444, %v8248
        %v8314 = vadd.f32 %v7445, %v7954
        %v8315 = vadd.f32 %v7446, %v7956
        %v8316 = vadd.f32 %v7447, %v8252
        %v8317 = vadd.f32 %v7448, %v8254
        %v8318 = vadd.f32 %v7449, %v7960
        %v8319 = vadd.f32 %v7450, %v7962
        %v8320 = vadd.f32 %v7451, %v8258
        %v8321 = vadd.f32 %v7452, %v8260
        %v8322 = vadd.f32 %v7453, %v7966
        %v8323 = vadd.f32 %v7454, %v7968
        %v8324 = vadd.f32 %v7455, %v8264
        %v8325 = vadd.f32 %v7456, %v8266
        %v8326 = vadd.f32 %v7457, %v7972
        %v8327 = vadd.f32 %v7458, %v7974
        %v8328 = vadd.f32 %v7459, %v8270
        %v8329 = vadd.f32 %v7460, %v8272
        %v8330 = vld [vmem:[#allocation9] sm:$0xf]
        %v8332 = vlaneseq
        %v8333 = vshrl.u32 %v8332, 7
        %v8334 = vsub.s32 0, %v8333
        %v8335 = vrot.slane %v8330, %v8334
        %v8336 = vlaneseq
        %v8337 = vshrl.u32 %v8336, 7
        %v8338 = vsub.s32 1, %v8337
        %v8339 = vrot.slane %v8330, %v8338
        %v8340 = vlaneseq
        %v8341 = vshrl.u32 %v8340, 7
        %v8342 = vsub.s32 2, %v8341
        %v8343 = vrot.slane %v8330, %v8342
        %v8344 = vlaneseq
        %v8345 = vshrl.u32 %v8344, 7
        %v8346 = vsub.s32 3, %v8345
        %v8347 = vrot.slane %v8330, %v8346
        %v8352 = vadd.f32 %v8274, %v8335
        %v8353 = vadd.f32 %v8275, %v8339
        %v8354 = vadd.f32 %v8276, %v8343
        %v8355 = vadd.f32 %v8277, %v8347
        %v8356 = vadd.f32 %v8278, %v8335
        %v8357 = vadd.f32 %v8279, %v8339
        %v8358 = vadd.f32 %v8280, %v8343
        %v8359 = vadd.f32 %v8281, %v8347
        %v8360 = vadd.f32 %v8282, %v8335
        %v8361 = vadd.f32 %v8283, %v8339
        %v8362 = vadd.f32 %v8284, %v8343
        %v8363 = vadd.f32 %v8285, %v8347
        %v8364 = vadd.f32 %v8286, %v8335
        %v8365 = vadd.f32 %v8287, %v8339
        %v8366 = vadd.f32 %v8288, %v8343
        %v8367 = vadd.f32 %v8289, %v8347
        %v8368 = vadd.f32 %v8290, %v8335
        %v8369 = vadd.f32 %v8291, %v8339
        %v8370 = vadd.f32 %v8292, %v8343
        %v8371 = vadd.f32 %v8293, %v8347
        %v8372 = vadd.f32 %v8294, %v8335
        %v8373 = vadd.f32 %v8295, %v8339
        %v8374 = vadd.f32 %v8296, %v8343
        %v8375 = vadd.f32 %v8297, %v8347
        %v8376 = vadd.f32 %v8298, %v8335
        %v8377 = vadd.f32 %v8299, %v8339
        %v8378 = vadd.f32 %v8300, %v8343
        %v8379 = vadd.f32 %v8301, %v8347
        %v8380 = vadd.f32 %v8302, %v8335
        %v8381 = vadd.f32 %v8303, %v8339
        %v8382 = vadd.f32 %v8304, %v8343
        %v8383 = vadd.f32 %v8305, %v8347
        %v8384 = vadd.f32 %v8306, %v8335
        %v8385 = vadd.f32 %v8307, %v8339
        %v8386 = vadd.f32 %v8308, %v8343
        %v8387 = vadd.f32 %v8309, %v8347
        %v8388 = vadd.f32 %v8310, %v8335
        %v8389 = vadd.f32 %v8311, %v8339
        %v8390 = vadd.f32 %v8312, %v8343
        %v8391 = vadd.f32 %v8313, %v8347
        %v8392 = vadd.f32 %v8314, %v8335
        %v8393 = vadd.f32 %v8315, %v8339
        %v8394 = vadd.f32 %v8316, %v8343
        %v8395 = vadd.f32 %v8317, %v8347
        %v8396 = vadd.f32 %v8318, %v8335
        %v8397 = vadd.f32 %v8319, %v8339
        %v8398 = vadd.f32 %v8320, %v8343
        %v8399 = vadd.f32 %v8321, %v8347
        %v8400 = vadd.f32 %v8322, %v8335
        %v8401 = vadd.f32 %v8323, %v8339
        %v8402 = vadd.f32 %v8324, %v8343
        %v8403 = vadd.f32 %v8325, %v8347
        %v8404 = vadd.f32 %v8326, %v8335
        %v8405 = vadd.f32 %v8327, %v8339
        %v8406 = vadd.f32 %v8328, %v8343
        %v8407 = vadd.f32 %v8329, %v8347
        %v8408 = vmax.f32 %v8352, 0.0
        %v8409 = vmax.f32 %v8353, 0.0
        %v8410 = vmax.f32 %v8354, 0.0
        %v8411 = vmax.f32 %v8355, 0.0
        %v8412 = vmax.f32 %v8356, 0.0
        %v8413 = vmax.f32 %v8357, 0.0
        %v8414 = vmax.f32 %v8358, 0.0
        %v8415 = vmax.f32 %v8359, 0.0
        %v8416 = vmax.f32 %v8360, 0.0
        %v8417 = vmax.f32 %v8361, 0.0
        %v8418 = vmax.f32 %v8362, 0.0
        %v8419 = vmax.f32 %v8363, 0.0
        %v8420 = vmax.f32 %v8364, 0.0
        %v8421 = vmax.f32 %v8365, 0.0
        %v8422 = vmax.f32 %v8366, 0.0
        %v8423 = vmax.f32 %v8367, 0.0
        %v8424 = vmax.f32 %v8368, 0.0
        %v8425 = vmax.f32 %v8369, 0.0
        %v8426 = vmax.f32 %v8370, 0.0
        %v8427 = vmax.f32 %v8371, 0.0
        %v8428 = vmax.f32 %v8372, 0.0
        %v8429 = vmax.f32 %v8373, 0.0
        %v8430 = vmax.f32 %v8374, 0.0
        %v8431 = vmax.f32 %v8375, 0.0
        %v8432 = vmax.f32 %v8376, 0.0
        %v8433 = vmax.f32 %v8377, 0.0
        %v8434 = vmax.f32 %v8378, 0.0
        %v8435 = vmax.f32 %v8379, 0.0
        %v8436 = vmax.f32 %v8380, 0.0
        %v8437 = vmax.f32 %v8381, 0.0
        %v8438 = vmax.f32 %v8382, 0.0
        %v8439 = vmax.f32 %v8383, 0.0
        %v8440 = vmax.f32 %v8384, 0.0
        %v8441 = vmax.f32 %v8385, 0.0
        %v8442 = vmax.f32 %v8386, 0.0
        %v8443 = vmax.f32 %v8387, 0.0
        %v8444 = vmax.f32 %v8388, 0.0
        %v8445 = vmax.f32 %v8389, 0.0
        %v8446 = vmax.f32 %v8390, 0.0
        %v8447 = vmax.f32 %v8391, 0.0
        %v8448 = vmax.f32 %v8392, 0.0
        %v8449 = vmax.f32 %v8393, 0.0
        %v8450 = vmax.f32 %v8394, 0.0
        %v8451 = vmax.f32 %v8395, 0.0
        %v8452 = vmax.f32 %v8396, 0.0
        %v8453 = vmax.f32 %v8397, 0.0
        %v8454 = vmax.f32 %v8398, 0.0
        %v8455 = vmax.f32 %v8399, 0.0
        %v8456 = vmax.f32 %v8400, 0.0
        %v8457 = vmax.f32 %v8401, 0.0
        %v8458 = vmax.f32 %v8402, 0.0
        %v8459 = vmax.f32 %v8403, 0.0
        %v8460 = vmax.f32 %v8404, 0.0
        %v8461 = vmax.f32 %v8405, 0.0
        %v8462 = vmax.f32 %v8406, 0.0
        %v8463 = vmax.f32 %v8407, 0.0
        %v8464 = vmax.f32 %v8408, %v8412
        %v8465 = vmax.f32 %v8409, %v8413
        %v8466 = vmax.f32 %v8410, %v8414
        %v8467 = vmax.f32 %v8411, %v8415
        %v8468 = vmax.f32 %v8416, %v8420
        %v8469 = vmax.f32 %v8417, %v8421
        %v8470 = vmax.f32 %v8418, %v8422
        %v8471 = vmax.f32 %v8419, %v8423
        %v8472 = vmax.f32 %v8424, %v8428
        %v8473 = vmax.f32 %v8425, %v8429
        %v8474 = vmax.f32 %v8426, %v8430
        %v8475 = vmax.f32 %v8427, %v8431
        %v8476 = vmax.f32 %v8432, %v8436
        %v8477 = vmax.f32 %v8433, %v8437
        %v8478 = vmax.f32 %v8434, %v8438
        %v8479 = vmax.f32 %v8435, %v8439
        %v8480 = vmax.f32 %v8440, %v8444
        %v8481 = vmax.f32 %v8441, %v8445
        %v8482 = vmax.f32 %v8442, %v8446
        %v8483 = vmax.f32 %v8443, %v8447
        %v8484 = vmax.f32 %v8448, %v8452
        %v8485 = vmax.f32 %v8449, %v8453
        %v8486 = vmax.f32 %v8450, %v8454
        %v8487 = vmax.f32 %v8451, %v8455
        %v8488 = vmax.f32 %v8456, %v8460
        %v8489 = vmax.f32 %v8457, %v8461
        %v8490 = vmax.f32 %v8458, %v8462
        %v8491 = vmax.f32 %v8459, %v8463
        %8520 = vrot.lane.b32.xlu0 %v8464, 96
        %v8521 = vpop.permute.xlu0 %8520
        %8522 = vrot.lane.b32.xlu0 %v8465, 96
        %v8523 = vpop.permute.xlu0 %8522
        %8524 = vrot.lane.b32.xlu0 %v8466, 96
        %v8525 = vpop.permute.xlu0 %8524
        %8526 = vrot.lane.b32.xlu0 %v8467, 96
        %v8527 = vpop.permute.xlu0 %8526
        %8528 = vrot.lane.b32.xlu0 %v8468, 96
        %v8529 = vpop.permute.xlu0 %8528
        %8530 = vrot.lane.b32.xlu0 %v8469, 96
        %v8531 = vpop.permute.xlu0 %8530
        %8532 = vrot.lane.b32.xlu0 %v8470, 96
        %v8533 = vpop.permute.xlu0 %8532
        %8534 = vrot.lane.b32.xlu0 %v8471, 96
        %v8535 = vpop.permute.xlu0 %8534
        %8536 = vrot.lane.b32.xlu0 %v8472, 96
        %v8537 = vpop.permute.xlu0 %8536
        %8538 = vrot.lane.b32.xlu0 %v8473, 96
        %v8539 = vpop.permute.xlu0 %8538
        %8540 = vrot.lane.b32.xlu0 %v8474, 96
        %v8541 = vpop.permute.xlu0 %8540
        %8542 = vrot.lane.b32.xlu0 %v8475, 96
        %v8543 = vpop.permute.xlu0 %8542
        %8544 = vrot.lane.b32.xlu0 %v8476, 96
        %v8545 = vpop.permute.xlu0 %8544
        %8546 = vrot.lane.b32.xlu0 %v8477, 96
        %v8547 = vpop.permute.xlu0 %8546
        %8548 = vrot.lane.b32.xlu0 %v8478, 96
        %v8549 = vpop.permute.xlu0 %8548
        %8550 = vrot.lane.b32.xlu0 %v8479, 96
        %v8551 = vpop.permute.xlu0 %8550
        %8552 = vrot.lane.b32.xlu0 %v8480, 96
        %v8553 = vpop.permute.xlu0 %8552
        %8554 = vrot.lane.b32.xlu0 %v8481, 96
        %v8555 = vpop.permute.xlu0 %8554
        %8556 = vrot.lane.b32.xlu0 %v8482, 96
        %v8557 = vpop.permute.xlu0 %8556
        %8558 = vrot.lane.b32.xlu0 %v8483, 96
        %v8559 = vpop.permute.xlu0 %8558
        %8560 = vrot.lane.b32.xlu0 %v8484, 96
        %v8561 = vpop.permute.xlu0 %8560
        %8562 = vrot.lane.b32.xlu0 %v8485, 96
        %v8563 = vpop.permute.xlu0 %8562
        %8564 = vrot.lane.b32.xlu0 %v8486, 96
        %v8565 = vpop.permute.xlu0 %8564
        %8566 = vrot.lane.b32.xlu0 %v8487, 96
        %v8567 = vpop.permute.xlu0 %8566
        %8568 = vrot.lane.b32.xlu0 %v8488, 96
        %v8569 = vpop.permute.xlu0 %8568
        %8570 = vrot.lane.b32.xlu0 %v8489, 96
        %v8571 = vpop.permute.xlu0 %8570
        %8572 = vrot.lane.b32.xlu0 %v8490, 96
        %v8573 = vpop.permute.xlu0 %8572
        %8574 = vrot.lane.b32.xlu0 %v8491, 96
        %v8575 = vpop.permute.xlu0 %8574
        %vm8576 = vcmask 785408
        %v8577 = vsel %vm8576, %v8521, %v8523
        %v8578 = vsel %vm8576, %v8523, %v8525
        %v8579 = vsel %vm8576, %v8525, %v8527
        %v8580 = vsel %vm8576, %v8529, %v8531
        %v8581 = vsel %vm8576, %v8531, %v8533
        %v8582 = vsel %vm8576, %v8533, %v8535
        %v8583 = vsel %vm8576, %v8537, %v8539
        %v8584 = vsel %vm8576, %v8539, %v8541
        %v8585 = vsel %vm8576, %v8541, %v8543
        %v8586 = vsel %vm8576, %v8545, %v8547
        %v8587 = vsel %vm8576, %v8547, %v8549
        %v8588 = vsel %vm8576, %v8549, %v8551
        %v8589 = vsel %vm8576, %v8553, %v8555
        %v8590 = vsel %vm8576, %v8555, %v8557
        %v8591 = vsel %vm8576, %v8557, %v8559
        %v8592 = vsel %vm8576, %v8561, %v8563
        %v8593 = vsel %vm8576, %v8563, %v8565
        %v8594 = vsel %vm8576, %v8565, %v8567
        %v8595 = vsel %vm8576, %v8569, %v8571
        %v8596 = vsel %vm8576, %v8571, %v8573
        %v8597 = vsel %vm8576, %v8573, %v8575
        %v8626 = vmax.f32 %v8464, %v8577
        %v8627 = vmax.f32 %v8465, %v8578
        %v8628 = vmax.f32 %v8466, %v8579
        %v8629 = vmax.f32 %v8467, %v8527
        %v8630 = vmax.f32 %v8468, %v8580
        %v8631 = vmax.f32 %v8469, %v8581
        %v8632 = vmax.f32 %v8470, %v8582
        %v8633 = vmax.f32 %v8471, %v8535
        %v8634 = vmax.f32 %v8472, %v8583
        %v8635 = vmax.f32 %v8473, %v8584
        %v8636 = vmax.f32 %v8474, %v8585
        %v8637 = vmax.f32 %v8475, %v8543
        %v8638 = vmax.f32 %v8476, %v8586
        %v8639 = vmax.f32 %v8477, %v8587
        %v8640 = vmax.f32 %v8478, %v8588
        %v8641 = vmax.f32 %v8479, %v8551
        %v8642 = vmax.f32 %v8480, %v8589
        %v8643 = vmax.f32 %v8481, %v8590
        %v8644 = vmax.f32 %v8482, %v8591
        %v8645 = vmax.f32 %v8483, %v8559
        %v8646 = vmax.f32 %v8484, %v8592
        %v8647 = vmax.f32 %v8485, %v8593
        %v8648 = vmax.f32 %v8486, %v8594
        %v8649 = vmax.f32 %v8487, %v8567
        %v8650 = vmax.f32 %v8488, %v8595
        %v8651 = vmax.f32 %v8489, %v8596
        %v8652 = vmax.f32 %v8490, %v8597
        %v8653 = vmax.f32 %v8491, %v8575
        %v8654 = vld [vmem:[#allocation11] sm:$0xff]
        %v8655 = vld [vmem:[#allocation11 + $0x8] sm:$0xff]
        %v8656 = vld [vmem:[#allocation11 + $0x10] sm:$0xff]
        %v8657 = vld [vmem:[#allocation11 + $0x18] sm:$0xff]
        %v8658 = vld [vmem:[#allocation11 + $0x20] sm:$0xff]
        %v8659 = vld [vmem:[#allocation11 + $0x28] sm:$0xff]
        %v8660 = vld [vmem:[#allocation11 + $0x30] sm:$0xff]
        %v8661 = vld [vmem:[#allocation11 + $0x38] sm:$0xff]
        %v8662 = vld [vmem:[#allocation11 + $0x40] sm:$0xff]
        %v8663 = vld [vmem:[#allocation11 + $0x48] sm:$0xff]
        %v8664 = vld [vmem:[#allocation11 + $0x50] sm:$0xff]
        %v8665 = vld [vmem:[#allocation11 + $0x58] sm:$0xff]
        %v8666 = vld [vmem:[#allocation11 + $0x60] sm:$0xff]
        %v8667 = vld [vmem:[#allocation11 + $0x68] sm:$0xff]
        %v8668 = vld [vmem:[#allocation11 + $0x70] sm:$0xff]
        %v8669 = vld [vmem:[#allocation11 + $0x78] sm:$0xff]
        %v8670 = vld [vmem:[#allocation11 + $0x80] sm:$0xff]
        %v8671 = vld [vmem:[#allocation11 + $0x88] sm:$0xff]
        %v8672 = vld [vmem:[#allocation11 + $0x90] sm:$0xff]
        %v8673 = vld [vmem:[#allocation11 + $0x98] sm:$0xff]
        %v8674 = vld [vmem:[#allocation11 + $0xa0] sm:$0xff]
        %v8675 = vld [vmem:[#allocation11 + $0xa8] sm:$0xff]
        %v8676 = vld [vmem:[#allocation11 + $0xb0] sm:$0xff]
        %v8677 = vld [vmem:[#allocation11 + $0xb8] sm:$0xff]
        %v8678 = vld [vmem:[#allocation11 + $0xc0] sm:$0xff]
        %v8679 = vld [vmem:[#allocation11 + $0xc8] sm:$0xff]
        %v8680 = vld [vmem:[#allocation11 + $0xd0] sm:$0xff]
        %v8681 = vld [vmem:[#allocation11 + $0xd8] sm:$0xff]
        %v8682 = vld [vmem:[#allocation11 + $0xe0] sm:$0xff]
        %v8683 = vld [vmem:[#allocation11 + $0xe8] sm:$0xff]
        %v8684 = vld [vmem:[#allocation11 + $0xf0] sm:$0xff]
        %v8685 = vld [vmem:[#allocation11 + $0xf8] sm:$0xff]
        %v8686 = vld [vmem:[#allocation11 + $0x100] sm:$0xff]
        %v8687 = vld [vmem:[#allocation11 + $0x108] sm:$0xff]
        %v8688 = vld [vmem:[#allocation11 + $0x110] sm:$0xff]
        %v8689 = vld [vmem:[#allocation11 + $0x118] sm:$0xff]
        %v8690 = vld [vmem:[#allocation11 + $0x120] sm:$0xff]
        %v8691 = vld [vmem:[#allocation11 + $0x128] sm:$0xff]
        %v8692 = vld [vmem:[#allocation11 + $0x130] sm:$0xff]
        %v8693 = vld [vmem:[#allocation11 + $0x138] sm:$0xff]
        %v8694 = vld [vmem:[#allocation11 + $0x140] sm:$0xff]
        %v8695 = vld [vmem:[#allocation11 + $0x148] sm:$0xff]
        %v8696 = vld [vmem:[#allocation11 + $0x150] sm:$0xff]
        %v8697 = vld [vmem:[#allocation11 + $0x158] sm:$0xff]
        %v8698 = vld [vmem:[#allocation11 + $0x160] sm:$0xff]
        %v8699 = vld [vmem:[#allocation11 + $0x168] sm:$0xff]
        %v8700 = vld [vmem:[#allocation11 + $0x170] sm:$0xff]
        %v8701 = vld [vmem:[#allocation11 + $0x178] sm:$0xff]
        %v8702 = vld [vmem:[#allocation11 + $0x180] sm:$0xff]
        %v8703 = vld [vmem:[#allocation11 + $0x188] sm:$0xff]
        %v8704 = vld [vmem:[#allocation11 + $0x190] sm:$0xff]
        %v8705 = vld [vmem:[#allocation11 + $0x198] sm:$0xff]
        %s8706 = scalar_lea.vmem [#allocation11], 416
        %v8707 = vld [vmem:[%s8706] sm:$0xff]
        %v8708 = vld [vmem:[%s8706 + $0x8] sm:$0xff]
        %v8709 = vld [vmem:[%s8706 + $0x10] sm:$0xff]
        %v8710 = vld [vmem:[%s8706 + $0x18] sm:$0xff]
        %v8711 = vld [vmem:[%s8706 + $0x20] sm:$0xff]
        %v8712 = vld [vmem:[%s8706 + $0x28] sm:$0xff]
        %v8713 = vld [vmem:[%s8706 + $0x30] sm:$0xff]
        %v8714 = vld [vmem:[%s8706 + $0x38] sm:$0xff]
        %v8715 = vld [vmem:[%s8706 + $0x40] sm:$0xff]
        %v8716 = vld [vmem:[%s8706 + $0x48] sm:$0xff]
        %v8717 = vld [vmem:[%s8706 + $0x50] sm:$0xff]
        %v8718 = vld [vmem:[%s8706 + $0x58] sm:$0xff]
        %v8719 = vld [vmem:[%s8706 + $0x60] sm:$0xff]
        %v8720 = vld [vmem:[%s8706 + $0x68] sm:$0xff]
        %v8721 = vld [vmem:[%s8706 + $0x70] sm:$0xff]
        %v8722 = vld [vmem:[%s8706 + $0x78] sm:$0xff]
        %v8723 = vld [vmem:[%s8706 + $0x80] sm:$0xff]
        %v8724 = vld [vmem:[%s8706 + $0x88] sm:$0xff]
        %v8725 = vld [vmem:[%s8706 + $0x90] sm:$0xff]
        %v8726 = vld [vmem:[%s8706 + $0x98] sm:$0xff]
        %v8727 = vld [vmem:[%s8706 + $0xa0] sm:$0xff]
        %v8728 = vld [vmem:[%s8706 + $0xa8] sm:$0xff]
        %v8729 = vld [vmem:[%s8706 + $0xb0] sm:$0xff]
        %v8730 = vld [vmem:[%s8706 + $0xb8] sm:$0xff]
        %v8731 = vld [vmem:[%s8706 + $0xc0] sm:$0xff]
        %v8732 = vld [vmem:[%s8706 + $0xc8] sm:$0xff]
        %v8733 = vld [vmem:[%s8706 + $0xd0] sm:$0xff]
        %v8734 = vld [vmem:[%s8706 + $0xd8] sm:$0xff]
        %v8735 = vld [vmem:[%s8706 + $0xe0] sm:$0xff]
        %v8736 = vld [vmem:[%s8706 + $0xe8] sm:$0xff]
        %v8737 = vld [vmem:[%s8706 + $0xf0] sm:$0xff]
        %v8738 = vld [vmem:[%s8706 + $0xf8] sm:$0xff]
        %v8739 = vld [vmem:[%s8706 + $0x100] sm:$0xff]
        %v8740 = vld [vmem:[%s8706 + $0x108] sm:$0xff]
        %v8741 = vld [vmem:[%s8706 + $0x110] sm:$0xff]
        %v8742 = vld [vmem:[%s8706 + $0x118] sm:$0xff]
        %v8743 = vld [vmem:[%s8706 + $0x120] sm:$0xff]
        %v8744 = vld [vmem:[%s8706 + $0x128] sm:$0xff]
        %v8745 = vld [vmem:[%s8706 + $0x130] sm:$0xff]
        %v8746 = vld [vmem:[%s8706 + $0x138] sm:$0xff]
        %v8747 = vld [vmem:[%s8706 + $0x140] sm:$0xff]
        %v8748 = vld [vmem:[%s8706 + $0x148] sm:$0xff]
        %v8749 = vld [vmem:[%s8706 + $0x150] sm:$0xff]
        %v8750 = vld [vmem:[%s8706 + $0x158] sm:$0xff]
        %v8751 = vld [vmem:[%s8706 + $0x160] sm:$0xff]
        %v8752 = vld [vmem:[%s8706 + $0x168] sm:$0xff]
        %v8753 = vld [vmem:[%s8706 + $0x170] sm:$0xff]
        %v8754 = vld [vmem:[%s8706 + $0x178] sm:$0xff]
        %v8755 = vld [vmem:[%s8706 + $0x180] sm:$0xff]
        %v8756 = vld [vmem:[%s8706 + $0x188] sm:$0xff]
        %v8757 = vld [vmem:[%s8706 + $0x190] sm:$0xff]
        %v8758 = vld [vmem:[%s8706 + $0x198] sm:$0xff]
        %vm8759 = vcmask 261120
        %v8761 = vsel %vm8759, %v8633, 0
        %8763 = vmatprep.subr.mxu0 0.0
        %8764 = vmatpush1.msra.mxu0 %v8707
        %8765 = vmatprep.subr.mxu0 0.0
        %8766 = vmatpush1.msra.mxu0 %v8708
        %8767 = vmatprep.subr.mxu0 0.0
        %8768 = vmatpush1.msra.mxu0 %v8709
        %8769 = vmatprep.subr.mxu0 0.0
        %8770 = vmatpush1.msra.mxu0 %v8710
        %8771 = vmatprep.subr.mxu0 0.0
        %8772 = vmatpush1.msra.mxu0 %v8711
        %8773 = vmatprep.subr.mxu0 0.0
        %8774 = vmatpush1.msra.mxu0 %v8712
        %8775 = vmatprep.subr.mxu0 0.0
        %8776 = vmatpush1.msra.mxu0 %v8713
        %8777 = vmatprep.subr.mxu0 0.0
        %8778 = vmatpush1.msra.mxu0 %v8714
        %8779 = vmatprep.subr.mxu0 0.0
        %8780 = vmatpush1.msra.mxu0 %v8715
        %8781 = vmatprep.subr.mxu0 0.0
        %8782 = vmatpush1.msra.mxu0 %v8716
        %8783 = vmatprep.subr.mxu0 0.0
        %8784 = vmatpush1.msra.mxu0 %v8717
        %8785 = vmatprep.subr.mxu0 0.0
        %8786 = vmatpush1.msra.mxu0 %v8718
        %8787 = vmatprep.subr.mxu0 0.0
        %8788 = vmatpush1.msra.mxu0 %v8719
        %8789 = vmatprep.subr.mxu0 0.0
        %8790 = vmatpush1.msra.mxu0 %v8720
        %8791 = vmatprep.subr.mxu0 0.0
        %8792 = vmatpush1.msra.mxu0 %v8721
        %8793 = vmatprep.subr.mxu0 0.0
        %8794 = vmatpush1.msra.mxu0 %v8722
        %8795 = vmatprep.subr.mxu0 0.0
        %8796 = vmatpush1.msra.mxu0 %v8723
        %8797 = vmatprep.subr.mxu0 0.0
        %8798 = vmatpush1.msra.mxu0 %v8724
        %8799 = vmatprep.subr.mxu0 0.0
        %8800 = vmatpush1.msra.mxu0 %v8725
        %8801 = vmatprep.subr.mxu0 0.0
        %8802 = vmatpush1.msra.mxu0 %v8726
        %8803 = vmatprep.subr.mxu0 0.0
        %8804 = vmatpush1.msra.mxu0 %v8727
        %8805 = vmatprep.subr.mxu0 0.0
        %8806 = vmatpush1.msra.mxu0 %v8728
        %8807 = vmatprep.subr.mxu0 0.0
        %8808 = vmatpush1.msra.mxu0 %v8729
        %8809 = vmatprep.subr.mxu0 0.0
        %8810 = vmatpush1.msra.mxu0 %v8730
        %8811 = vmatprep.subr.mxu0 0.0
        %8812 = vmatpush1.msra.mxu0 %v8731
        %8813 = vmatprep.subr.mxu0 0.0
        %8814 = vmatpush1.msra.mxu0 %v8732
        %8815 = vmatprep.subr.mxu0 0.0
        %8816 = vmatpush1.msra.mxu0 %v8733
        %8817 = vmatprep.subr.mxu0 0.0
        %8818 = vmatpush1.msra.mxu0 %v8734
        %8819 = vmatprep.subr.mxu0 0.0
        %8820 = vmatpush1.msra.mxu0 %v8735
        %8821 = vmatprep.subr.mxu0 0.0
        %8822 = vmatpush1.msra.mxu0 %v8736
        %8823 = vmatprep.subr.mxu0 0.0
        %8824 = vmatpush1.msra.mxu0 %v8737
        %8825 = vmatprep.subr.mxu0 0.0
        %8826 = vmatpush1.msra.mxu0 %v8738
        %8827 = vmatprep.mubr.f32.mxu0 %v8631
        %8828 = vmatmul.mubr.f32.gmra.mrb[0].mxu0 %v8630
        %v8829 = vpop.f32.mrb[0].mxu0
        %v8830 = vadd.f32 0.0, %v8829
        %v8831 = vpop.f32.mrb[0].mxu0
        %8832 = vdwg.mxu0
        %8833 = vmatprep.subr.mxu0 0.0
        %8834 = vmatpush1.msra.mxu0 %v8739
        %8835 = vmatprep.subr.mxu0 0.0
        %8836 = vmatpush1.msra.mxu0 %v8740
        %8837 = vmatprep.subr.mxu0 0.0
        %8838 = vmatpush1.msra.mxu0 %v8741
        %8839 = vmatprep.subr.mxu0 0.0
        %8840 = vmatpush1.msra.mxu0 %v8742
        %8841 = vmatprep.subr.mxu0 0.0
        %8842 = vmatpush1.msra.mxu0 %v8743
        %8843 = vmatprep.subr.mxu0 0.0
        %8844 = vmatpush1.msra.mxu0 %v8744
        %8845 = vmatprep.subr.mxu0 0.0
        %8846 = vmatpush1.msra.mxu0 %v8745
        %8847 = vmatprep.subr.mxu0 0.0
        %8848 = vmatpush1.msra.mxu0 %v8746
        %8849 = vmatprep.subr.mxu0 0.0
        %8850 = vmatpush1.msra.mxu0 %v8747
        %8851 = vmatprep.subr.mxu0 0.0
        %8852 = vmatpush1.msra.mxu0 %v8748
        %8853 = vmatprep.subr.mxu0 0.0
        %8854 = vmatpush1.msra.mxu0 %v8749
        %8855 = vmatprep.subr.mxu0 0.0
        %8856 = vmatpush1.msra.mxu0 %v8750
        %8857 = vmatprep.subr.mxu0 0.0
        %8858 = vmatpush1.msra.mxu0 %v8751
        %8859 = vmatprep.subr.mxu0 0.0
        %8860 = vmatpush1.msra.mxu0 %v8752
        %8861 = vmatprep.subr.mxu0 0.0
        %8862 = vmatpush1.msra.mxu0 %v8753
        %8863 = vmatprep.subr.mxu0 0.0
        %8864 = vmatpush1.msra.mxu0 %v8754
        %8865 = vmatprep.subr.mxu0 0.0
        %8866 = vmatpush1.msra.mxu0 %v8755
        %8867 = vmatprep.subr.mxu0 0.0
        %8868 = vmatpush1.msra.mxu0 %v8756
        %8869 = vmatprep.subr.mxu0 0.0
        %8870 = vmatpush1.msra.mxu0 %v8757
        %8871 = vmatprep.subr.mxu0 0.0
        %8872 = vmatpush1.msra.mxu0 %v8758
        %8873 = vmatprep.subr.mxu0 0.0
        %8874 = vmatpush1.msra.mxu0 0.0
        %8875 = vmatprep.subr.mxu0 0.0
        %8876 = vmatpush1.msra.mxu0 0.0
        %8877 = vmatprep.subr.mxu0 0.0
        %8878 = vmatpush1.msra.mxu0 0.0
        %8879 = vmatprep.subr.mxu0 0.0
        %8880 = vmatpush1.msra.mxu0 0.0
        %8881 = vmatprep.subr.mxu0 0.0
        %8882 = vmatpush1.msra.mxu0 0.0
        %8883 = vmatprep.subr.mxu0 0.0
        %8884 = vmatpush1.msra.mxu0 0.0
        %8885 = vmatprep.subr.mxu0 0.0
        %8886 = vmatpush1.msra.mxu0 0.0
        %8887 = vmatprep.subr.mxu0 0.0
        %8888 = vmatpush1.msra.mxu0 0.0
        %8889 = vmatprep.subr.mxu0 0.0
        %8890 = vmatpush1.msra.mxu0 0.0
        %8891 = vmatprep.subr.mxu0 0.0
        %8892 = vmatpush1.msra.mxu0 0.0
        %8893 = vmatprep.subr.mxu0 0.0
        %8894 = vmatpush1.msra.mxu0 0.0
        %8895 = vmatprep.subr.mxu0 0.0
        %8896 = vmatpush1.msra.mxu0 0.0
        %8897 = vmatprep.mubr.f32.mxu0 %v8761
        %8898 = vmatmul.mubr.f32.gmra.mrb[0].mxu0 %v8632
        %v8899 = vpop.f32.mrb[0].mxu0
        %v8900 = vadd.f32 %v8830, %v8899
        %v8901 = vpop.f32.mrb[0].mxu0
        %8902 = vdwg.mxu0
        %v8904 = vsel %vm8759, %v8629, 0
        %8906 = vmatprep.subr.mxu0 0.0
        %8907 = vmatpush1.msra.mxu0 %v8654
        %8908 = vmatprep.subr.mxu0 0.0
        %8909 = vmatpush1.msra.mxu0 %v8655
        %8910 = vmatprep.subr.mxu0 0.0
        %8911 = vmatpush1.msra.mxu0 %v8656
        %8912 = vmatprep.subr.mxu0 0.0
        %8913 = vmatpush1.msra.mxu0 %v8657
        %8914 = vmatprep.subr.mxu0 0.0
        %8915 = vmatpush1.msra.mxu0 %v8658
        %8916 = vmatprep.subr.mxu0 0.0
        %8917 = vmatpush1.msra.mxu0 %v8659
        %8918 = vmatprep.subr.mxu0 0.0
        %8919 = vmatpush1.msra.mxu0 %v8660
        %8920 = vmatprep.subr.mxu0 0.0
        %8921 = vmatpush1.msra.mxu0 %v8661
        %8922 = vmatprep.subr.mxu0 0.0
        %8923 = vmatpush1.msra.mxu0 %v8662
        %8924 = vmatprep.subr.mxu0 0.0
        %8925 = vmatpush1.msra.mxu0 %v8663
        %8926 = vmatprep.subr.mxu0 0.0
        %8927 = vmatpush1.msra.mxu0 %v8664
        %8928 = vmatprep.subr.mxu0 0.0
        %8929 = vmatpush1.msra.mxu0 %v8665
        %8930 = vmatprep.subr.mxu0 0.0
        %8931 = vmatpush1.msra.mxu0 %v8666
        %8932 = vmatprep.subr.mxu0 0.0
        %8933 = vmatpush1.msra.mxu0 %v8667
        %8934 = vmatprep.subr.mxu0 0.0
        %8935 = vmatpush1.msra.mxu0 %v8668
        %8936 = vmatprep.subr.mxu0 0.0
        %8937 = vmatpush1.msra.mxu0 %v8669
        %8938 = vmatprep.subr.mxu0 0.0
        %8939 = vmatpush1.msra.mxu0 %v8670
        %8940 = vmatprep.subr.mxu0 0.0
        %8941 = vmatpush1.msra.mxu0 %v8671
        %8942 = vmatprep.subr.mxu0 0.0
        %8943 = vmatpush1.msra.mxu0 %v8672
        %8944 = vmatprep.subr.mxu0 0.0
        %8945 = vmatpush1.msra.mxu0 %v8673
        %8946 = vmatprep.subr.mxu0 0.0
        %8947 = vmatpush1.msra.mxu0 %v8674
        %8948 = vmatprep.subr.mxu0 0.0
        %8949 = vmatpush1.msra.mxu0 %v8675
        %8950 = vmatprep.subr.mxu0 0.0
        %8951 = vmatpush1.msra.mxu0 %v8676
        %8952 = vmatprep.subr.mxu0 0.0
        %8953 = vmatpush1.msra.mxu0 %v8677
        %8954 = vmatprep.subr.mxu0 0.0
        %8955 = vmatpush1.msra.mxu0 %v8678
        %8956 = vmatprep.subr.mxu0 0.0
        %8957 = vmatpush1.msra.mxu0 %v8679
        %8958 = vmatprep.subr.mxu0 0.0
        %8959 = vmatpush1.msra.mxu0 %v8680
        %8960 = vmatprep.subr.mxu0 0.0
        %8961 = vmatpush1.msra.mxu0 %v8681
        %8962 = vmatprep.subr.mxu0 0.0
        %8963 = vmatpush1.msra.mxu0 %v8682
        %8964 = vmatprep.subr.mxu0 0.0
        %8965 = vmatpush1.msra.mxu0 %v8683
        %8966 = vmatprep.subr.mxu0 0.0
        %8967 = vmatpush1.msra.mxu0 %v8684
        %8968 = vmatprep.subr.mxu0 0.0
        %8969 = vmatpush1.msra.mxu0 %v8685
        %8970 = vmatprep.mubr.f32.mxu0 %v8627
        %8971 = vmatmul.mubr.f32.gmra.mrb[0].mxu0 %v8626
        %v8972 = vpop.f32.mrb[0].mxu0
        %v8973 = vadd.f32 %v8900, %v8972
        %v8974 = vpop.f32.mrb[0].mxu0
        %8975 = vdwg.mxu0
        %8976 = vmatprep.subr.mxu0 0.0
        %8977 = vmatpush1.msra.mxu0 %v8686
        %8978 = vmatprep.subr.mxu0 0.0
        %8979 = vmatpush1.msra.mxu0 %v8687
        %8980 = vmatprep.subr.mxu0 0.0
        %8981 = vmatpush1.msra.mxu0 %v8688
        %8982 = vmatprep.subr.mxu0 0.0
        %8983 = vmatpush1.msra.mxu0 %v8689
        %8984 = vmatprep.subr.mxu0 0.0
        %8985 = vmatpush1.msra.mxu0 %v8690
        %8986 = vmatprep.subr.mxu0 0.0
        %8987 = vmatpush1.msra.mxu0 %v8691
        %8988 = vmatprep.subr.mxu0 0.0
        %8989 = vmatpush1.msra.mxu0 %v8692
        %8990 = vmatprep.subr.mxu0 0.0
        %8991 = vmatpush1.msra.mxu0 %v8693
        %8992 = vmatprep.subr.mxu0 0.0
        %8993 = vmatpush1.msra.mxu0 %v8694
        %8994 = vmatprep.subr.mxu0 0.0
        %8995 = vmatpush1.msra.mxu0 %v8695
        %8996 = vmatprep.subr.mxu0 0.0
        %8997 = vmatpush1.msra.mxu0 %v8696
        %8998 = vmatprep.subr.mxu0 0.0
        %8999 = vmatpush1.msra.mxu0 %v8697
        %9000 = vmatprep.subr.mxu0 0.0
        %9001 = vmatpush1.msra.mxu0 %v8698
        %9002 = vmatprep.subr.mxu0 0.0
        %9003 = vmatpush1.msra.mxu0 %v8699
        %9004 = vmatprep.subr.mxu0 0.0
        %9005 = vmatpush1.msra.mxu0 %v8700
        %9006 = vmatprep.subr.mxu0 0.0
        %9007 = vmatpush1.msra.mxu0 %v8701
        %9008 = vmatprep.subr.mxu0 0.0
        %9009 = vmatpush1.msra.mxu0 %v8702
        %9010 = vmatprep.subr.mxu0 0.0
        %9011 = vmatpush1.msra.mxu0 %v8703
        %9012 = vmatprep.subr.mxu0 0.0
        %9013 = vmatpush1.msra.mxu0 %v8704
        %9014 = vmatprep.subr.mxu0 0.0
        %9015 = vmatpush1.msra.mxu0 %v8705
        %9016 = vmatprep.subr.mxu0 0.0
        %9017 = vmatpush1.msra.mxu0 0.0
        %9018 = vmatprep.subr.mxu0 0.0
        %9019 = vmatpush1.msra.mxu0 0.0
        %9020 = vmatprep.subr.mxu0 0.0
        %9021 = vmatpush1.msra.mxu0 0.0
        %9022 = vmatprep.subr.mxu0 0.0
        %9023 = vmatpush1.msra.mxu0 0.0
        %9024 = vmatprep.subr.mxu0 0.0
        %9025 = vmatpush1.msra.mxu0 0.0
        %9026 = vmatprep.subr.mxu0 0.0
        %9027 = vmatpush1.msra.mxu0 0.0
        %9028 = vmatprep.subr.mxu0 0.0
        %9029 = vmatpush1.msra.mxu0 0.0
        %9030 = vmatprep.subr.mxu0 0.0
        %9031 = vmatpush1.msra.mxu0 0.0
        %9032 = vmatprep.subr.mxu0 0.0
        %9033 = vmatpush1.msra.mxu0 0.0
        %9034 = vmatprep.subr.mxu0 0.0
        %9035 = vmatpush1.msra.mxu0 0.0
        %9036 = vmatprep.subr.mxu0 0.0
        %9037 = vmatpush1.msra.mxu0 0.0
        %9038 = vmatprep.subr.mxu0 0.0
        %9039 = vmatpush1.msra.mxu0 0.0
        %9040 = vmatprep.mubr.f32.mxu0 %v8904
        %9041 = vmatmul.mubr.f32.gmra.mrb[0].mxu0 %v8628
        %v9042 = vpop.f32.mrb[0].mxu0
        %v9043 = vadd.f32 %v8973, %v9042
        %v9044 = vpop.f32.mrb[0].mxu0
        %9045 = vdwg.mxu0
        %s9046 = scalar_lea.vmem [#allocation11], 832
        %v9047 = vld [vmem:[%s9046] sm:$0xff]
        %v9048 = vld [vmem:[%s9046 + $0x8] sm:$0xff]
        %v9049 = vld [vmem:[%s9046 + $0x10] sm:$0xff]
        %v9050 = vld [vmem:[%s9046 + $0x18] sm:$0xff]
        %v9051 = vld [vmem:[%s9046 + $0x20] sm:$0xff]
        %v9052 = vld [vmem:[%s9046 + $0x28] sm:$0xff]
        %v9053 = vld [vmem:[%s9046 + $0x30] sm:$0xff]
        %v9054 = vld [vmem:[%s9046 + $0x38] sm:$0xff]
        %v9055 = vld [vmem:[%s9046 + $0x40] sm:$0xff]
        %v9056 = vld [vmem:[%s9046 + $0x48] sm:$0xff]
        %v9057 = vld [vmem:[%s9046 + $0x50] sm:$0xff]
        %v9058 = vld [vmem:[%s9046 + $0x58] sm:$0xff]
        %v9059 = vld [vmem:[%s9046 + $0x60] sm:$0xff]
        %v9060 = vld [vmem:[%s9046 + $0x68] sm:$0xff]
        %v9061 = vld [vmem:[%s9046 + $0x70] sm:$0xff]
        %v9062 = vld [vmem:[%s9046 + $0x78] sm:$0xff]
        %v9063 = vld [vmem:[%s9046 + $0x80] sm:$0xff]
        %v9064 = vld [vmem:[%s9046 + $0x88] sm:$0xff]
        %v9065 = vld [vmem:[%s9046 + $0x90] sm:$0xff]
        %v9066 = vld [vmem:[%s9046 + $0x98] sm:$0xff]
        %v9067 = vld [vmem:[%s9046 + $0xa0] sm:$0xff]
        %v9068 = vld [vmem:[%s9046 + $0xa8] sm:$0xff]
        %v9069 = vld [vmem:[%s9046 + $0xb0] sm:$0xff]
        %v9070 = vld [vmem:[%s9046 + $0xb8] sm:$0xff]
        %v9071 = vld [vmem:[%s9046 + $0xc0] sm:$0xff]
        %v9072 = vld [vmem:[%s9046 + $0xc8] sm:$0xff]
        %v9073 = vld [vmem:[%s9046 + $0xd0] sm:$0xff]
        %v9074 = vld [vmem:[%s9046 + $0xd8] sm:$0xff]
        %v9075 = vld [vmem:[%s9046 + $0xe0] sm:$0xff]
        %v9076 = vld [vmem:[%s9046 + $0xe8] sm:$0xff]
        %v9077 = vld [vmem:[%s9046 + $0xf0] sm:$0xff]
        %v9078 = vld [vmem:[%s9046 + $0xf8] sm:$0xff]
        %v9079 = vld [vmem:[%s9046 + $0x100] sm:$0xff]
        %v9080 = vld [vmem:[%s9046 + $0x108] sm:$0xff]
        %v9081 = vld [vmem:[%s9046 + $0x110] sm:$0xff]
        %v9082 = vld [vmem:[%s9046 + $0x118] sm:$0xff]
        %v9083 = vld [vmem:[%s9046 + $0x120] sm:$0xff]
        %v9084 = vld [vmem:[%s9046 + $0x128] sm:$0xff]
        %v9085 = vld [vmem:[%s9046 + $0x130] sm:$0xff]
        %v9086 = vld [vmem:[%s9046 + $0x138] sm:$0xff]
        %v9087 = vld [vmem:[%s9046 + $0x140] sm:$0xff]
        %v9088 = vld [vmem:[%s9046 + $0x148] sm:$0xff]
        %v9089 = vld [vmem:[%s9046 + $0x150] sm:$0xff]
        %v9090 = vld [vmem:[%s9046 + $0x158] sm:$0xff]
        %v9091 = vld [vmem:[%s9046 + $0x160] sm:$0xff]
        %v9092 = vld [vmem:[%s9046 + $0x168] sm:$0xff]
        %v9093 = vld [vmem:[%s9046 + $0x170] sm:$0xff]
        %v9094 = vld [vmem:[%s9046 + $0x178] sm:$0xff]
        %v9095 = vld [vmem:[%s9046 + $0x180] sm:$0xff]
        %v9096 = vld [vmem:[%s9046 + $0x188] sm:$0xff]
        %v9097 = vld [vmem:[%s9046 + $0x190] sm:$0xff]
        %v9098 = vld [vmem:[%s9046 + $0x198] sm:$0xff]
        %v9100 = vsel %vm8759, %v8637, 0
        %9102 = vmatprep.subr.mxu0 0.0
        %9103 = vmatpush1.msra.mxu0 %v9047
        %9104 = vmatprep.subr.mxu0 0.0
        %9105 = vmatpush1.msra.mxu0 %v9048
        %9106 = vmatprep.subr.mxu0 0.0
        %9107 = vmatpush1.msra.mxu0 %v9049
        %9108 = vmatprep.subr.mxu0 0.0
        %9109 = vmatpush1.msra.mxu0 %v9050
        %9110 = vmatprep.subr.mxu0 0.0
        %9111 = vmatpush1.msra.mxu0 %v9051
        %9112 = vmatprep.subr.mxu0 0.0
        %9113 = vmatpush1.msra.mxu0 %v9052
        %9114 = vmatprep.subr.mxu0 0.0
        %9115 = vmatpush1.msra.mxu0 %v9053
        %9116 = vmatprep.subr.mxu0 0.0
        %9117 = vmatpush1.msra.mxu0 %v9054
        %9118 = vmatprep.subr.mxu0 0.0
        %9119 = vmatpush1.msra.mxu0 %v9055
        %9120 = vmatprep.subr.mxu0 0.0
        %9121 = vmatpush1.msra.mxu0 %v9056
        %9122 = vmatprep.subr.mxu0 0.0
        %9123 = vmatpush1.msra.mxu0 %v9057
        %9124 = vmatprep.subr.mxu0 0.0
        %9125 = vmatpush1.msra.mxu0 %v9058
        %9126 = vmatprep.subr.mxu0 0.0
        %9127 = vmatpush1.msra.mxu0 %v9059
        %9128 = vmatprep.subr.mxu0 0.0
        %9129 = vmatpush1.msra.mxu0 %v9060
        %9130 = vmatprep.subr.mxu0 0.0
        %9131 = vmatpush1.msra.mxu0 %v9061
        %9132 = vmatprep.subr.mxu0 0.0
        %9133 = vmatpush1.msra.mxu0 %v9062
        %9134 = vmatprep.subr.mxu0 0.0
        %9135 = vmatpush1.msra.mxu0 %v9063
        %9136 = vmatprep.subr.mxu0 0.0
        %9137 = vmatpush1.msra.mxu0 %v9064
        %9138 = vmatprep.subr.mxu0 0.0
        %9139 = vmatpush1.msra.mxu0 %v9065
        %9140 = vmatprep.subr.mxu0 0.0
        %9141 = vmatpush1.msra.mxu0 %v9066
        %9142 = vmatprep.subr.mxu0 0.0
        %9143 = vmatpush1.msra.mxu0 %v9067
        %9144 = vmatprep.subr.mxu0 0.0
        %9145 = vmatpush1.msra.mxu0 %v9068
        %9146 = vmatprep.subr.mxu0 0.0
        %9147 = vmatpush1.msra.mxu0 %v9069
        %9148 = vmatprep.subr.mxu0 0.0
        %9149 = vmatpush1.msra.mxu0 %v9070
        %9150 = vmatprep.subr.mxu0 0.0
        %9151 = vmatpush1.msra.mxu0 %v9071
        %9152 = vmatprep.subr.mxu0 0.0
        %9153 = vmatpush1.msra.mxu0 %v9072
        %9154 = vmatprep.subr.mxu0 0.0
        %9155 = vmatpush1.msra.mxu0 %v9073
        %9156 = vmatprep.subr.mxu0 0.0
        %9157 = vmatpush1.msra.mxu0 %v9074
        %9158 = vmatprep.subr.mxu0 0.0
        %9159 = vmatpush1.msra.mxu0 %v9075
        %9160 = vmatprep.subr.mxu0 0.0
        %9161 = vmatpush1.msra.mxu0 %v9076
        %9162 = vmatprep.subr.mxu0 0.0
        %9163 = vmatpush1.msra.mxu0 %v9077
        %9164 = vmatprep.subr.mxu0 0.0
        %9165 = vmatpush1.msra.mxu0 %v9078
        %9166 = vmatprep.mubr.f32.mxu0 %v8635
        %9167 = vmatmul.mubr.f32.gmra.mrb[0].mxu0 %v8634
        %v9168 = vpop.f32.mrb[0].mxu0
        %v9169 = vadd.f32 0.0, %v9168
        %v9170 = vpop.f32.mrb[0].mxu0
        %9171 = vdwg.mxu0
        %9172 = vmatprep.subr.mxu0 0.0
        %9173 = vmatpush1.msra.mxu0 %v9079
        %9174 = vmatprep.subr.mxu0 0.0
        %9175 = vmatpush1.msra.mxu0 %v9080
        %9176 = vmatprep.subr.mxu0 0.0
        %9177 = vmatpush1.msra.mxu0 %v9081
        %9178 = vmatprep.subr.mxu0 0.0
        %9179 = vmatpush1.msra.mxu0 %v9082
        %9180 = vmatprep.subr.mxu0 0.0
        %9181 = vmatpush1.msra.mxu0 %v9083
        %9182 = vmatprep.subr.mxu0 0.0
        %9183 = vmatpush1.msra.mxu0 %v9084
        %9184 = vmatprep.subr.mxu0 0.0
        %9185 = vmatpush1.msra.mxu0 %v9085
        %9186 = vmatprep.subr.mxu0 0.0
        %9187 = vmatpush1.msra.mxu0 %v9086
        %9188 = vmatprep.subr.mxu0 0.0
        %9189 = vmatpush1.msra.mxu0 %v9087
        %9190 = vmatprep.subr.mxu0 0.0
        %9191 = vmatpush1.msra.mxu0 %v9088
        %9192 = vmatprep.subr.mxu0 0.0
        %9193 = vmatpush1.msra.mxu0 %v9089
        %9194 = vmatprep.subr.mxu0 0.0
        %9195 = vmatpush1.msra.mxu0 %v9090
        %9196 = vmatprep.subr.mxu0 0.0
        %9197 = vmatpush1.msra.mxu0 %v9091
        %9198 = vmatprep.subr.mxu0 0.0
        %9199 = vmatpush1.msra.mxu0 %v9092
        %9200 = vmatprep.subr.mxu0 0.0
        %9201 = vmatpush1.msra.mxu0 %v9093
        %9202 = vmatprep.subr.mxu0 0.0
        %9203 = vmatpush1.msra.mxu0 %v9094
        %9204 = vmatprep.subr.mxu0 0.0
        %9205 = vmatpush1.msra.mxu0 %v9095
        %9206 = vmatprep.subr.mxu0 0.0
        %9207 = vmatpush1.msra.mxu0 %v9096
        %9208 = vmatprep.subr.mxu0 0.0
        %9209 = vmatpush1.msra.mxu0 %v9097
        %9210 = vmatprep.subr.mxu0 0.0
        %9211 = vmatpush1.msra.mxu0 %v9098
        %9212 = vmatprep.subr.mxu0 0.0
        %9213 = vmatpush1.msra.mxu0 0.0
        %9214 = vmatprep.subr.mxu0 0.0
        %9215 = vmatpush1.msra.mxu0 0.0
        %9216 = vmatprep.subr.mxu0 0.0
        %9217 = vmatpush1.msra.mxu0 0.0
        %9218 = vmatprep.subr.mxu0 0.0
        %9219 = vmatpush1.msra.mxu0 0.0
        %9220 = vmatprep.subr.mxu0 0.0
        %9221 = vmatpush1.msra.mxu0 0.0
        %9222 = vmatprep.subr.mxu0 0.0
        %9223 = vmatpush1.msra.mxu0 0.0
        %9224 = vmatprep.subr.mxu0 0.0
        %9225 = vmatpush1.msra.mxu0 0.0
        %9226 = vmatprep.subr.mxu0 0.0
        %9227 = vmatpush1.msra.mxu0 0.0
        %9228 = vmatprep.subr.mxu0 0.0
        %9229 = vmatpush1.msra.mxu0 0.0
        %9230 = vmatprep.subr.mxu0 0.0
        %9231 = vmatpush1.msra.mxu0 0.0
        %9232 = vmatprep.subr.mxu0 0.0
        %9233 = vmatpush1.msra.mxu0 0.0
        %9234 = vmatprep.subr.mxu0 0.0
        %9235 = vmatpush1.msra.mxu0 0.0
        %9236 = vmatprep.mubr.f32.mxu0 %v9100
        %9237 = vmatmul.mubr.f32.gmra.mrb[0].mxu0 %v8636
        %v9238 = vpop.f32.mrb[0].mxu0
        %v9239 = vadd.f32 %v9169, %v9238
        %v9240 = vpop.f32.mrb[0].mxu0
        %9241 = vdwg.mxu0
        %v9242 = vadd.f32 %v9043, %v9239
        %s9243 = scalar_lea.vmem [#allocation11], 1248
        %v9244 = vld [vmem:[%s9243] sm:$0xff]
        %v9245 = vld [vmem:[%s9243 + $0x8] sm:$0xff]
        %v9246 = vld [vmem:[%s9243 + $0x10] sm:$0xff]
        %v9247 = vld [vmem:[%s9243 + $0x18] sm:$0xff]
        %v9248 = vld [vmem:[%s9243 + $0x20] sm:$0xff]
        %v9249 = vld [vmem:[%s9243 + $0x28] sm:$0xff]
        %v9250 = vld [vmem:[%s9243 + $0x30] sm:$0xff]
        %v9251 = vld [vmem:[%s9243 + $0x38] sm:$0xff]
        %v9252 = vld [vmem:[%s9243 + $0x40] sm:$0xff]
        %v9253 = vld [vmem:[%s9243 + $0x48] sm:$0xff]
        %v9254 = vld [vmem:[%s9243 + $0x50] sm:$0xff]
        %v9255 = vld [vmem:[%s9243 + $0x58] sm:$0xff]
        %v9256 = vld [vmem:[%s9243 + $0x60] sm:$0xff]
        %v9257 = vld [vmem:[%s9243 + $0x68] sm:$0xff]
        %v9258 = vld [vmem:[%s9243 + $0x70] sm:$0xff]
        %v9259 = vld [vmem:[%s9243 + $0x78] sm:$0xff]
        %v9260 = vld [vmem:[%s9243 + $0x80] sm:$0xff]
        %v9261 = vld [vmem:[%s9243 + $0x88] sm:$0xff]
        %v9262 = vld [vmem:[%s9243 + $0x90] sm:$0xff]
        %v9263 = vld [vmem:[%s9243 + $0x98] sm:$0xff]
        %v9264 = vld [vmem:[%s9243 + $0xa0] sm:$0xff]
        %v9265 = vld [vmem:[%s9243 + $0xa8] sm:$0xff]
        %v9266 = vld [vmem:[%s9243 + $0xb0] sm:$0xff]
        %v9267 = vld [vmem:[%s9243 + $0xb8] sm:$0xff]
        %v9268 = vld [vmem:[%s9243 + $0xc0] sm:$0xff]
        %v9269 = vld [vmem:[%s9243 + $0xc8] sm:$0xff]
        %v9270 = vld [vmem:[%s9243 + $0xd0] sm:$0xff]
        %v9271 = vld [vmem:[%s9243 + $0xd8] sm:$0xff]
        %v9272 = vld [vmem:[%s9243 + $0xe0] sm:$0xff]
        %v9273 = vld [vmem:[%s9243 + $0xe8] sm:$0xff]
        %v9274 = vld [vmem:[%s9243 + $0xf0] sm:$0xff]
        %v9275 = vld [vmem:[%s9243 + $0xf8] sm:$0xff]
        %v9276 = vld [vmem:[%s9243 + $0x100] sm:$0xff]
        %v9277 = vld [vmem:[%s9243 + $0x108] sm:$0xff]
        %v9278 = vld [vmem:[%s9243 + $0x110] sm:$0xff]
        %v9279 = vld [vmem:[%s9243 + $0x118] sm:$0xff]
        %v9280 = vld [vmem:[%s9243 + $0x120] sm:$0xff]
        %v9281 = vld [vmem:[%s9243 + $0x128] sm:$0xff]
        %v9282 = vld [vmem:[%s9243 + $0x130] sm:$0xff]
        %v9283 = vld [vmem:[%s9243 + $0x138] sm:$0xff]
        %v9284 = vld [vmem:[%s9243 + $0x140] sm:$0xff]
        %v9285 = vld [vmem:[%s9243 + $0x148] sm:$0xff]
        %v9286 = vld [vmem:[%s9243 + $0x150] sm:$0xff]
        %v9287 = vld [vmem:[%s9243 + $0x158] sm:$0xff]
        %v9288 = vld [vmem:[%s9243 + $0x160] sm:$0xff]
        %v9289 = vld [vmem:[%s9243 + $0x168] sm:$0xff]
        %v9290 = vld [vmem:[%s9243 + $0x170] sm:$0xff]
        %v9291 = vld [vmem:[%s9243 + $0x178] sm:$0xff]
        %v9292 = vld [vmem:[%s9243 + $0x180] sm:$0xff]
        %v9293 = vld [vmem:[%s9243 + $0x188] sm:$0xff]
        %v9294 = vld [vmem:[%s9243 + $0x190] sm:$0xff]
        %v9295 = vld [vmem:[%s9243 + $0x198] sm:$0xff]
        %v9297 = vsel %vm8759, %v8641, 0
        %9299 = vmatprep.subr.mxu0 0.0
        %9300 = vmatpush1.msra.mxu0 %v9244
        %9301 = vmatprep.subr.mxu0 0.0
        %9302 = vmatpush1.msra.mxu0 %v9245
        %9303 = vmatprep.subr.mxu0 0.0
        %9304 = vmatpush1.msra.mxu0 %v9246
        %9305 = vmatprep.subr.mxu0 0.0
        %9306 = vmatpush1.msra.mxu0 %v9247
        %9307 = vmatprep.subr.mxu0 0.0
        %9308 = vmatpush1.msra.mxu0 %v9248
        %9309 = vmatprep.subr.mxu0 0.0
        %9310 = vmatpush1.msra.mxu0 %v9249
        %9311 = vmatprep.subr.mxu0 0.0
        %9312 = vmatpush1.msra.mxu0 %v9250
        %9313 = vmatprep.subr.mxu0 0.0
        %9314 = vmatpush1.msra.mxu0 %v9251
        %9315 = vmatprep.subr.mxu0 0.0
        %9316 = vmatpush1.msra.mxu0 %v9252
        %9317 = vmatprep.subr.mxu0 0.0
        %9318 = vmatpush1.msra.mxu0 %v9253
        %9319 = vmatprep.subr.mxu0 0.0
        %9320 = vmatpush1.msra.mxu0 %v9254
        %9321 = vmatprep.subr.mxu0 0.0
        %9322 = vmatpush1.msra.mxu0 %v9255
        %9323 = vmatprep.subr.mxu0 0.0
        %9324 = vmatpush1.msra.mxu0 %v9256
        %9325 = vmatprep.subr.mxu0 0.0
        %9326 = vmatpush1.msra.mxu0 %v9257
        %9327 = vmatprep.subr.mxu0 0.0
        %9328 = vmatpush1.msra.mxu0 %v9258
        %9329 = vmatprep.subr.mxu0 0.0
        %9330 = vmatpush1.msra.mxu0 %v9259
        %9331 = vmatprep.subr.mxu0 0.0
        %9332 = vmatpush1.msra.mxu0 %v9260
        %9333 = vmatprep.subr.mxu0 0.0
        %9334 = vmatpush1.msra.mxu0 %v9261
        %9335 = vmatprep.subr.mxu0 0.0
        %9336 = vmatpush1.msra.mxu0 %v9262
        %9337 = vmatprep.subr.mxu0 0.0
        %9338 = vmatpush1.msra.mxu0 %v9263
        %9339 = vmatprep.subr.mxu0 0.0
        %9340 = vmatpush1.msra.mxu0 %v9264
        %9341 = vmatprep.subr.mxu0 0.0
        %9342 = vmatpush1.msra.mxu0 %v9265
        %9343 = vmatprep.subr.mxu0 0.0
        %9344 = vmatpush1.msra.mxu0 %v9266
        %9345 = vmatprep.subr.mxu0 0.0
        %9346 = vmatpush1.msra.mxu0 %v9267
        %9347 = vmatprep.subr.mxu0 0.0
        %9348 = vmatpush1.msra.mxu0 %v9268
        %9349 = vmatprep.subr.mxu0 0.0
        %9350 = vmatpush1.msra.mxu0 %v9269
        %9351 = vmatprep.subr.mxu0 0.0
        %9352 = vmatpush1.msra.mxu0 %v9270
        %9353 = vmatprep.subr.mxu0 0.0
        %9354 = vmatpush1.msra.mxu0 %v9271
        %9355 = vmatprep.subr.mxu0 0.0
        %9356 = vmatpush1.msra.mxu0 %v9272
        %9357 = vmatprep.subr.mxu0 0.0
        %9358 = vmatpush1.msra.mxu0 %v9273
        %9359 = vmatprep.subr.mxu0 0.0
        %9360 = vmatpush1.msra.mxu0 %v9274
        %9361 = vmatprep.subr.mxu0 0.0
        %9362 = vmatpush1.msra.mxu0 %v9275
        %9363 = vmatprep.mubr.f32.mxu0 %v8639
        %9364 = vmatmul.mubr.f32.gmra.mrb[0].mxu0 %v8638
        %v9365 = vpop.f32.mrb[0].mxu0
        %v9366 = vadd.f32 0.0, %v9365
        %v9367 = vpop.f32.mrb[0].mxu0
        %9368 = vdwg.mxu0
        %9369 = vmatprep.subr.mxu0 0.0
        %9370 = vmatpush1.msra.mxu0 %v9276
        %9371 = vmatprep.subr.mxu0 0.0
        %9372 = vmatpush1.msra.mxu0 %v9277
        %9373 = vmatprep.subr.mxu0 0.0
        %9374 = vmatpush1.msra.mxu0 %v9278
        %9375 = vmatprep.subr.mxu0 0.0
        %9376 = vmatpush1.msra.mxu0 %v9279
        %9377 = vmatprep.subr.mxu0 0.0
        %9378 = vmatpush1.msra.mxu0 %v9280
        %9379 = vmatprep.subr.mxu0 0.0
        %9380 = vmatpush1.msra.mxu0 %v9281
        %9381 = vmatprep.subr.mxu0 0.0
        %9382 = vmatpush1.msra.mxu0 %v9282
        %9383 = vmatprep.subr.mxu0 0.0
        %9384 = vmatpush1.msra.mxu0 %v9283
        %9385 = vmatprep.subr.mxu0 0.0
        %9386 = vmatpush1.msra.mxu0 %v9284
        %9387 = vmatprep.subr.mxu0 0.0
        %9388 = vmatpush1.msra.mxu0 %v9285
        %9389 = vmatprep.subr.mxu0 0.0
        %9390 = vmatpush1.msra.mxu0 %v9286
        %9391 = vmatprep.subr.mxu0 0.0
        %9392 = vmatpush1.msra.mxu0 %v9287
        %9393 = vmatprep.subr.mxu0 0.0
        %9394 = vmatpush1.msra.mxu0 %v9288
        %9395 = vmatprep.subr.mxu0 0.0
        %9396 = vmatpush1.msra.mxu0 %v9289
        %9397 = vmatprep.subr.mxu0 0.0
        %9398 = vmatpush1.msra.mxu0 %v9290
        %9399 = vmatprep.subr.mxu0 0.0
        %9400 = vmatpush1.msra.mxu0 %v9291
        %9401 = vmatprep.subr.mxu0 0.0
        %9402 = vmatpush1.msra.mxu0 %v9292
        %9403 = vmatprep.subr.mxu0 0.0
        %9404 = vmatpush1.msra.mxu0 %v9293
        %9405 = vmatprep.subr.mxu0 0.0
        %9406 = vmatpush1.msra.mxu0 %v9294
        %9407 = vmatprep.subr.mxu0 0.0
        %9408 = vmatpush1.msra.mxu0 %v9295
        %9409 = vmatprep.subr.mxu0 0.0
        %9410 = vmatpush1.msra.mxu0 0.0
        %9411 = vmatprep.subr.mxu0 0.0
        %9412 = vmatpush1.msra.mxu0 0.0
        %9413 = vmatprep.subr.mxu0 0.0
        %9414 = vmatpush1.msra.mxu0 0.0
        %9415 = vmatprep.subr.mxu0 0.0
        %9416 = vmatpush1.msra.mxu0 0.0
        %9417 = vmatprep.subr.mxu0 0.0
        %9418 = vmatpush1.msra.mxu0 0.0
        %9419 = vmatprep.subr.mxu0 0.0
        %9420 = vmatpush1.msra.mxu0 0.0
        %9421 = vmatprep.subr.mxu0 0.0
        %9422 = vmatpush1.msra.mxu0 0.0
        %9423 = vmatprep.subr.mxu0 0.0
        %9424 = vmatpush1.msra.mxu0 0.0
        %9425 = vmatprep.subr.mxu0 0.0
        %9426 = vmatpush1.msra.mxu0 0.0
        %9427 = vmatprep.subr.mxu0 0.0
        %9428 = vmatpush1.msra.mxu0 0.0
        %9429 = vmatprep.subr.mxu0 0.0
        %9430 = vmatpush1.msra.mxu0 0.0
        %9431 = vmatprep.subr.mxu0 0.0
        %9432 = vmatpush1.msra.mxu0 0.0
        %9433 = vmatprep.mubr.f32.mxu0 %v9297
        %9434 = vmatmul.mubr.f32.gmra.mrb[0].mxu0 %v8640
        %v9435 = vpop.f32.mrb[0].mxu0
        %v9436 = vadd.f32 %v9366, %v9435
        %v9437 = vpop.f32.mrb[0].mxu0
        %9438 = vdwg.mxu0
        %v9439 = vadd.f32 %v9242, %v9436
        %s9440 = scalar_lea.vmem [#allocation11], 1664
        %v9441 = vld [vmem:[%s9440] sm:$0xff]
        %v9442 = vld [vmem:[%s9440 + $0x8] sm:$0xff]
        %v9443 = vld [vmem:[%s9440 + $0x10] sm:$0xff]
        %v9444 = vld [vmem:[%s9440 + $0x18] sm:$0xff]
        %v9445 = vld [vmem:[%s9440 + $0x20] sm:$0xff]
        %v9446 = vld [vmem:[%s9440 + $0x28] sm:$0xff]
        %v9447 = vld [vmem:[%s9440 + $0x30] sm:$0xff]
        %v9448 = vld [vmem:[%s9440 + $0x38] sm:$0xff]
        %v9449 = vld [vmem:[%s9440 + $0x40] sm:$0xff]
        %v9450 = vld [vmem:[%s9440 + $0x48] sm:$0xff]
        %v9451 = vld [vmem:[%s9440 + $0x50] sm:$0xff]
        %v9452 = vld [vmem:[%s9440 + $0x58] sm:$0xff]
        %v9453 = vld [vmem:[%s9440 + $0x60] sm:$0xff]
        %v9454 = vld [vmem:[%s9440 + $0x68] sm:$0xff]
        %v9455 = vld [vmem:[%s9440 + $0x70] sm:$0xff]
        %v9456 = vld [vmem:[%s9440 + $0x78] sm:$0xff]
        %v9457 = vld [vmem:[%s9440 + $0x80] sm:$0xff]
        %v9458 = vld [vmem:[%s9440 + $0x88] sm:$0xff]
        %v9459 = vld [vmem:[%s9440 + $0x90] sm:$0xff]
        %v9460 = vld [vmem:[%s9440 + $0x98] sm:$0xff]
        %v9461 = vld [vmem:[%s9440 + $0xa0] sm:$0xff]
        %v9462 = vld [vmem:[%s9440 + $0xa8] sm:$0xff]
        %v9463 = vld [vmem:[%s9440 + $0xb0] sm:$0xff]
        %v9464 = vld [vmem:[%s9440 + $0xb8] sm:$0xff]
        %v9465 = vld [vmem:[%s9440 + $0xc0] sm:$0xff]
        %v9466 = vld [vmem:[%s9440 + $0xc8] sm:$0xff]
        %v9467 = vld [vmem:[%s9440 + $0xd0] sm:$0xff]
        %v9468 = vld [vmem:[%s9440 + $0xd8] sm:$0xff]
        %v9469 = vld [vmem:[%s9440 + $0xe0] sm:$0xff]
        %v9470 = vld [vmem:[%s9440 + $0xe8] sm:$0xff]
        %v9471 = vld [vmem:[%s9440 + $0xf0] sm:$0xff]
        %v9472 = vld [vmem:[%s9440 + $0xf8] sm:$0xff]
        %v9473 = vld [vmem:[%s9440 + $0x100] sm:$0xff]
        %v9474 = vld [vmem:[%s9440 + $0x108] sm:$0xff]
        %v9475 = vld [vmem:[%s9440 + $0x110] sm:$0xff]
        %v9476 = vld [vmem:[%s9440 + $0x118] sm:$0xff]
        %v9477 = vld [vmem:[%s9440 + $0x120] sm:$0xff]
        %v9478 = vld [vmem:[%s9440 + $0x128] sm:$0xff]
        %v9479 = vld [vmem:[%s9440 + $0x130] sm:$0xff]
        %v9480 = vld [vmem:[%s9440 + $0x138] sm:$0xff]
        %v9481 = vld [vmem:[%s9440 + $0x140] sm:$0xff]
        %v9482 = vld [vmem:[%s9440 + $0x148] sm:$0xff]
        %v9483 = vld [vmem:[%s9440 + $0x150] sm:$0xff]
        %v9484 = vld [vmem:[%s9440 + $0x158] sm:$0xff]
        %v9485 = vld [vmem:[%s9440 + $0x160] sm:$0xff]
        %v9486 = vld [vmem:[%s9440 + $0x168] sm:$0xff]
        %v9487 = vld [vmem:[%s9440 + $0x170] sm:$0xff]
        %v9488 = vld [vmem:[%s9440 + $0x178] sm:$0xff]
        %v9489 = vld [vmem:[%s9440 + $0x180] sm:$0xff]
        %v9490 = vld [vmem:[%s9440 + $0x188] sm:$0xff]
        %v9491 = vld [vmem:[%s9440 + $0x190] sm:$0xff]
        %v9492 = vld [vmem:[%s9440 + $0x198] sm:$0xff]
        %v9494 = vsel %vm8759, %v8645, 0
        %9496 = vmatprep.subr.mxu0 0.0
        %9497 = vmatpush1.msra.mxu0 %v9441
        %9498 = vmatprep.subr.mxu0 0.0
        %9499 = vmatpush1.msra.mxu0 %v9442
        %9500 = vmatprep.subr.mxu0 0.0
        %9501 = vmatpush1.msra.mxu0 %v9443
        %9502 = vmatprep.subr.mxu0 0.0
        %9503 = vmatpush1.msra.mxu0 %v9444
        %9504 = vmatprep.subr.mxu0 0.0
        %9505 = vmatpush1.msra.mxu0 %v9445
        %9506 = vmatprep.subr.mxu0 0.0
        %9507 = vmatpush1.msra.mxu0 %v9446
        %9508 = vmatprep.subr.mxu0 0.0
        %9509 = vmatpush1.msra.mxu0 %v9447
        %9510 = vmatprep.subr.mxu0 0.0
        %9511 = vmatpush1.msra.mxu0 %v9448
        %9512 = vmatprep.subr.mxu0 0.0
        %9513 = vmatpush1.msra.mxu0 %v9449
        %9514 = vmatprep.subr.mxu0 0.0
        %9515 = vmatpush1.msra.mxu0 %v9450
        %9516 = vmatprep.subr.mxu0 0.0
        %9517 = vmatpush1.msra.mxu0 %v9451
        %9518 = vmatprep.subr.mxu0 0.0
        %9519 = vmatpush1.msra.mxu0 %v9452
        %9520 = vmatprep.subr.mxu0 0.0
        %9521 = vmatpush1.msra.mxu0 %v9453
        %9522 = vmatprep.subr.mxu0 0.0
        %9523 = vmatpush1.msra.mxu0 %v9454
        %9524 = vmatprep.subr.mxu0 0.0
        %9525 = vmatpush1.msra.mxu0 %v9455
        %9526 = vmatprep.subr.mxu0 0.0
        %9527 = vmatpush1.msra.mxu0 %v9456
        %9528 = vmatprep.subr.mxu0 0.0
        %9529 = vmatpush1.msra.mxu0 %v9457
        %9530 = vmatprep.subr.mxu0 0.0
        %9531 = vmatpush1.msra.mxu0 %v9458
        %9532 = vmatprep.subr.mxu0 0.0
        %9533 = vmatpush1.msra.mxu0 %v9459
        %9534 = vmatprep.subr.mxu0 0.0
        %9535 = vmatpush1.msra.mxu0 %v9460
        %9536 = vmatprep.subr.mxu0 0.0
        %9537 = vmatpush1.msra.mxu0 %v9461
        %9538 = vmatprep.subr.mxu0 0.0
        %9539 = vmatpush1.msra.mxu0 %v9462
        %9540 = vmatprep.subr.mxu0 0.0
        %9541 = vmatpush1.msra.mxu0 %v9463
        %9542 = vmatprep.subr.mxu0 0.0
        %9543 = vmatpush1.msra.mxu0 %v9464
        %9544 = vmatprep.subr.mxu0 0.0
        %9545 = vmatpush1.msra.mxu0 %v9465
        %9546 = vmatprep.subr.mxu0 0.0
        %9547 = vmatpush1.msra.mxu0 %v9466
        %9548 = vmatprep.subr.mxu0 0.0
        %9549 = vmatpush1.msra.mxu0 %v9467
        %9550 = vmatprep.subr.mxu0 0.0
        %9551 = vmatpush1.msra.mxu0 %v9468
        %9552 = vmatprep.subr.mxu0 0.0
        %9553 = vmatpush1.msra.mxu0 %v9469
        %9554 = vmatprep.subr.mxu0 0.0
        %9555 = vmatpush1.msra.mxu0 %v9470
        %9556 = vmatprep.subr.mxu0 0.0
        %9557 = vmatpush1.msra.mxu0 %v9471
        %9558 = vmatprep.subr.mxu0 0.0
        %9559 = vmatpush1.msra.mxu0 %v9472
        %9560 = vmatprep.mubr.f32.mxu0 %v8643
        %9561 = vmatmul.mubr.f32.gmra.mrb[0].mxu0 %v8642
        %v9562 = vpop.f32.mrb[0].mxu0
        %v9563 = vadd.f32 0.0, %v9562
        %v9564 = vpop.f32.mrb[0].mxu0
        %9565 = vdwg.mxu0
        %9566 = vmatprep.subr.mxu0 0.0
        %9567 = vmatpush1.msra.mxu0 %v9473
        %9568 = vmatprep.subr.mxu0 0.0
        %9569 = vmatpush1.msra.mxu0 %v9474
        %9570 = vmatprep.subr.mxu0 0.0
        %9571 = vmatpush1.msra.mxu0 %v9475
        %9572 = vmatprep.subr.mxu0 0.0
        %9573 = vmatpush1.msra.mxu0 %v9476
        %9574 = vmatprep.subr.mxu0 0.0
        %9575 = vmatpush1.msra.mxu0 %v9477
        %9576 = vmatprep.subr.mxu0 0.0
        %9577 = vmatpush1.msra.mxu0 %v9478
        %9578 = vmatprep.subr.mxu0 0.0
        %9579 = vmatpush1.msra.mxu0 %v9479
        %9580 = vmatprep.subr.mxu0 0.0
        %9581 = vmatpush1.msra.mxu0 %v9480
        %9582 = vmatprep.subr.mxu0 0.0
        %9583 = vmatpush1.msra.mxu0 %v9481
        %9584 = vmatprep.subr.mxu0 0.0
        %9585 = vmatpush1.msra.mxu0 %v9482
        %9586 = vmatprep.subr.mxu0 0.0
        %9587 = vmatpush1.msra.mxu0 %v9483
        %9588 = vmatprep.subr.mxu0 0.0
        %9589 = vmatpush1.msra.mxu0 %v9484
        %9590 = vmatprep.subr.mxu0 0.0
        %9591 = vmatpush1.msra.mxu0 %v9485
        %9592 = vmatprep.subr.mxu0 0.0
        %9593 = vmatpush1.msra.mxu0 %v9486
        %9594 = vmatprep.subr.mxu0 0.0
        %9595 = vmatpush1.msra.mxu0 %v9487
        %9596 = vmatprep.subr.mxu0 0.0
        %9597 = vmatpush1.msra.mxu0 %v9488
        %9598 = vmatprep.subr.mxu0 0.0
        %9599 = vmatpush1.msra.mxu0 %v9489
        %9600 = vmatprep.subr.mxu0 0.0
        %9601 = vmatpush1.msra.mxu0 %v9490
        %9602 = vmatprep.subr.mxu0 0.0
        %9603 = vmatpush1.msra.mxu0 %v9491
        %9604 = vmatprep.subr.mxu0 0.0
        %9605 = vmatpush1.msra.mxu0 %v9492
        %9606 = vmatprep.subr.mxu0 0.0
        %9607 = vmatpush1.msra.mxu0 0.0
        %9608 = vmatprep.subr.mxu0 0.0
        %9609 = vmatpush1.msra.mxu0 0.0
        %9610 = vmatprep.subr.mxu0 0.0
        %9611 = vmatpush1.msra.mxu0 0.0
        %9612 = vmatprep.subr.mxu0 0.0
        %9613 = vmatpush1.msra.mxu0 0.0
        %9614 = vmatprep.subr.mxu0 0.0
        %9615 = vmatpush1.msra.mxu0 0.0
        %9616 = vmatprep.subr.mxu0 0.0
        %9617 = vmatpush1.msra.mxu0 0.0
        %9618 = vmatprep.subr.mxu0 0.0
        %9619 = vmatpush1.msra.mxu0 0.0
        %9620 = vmatprep.subr.mxu0 0.0
        %9621 = vmatpush1.msra.mxu0 0.0
        %9622 = vmatprep.subr.mxu0 0.0
        %9623 = vmatpush1.msra.mxu0 0.0
        %9624 = vmatprep.subr.mxu0 0.0
        %9625 = vmatpush1.msra.mxu0 0.0
        %9626 = vmatprep.subr.mxu0 0.0
        %9627 = vmatpush1.msra.mxu0 0.0
        %9628 = vmatprep.subr.mxu0 0.0
        %9629 = vmatpush1.msra.mxu0 0.0
        %9630 = vmatprep.mubr.f32.mxu0 %v9494
        %9631 = vmatmul.mubr.f32.gmra.mrb[0].mxu0 %v8644
        %v9632 = vpop.f32.mrb[0].mxu0
        %v9633 = vadd.f32 %v9563, %v9632
        %v9634 = vpop.f32.mrb[0].mxu0
        %9635 = vdwg.mxu0
        %v9636 = vadd.f32 %v9439, %v9633
        %s9637 = scalar_lea.vmem [#allocation11], 2080
        %v9638 = vld [vmem:[%s9637] sm:$0xff]
        %v9639 = vld [vmem:[%s9637 + $0x8] sm:$0xff]
        %v9640 = vld [vmem:[%s9637 + $0x10] sm:$0xff]
        %v9641 = vld [vmem:[%s9637 + $0x18] sm:$0xff]
        %v9642 = vld [vmem:[%s9637 + $0x20] sm:$0xff]
        %v9643 = vld [vmem:[%s9637 + $0x28] sm:$0xff]
        %v9644 = vld [vmem:[%s9637 + $0x30] sm:$0xff]
        %v9645 = vld [vmem:[%s9637 + $0x38] sm:$0xff]
        %v9646 = vld [vmem:[%s9637 + $0x40] sm:$0xff]
        %v9647 = vld [vmem:[%s9637 + $0x48] sm:$0xff]
        %v9648 = vld [vmem:[%s9637 + $0x50] sm:$0xff]
        %v9649 = vld [vmem:[%s9637 + $0x58] sm:$0xff]
        %v9650 = vld [vmem:[%s9637 + $0x60] sm:$0xff]
        %v9651 = vld [vmem:[%s9637 + $0x68] sm:$0xff]
        %v9652 = vld [vmem:[%s9637 + $0x70] sm:$0xff]
        %v9653 = vld [vmem:[%s9637 + $0x78] sm:$0xff]
        %v9654 = vld [vmem:[%s9637 + $0x80] sm:$0xff]
        %v9655 = vld [vmem:[%s9637 + $0x88] sm:$0xff]
        %v9656 = vld [vmem:[%s9637 + $0x90] sm:$0xff]
        %v9657 = vld [vmem:[%s9637 + $0x98] sm:$0xff]
        %v9658 = vld [vmem:[%s9637 + $0xa0] sm:$0xff]
        %v9659 = vld [vmem:[%s9637 + $0xa8] sm:$0xff]
        %v9660 = vld [vmem:[%s9637 + $0xb0] sm:$0xff]
        %v9661 = vld [vmem:[%s9637 + $0xb8] sm:$0xff]
        %v9662 = vld [vmem:[%s9637 + $0xc0] sm:$0xff]
        %v9663 = vld [vmem:[%s9637 + $0xc8] sm:$0xff]
        %v9664 = vld [vmem:[%s9637 + $0xd0] sm:$0xff]
        %v9665 = vld [vmem:[%s9637 + $0xd8] sm:$0xff]
        %v9666 = vld [vmem:[%s9637 + $0xe0] sm:$0xff]
        %v9667 = vld [vmem:[%s9637 + $0xe8] sm:$0xff]
        %v9668 = vld [vmem:[%s9637 + $0xf0] sm:$0xff]
        %v9669 = vld [vmem:[%s9637 + $0xf8] sm:$0xff]
        %v9670 = vld [vmem:[%s9637 + $0x100] sm:$0xff]
        %v9671 = vld [vmem:[%s9637 + $0x108] sm:$0xff]
        %v9672 = vld [vmem:[%s9637 + $0x110] sm:$0xff]
        %v9673 = vld [vmem:[%s9637 + $0x118] sm:$0xff]
        %v9674 = vld [vmem:[%s9637 + $0x120] sm:$0xff]
        %v9675 = vld [vmem:[%s9637 + $0x128] sm:$0xff]
        %v9676 = vld [vmem:[%s9637 + $0x130] sm:$0xff]
        %v9677 = vld [vmem:[%s9637 + $0x138] sm:$0xff]
        %v9678 = vld [vmem:[%s9637 + $0x140] sm:$0xff]
        %v9679 = vld [vmem:[%s9637 + $0x148] sm:$0xff]
        %v9680 = vld [vmem:[%s9637 + $0x150] sm:$0xff]
        %v9681 = vld [vmem:[%s9637 + $0x158] sm:$0xff]
        %v9682 = vld [vmem:[%s9637 + $0x160] sm:$0xff]
        %v9683 = vld [vmem:[%s9637 + $0x168] sm:$0xff]
        %v9684 = vld [vmem:[%s9637 + $0x170] sm:$0xff]
        %v9685 = vld [vmem:[%s9637 + $0x178] sm:$0xff]
        %v9686 = vld [vmem:[%s9637 + $0x180] sm:$0xff]
        %v9687 = vld [vmem:[%s9637 + $0x188] sm:$0xff]
        %v9688 = vld [vmem:[%s9637 + $0x190] sm:$0xff]
        %v9689 = vld [vmem:[%s9637 + $0x198] sm:$0xff]
        %v9691 = vsel %vm8759, %v8649, 0
        %9693 = vmatprep.subr.mxu0 0.0
        %9694 = vmatpush1.msra.mxu0 %v9638
        %9695 = vmatprep.subr.mxu0 0.0
        %9696 = vmatpush1.msra.mxu0 %v9639
        %9697 = vmatprep.subr.mxu0 0.0
        %9698 = vmatpush1.msra.mxu0 %v9640
        %9699 = vmatprep.subr.mxu0 0.0
        %9700 = vmatpush1.msra.mxu0 %v9641
        %9701 = vmatprep.subr.mxu0 0.0
        %9702 = vmatpush1.msra.mxu0 %v9642
        %9703 = vmatprep.subr.mxu0 0.0
        %9704 = vmatpush1.msra.mxu0 %v9643
        %9705 = vmatprep.subr.mxu0 0.0
        %9706 = vmatpush1.msra.mxu0 %v9644
        %9707 = vmatprep.subr.mxu0 0.0
        %9708 = vmatpush1.msra.mxu0 %v9645
        %9709 = vmatprep.subr.mxu0 0.0
        %9710 = vmatpush1.msra.mxu0 %v9646
        %9711 = vmatprep.subr.mxu0 0.0
        %9712 = vmatpush1.msra.mxu0 %v9647
        %9713 = vmatprep.subr.mxu0 0.0
        %9714 = vmatpush1.msra.mxu0 %v9648
        %9715 = vmatprep.subr.mxu0 0.0
        %9716 = vmatpush1.msra.mxu0 %v9649
        %9717 = vmatprep.subr.mxu0 0.0
        %9718 = vmatpush1.msra.mxu0 %v9650
        %9719 = vmatprep.subr.mxu0 0.0
        %9720 = vmatpush1.msra.mxu0 %v9651
        %9721 = vmatprep.subr.mxu0 0.0
        %9722 = vmatpush1.msra.mxu0 %v9652
        %9723 = vmatprep.subr.mxu0 0.0
        %9724 = vmatpush1.msra.mxu0 %v9653
        %9725 = vmatprep.subr.mxu0 0.0
        %9726 = vmatpush1.msra.mxu0 %v9654
        %9727 = vmatprep.subr.mxu0 0.0
        %9728 = vmatpush1.msra.mxu0 %v9655
        %9729 = vmatprep.subr.mxu0 0.0
        %9730 = vmatpush1.msra.mxu0 %v9656
        %9731 = vmatprep.subr.mxu0 0.0
        %9732 = vmatpush1.msra.mxu0 %v9657
        %9733 = vmatprep.subr.mxu0 0.0
        %9734 = vmatpush1.msra.mxu0 %v9658
        %9735 = vmatprep.subr.mxu0 0.0
        %9736 = vmatpush1.msra.mxu0 %v9659
        %9737 = vmatprep.subr.mxu0 0.0
        %9738 = vmatpush1.msra.mxu0 %v9660
        %9739 = vmatprep.subr.mxu0 0.0
        %9740 = vmatpush1.msra.mxu0 %v9661
        %9741 = vmatprep.subr.mxu0 0.0
        %9742 = vmatpush1.msra.mxu0 %v9662
        %9743 = vmatprep.subr.mxu0 0.0
        %9744 = vmatpush1.msra.mxu0 %v9663
        %9745 = vmatprep.subr.mxu0 0.0
        %9746 = vmatpush1.msra.mxu0 %v9664
        %9747 = vmatprep.subr.mxu0 0.0
        %9748 = vmatpush1.msra.mxu0 %v9665
        %9749 = vmatprep.subr.mxu0 0.0
        %9750 = vmatpush1.msra.mxu0 %v9666
        %9751 = vmatprep.subr.mxu0 0.0
        %9752 = vmatpush1.msra.mxu0 %v9667
        %9753 = vmatprep.subr.mxu0 0.0
        %9754 = vmatpush1.msra.mxu0 %v9668
        %9755 = vmatprep.subr.mxu0 0.0
        %9756 = vmatpush1.msra.mxu0 %v9669
        %9757 = vmatprep.mubr.f32.mxu0 %v8647
        %9758 = vmatmul.mubr.f32.gmra.mrb[0].mxu0 %v8646
        %v9759 = vpop.f32.mrb[0].mxu0
        %v9760 = vadd.f32 0.0, %v9759
        %v9761 = vpop.f32.mrb[0].mxu0
        %9762 = vdwg.mxu0
        %9763 = vmatprep.subr.mxu0 0.0
        %9764 = vmatpush1.msra.mxu0 %v9670
        %9765 = vmatprep.subr.mxu0 0.0
        %9766 = vmatpush1.msra.mxu0 %v9671
        %9767 = vmatprep.subr.mxu0 0.0
        %9768 = vmatpush1.msra.mxu0 %v9672
        %9769 = vmatprep.subr.mxu0 0.0
        %9770 = vmatpush1.msra.mxu0 %v9673
        %9771 = vmatprep.subr.mxu0 0.0
        %9772 = vmatpush1.msra.mxu0 %v9674
        %9773 = vmatprep.subr.mxu0 0.0
        %9774 = vmatpush1.msra.mxu0 %v9675
        %9775 = vmatprep.subr.mxu0 0.0
        %9776 = vmatpush1.msra.mxu0 %v9676
        %9777 = vmatprep.subr.mxu0 0.0
        %9778 = vmatpush1.msra.mxu0 %v9677
        %9779 = vmatprep.subr.mxu0 0.0
        %9780 = vmatpush1.msra.mxu0 %v9678
        %9781 = vmatprep.subr.mxu0 0.0
        %9782 = vmatpush1.msra.mxu0 %v9679
        %9783 = vmatprep.subr.mxu0 0.0
        %9784 = vmatpush1.msra.mxu0 %v9680
        %9785 = vmatprep.subr.mxu0 0.0
        %9786 = vmatpush1.msra.mxu0 %v9681
        %9787 = vmatprep.subr.mxu0 0.0
        %9788 = vmatpush1.msra.mxu0 %v9682
        %9789 = vmatprep.subr.mxu0 0.0
        %9790 = vmatpush1.msra.mxu0 %v9683
        %9791 = vmatprep.subr.mxu0 0.0
        %9792 = vmatpush1.msra.mxu0 %v9684
        %9793 = vmatprep.subr.mxu0 0.0
        %9794 = vmatpush1.msra.mxu0 %v9685
        %9795 = vmatprep.subr.mxu0 0.0
        %9796 = vmatpush1.msra.mxu0 %v9686
        %9797 = vmatprep.subr.mxu0 0.0
        %9798 = vmatpush1.msra.mxu0 %v9687
        %9799 = vmatprep.subr.mxu0 0.0
        %9800 = vmatpush1.msra.mxu0 %v9688
        %9801 = vmatprep.subr.mxu0 0.0
        %9802 = vmatpush1.msra.mxu0 %v9689
        %9803 = vmatprep.subr.mxu0 0.0
        %9804 = vmatpush1.msra.mxu0 0.0
        %9805 = vmatprep.subr.mxu0 0.0
        %9806 = vmatpush1.msra.mxu0 0.0
        %9807 = vmatprep.subr.mxu0 0.0
        %9808 = vmatpush1.msra.mxu0 0.0
        %9809 = vmatprep.subr.mxu0 0.0
        %9810 = vmatpush1.msra.mxu0 0.0
        %9811 = vmatprep.subr.mxu0 0.0
        %9812 = vmatpush1.msra.mxu0 0.0
        %9813 = vmatprep.subr.mxu0 0.0
        %9814 = vmatpush1.msra.mxu0 0.0
        %9815 = vmatprep.subr.mxu0 0.0
        %9816 = vmatpush1.msra.mxu0 0.0
        %9817 = vmatprep.subr.mxu0 0.0
        %9818 = vmatpush1.msra.mxu0 0.0
        %9819 = vmatprep.subr.mxu0 0.0
        %9820 = vmatpush1.msra.mxu0 0.0
        %9821 = vmatprep.subr.mxu0 0.0
        %9822 = vmatpush1.msra.mxu0 0.0
        %9823 = vmatprep.subr.mxu0 0.0
        %9824 = vmatpush1.msra.mxu0 0.0
        %9825 = vmatprep.subr.mxu0 0.0
        %9826 = vmatpush1.msra.mxu0 0.0
        %9827 = vmatprep.mubr.f32.mxu0 %v9691
        %9828 = vmatmul.mubr.f32.gmra.mrb[0].mxu0 %v8648
        %v9829 = vpop.f32.mrb[0].mxu0
        %v9830 = vadd.f32 %v9760, %v9829
        %v9831 = vpop.f32.mrb[0].mxu0
        %9832 = vdwg.mxu0
        %v9833 = vadd.f32 %v9636, %v9830
        %s9834 = scalar_lea.vmem [#allocation11], 2496
        %v9835 = vld [vmem:[%s9834] sm:$0xff]
        %v9836 = vld [vmem:[%s9834 + $0x8] sm:$0xff]
        %v9837 = vld [vmem:[%s9834 + $0x10] sm:$0xff]
        %v9838 = vld [vmem:[%s9834 + $0x18] sm:$0xff]
        %v9839 = vld [vmem:[%s9834 + $0x20] sm:$0xff]
        %v9840 = vld [vmem:[%s9834 + $0x28] sm:$0xff]
        %v9841 = vld [vmem:[%s9834 + $0x30] sm:$0xff]
        %v9842 = vld [vmem:[%s9834 + $0x38] sm:$0xff]
        %v9843 = vld [vmem:[%s9834 + $0x40] sm:$0xff]
        %v9844 = vld [vmem:[%s9834 + $0x48] sm:$0xff]
        %v9845 = vld [vmem:[%s9834 + $0x50] sm:$0xff]
        %v9846 = vld [vmem:[%s9834 + $0x58] sm:$0xff]
        %v9847 = vld [vmem:[%s9834 + $0x60] sm:$0xff]
        %v9848 = vld [vmem:[%s9834 + $0x68] sm:$0xff]
        %v9849 = vld [vmem:[%s9834 + $0x70] sm:$0xff]
        %v9850 = vld [vmem:[%s9834 + $0x78] sm:$0xff]
        %v9851 = vld [vmem:[%s9834 + $0x80] sm:$0xff]
        %v9852 = vld [vmem:[%s9834 + $0x88] sm:$0xff]
        %v9853 = vld [vmem:[%s9834 + $0x90] sm:$0xff]
        %v9854 = vld [vmem:[%s9834 + $0x98] sm:$0xff]
        %v9855 = vld [vmem:[%s9834 + $0xa0] sm:$0xff]
        %v9856 = vld [vmem:[%s9834 + $0xa8] sm:$0xff]
        %v9857 = vld [vmem:[%s9834 + $0xb0] sm:$0xff]
        %v9858 = vld [vmem:[%s9834 + $0xb8] sm:$0xff]
        %v9859 = vld [vmem:[%s9834 + $0xc0] sm:$0xff]
        %v9860 = vld [vmem:[%s9834 + $0xc8] sm:$0xff]
        %v9861 = vld [vmem:[%s9834 + $0xd0] sm:$0xff]
        %v9862 = vld [vmem:[%s9834 + $0xd8] sm:$0xff]
        %v9863 = vld [vmem:[%s9834 + $0xe0] sm:$0xff]
        %v9864 = vld [vmem:[%s9834 + $0xe8] sm:$0xff]
        %v9865 = vld [vmem:[%s9834 + $0xf0] sm:$0xff]
        %v9866 = vld [vmem:[%s9834 + $0xf8] sm:$0xff]
        %v9867 = vld [vmem:[%s9834 + $0x100] sm:$0xff]
        %v9868 = vld [vmem:[%s9834 + $0x108] sm:$0xff]
        %v9869 = vld [vmem:[%s9834 + $0x110] sm:$0xff]
        %v9870 = vld [vmem:[%s9834 + $0x118] sm:$0xff]
        %v9871 = vld [vmem:[%s9834 + $0x120] sm:$0xff]
        %v9872 = vld [vmem:[%s9834 + $0x128] sm:$0xff]
        %v9873 = vld [vmem:[%s9834 + $0x130] sm:$0xff]
        %v9874 = vld [vmem:[%s9834 + $0x138] sm:$0xff]
        %v9875 = vld [vmem:[%s9834 + $0x140] sm:$0xff]
        %v9876 = vld [vmem:[%s9834 + $0x148] sm:$0xff]
        %v9877 = vld [vmem:[%s9834 + $0x150] sm:$0xff]
        %v9878 = vld [vmem:[%s9834 + $0x158] sm:$0xff]
        %v9879 = vld [vmem:[%s9834 + $0x160] sm:$0xff]
        %v9880 = vld [vmem:[%s9834 + $0x168] sm:$0xff]
        %v9881 = vld [vmem:[%s9834 + $0x170] sm:$0xff]
        %v9882 = vld [vmem:[%s9834 + $0x178] sm:$0xff]
        %v9883 = vld [vmem:[%s9834 + $0x180] sm:$0xff]
        %v9884 = vld [vmem:[%s9834 + $0x188] sm:$0xff]
        %v9885 = vld [vmem:[%s9834 + $0x190] sm:$0xff]
        %v9886 = vld [vmem:[%s9834 + $0x198] sm:$0xff]
        %v9888 = vsel %vm8759, %v8653, 0
        %9890 = vmatprep.subr.mxu0 0.0
        %9891 = vmatpush1.msra.mxu0 %v9835
        %9892 = vmatprep.subr.mxu0 0.0
        %9893 = vmatpush1.msra.mxu0 %v9836
        %9894 = vmatprep.subr.mxu0 0.0
        %9895 = vmatpush1.msra.mxu0 %v9837
        %9896 = vmatprep.subr.mxu0 0.0
        %9897 = vmatpush1.msra.mxu0 %v9838
        %9898 = vmatprep.subr.mxu0 0.0
        %9899 = vmatpush1.msra.mxu0 %v9839
        %9900 = vmatprep.subr.mxu0 0.0
        %9901 = vmatpush1.msra.mxu0 %v9840
        %9902 = vmatprep.subr.mxu0 0.0
        %9903 = vmatpush1.msra.mxu0 %v9841
        %9904 = vmatprep.subr.mxu0 0.0
        %9905 = vmatpush1.msra.mxu0 %v9842
        %9906 = vmatprep.subr.mxu0 0.0
        %9907 = vmatpush1.msra.mxu0 %v9843
        %9908 = vmatprep.subr.mxu0 0.0
        %9909 = vmatpush1.msra.mxu0 %v9844
        %9910 = vmatprep.subr.mxu0 0.0
        %9911 = vmatpush1.msra.mxu0 %v9845
        %9912 = vmatprep.subr.mxu0 0.0
        %9913 = vmatpush1.msra.mxu0 %v9846
        %9914 = vmatprep.subr.mxu0 0.0
        %9915 = vmatpush1.msra.mxu0 %v9847
        %9916 = vmatprep.subr.mxu0 0.0
        %9917 = vmatpush1.msra.mxu0 %v9848
        %9918 = vmatprep.subr.mxu0 0.0
        %9919 = vmatpush1.msra.mxu0 %v9849
        %9920 = vmatprep.subr.mxu0 0.0
        %9921 = vmatpush1.msra.mxu0 %v9850
        %9922 = vmatprep.subr.mxu0 0.0
        %9923 = vmatpush1.msra.mxu0 %v9851
        %9924 = vmatprep.subr.mxu0 0.0
        %9925 = vmatpush1.msra.mxu0 %v9852
        %9926 = vmatprep.subr.mxu0 0.0
        %9927 = vmatpush1.msra.mxu0 %v9853
        %9928 = vmatprep.subr.mxu0 0.0
        %9929 = vmatpush1.msra.mxu0 %v9854
        %9930 = vmatprep.subr.mxu0 0.0
        %9931 = vmatpush1.msra.mxu0 %v9855
        %9932 = vmatprep.subr.mxu0 0.0
        %9933 = vmatpush1.msra.mxu0 %v9856
        %9934 = vmatprep.subr.mxu0 0.0
        %9935 = vmatpush1.msra.mxu0 %v9857
        %9936 = vmatprep.subr.mxu0 0.0
        %9937 = vmatpush1.msra.mxu0 %v9858
        %9938 = vmatprep.subr.mxu0 0.0
        %9939 = vmatpush1.msra.mxu0 %v9859
        %9940 = vmatprep.subr.mxu0 0.0
        %9941 = vmatpush1.msra.mxu0 %v9860
        %9942 = vmatprep.subr.mxu0 0.0
        %9943 = vmatpush1.msra.mxu0 %v9861
        %9944 = vmatprep.subr.mxu0 0.0
        %9945 = vmatpush1.msra.mxu0 %v9862
        %9946 = vmatprep.subr.mxu0 0.0
        %9947 = vmatpush1.msra.mxu0 %v9863
        %9948 = vmatprep.subr.mxu0 0.0
        %9949 = vmatpush1.msra.mxu0 %v9864
        %9950 = vmatprep.subr.mxu0 0.0
        %9951 = vmatpush1.msra.mxu0 %v9865
        %9952 = vmatprep.subr.mxu0 0.0
        %9953 = vmatpush1.msra.mxu0 %v9866
        %9954 = vmatprep.mubr.f32.mxu0 %v8651
        %9955 = vmatmul.mubr.f32.gmra.mrb[0].mxu0 %v8650
        %v9956 = vpop.f32.mrb[0].mxu0
        %v9957 = vadd.f32 0.0, %v9956
        %v9958 = vpop.f32.mrb[0].mxu0
        %9959 = vdwg.mxu0
        %9960 = vmatprep.subr.mxu0 0.0
        %9961 = vmatpush1.msra.mxu0 %v9867
        %9962 = vmatprep.subr.mxu0 0.0
        %9963 = vmatpush1.msra.mxu0 %v9868
        %9964 = vmatprep.subr.mxu0 0.0
        %9965 = vmatpush1.msra.mxu0 %v9869
        %9966 = vmatprep.subr.mxu0 0.0
        %9967 = vmatpush1.msra.mxu0 %v9870
        %9968 = vmatprep.subr.mxu0 0.0
        %9969 = vmatpush1.msra.mxu0 %v9871
        %9970 = vmatprep.subr.mxu0 0.0
        %9971 = vmatpush1.msra.mxu0 %v9872
        %9972 = vmatprep.subr.mxu0 0.0
        %9973 = vmatpush1.msra.mxu0 %v9873
        %9974 = vmatprep.subr.mxu0 0.0
        %9975 = vmatpush1.msra.mxu0 %v9874
        %9976 = vmatprep.subr.mxu0 0.0
        %9977 = vmatpush1.msra.mxu0 %v9875
        %9978 = vmatprep.subr.mxu0 0.0
        %9979 = vmatpush1.msra.mxu0 %v9876
        %9980 = vmatprep.subr.mxu0 0.0
        %9981 = vmatpush1.msra.mxu0 %v9877
        %9982 = vmatprep.subr.mxu0 0.0
        %9983 = vmatpush1.msra.mxu0 %v9878
        %9984 = vmatprep.subr.mxu0 0.0
        %9985 = vmatpush1.msra.mxu0 %v9879
        %9986 = vmatprep.subr.mxu0 0.0
        %9987 = vmatpush1.msra.mxu0 %v9880
        %9988 = vmatprep.subr.mxu0 0.0
        %9989 = vmatpush1.msra.mxu0 %v9881
        %9990 = vmatprep.subr.mxu0 0.0
        %9991 = vmatpush1.msra.mxu0 %v9882
        %9992 = vmatprep.subr.mxu0 0.0
        %9993 = vmatpush1.msra.mxu0 %v9883
        %9994 = vmatprep.subr.mxu0 0.0
        %9995 = vmatpush1.msra.mxu0 %v9884
        %9996 = vmatprep.subr.mxu0 0.0
        %9997 = vmatpush1.msra.mxu0 %v9885
        %9998 = vmatprep.subr.mxu0 0.0
        %9999 = vmatpush1.msra.mxu0 %v9886
        %10000 = vmatprep.subr.mxu0 0.0
        %10001 = vmatpush1.msra.mxu0 0.0
        %10002 = vmatprep.subr.mxu0 0.0
        %10003 = vmatpush1.msra.mxu0 0.0
        %10004 = vmatprep.subr.mxu0 0.0
        %10005 = vmatpush1.msra.mxu0 0.0
        %10006 = vmatprep.subr.mxu0 0.0
        %10007 = vmatpush1.msra.mxu0 0.0
        %10008 = vmatprep.subr.mxu0 0.0
        %10009 = vmatpush1.msra.mxu0 0.0
        %10010 = vmatprep.subr.mxu0 0.0
        %10011 = vmatpush1.msra.mxu0 0.0
        %10012 = vmatprep.subr.mxu0 0.0
        %10013 = vmatpush1.msra.mxu0 0.0
        %10014 = vmatprep.subr.mxu0 0.0
        %10015 = vmatpush1.msra.mxu0 0.0
        %10016 = vmatprep.subr.mxu0 0.0
        %10017 = vmatpush1.msra.mxu0 0.0
        %10018 = vmatprep.subr.mxu0 0.0
        %10019 = vmatpush1.msra.mxu0 0.0
        %10020 = vmatprep.subr.mxu0 0.0
        %10021 = vmatpush1.msra.mxu0 0.0
        %10022 = vmatprep.subr.mxu0 0.0
        %10023 = vmatpush1.msra.mxu0 0.0
        %10024 = vmatprep.mubr.f32.mxu0 %v9888
        %10025 = vmatmul.mubr.f32.gmra.mrb[0].mxu0 %v8652
        %v10026 = vpop.f32.mrb[0].mxu0
        %v10027 = vadd.f32 %v9957, %v10026
        %v10028 = vpop.f32.mrb[0].mxu0
        %10029 = vdwg.mxu0
        %v10030 = vadd.f32 %v9833, %v10027
        %v10031 = vld [vmem:[#allocation12] sm:$0x1]
        %v10033 = vlaneseq
        %v10034 = vshrl.u32 %v10033, 7
        %v10035 = vsub.s32 0, %v10034
        %v10036 = vrot.slane %v10031, %v10035
        %v10038 = vadd.f32 %v10030, %v10036
        %10039 = vst [vmem:[%s500] sm:$0xff] %v10038
        %s10040 = sand.u32 %s185, 1
        %s10041 = scalar_lea.sflag [#allocation5], %s10040
        %s10042 = sand.u32 %s185, 1
        %s10043 = smul.addr %s10042, 8
        %s10044 = scalar_lea.vmem [#allocation14], %s10043
        // Predicated region
        $region111: #{cnn_forward.1} parent=81 // pred_check
          %p10045 = pneg %p195
        $region112: #{cnn_forward.1} parent=81 // pred_check_branch
          %10047 = sbr.rel (%p10045) target = $region114
        $region113: #{cnn_forward.1} parent=81 // pred_region
          %s10049 = ssub.s32 128, 128
          %10050 = vsyncadd %s10041, %s10049
          %s10051 = smul.addr %s25, 128
          %s10052 = scalar_lea.hbm %s7, %s10051
          %s10054 = sshll.u32 %s10044, 4
          %s10055 = int_to_ptr.vmem [resolvable:$true] %s10054
          %10057 = dma.vmem_to_hbm [thread:$0]  %s10055, 128, %s10052, %s10041
        $region114: #{cnn_forward.1} parent=81 // pred_fallthru
          _
      $region82: #{cnn_forward.1} parent=5 // pred_fallthru
        _
      %p10058 = scmp.le.s32.totalorder 2, %s20
      // Predicated region
      $region115: #{cnn_forward.1} parent=5 // pred_check
        %p10059 = pneg %p10058
      $region116: #{cnn_forward.1} parent=5 // pred_check_branch
        %10061 = sbr.rel (%p10059) target = $region118
      $region117: #{cnn_forward.1} parent=5 // pred_region
        %s10062 = ssub.s32 %s20, 2
        // Predicated region
        $region119: #{cnn_forward.1} parent=117 // pred_check
          %p10063 = pneg %p201
        $region120: #{cnn_forward.1} parent=117 // pred_check_branch
          %10065 = sbr.rel (%p10063) target = $region122
        $region121: #{cnn_forward.1} parent=117 // pred_region
          %s10066 = sand.u32 %s186, 1
          %s10067 = scalar_lea.sflag [#allocation5], %s10066
          %s10068 = sand.u32 %s186, 1
          %s10069 = smul.addr %s10068, 8
          %s10070 = scalar_lea.vmem [#allocation14], %s10069
          %10071 = dma.done %s10067, 128
        $region122: #{cnn_forward.1} parent=117 // pred_fallthru
          _
      $region118: #{cnn_forward.1} parent=5 // pred_fallthru
        _
    $region6: #{cnn_forward.1} parent=1 // loop_footer
      %s24 = sadd.s32 1, %s20
    $region7: #{cnn_forward.1} parent=1 // loop_footer_branch
      %19 = sbr.rel target = $region3
    $region8: #{cnn_forward.1} parent=1 // loop_exit
      _
    %10072 = vsyncpa [#allocation4], 1
    %s10073 = scalar_lea.sflag [#allocation4], 1
    %10074 = vsyncpa %s10073, 1
    %10075 = vsyncpa [#allocation7], 1
    %10076 = vsyncpa [#allocation10], 1
    %10077 = vsyncpa [#allocation13], 1
    %10078 = vsyncpa [#allocation5], 1
    %s10079 = scalar_lea.sflag [#allocation5], 1
    %10080 = vsyncpa %s10079, 1

</llo_original>
